<compile_context>
chip_gen: v7x
topology: tpu7x:2x2x1
jax: 0.10.0
libtpu: 0.0.40
codegen_flags: <defaults>
</compile_context>

<pallas_src>
import jax
import jax.numpy as jnp
from jax import lax
from jax.experimental import pallas as pl
from jax.experimental.pallas import tpu as pltpu

EPS = 1e-5          # BatchNorm eps (PyTorch default)
NEG_SLOPE = 0.2     # LeakyReLU slope
KSIZE = 11          # conv kernel size
STRIDE = 2
C_IN, C1, C2 = 3, 64, 128
IMG = 32
OH1 = (IMG - KSIZE) // STRIDE + 1     # 11
NPOS = OH1 * OH1                      # 121 spatial positions after conv1
K1 = C_IN * KSIZE * KSIZE             # 363  (conv1 contraction length)
K1_PAD = 384                          # padded to a multiple of 128
K2 = NPOS * C1                        # 7744 (conv2 merged contraction length)
K2_PAD = 7808                         # 61 * 128 (lane-aligned, zero-padded)

# Lane offsets inside the packed "small params" vector  [g1 | be1 | g2 | be2 | w3 | b3]
OFF_G1, OFF_BE1 = 0, 64
OFF_G2, OFF_BE2 = 128, 256
OFF_W3, OFF_B3 = 384, 512
SMALL_PAD = 640


def discriminator_kernel(patches_ref,    # (NPOS*B, K1_PAD) bf16  im2col of x
                         w1_ref,          # (K1_PAD, C1)     bf16
                         small_ref,       # (1, SMALL_PAD)   f32   packed small params
                         w2_hbm_ref,      # (K2_PAD, C2)     bf16  (HBM, manual DMA)
                         o_ref,           # (B, 1)           f32
                         h1_scr,          # (NPOS*B, C1)     f32   scratch
                         a_scr,           # (B, K2_PAD)      bf16  scratch (conv2 LHS)
                         w2_vmem,         # (K2_PAD, C2)     bf16  scratch
                         w2_sem):         # DMA semaphore
    B = o_ref.shape[0]

    # ---- Kick off the conv2 weight fetch (single largest input, ~2 MiB) so it
    #      overlaps with conv1 + BN1; it is only needed at the merged matmul below.
    w2_copy = pltpu.make_async_copy(w2_hbm_ref, w2_vmem, w2_sem)
    w2_copy.start()

    # ---- Conv1 as one im2col matmul (bf16 MXU operands, f32 accumulation) ---------
    h1_scr[...] = jnp.dot(patches_ref[...], w1_ref[...],
                          preferred_element_type=jnp.float32)        # (NPOS*B, C1)

    # ---- BatchNorm2d(64) statistics: streamed per-tile sum / sum-of-squares -------
    # (keeps the live set to two (B, C1) accumulators + one tile; no big-value spill)
    ps = jnp.zeros((B, C1), jnp.float32)
    pss = jnp.zeros((B, C1), jnp.float32)
    for p in range(NPOS):                                  # static slices, unrolled
        t = h1_scr[p * B:(p + 1) * B, :]
        ps = ps + t
        pss = pss + t * t
    inv_n = 1.0 / float(NPOS * B)
    mean1 = jnp.sum(ps, axis=0, keepdims=True) * inv_n                 # (1, C1)
    var1 = jnp.sum(pss, axis=0, keepdims=True) * inv_n - mean1 * mean1  # biased var

    g1 = small_ref[:, OFF_G1:OFF_G1 + C1]
    be1 = small_ref[:, OFF_BE1:OFF_BE1 + C1]
    scale1 = g1 * lax.rsqrt(var1 + EPS)
    shift1 = be1 - mean1 * scale1
    scale1 = jnp.broadcast_to(scale1, (B, C1))   # hoisted: broadcasts are not CSE'd
    shift1 = jnp.broadcast_to(shift1, (B, C1))

    # ---- Fold BN1 affine + LeakyReLU into the relayout to a lane-dense (B, K2_PAD)
    #      bf16 LHS, so conv2 becomes ONE merged-K matmul instead of 121 small ones.
    a_scr[:, K2:K2_PAD] = jnp.zeros((B, K2_PAD - K2), jnp.bfloat16)   # zero the K pad
    for p in range(NPOS):
        t = h1_scr[p * B:(p + 1) * B, :] * scale1 + shift1
        t = jnp.where(t > 0, t, NEG_SLOPE * t)
        a_scr[:, p * C1:(p + 1) * C1] = t.astype(jnp.bfloat16)

    # ---- Conv2: single 1x1 output covering the whole 11x11 map -> one matmul ------
    w2_copy.wait()
    h2 = jnp.dot(a_scr[...], w2_vmem[...],
                 preferred_element_type=jnp.float32)                   # (B, C2)

    # ---- BatchNorm2d(128): spatial is 1x1, stats over the batch only + LeakyReLU --
    g2 = small_ref[:, OFF_G2:OFF_G2 + C2]
    be2 = small_ref[:, OFF_BE2:OFF_BE2 + C2]
    mean2 = jnp.mean(h2, axis=0, keepdims=True)
    var2 = jnp.mean(h2 * h2, axis=0, keepdims=True) - mean2 * mean2
    h2 = (h2 - mean2) * lax.rsqrt(var2 + EPS) * g2 + be2
    h2 = jnp.where(h2 > 0, h2, NEG_SLOPE * h2)

    # ---- Flatten -> Linear(128, 1) -> Sigmoid --------------------------------------
    w3 = small_ref[:, OFF_W3:OFF_W3 + C2]
    b3 = small_ref[:, OFF_B3:OFF_B3 + 1]
    logit = jnp.sum(h2 * w3, axis=1, keepdims=True) + b3
    o_ref[...] = jax.nn.sigmoid(logit)


def init_params(key):
    """PyTorch-style default init (U(-1/sqrt(fan_in), +)); BN gamma=1, beta=0."""
    k1, k2, k3, k4 = jax.random.split(key, 4)
    bnd1 = 1.0 / (C_IN * KSIZE * KSIZE) ** 0.5
    w1 = jax.random.uniform(k1, (C1, C_IN, KSIZE, KSIZE), jnp.float32, -bnd1, bnd1)
    bnd2 = 1.0 / (C1 * KSIZE * KSIZE) ** 0.5
    w2 = jax.random.uniform(k2, (C2, C1, KSIZE, KSIZE), jnp.float32, -bnd2, bnd2)
    bnd3 = 1.0 / C2 ** 0.5
    w3 = jax.random.uniform(k3, (1, C2), jnp.float32, -bnd3, bnd3)
    b3 = jax.random.uniform(k4, (1, 1), jnp.float32, -bnd3, bnd3)
    # Conv biases omitted: they cancel exactly under training-mode BatchNorm.
    g1 = jnp.ones((1, C1), jnp.float32); be1 = jnp.zeros((1, C1), jnp.float32)
    g2 = jnp.ones((1, C2), jnp.float32); be2 = jnp.zeros((1, C2), jnp.float32)
    return dict(w1=w1, w2=w2, w3=w3, b3=b3, g1=g1, be1=be1, g2=g2, be2=be2)


def pack_params(params):
    """One-time host-side repack: matmul-layout bf16 conv weights + one small f32 vec."""
    # conv1 weight: (C1, C_IN, 11, 11) -> (K1, C1) -> zero-pad K to 384, bf16
    w1m = params["w1"].reshape(C1, K1).T
    w1m = jnp.pad(w1m, ((0, K1_PAD - K1), (0, 0))).astype(jnp.bfloat16)   # (384, 64)
    # conv2 weight: w2m[p*C1 + c, f] = w2[f, c, kh, kw], p = kh*11 + kw; pad K to 7808
    w2m = params["w2"].transpose(2, 3, 1, 0).reshape(K2, C2)
    w2m = jnp.pad(w2m, ((0, K2_PAD - K2), (0, 0))).astype(jnp.bfloat16)   # (7808, 128)
    # small params packed into one lane-aligned vector
    small = jnp.concatenate([params["g1"], params["be1"],
                             params["g2"], params["be2"],
                             params["w3"], params["b3"]], axis=1)         # (1, 513)
    small = jnp.pad(small, ((0, 0), (0, SMALL_PAD - small.shape[1])))     # (1, 640)
    return dict(w1m=w1m, w2m=w2m, small=small)


def _im2col_conv1(x):
    """x (B,3,32,32) -> patches (121*B, 363): row = pos*B + b, col = c*121 + kh*11 + kw."""
    B = x.shape[0]
    span = STRIDE * (OH1 - 1) + 1
    cols = []
    for kh in range(KSIZE):
        for kw in range(KSIZE):
            cols.append(x[:, :, kh:kh + span:STRIDE, kw:kw + span:STRIDE])  # (B,3,11,11)
    p = jnp.stack(cols, axis=2)              # (B, 3, 121, 11, 11), axis2 = kh*11 + kw
    p = p.transpose(3, 4, 0, 1, 2)           # (oh, ow, B, c, kh*kw)
    return p.reshape(NPOS * B, K1)


def discriminator_forward(x, packed):
    """x: (B, 3, 32, 32) float32 -> (B, 1) float32.  B must be a multiple of 8."""
    x = x.astype(jnp.float32)
    B = x.shape[0]
    assert B % 8 == 0 and B > 1, "batch must be a multiple of 8 and > 1 (training BN)"
    patches = _im2col_conv1(x)
    patches = jnp.pad(patches, ((0, 0), (0, K1_PAD - K1))).astype(jnp.bfloat16)

    vmem = pl.BlockSpec(memory_space=pltpu.MemorySpace.VMEM)
    out = pl.pallas_call(
        discriminator_kernel,
        out_shape=jax.ShapeDtypeStruct((B, 1), jnp.float32),
        in_specs=[vmem, vmem, vmem, pl.BlockSpec(memory_space=pl.ANY)],
        out_specs=vmem,
        scratch_shapes=[
            pltpu.VMEM((NPOS * B, C1), jnp.float32),   # raw conv1 output
            pltpu.VMEM((B, K2_PAD), jnp.bfloat16),     # BN'd/leaky'd conv2 LHS
            pltpu.VMEM((K2_PAD, C2), jnp.bfloat16),    # conv2 weights (manual DMA dst)
            pltpu.SemaphoreType.DMA(()),
        ],
        compiler_params=pltpu.CompilerParams(vmem_limit_bytes=32 * 1024 * 1024),
    )(patches, packed["w1m"], packed["small"], packed["w2m"])
    return out


def _reference(x, params):
    """Pure-JAX reference mirroring the kernel's bf16 rounding of matmul operands."""
    f32 = jnp.float32
    xr = x.astype(jnp.bfloat16).astype(f32)
    w1 = params["w1"].astype(jnp.bfloat16).astype(f32)
    w2 = params["w2"].astype(jnp.bfloat16).astype(f32)
    dn = ("NCHW", "OIHW", "NCHW")

    h = lax.conv_general_dilated(xr, w1, (STRIDE, STRIDE), "VALID", dimension_numbers=dn)
    mean = jnp.mean(h, axis=(0, 2, 3), keepdims=True)
    var = jnp.mean((h - mean) ** 2, axis=(0, 2, 3), keepdims=True)
    h = (h - mean) * lax.rsqrt(var + EPS)
    h = h * params["g1"].reshape(1, C1, 1, 1) + params["be1"].reshape(1, C1, 1, 1)
    h = jnp.where(h > 0, h, NEG_SLOPE * h)

    hr = h.astype(jnp.bfloat16).astype(f32)
    h2 = lax.conv_general_dilated(hr, w2, (STRIDE, STRIDE), "VALID", dimension_numbers=dn)
    mean2 = jnp.mean(h2, axis=(0, 2, 3), keepdims=True)
    var2 = jnp.mean((h2 - mean2) ** 2, axis=(0, 2, 3), keepdims=True)
    h2 = (h2 - mean2) * lax.rsqrt(var2 + EPS)
    h2 = h2 * params["g2"].reshape(1, C2, 1, 1) + params["be2"].reshape(1, C2, 1, 1)
    h2 = jnp.where(h2 > 0, h2, NEG_SLOPE * h2)

    flat = h2.reshape(x.shape[0], C2)
    logit = flat @ params["w3"].T + params["b3"]
    return jax.nn.sigmoid(logit)


if __name__ == "__main__":
    key = jax.random.PRNGKey(0)
    kx, kp = jax.random.split(key)

    batch = 8   # multiple of the f32 sublane count; training-mode BatchNorm needs batch > 1
    x = jax.random.normal(kx, (batch, C_IN, IMG, IMG), dtype=jnp.float32)

    params = init_params(kp)
    packed = pack_params(params)

    fwd = jax.jit(discriminator_forward)
    y = jax.block_until_ready(fwd(x, packed))

    assert y.shape == (batch, 1), y.shape
    y_ref = _reference(x, params)
    max_err = float(jnp.max(jnp.abs(y - y_ref)))
    assert jnp.allclose(y, y_ref, atol=2e-3, rtol=2e-3), f"mismatch vs reference: {max_err}"

    print("KERNEL_OK")
</pallas_src>

<mosaic_0001>
module attributes {stable_mosaic.version = 11 : i64} {
  func.func @discriminator_kernel(%arg0: memref<968x384xbf16, #tpu.memory_space<vmem>>, %arg1: memref<384x64xbf16, #tpu.memory_space<vmem>>, %arg2: memref<1x640xf32, #tpu.memory_space<vmem>>, %arg3: memref<7808x128xbf16, #tpu.memory_space<any>>, %arg4: memref<8x1xf32, #tpu.memory_space<vmem>>, %arg5: memref<968x64xf32, #tpu.memory_space<vmem>>, %arg6: memref<8x7808xbf16, #tpu.memory_space<vmem>>, %arg7: memref<7808x128xbf16, #tpu.memory_space<vmem>>, %arg8: memref<!tpu.dma_semaphore, #tpu.memory_space<semaphore_mem>>) attributes {dimension_semantics = [], scalar_prefetch = 0 : i64, scratch_operands = 4 : i64, tpu.core_type = #tpu.core_type<tc>} {
    tpu.enqueue_dma source(%arg3 : memref<7808x128xbf16, #tpu.memory_space<any>>) target(%arg7 : memref<7808x128xbf16, #tpu.memory_space<vmem>>) target_semaphore(%arg8 : memref<!tpu.dma_semaphore, #tpu.memory_space<semaphore_mem>>)
    %c0 = arith.constant 0 : index
    %c0_0 = arith.constant 0 : index
    %0 = vector.load %arg0[%c0, %c0_0] : memref<968x384xbf16, #tpu.memory_space<vmem>>, vector<968x384xbf16>
    %c0_1 = arith.constant 0 : index
    %c0_2 = arith.constant 0 : index
    %1 = vector.load %arg1[%c0_1, %c0_2] : memref<384x64xbf16, #tpu.memory_space<vmem>>, vector<384x64xbf16>
    %cst = arith.constant dense<0.000000e+00> : vector<968x64xf32>
    %2 = tpu.matmul %0, %1, %cst {dimension_numbers = #tpu.dot_dimension_numbers<[1], [0], [0], [1], [0, 0, 1, 1], [], []>} : vector<968x384xbf16>, vector<384x64xbf16>, vector<968x64xf32> -> vector<968x64xf32>
    %c0_3 = arith.constant 0 : index
    %c0_4 = arith.constant 0 : index
    %3 = vector.load %arg5[%c0_3, %c0_4] : memref<968x64xf32, #tpu.memory_space<vmem>>, vector<968x64xf32>
    tpu.vector_store %arg5[%c0_3, %c0_4], %2 {strides = array<i32>} : memref<968x64xf32, #tpu.memory_space<vmem>>, vector<968x64xf32>,
    %cst_5 = arith.constant 0.000000e+00 : f32
    %4 = vector.broadcast %cst_5 : f32 to vector<8x64xf32>
    %cst_6 = arith.constant 0.000000e+00 : f32
    %5 = vector.broadcast %cst_6 : f32 to vector<8x64xf32>
    %c0_7 = arith.constant 0 : index
    %c0_8 = arith.constant 0 : index
    %6 = vector.load %arg5[%c0_7, %c0_8] : memref<968x64xf32, #tpu.memory_space<vmem>>, vector<8x64xf32>
    %7 = arith.addf %4, %6 : vector<8x64xf32>
    %8 = arith.mulf %6, %6 : vector<8x64xf32>
    %9 = arith.addf %5, %8 : vector<8x64xf32>
    %c8 = arith.constant 8 : index
    %c0_9 = arith.constant 0 : index
    %10 = vector.load %arg5[%c8, %c0_9] : memref<968x64xf32, #tpu.memory_space<vmem>>, vector<8x64xf32>
    %11 = arith.addf %7, %10 : vector<8x64xf32>
    %12 = arith.mulf %10, %10 : vector<8x64xf32>
    %13 = arith.addf %9, %12 : vector<8x64xf32>
    %c16 = arith.constant 16 : index
    %c0_10 = arith.constant 0 : index
    %14 = vector.load %arg5[%c16, %c0_10] : memref<968x64xf32, #tpu.memory_space<vmem>>, vector<8x64xf32>
    %15 = arith.addf %11, %14 : vector<8x64xf32>
    %16 = arith.mulf %14, %14 : vector<8x64xf32>
    %17 = arith.addf %13, %16 : vector<8x64xf32>
    %c24 = arith.constant 24 : index
    %c0_11 = arith.constant 0 : index
    %18 = vector.load %arg5[%c24, %c0_11] : memref<968x64xf32, #tpu.memory_space<vmem>>, vector<8x64xf32>
    %19 = arith.addf %15, %18 : vector<8x64xf32>
    %20 = arith.mulf %18, %18 : vector<8x64xf32>
    %21 = arith.addf %17, %20 : vector<8x64xf32>
    %c32 = arith.constant 32 : index
    %c0_12 = arith.constant 0 : index
    %22 = vector.load %arg5[%c32, %c0_12] : memref<968x64xf32, #tpu.memory_space<vmem>>, vector<8x64xf32>
    %23 = arith.addf %19, %22 : vector<8x64xf32>
    %24 = arith.mulf %22, %22 : vector<8x64xf32>
    %25 = arith.addf %21, %24 : vector<8x64xf32>
    %c40 = arith.constant 40 : index
    %c0_13 = arith.constant 0 : index
    %26 = vector.load %arg5[%c40, %c0_13] : memref<968x64xf32, #tpu.memory_space<vmem>>, vector<8x64xf32>
    %27 = arith.addf %23, %26 : vector<8x64xf32>
    %28 = arith.mulf %26, %26 : vector<8x64xf32>
    %29 = arith.addf %25, %28 : vector<8x64xf32>
    %c48 = arith.constant 48 : index
    %c0_14 = arith.constant 0 : index
    %30 = vector.load %arg5[%c48, %c0_14] : memref<968x64xf32, #tpu.memory_space<vmem>>, vector<8x64xf32>
    %31 = arith.addf %27, %30 : vector<8x64xf32>
    %32 = arith.mulf %30, %30 : vector<8x64xf32>
    %33 = arith.addf %29, %32 : vector<8x64xf32>
    %c56 = arith.constant 56 : index
    %c0_15 = arith.constant 0 : index
    %34 = vector.load %arg5[%c56, %c0_15] : memref<968x64xf32, #tpu.memory_space<vmem>>, vector<8x64xf32>
    %35 = arith.addf %31, %34 : vector<8x64xf32>
    %36 = arith.mulf %34, %34 : vector<8x64xf32>
    %37 = arith.addf %33, %36 : vector<8x64xf32>
    %c64 = arith.constant 64 : index
    %c0_16 = arith.constant 0 : index
    %38 = vector.load %arg5[%c64, %c0_16] : memref<968x64xf32, #tpu.memory_space<vmem>>, vector<8x64xf32>
    %39 = arith.addf %35, %38 : vector<8x64xf32>
    %40 = arith.mulf %38, %38 : vector<8x64xf32>
    %41 = arith.addf %37, %40 : vector<8x64xf32>
    %c72 = arith.constant 72 : index
    %c0_17 = arith.constant 0 : index
    %42 = vector.load %arg5[%c72, %c0_17] : memref<968x64xf32, #tpu.memory_space<vmem>>, vector<8x64xf32>
    %43 = arith.addf %39, %42 : vector<8x64xf32>
    %44 = arith.mulf %42, %42 : vector<8x64xf32>
    %45 = arith.addf %41, %44 : vector<8x64xf32>
    %c80 = arith.constant 80 : index
    %c0_18 = arith.constant 0 : index
    %46 = vector.load %arg5[%c80, %c0_18] : memref<968x64xf32, #tpu.memory_space<vmem>>, vector<8x64xf32>
    %47 = arith.addf %43, %46 : vector<8x64xf32>
    %48 = arith.mulf %46, %46 : vector<8x64xf32>
    %49 = arith.addf %45, %48 : vector<8x64xf32>
    %c88 = arith.constant 88 : index
    %c0_19 = arith.constant 0 : index
    %50 = vector.load %arg5[%c88, %c0_19] : memref<968x64xf32, #tpu.memory_space<vmem>>, vector<8x64xf32>
    %51 = arith.addf %47, %50 : vector<8x64xf32>
    %52 = arith.mulf %50, %50 : vector<8x64xf32>
    %53 = arith.addf %49, %52 : vector<8x64xf32>
    %c96 = arith.constant 96 : index
    %c0_20 = arith.constant 0 : index
    %54 = vector.load %arg5[%c96, %c0_20] : memref<968x64xf32, #tpu.memory_space<vmem>>, vector<8x64xf32>
    %55 = arith.addf %51, %54 : vector<8x64xf32>
    %56 = arith.mulf %54, %54 : vector<8x64xf32>
    %57 = arith.addf %53, %56 : vector<8x64xf32>
    %c104 = arith.constant 104 : index
    %c0_21 = arith.constant 0 : index
    %58 = vector.load %arg5[%c104, %c0_21] : memref<968x64xf32, #tpu.memory_space<vmem>>, vector<8x64xf32>
    %59 = arith.addf %55, %58 : vector<8x64xf32>
    %60 = arith.mulf %58, %58 : vector<8x64xf32>
    %61 = arith.addf %57, %60 : vector<8x64xf32>
    %c112 = arith.constant 112 : index
    %c0_22 = arith.constant 0 : index
    %62 = vector.load %arg5[%c112, %c0_22] : memref<968x64xf32, #tpu.memory_space<vmem>>, vector<8x64xf32>
    %63 = arith.addf %59, %62 : vector<8x64xf32>
    %64 = arith.mulf %62, %62 : vector<8x64xf32>
    %65 = arith.addf %61, %64 : vector<8x64xf32>
    %c120 = arith.constant 120 : index
    %c0_23 = arith.constant 0 : index
    %66 = vector.load %arg5[%c120, %c0_23] : memref<968x64xf32, #tpu.memory_space<vmem>>, vector<8x64xf32>
    %67 = arith.addf %63, %66 : vector<8x64xf32>
    %68 = arith.mulf %66, %66 : vector<8x64xf32>
    %69 = arith.addf %65, %68 : vector<8x64xf32>
    %c128 = arith.constant 128 : index
    %c0_24 = arith.constant 0 : index
    %70 = vector.load %arg5[%c128, %c0_24] : memref<968x64xf32, #tpu.memory_space<vmem>>, vector<8x64xf32>
    %71 = arith.addf %67, %70 : vector<8x64xf32>
    %72 = arith.mulf %70, %70 : vector<8x64xf32>
    %73 = arith.addf %69, %72 : vector<8x64xf32>
    %c136 = arith.constant 136 : index
    %c0_25 = arith.constant 0 : index
    %74 = vector.load %arg5[%c136, %c0_25] : memref<968x64xf32, #tpu.memory_space<vmem>>, vector<8x64xf32>
    %75 = arith.addf %71, %74 : vector<8x64xf32>
    %76 = arith.mulf %74, %74 : vector<8x64xf32>
    %77 = arith.addf %73, %76 : vector<8x64xf32>
    %c144 = arith.constant 144 : index
    %c0_26 = arith.constant 0 : index
    %78 = vector.load %arg5[%c144, %c0_26] : memref<968x64xf32, #tpu.memory_space<vmem>>, vector<8x64xf32>
    %79 = arith.addf %75, %78 : vector<8x64xf32>
    %80 = arith.mulf %78, %78 : vector<8x64xf32>
    %81 = arith.addf %77, %80 : vector<8x64xf32>
    %c152 = arith.constant 152 : index
    %c0_27 = arith.constant 0 : index
    %82 = vector.load %arg5[%c152, %c0_27] : memref<968x64xf32, #tpu.memory_space<vmem>>, vector<8x64xf32>
    %83 = arith.addf %79, %82 : vector<8x64xf32>
    %84 = arith.mulf %82, %82 : vector<8x64xf32>
    %85 = arith.addf %81, %84 : vector<8x64xf32>
    %c160 = arith.constant 160 : index
    %c0_28 = arith.constant 0 : index
    %86 = vector.load %arg5[%c160, %c0_28] : memref<968x64xf32, #tpu.memory_space<vmem>>, vector<8x64xf32>
    %87 = arith.addf %83, %86 : vector<8x64xf32>
    %88 = arith.mulf %86, %86 : vector<8x64xf32>
    %89 = arith.addf %85, %88 : vector<8x64xf32>
    %c168 = arith.constant 168 : index
    %c0_29 = arith.constant 0 : index
    %90 = vector.load %arg5[%c168, %c0_29] : memref<968x64xf32, #tpu.memory_space<vmem>>, vector<8x64xf32>
    %91 = arith.addf %87, %90 : vector<8x64xf32>
    %92 = arith.mulf %90, %90 : vector<8x64xf32>
    %93 = arith.addf %89, %92 : vector<8x64xf32>
    %c176 = arith.constant 176 : index
    %c0_30 = arith.constant 0 : index
    %94 = vector.load %arg5[%c176, %c0_30] : memref<968x64xf32, #tpu.memory_space<vmem>>, vector<8x64xf32>
    %95 = arith.addf %91, %94 : vector<8x64xf32>
    %96 = arith.mulf %94, %94 : vector<8x64xf32>
    %97 = arith.addf %93, %96 : vector<8x64xf32>
    %c184 = arith.constant 184 : index
    %c0_31 = arith.constant 0 : index
    %98 = vector.load %arg5[%c184, %c0_31] : memref<968x64xf32, #tpu.memory_space<vmem>>, vector<8x64xf32>
    %99 = arith.addf %95, %98 : vector<8x64xf32>
    %100 = arith.mulf %98, %98 : vector<8x64xf32>
    %101 = arith.addf %97, %100 : vector<8x64xf32>
    %c192 = arith.constant 192 : index
    %c0_32 = arith.constant 0 : index
    %102 = vector.load %arg5[%c192, %c0_32] : memref<968x64xf32, #tpu.memory_space<vmem>>, vector<8x64xf32>
    %103 = arith.addf %99, %102 : vector<8x64xf32>
    %104 = arith.mulf %102, %102 : vector<8x64xf32>
    %105 = arith.addf %101, %104 : vector<8x64xf32>
    %c200 = arith.constant 200 : index
    %c0_33 = arith.constant 0 : index
    %106 = vector.load %arg5[%c200, %c0_33] : memref<968x64xf32, #tpu.memory_space<vmem>>, vector<8x64xf32>
    %107 = arith.addf %103, %106 : vector<8x64xf32>
    %108 = arith.mulf %106, %106 : vector<8x64xf32>
    %109 = arith.addf %105, %108 : vector<8x64xf32>
    %c208 = arith.constant 208 : index
    %c0_34 = arith.constant 0 : index
    %110 = vector.load %arg5[%c208, %c0_34] : memref<968x64xf32, #tpu.memory_space<vmem>>, vector<8x64xf32>
    %111 = arith.addf %107, %110 : vector<8x64xf32>
    %112 = arith.mulf %110, %110 : vector<8x64xf32>
    %113 = arith.addf %109, %112 : vector<8x64xf32>
    %c216 = arith.constant 216 : index
    %c0_35 = arith.constant 0 : index
    %114 = vector.load %arg5[%c216, %c0_35] : memref<968x64xf32, #tpu.memory_space<vmem>>, vector<8x64xf32>
    %115 = arith.addf %111, %114 : vector<8x64xf32>
    %116 = arith.mulf %114, %114 : vector<8x64xf32>
    %117 = arith.addf %113, %116 : vector<8x64xf32>
    %c224 = arith.constant 224 : index
    %c0_36 = arith.constant 0 : index
    %118 = vector.load %arg5[%c224, %c0_36] : memref<968x64xf32, #tpu.memory_space<vmem>>, vector<8x64xf32>
    %119 = arith.addf %115, %118 : vector<8x64xf32>
    %120 = arith.mulf %118, %118 : vector<8x64xf32>
    %121 = arith.addf %117, %120 : vector<8x64xf32>
    %c232 = arith.constant 232 : index
    %c0_37 = arith.constant 0 : index
    %122 = vector.load %arg5[%c232, %c0_37] : memref<968x64xf32, #tpu.memory_space<vmem>>, vector<8x64xf32>
    %123 = arith.addf %119, %122 : vector<8x64xf32>
    %124 = arith.mulf %122, %122 : vector<8x64xf32>
    %125 = arith.addf %121, %124 : vector<8x64xf32>
    %c240 = arith.constant 240 : index
    %c0_38 = arith.constant 0 : index
    %126 = vector.load %arg5[%c240, %c0_38] : memref<968x64xf32, #tpu.memory_space<vmem>>, vector<8x64xf32>
    %127 = arith.addf %123, %126 : vector<8x64xf32>
    %128 = arith.mulf %126, %126 : vector<8x64xf32>
    %129 = arith.addf %125, %128 : vector<8x64xf32>
    %c248 = arith.constant 248 : index
    %c0_39 = arith.constant 0 : index
    %130 = vector.load %arg5[%c248, %c0_39] : memref<968x64xf32, #tpu.memory_space<vmem>>, vector<8x64xf32>
    %131 = arith.addf %127, %130 : vector<8x64xf32>
    %132 = arith.mulf %130, %130 : vector<8x64xf32>
    %133 = arith.addf %129, %132 : vector<8x64xf32>
    %c256 = arith.constant 256 : index
    %c0_40 = arith.constant 0 : index
    %134 = vector.load %arg5[%c256, %c0_40] : memref<968x64xf32, #tpu.memory_space<vmem>>, vector<8x64xf32>
    %135 = arith.addf %131, %134 : vector<8x64xf32>
    %136 = arith.mulf %134, %134 : vector<8x64xf32>
    %137 = arith.addf %133, %136 : vector<8x64xf32>
    %c264 = arith.constant 264 : index
    %c0_41 = arith.constant 0 : index
    %138 = vector.load %arg5[%c264, %c0_41] : memref<968x64xf32, #tpu.memory_space<vmem>>, vector<8x64xf32>
    %139 = arith.addf %135, %138 : vector<8x64xf32>
    %140 = arith.mulf %138, %138 : vector<8x64xf32>
    %141 = arith.addf %137, %140 : vector<8x64xf32>
    %c272 = arith.constant 272 : index
    %c0_42 = arith.constant 0 : index
    %142 = vector.load %arg5[%c272, %c0_42] : memref<968x64xf32, #tpu.memory_space<vmem>>, vector<8x64xf32>
    %143 = arith.addf %139, %142 : vector<8x64xf32>
    %144 = arith.mulf %142, %142 : vector<8x64xf32>
    %145 = arith.addf %141, %144 : vector<8x64xf32>
    %c280 = arith.constant 280 : index
    %c0_43 = arith.constant 0 : index
    %146 = vector.load %arg5[%c280, %c0_43] : memref<968x64xf32, #tpu.memory_space<vmem>>, vector<8x64xf32>
    %147 = arith.addf %143, %146 : vector<8x64xf32>
    %148 = arith.mulf %146, %146 : vector<8x64xf32>
    %149 = arith.addf %145, %148 : vector<8x64xf32>
    %c288 = arith.constant 288 : index
    %c0_44 = arith.constant 0 : index
    %150 = vector.load %arg5[%c288, %c0_44] : memref<968x64xf32, #tpu.memory_space<vmem>>, vector<8x64xf32>
    %151 = arith.addf %147, %150 : vector<8x64xf32>
    %152 = arith.mulf %150, %150 : vector<8x64xf32>
    %153 = arith.addf %149, %152 : vector<8x64xf32>
    %c296 = arith.constant 296 : index
    %c0_45 = arith.constant 0 : index
    %154 = vector.load %arg5[%c296, %c0_45] : memref<968x64xf32, #tpu.memory_space<vmem>>, vector<8x64xf32>
    %155 = arith.addf %151, %154 : vector<8x64xf32>
    %156 = arith.mulf %154, %154 : vector<8x64xf32>
    %157 = arith.addf %153, %156 : vector<8x64xf32>
    %c304 = arith.constant 304 : index
    %c0_46 = arith.constant 0 : index
    %158 = vector.load %arg5[%c304, %c0_46] : memref<968x64xf32, #tpu.memory_space<vmem>>, vector<8x64xf32>
    %159 = arith.addf %155, %158 : vector<8x64xf32>
    %160 = arith.mulf %158, %158 : vector<8x64xf32>
    %161 = arith.addf %157, %160 : vector<8x64xf32>
    %c312 = arith.constant 312 : index
    %c0_47 = arith.constant 0 : index
    %162 = vector.load %arg5[%c312, %c0_47] : memref<968x64xf32, #tpu.memory_space<vmem>>, vector<8x64xf32>
    %163 = arith.addf %159, %162 : vector<8x64xf32>
    %164 = arith.mulf %162, %162 : vector<8x64xf32>
    %165 = arith.addf %161, %164 : vector<8x64xf32>
    %c320 = arith.constant 320 : index
    %c0_48 = arith.constant 0 : index
    %166 = vector.load %arg5[%c320, %c0_48] : memref<968x64xf32, #tpu.memory_space<vmem>>, vector<8x64xf32>
    %167 = arith.addf %163, %166 : vector<8x64xf32>
    %168 = arith.mulf %166, %166 : vector<8x64xf32>
    %169 = arith.addf %165, %168 : vector<8x64xf32>
    %c328 = arith.constant 328 : index
    %c0_49 = arith.constant 0 : index
    %170 = vector.load %arg5[%c328, %c0_49] : memref<968x64xf32, #tpu.memory_space<vmem>>, vector<8x64xf32>
    %171 = arith.addf %167, %170 : vector<8x64xf32>
    %172 = arith.mulf %170, %170 : vector<8x64xf32>
    %173 = arith.addf %169, %172 : vector<8x64xf32>
    %c336 = arith.constant 336 : index
    %c0_50 = arith.constant 0 : index
    %174 = vector.load %arg5[%c336, %c0_50] : memref<968x64xf32, #tpu.memory_space<vmem>>, vector<8x64xf32>
    %175 = arith.addf %171, %174 : vector<8x64xf32>
    %176 = arith.mulf %174, %174 : vector<8x64xf32>
    %177 = arith.addf %173, %176 : vector<8x64xf32>
    %c344 = arith.constant 344 : index
    %c0_51 = arith.constant 0 : index
    %178 = vector.load %arg5[%c344, %c0_51] : memref<968x64xf32, #tpu.memory_space<vmem>>, vector<8x64xf32>
    %179 = arith.addf %175, %178 : vector<8x64xf32>
    %180 = arith.mulf %178, %178 : vector<8x64xf32>
    %181 = arith.addf %177, %180 : vector<8x64xf32>
    %c352 = arith.constant 352 : index
    %c0_52 = arith.constant 0 : index
    %182 = vector.load %arg5[%c352, %c0_52] : memref<968x64xf32, #tpu.memory_space<vmem>>, vector<8x64xf32>
    %183 = arith.addf %179, %182 : vector<8x64xf32>
    %184 = arith.mulf %182, %182 : vector<8x64xf32>
    %185 = arith.addf %181, %184 : vector<8x64xf32>
    %c360 = arith.constant 360 : index
    %c0_53 = arith.constant 0 : index
    %186 = vector.load %arg5[%c360, %c0_53] : memref<968x64xf32, #tpu.memory_space<vmem>>, vector<8x64xf32>
    %187 = arith.addf %183, %186 : vector<8x64xf32>
    %188 = arith.mulf %186, %186 : vector<8x64xf32>
    %189 = arith.addf %185, %188 : vector<8x64xf32>
    %c368 = arith.constant 368 : index
    %c0_54 = arith.constant 0 : index
    %190 = vector.load %arg5[%c368, %c0_54] : memref<968x64xf32, #tpu.memory_space<vmem>>, vector<8x64xf32>
    %191 = arith.addf %187, %190 : vector<8x64xf32>
    %192 = arith.mulf %190, %190 : vector<8x64xf32>
    %193 = arith.addf %189, %192 : vector<8x64xf32>
    %c376 = arith.constant 376 : index
    %c0_55 = arith.constant 0 : index
    %194 = vector.load %arg5[%c376, %c0_55] : memref<968x64xf32, #tpu.memory_space<vmem>>, vector<8x64xf32>
    %195 = arith.addf %191, %194 : vector<8x64xf32>
    %196 = arith.mulf %194, %194 : vector<8x64xf32>
    %197 = arith.addf %193, %196 : vector<8x64xf32>
    %c384 = arith.constant 384 : index
    %c0_56 = arith.constant 0 : index
    %198 = vector.load %arg5[%c384, %c0_56] : memref<968x64xf32, #tpu.memory_space<vmem>>, vector<8x64xf32>
    %199 = arith.addf %195, %198 : vector<8x64xf32>
    %200 = arith.mulf %198, %198 : vector<8x64xf32>
    %201 = arith.addf %197, %200 : vector<8x64xf32>
    %c392 = arith.constant 392 : index
    %c0_57 = arith.constant 0 : index
    %202 = vector.load %arg5[%c392, %c0_57] : memref<968x64xf32, #tpu.memory_space<vmem>>, vector<8x64xf32>
    %203 = arith.addf %199, %202 : vector<8x64xf32>
    %204 = arith.mulf %202, %202 : vector<8x64xf32>
    %205 = arith.addf %201, %204 : vector<8x64xf32>
    %c400 = arith.constant 400 : index
    %c0_58 = arith.constant 0 : index
    %206 = vector.load %arg5[%c400, %c0_58] : memref<968x64xf32, #tpu.memory_space<vmem>>, vector<8x64xf32>
    %207 = arith.addf %203, %206 : vector<8x64xf32>
    %208 = arith.mulf %206, %206 : vector<8x64xf32>
    %209 = arith.addf %205, %208 : vector<8x64xf32>
    %c408 = arith.constant 408 : index
    %c0_59 = arith.constant 0 : index
    %210 = vector.load %arg5[%c408, %c0_59] : memref<968x64xf32, #tpu.memory_space<vmem>>, vector<8x64xf32>
    %211 = arith.addf %207, %210 : vector<8x64xf32>
    %212 = arith.mulf %210, %210 : vector<8x64xf32>
    %213 = arith.addf %209, %212 : vector<8x64xf32>
    %c416 = arith.constant 416 : index
    %c0_60 = arith.constant 0 : index
    %214 = vector.load %arg5[%c416, %c0_60] : memref<968x64xf32, #tpu.memory_space<vmem>>, vector<8x64xf32>
    %215 = arith.addf %211, %214 : vector<8x64xf32>
    %216 = arith.mulf %214, %214 : vector<8x64xf32>
    %217 = arith.addf %213, %216 : vector<8x64xf32>
    %c424 = arith.constant 424 : index
    %c0_61 = arith.constant 0 : index
    %218 = vector.load %arg5[%c424, %c0_61] : memref<968x64xf32, #tpu.memory_space<vmem>>, vector<8x64xf32>
    %219 = arith.addf %215, %218 : vector<8x64xf32>
    %220 = arith.mulf %218, %218 : vector<8x64xf32>
    %221 = arith.addf %217, %220 : vector<8x64xf32>
    %c432 = arith.constant 432 : index
    %c0_62 = arith.constant 0 : index
    %222 = vector.load %arg5[%c432, %c0_62] : memref<968x64xf32, #tpu.memory_space<vmem>>, vector<8x64xf32>
    %223 = arith.addf %219, %222 : vector<8x64xf32>
    %224 = arith.mulf %222, %222 : vector<8x64xf32>
    %225 = arith.addf %221, %224 : vector<8x64xf32>
    %c440 = arith.constant 440 : index
    %c0_63 = arith.constant 0 : index
    %226 = vector.load %arg5[%c440, %c0_63] : memref<968x64xf32, #tpu.memory_space<vmem>>, vector<8x64xf32>
    %227 = arith.addf %223, %226 : vector<8x64xf32>
    %228 = arith.mulf %226, %226 : vector<8x64xf32>
    %229 = arith.addf %225, %228 : vector<8x64xf32>
    %c448 = arith.constant 448 : index
    %c0_64 = arith.constant 0 : index
    %230 = vector.load %arg5[%c448, %c0_64] : memref<968x64xf32, #tpu.memory_space<vmem>>, vector<8x64xf32>
    %231 = arith.addf %227, %230 : vector<8x64xf32>
    %232 = arith.mulf %230, %230 : vector<8x64xf32>
    %233 = arith.addf %229, %232 : vector<8x64xf32>
    %c456 = arith.constant 456 : index
    %c0_65 = arith.constant 0 : index
    %234 = vector.load %arg5[%c456, %c0_65] : memref<968x64xf32, #tpu.memory_space<vmem>>, vector<8x64xf32>
    %235 = arith.addf %231, %234 : vector<8x64xf32>
    %236 = arith.mulf %234, %234 : vector<8x64xf32>
    %237 = arith.addf %233, %236 : vector<8x64xf32>
    %c464 = arith.constant 464 : index
    %c0_66 = arith.constant 0 : index
    %238 = vector.load %arg5[%c464, %c0_66] : memref<968x64xf32, #tpu.memory_space<vmem>>, vector<8x64xf32>
    %239 = arith.addf %235, %238 : vector<8x64xf32>
    %240 = arith.mulf %238, %238 : vector<8x64xf32>
    %241 = arith.addf %237, %240 : vector<8x64xf32>
    %c472 = arith.constant 472 : index
    %c0_67 = arith.constant 0 : index
    %242 = vector.load %arg5[%c472, %c0_67] : memref<968x64xf32, #tpu.memory_space<vmem>>, vector<8x64xf32>
    %243 = arith.addf %239, %242 : vector<8x64xf32>
    %244 = arith.mulf %242, %242 : vector<8x64xf32>
    %245 = arith.addf %241, %244 : vector<8x64xf32>
    %c480 = arith.constant 480 : index
    %c0_68 = arith.constant 0 : index
    %246 = vector.load %arg5[%c480, %c0_68] : memref<968x64xf32, #tpu.memory_space<vmem>>, vector<8x64xf32>
    %247 = arith.addf %243, %246 : vector<8x64xf32>
    %248 = arith.mulf %246, %246 : vector<8x64xf32>
    %249 = arith.addf %245, %248 : vector<8x64xf32>
    %c488 = arith.constant 488 : index
    %c0_69 = arith.constant 0 : index
    %250 = vector.load %arg5[%c488, %c0_69] : memref<968x64xf32, #tpu.memory_space<vmem>>, vector<8x64xf32>
    %251 = arith.addf %247, %250 : vector<8x64xf32>
    %252 = arith.mulf %250, %250 : vector<8x64xf32>
    %253 = arith.addf %249, %252 : vector<8x64xf32>
    %c496 = arith.constant 496 : index
    %c0_70 = arith.constant 0 : index
    %254 = vector.load %arg5[%c496, %c0_70] : memref<968x64xf32, #tpu.memory_space<vmem>>, vector<8x64xf32>
    %255 = arith.addf %251, %254 : vector<8x64xf32>
    %256 = arith.mulf %254, %254 : vector<8x64xf32>
    %257 = arith.addf %253, %256 : vector<8x64xf32>
    %c504 = arith.constant 504 : index
    %c0_71 = arith.constant 0 : index
    %258 = vector.load %arg5[%c504, %c0_71] : memref<968x64xf32, #tpu.memory_space<vmem>>, vector<8x64xf32>
    %259 = arith.addf %255, %258 : vector<8x64xf32>
    %260 = arith.mulf %258, %258 : vector<8x64xf32>
    %261 = arith.addf %257, %260 : vector<8x64xf32>
    %c512 = arith.constant 512 : index
    %c0_72 = arith.constant 0 : index
    %262 = vector.load %arg5[%c512, %c0_72] : memref<968x64xf32, #tpu.memory_space<vmem>>, vector<8x64xf32>
    %263 = arith.addf %259, %262 : vector<8x64xf32>
    %264 = arith.mulf %262, %262 : vector<8x64xf32>
    %265 = arith.addf %261, %264 : vector<8x64xf32>
    %c520 = arith.constant 520 : index
    %c0_73 = arith.constant 0 : index
    %266 = vector.load %arg5[%c520, %c0_73] : memref<968x64xf32, #tpu.memory_space<vmem>>, vector<8x64xf32>
    %267 = arith.addf %263, %266 : vector<8x64xf32>
    %268 = arith.mulf %266, %266 : vector<8x64xf32>
    %269 = arith.addf %265, %268 : vector<8x64xf32>
    %c528 = arith.constant 528 : index
    %c0_74 = arith.constant 0 : index
    %270 = vector.load %arg5[%c528, %c0_74] : memref<968x64xf32, #tpu.memory_space<vmem>>, vector<8x64xf32>
    %271 = arith.addf %267, %270 : vector<8x64xf32>
    %272 = arith.mulf %270, %270 : vector<8x64xf32>
    %273 = arith.addf %269, %272 : vector<8x64xf32>
    %c536 = arith.constant 536 : index
    %c0_75 = arith.constant 0 : index
    %274 = vector.load %arg5[%c536, %c0_75] : memref<968x64xf32, #tpu.memory_space<vmem>>, vector<8x64xf32>
    %275 = arith.addf %271, %274 : vector<8x64xf32>
    %276 = arith.mulf %274, %274 : vector<8x64xf32>
    %277 = arith.addf %273, %276 : vector<8x64xf32>
    %c544 = arith.constant 544 : index
    %c0_76 = arith.constant 0 : index
    %278 = vector.load %arg5[%c544, %c0_76] : memref<968x64xf32, #tpu.memory_space<vmem>>, vector<8x64xf32>
    %279 = arith.addf %275, %278 : vector<8x64xf32>
    %280 = arith.mulf %278, %278 : vector<8x64xf32>
    %281 = arith.addf %277, %280 : vector<8x64xf32>
    %c552 = arith.constant 552 : index
    %c0_77 = arith.constant 0 : index
    %282 = vector.load %arg5[%c552, %c0_77] : memref<968x64xf32, #tpu.memory_space<vmem>>, vector<8x64xf32>
    %283 = arith.addf %279, %282 : vector<8x64xf32>
    %284 = arith.mulf %282, %282 : vector<8x64xf32>
    %285 = arith.addf %281, %284 : vector<8x64xf32>
    %c560 = arith.constant 560 : index
    %c0_78 = arith.constant 0 : index
    %286 = vector.load %arg5[%c560, %c0_78] : memref<968x64xf32, #tpu.memory_space<vmem>>, vector<8x64xf32>
    %287 = arith.addf %283, %286 : vector<8x64xf32>
    %288 = arith.mulf %286, %286 : vector<8x64xf32>
    %289 = arith.addf %285, %288 : vector<8x64xf32>
    %c568 = arith.constant 568 : index
    %c0_79 = arith.constant 0 : index
    %290 = vector.load %arg5[%c568, %c0_79] : memref<968x64xf32, #tpu.memory_space<vmem>>, vector<8x64xf32>
    %291 = arith.addf %287, %290 : vector<8x64xf32>
    %292 = arith.mulf %290, %290 : vector<8x64xf32>
    %293 = arith.addf %289, %292 : vector<8x64xf32>
    %c576 = arith.constant 576 : index
    %c0_80 = arith.constant 0 : index
    %294 = vector.load %arg5[%c576, %c0_80] : memref<968x64xf32, #tpu.memory_space<vmem>>, vector<8x64xf32>
    %295 = arith.addf %291, %294 : vector<8x64xf32>
    %296 = arith.mulf %294, %294 : vector<8x64xf32>
    %297 = arith.addf %293, %296 : vector<8x64xf32>
    %c584 = arith.constant 584 : index
    %c0_81 = arith.constant 0 : index
    %298 = vector.load %arg5[%c584, %c0_81] : memref<968x64xf32, #tpu.memory_space<vmem>>, vector<8x64xf32>
    %299 = arith.addf %295, %298 : vector<8x64xf32>
    %300 = arith.mulf %298, %298 : vector<8x64xf32>
    %301 = arith.addf %297, %300 : vector<8x64xf32>
    %c592 = arith.constant 592 : index
    %c0_82 = arith.constant 0 : index
    %302 = vector.load %arg5[%c592, %c0_82] : memref<968x64xf32, #tpu.memory_space<vmem>>, vector<8x64xf32>
    %303 = arith.addf %299, %302 : vector<8x64xf32>
    %304 = arith.mulf %302, %302 : vector<8x64xf32>
    %305 = arith.addf %301, %304 : vector<8x64xf32>
    %c600 = arith.constant 600 : index
    %c0_83 = arith.constant 0 : index
    %306 = vector.load %arg5[%c600, %c0_83] : memref<968x64xf32, #tpu.memory_space<vmem>>, vector<8x64xf32>
    %307 = arith.addf %303, %306 : vector<8x64xf32>
    %308 = arith.mulf %306, %306 : vector<8x64xf32>
    %309 = arith.addf %305, %308 : vector<8x64xf32>
    %c608 = arith.constant 608 : index
    %c0_84 = arith.constant 0 : index
    %310 = vector.load %arg5[%c608, %c0_84] : memref<968x64xf32, #tpu.memory_space<vmem>>, vector<8x64xf32>
    %311 = arith.addf %307, %310 : vector<8x64xf32>
    %312 = arith.mulf %310, %310 : vector<8x64xf32>
    %313 = arith.addf %309, %312 : vector<8x64xf32>
    %c616 = arith.constant 616 : index
    %c0_85 = arith.constant 0 : index
    %314 = vector.load %arg5[%c616, %c0_85] : memref<968x64xf32, #tpu.memory_space<vmem>>, vector<8x64xf32>
    %315 = arith.addf %311, %314 : vector<8x64xf32>
    %316 = arith.mulf %314, %314 : vector<8x64xf32>
    %317 = arith.addf %313, %316 : vector<8x64xf32>
    %c624 = arith.constant 624 : index
    %c0_86 = arith.constant 0 : index
    %318 = vector.load %arg5[%c624, %c0_86] : memref<968x64xf32, #tpu.memory_space<vmem>>, vector<8x64xf32>
    %319 = arith.addf %315, %318 : vector<8x64xf32>
    %320 = arith.mulf %318, %318 : vector<8x64xf32>
    %321 = arith.addf %317, %320 : vector<8x64xf32>
    %c632 = arith.constant 632 : index
    %c0_87 = arith.constant 0 : index
    %322 = vector.load %arg5[%c632, %c0_87] : memref<968x64xf32, #tpu.memory_space<vmem>>, vector<8x64xf32>
    %323 = arith.addf %319, %322 : vector<8x64xf32>
    %324 = arith.mulf %322, %322 : vector<8x64xf32>
    %325 = arith.addf %321, %324 : vector<8x64xf32>
    %c640 = arith.constant 640 : index
    %c0_88 = arith.constant 0 : index
    %326 = vector.load %arg5[%c640, %c0_88] : memref<968x64xf32, #tpu.memory_space<vmem>>, vector<8x64xf32>
    %327 = arith.addf %323, %326 : vector<8x64xf32>
    %328 = arith.mulf %326, %326 : vector<8x64xf32>
    %329 = arith.addf %325, %328 : vector<8x64xf32>
    %c648 = arith.constant 648 : index
    %c0_89 = arith.constant 0 : index
    %330 = vector.load %arg5[%c648, %c0_89] : memref<968x64xf32, #tpu.memory_space<vmem>>, vector<8x64xf32>
    %331 = arith.addf %327, %330 : vector<8x64xf32>
    %332 = arith.mulf %330, %330 : vector<8x64xf32>
    %333 = arith.addf %329, %332 : vector<8x64xf32>
    %c656 = arith.constant 656 : index
    %c0_90 = arith.constant 0 : index
    %334 = vector.load %arg5[%c656, %c0_90] : memref<968x64xf32, #tpu.memory_space<vmem>>, vector<8x64xf32>
    %335 = arith.addf %331, %334 : vector<8x64xf32>
    %336 = arith.mulf %334, %334 : vector<8x64xf32>
    %337 = arith.addf %333, %336 : vector<8x64xf32>
    %c664 = arith.constant 664 : index
    %c0_91 = arith.constant 0 : index
    %338 = vector.load %arg5[%c664, %c0_91] : memref<968x64xf32, #tpu.memory_space<vmem>>, vector<8x64xf32>
    %339 = arith.addf %335, %338 : vector<8x64xf32>
    %340 = arith.mulf %338, %338 : vector<8x64xf32>
    %341 = arith.addf %337, %340 : vector<8x64xf32>
    %c672 = arith.constant 672 : index
    %c0_92 = arith.constant 0 : index
    %342 = vector.load %arg5[%c672, %c0_92] : memref<968x64xf32, #tpu.memory_space<vmem>>, vector<8x64xf32>
    %343 = arith.addf %339, %342 : vector<8x64xf32>
    %344 = arith.mulf %342, %342 : vector<8x64xf32>
    %345 = arith.addf %341, %344 : vector<8x64xf32>
    %c680 = arith.constant 680 : index
    %c0_93 = arith.constant 0 : index
    %346 = vector.load %arg5[%c680, %c0_93] : memref<968x64xf32, #tpu.memory_space<vmem>>, vector<8x64xf32>
    %347 = arith.addf %343, %346 : vector<8x64xf32>
    %348 = arith.mulf %346, %346 : vector<8x64xf32>
    %349 = arith.addf %345, %348 : vector<8x64xf32>
    %c688 = arith.constant 688 : index
    %c0_94 = arith.constant 0 : index
    %350 = vector.load %arg5[%c688, %c0_94] : memref<968x64xf32, #tpu.memory_space<vmem>>, vector<8x64xf32>
    %351 = arith.addf %347, %350 : vector<8x64xf32>
    %352 = arith.mulf %350, %350 : vector<8x64xf32>
    %353 = arith.addf %349, %352 : vector<8x64xf32>
    %c696 = arith.constant 696 : index
    %c0_95 = arith.constant 0 : index
    %354 = vector.load %arg5[%c696, %c0_95] : memref<968x64xf32, #tpu.memory_space<vmem>>, vector<8x64xf32>
    %355 = arith.addf %351, %354 : vector<8x64xf32>
    %356 = arith.mulf %354, %354 : vector<8x64xf32>
    %357 = arith.addf %353, %356 : vector<8x64xf32>
    %c704 = arith.constant 704 : index
    %c0_96 = arith.constant 0 : index
    %358 = vector.load %arg5[%c704, %c0_96] : memref<968x64xf32, #tpu.memory_space<vmem>>, vector<8x64xf32>
    %359 = arith.addf %355, %358 : vector<8x64xf32>
    %360 = arith.mulf %358, %358 : vector<8x64xf32>
    %361 = arith.addf %357, %360 : vector<8x64xf32>
    %c712 = arith.constant 712 : index
    %c0_97 = arith.constant 0 : index
    %362 = vector.load %arg5[%c712, %c0_97] : memref<968x64xf32, #tpu.memory_space<vmem>>, vector<8x64xf32>
    %363 = arith.addf %359, %362 : vector<8x64xf32>
    %364 = arith.mulf %362, %362 : vector<8x64xf32>
    %365 = arith.addf %361, %364 : vector<8x64xf32>
    %c720 = arith.constant 720 : index
    %c0_98 = arith.constant 0 : index
    %366 = vector.load %arg5[%c720, %c0_98] : memref<968x64xf32, #tpu.memory_space<vmem>>, vector<8x64xf32>
    %367 = arith.addf %363, %366 : vector<8x64xf32>
    %368 = arith.mulf %366, %366 : vector<8x64xf32>
    %369 = arith.addf %365, %368 : vector<8x64xf32>
    %c728 = arith.constant 728 : index
    %c0_99 = arith.constant 0 : index
    %370 = vector.load %arg5[%c728, %c0_99] : memref<968x64xf32, #tpu.memory_space<vmem>>, vector<8x64xf32>
    %371 = arith.addf %367, %370 : vector<8x64xf32>
    %372 = arith.mulf %370, %370 : vector<8x64xf32>
    %373 = arith.addf %369, %372 : vector<8x64xf32>
    %c736 = arith.constant 736 : index
    %c0_100 = arith.constant 0 : index
    %374 = vector.load %arg5[%c736, %c0_100] : memref<968x64xf32, #tpu.memory_space<vmem>>, vector<8x64xf32>
    %375 = arith.addf %371, %374 : vector<8x64xf32>
    %376 = arith.mulf %374, %374 : vector<8x64xf32>
    %377 = arith.addf %373, %376 : vector<8x64xf32>
    %c744 = arith.constant 744 : index
    %c0_101 = arith.constant 0 : index
    %378 = vector.load %arg5[%c744, %c0_101] : memref<968x64xf32, #tpu.memory_space<vmem>>, vector<8x64xf32>
    %379 = arith.addf %375, %378 : vector<8x64xf32>
    %380 = arith.mulf %378, %378 : vector<8x64xf32>
    %381 = arith.addf %377, %380 : vector<8x64xf32>
    %c752 = arith.constant 752 : index
    %c0_102 = arith.constant 0 : index
    %382 = vector.load %arg5[%c752, %c0_102] : memref<968x64xf32, #tpu.memory_space<vmem>>, vector<8x64xf32>
    %383 = arith.addf %379, %382 : vector<8x64xf32>
    %384 = arith.mulf %382, %382 : vector<8x64xf32>
    %385 = arith.addf %381, %384 : vector<8x64xf32>
    %c760 = arith.constant 760 : index
    %c0_103 = arith.constant 0 : index
    %386 = vector.load %arg5[%c760, %c0_103] : memref<968x64xf32, #tpu.memory_space<vmem>>, vector<8x64xf32>
    %387 = arith.addf %383, %386 : vector<8x64xf32>
    %388 = arith.mulf %386, %386 : vector<8x64xf32>
    %389 = arith.addf %385, %388 : vector<8x64xf32>
    %c768 = arith.constant 768 : index
    %c0_104 = arith.constant 0 : index
    %390 = vector.load %arg5[%c768, %c0_104] : memref<968x64xf32, #tpu.memory_space<vmem>>, vector<8x64xf32>
    %391 = arith.addf %387, %390 : vector<8x64xf32>
    %392 = arith.mulf %390, %390 : vector<8x64xf32>
    %393 = arith.addf %389, %392 : vector<8x64xf32>
    %c776 = arith.constant 776 : index
    %c0_105 = arith.constant 0 : index
    %394 = vector.load %arg5[%c776, %c0_105] : memref<968x64xf32, #tpu.memory_space<vmem>>, vector<8x64xf32>
    %395 = arith.addf %391, %394 : vector<8x64xf32>
    %396 = arith.mulf %394, %394 : vector<8x64xf32>
    %397 = arith.addf %393, %396 : vector<8x64xf32>
    %c784 = arith.constant 784 : index
    %c0_106 = arith.constant 0 : index
    %398 = vector.load %arg5[%c784, %c0_106] : memref<968x64xf32, #tpu.memory_space<vmem>>, vector<8x64xf32>
    %399 = arith.addf %395, %398 : vector<8x64xf32>
    %400 = arith.mulf %398, %398 : vector<8x64xf32>
    %401 = arith.addf %397, %400 : vector<8x64xf32>
    %c792 = arith.constant 792 : index
    %c0_107 = arith.constant 0 : index
    %402 = vector.load %arg5[%c792, %c0_107] : memref<968x64xf32, #tpu.memory_space<vmem>>, vector<8x64xf32>
    %403 = arith.addf %399, %402 : vector<8x64xf32>
    %404 = arith.mulf %402, %402 : vector<8x64xf32>
    %405 = arith.addf %401, %404 : vector<8x64xf32>
    %c800 = arith.constant 800 : index
    %c0_108 = arith.constant 0 : index
    %406 = vector.load %arg5[%c800, %c0_108] : memref<968x64xf32, #tpu.memory_space<vmem>>, vector<8x64xf32>
    %407 = arith.addf %403, %406 : vector<8x64xf32>
    %408 = arith.mulf %406, %406 : vector<8x64xf32>
    %409 = arith.addf %405, %408 : vector<8x64xf32>
    %c808 = arith.constant 808 : index
    %c0_109 = arith.constant 0 : index
    %410 = vector.load %arg5[%c808, %c0_109] : memref<968x64xf32, #tpu.memory_space<vmem>>, vector<8x64xf32>
    %411 = arith.addf %407, %410 : vector<8x64xf32>
    %412 = arith.mulf %410, %410 : vector<8x64xf32>
    %413 = arith.addf %409, %412 : vector<8x64xf32>
    %c816 = arith.constant 816 : index
    %c0_110 = arith.constant 0 : index
    %414 = vector.load %arg5[%c816, %c0_110] : memref<968x64xf32, #tpu.memory_space<vmem>>, vector<8x64xf32>
    %415 = arith.addf %411, %414 : vector<8x64xf32>
    %416 = arith.mulf %414, %414 : vector<8x64xf32>
    %417 = arith.addf %413, %416 : vector<8x64xf32>
    %c824 = arith.constant 824 : index
    %c0_111 = arith.constant 0 : index
    %418 = vector.load %arg5[%c824, %c0_111] : memref<968x64xf32, #tpu.memory_space<vmem>>, vector<8x64xf32>
    %419 = arith.addf %415, %418 : vector<8x64xf32>
    %420 = arith.mulf %418, %418 : vector<8x64xf32>
    %421 = arith.addf %417, %420 : vector<8x64xf32>
    %c832 = arith.constant 832 : index
    %c0_112 = arith.constant 0 : index
    %422 = vector.load %arg5[%c832, %c0_112] : memref<968x64xf32, #tpu.memory_space<vmem>>, vector<8x64xf32>
    %423 = arith.addf %419, %422 : vector<8x64xf32>
    %424 = arith.mulf %422, %422 : vector<8x64xf32>
    %425 = arith.addf %421, %424 : vector<8x64xf32>
    %c840 = arith.constant 840 : index
    %c0_113 = arith.constant 0 : index
    %426 = vector.load %arg5[%c840, %c0_113] : memref<968x64xf32, #tpu.memory_space<vmem>>, vector<8x64xf32>
    %427 = arith.addf %423, %426 : vector<8x64xf32>
    %428 = arith.mulf %426, %426 : vector<8x64xf32>
    %429 = arith.addf %425, %428 : vector<8x64xf32>
    %c848 = arith.constant 848 : index
    %c0_114 = arith.constant 0 : index
    %430 = vector.load %arg5[%c848, %c0_114] : memref<968x64xf32, #tpu.memory_space<vmem>>, vector<8x64xf32>
    %431 = arith.addf %427, %430 : vector<8x64xf32>
    %432 = arith.mulf %430, %430 : vector<8x64xf32>
    %433 = arith.addf %429, %432 : vector<8x64xf32>
    %c856 = arith.constant 856 : index
    %c0_115 = arith.constant 0 : index
    %434 = vector.load %arg5[%c856, %c0_115] : memref<968x64xf32, #tpu.memory_space<vmem>>, vector<8x64xf32>
    %435 = arith.addf %431, %434 : vector<8x64xf32>
    %436 = arith.mulf %434, %434 : vector<8x64xf32>
    %437 = arith.addf %433, %436 : vector<8x64xf32>
    %c864 = arith.constant 864 : index
    %c0_116 = arith.constant 0 : index
    %438 = vector.load %arg5[%c864, %c0_116] : memref<968x64xf32, #tpu.memory_space<vmem>>, vector<8x64xf32>
    %439 = arith.addf %435, %438 : vector<8x64xf32>
    %440 = arith.mulf %438, %438 : vector<8x64xf32>
    %441 = arith.addf %437, %440 : vector<8x64xf32>
    %c872 = arith.constant 872 : index
    %c0_117 = arith.constant 0 : index
    %442 = vector.load %arg5[%c872, %c0_117] : memref<968x64xf32, #tpu.memory_space<vmem>>, vector<8x64xf32>
    %443 = arith.addf %439, %442 : vector<8x64xf32>
    %444 = arith.mulf %442, %442 : vector<8x64xf32>
    %445 = arith.addf %441, %444 : vector<8x64xf32>
    %c880 = arith.constant 880 : index
    %c0_118 = arith.constant 0 : index
    %446 = vector.load %arg5[%c880, %c0_118] : memref<968x64xf32, #tpu.memory_space<vmem>>, vector<8x64xf32>
    %447 = arith.addf %443, %446 : vector<8x64xf32>
    %448 = arith.mulf %446, %446 : vector<8x64xf32>
    %449 = arith.addf %445, %448 : vector<8x64xf32>
    %c888 = arith.constant 888 : index
    %c0_119 = arith.constant 0 : index
    %450 = vector.load %arg5[%c888, %c0_119] : memref<968x64xf32, #tpu.memory_space<vmem>>, vector<8x64xf32>
    %451 = arith.addf %447, %450 : vector<8x64xf32>
    %452 = arith.mulf %450, %450 : vector<8x64xf32>
    %453 = arith.addf %449, %452 : vector<8x64xf32>
    %c896 = arith.constant 896 : index
    %c0_120 = arith.constant 0 : index
    %454 = vector.load %arg5[%c896, %c0_120] : memref<968x64xf32, #tpu.memory_space<vmem>>, vector<8x64xf32>
    %455 = arith.addf %451, %454 : vector<8x64xf32>
    %456 = arith.mulf %454, %454 : vector<8x64xf32>
    %457 = arith.addf %453, %456 : vector<8x64xf32>
    %c904 = arith.constant 904 : index
    %c0_121 = arith.constant 0 : index
    %458 = vector.load %arg5[%c904, %c0_121] : memref<968x64xf32, #tpu.memory_space<vmem>>, vector<8x64xf32>
    %459 = arith.addf %455, %458 : vector<8x64xf32>
    %460 = arith.mulf %458, %458 : vector<8x64xf32>
    %461 = arith.addf %457, %460 : vector<8x64xf32>
    %c912 = arith.constant 912 : index
    %c0_122 = arith.constant 0 : index
    %462 = vector.load %arg5[%c912, %c0_122] : memref<968x64xf32, #tpu.memory_space<vmem>>, vector<8x64xf32>
    %463 = arith.addf %459, %462 : vector<8x64xf32>
    %464 = arith.mulf %462, %462 : vector<8x64xf32>
    %465 = arith.addf %461, %464 : vector<8x64xf32>
    %c920 = arith.constant 920 : index
    %c0_123 = arith.constant 0 : index
    %466 = vector.load %arg5[%c920, %c0_123] : memref<968x64xf32, #tpu.memory_space<vmem>>, vector<8x64xf32>
    %467 = arith.addf %463, %466 : vector<8x64xf32>
    %468 = arith.mulf %466, %466 : vector<8x64xf32>
    %469 = arith.addf %465, %468 : vector<8x64xf32>
    %c928 = arith.constant 928 : index
    %c0_124 = arith.constant 0 : index
    %470 = vector.load %arg5[%c928, %c0_124] : memref<968x64xf32, #tpu.memory_space<vmem>>, vector<8x64xf32>
    %471 = arith.addf %467, %470 : vector<8x64xf32>
    %472 = arith.mulf %470, %470 : vector<8x64xf32>
    %473 = arith.addf %469, %472 : vector<8x64xf32>
    %c936 = arith.constant 936 : index
    %c0_125 = arith.constant 0 : index
    %474 = vector.load %arg5[%c936, %c0_125] : memref<968x64xf32, #tpu.memory_space<vmem>>, vector<8x64xf32>
    %475 = arith.addf %471, %474 : vector<8x64xf32>
    %476 = arith.mulf %474, %474 : vector<8x64xf32>
    %477 = arith.addf %473, %476 : vector<8x64xf32>
    %c944 = arith.constant 944 : index
    %c0_126 = arith.constant 0 : index
    %478 = vector.load %arg5[%c944, %c0_126] : memref<968x64xf32, #tpu.memory_space<vmem>>, vector<8x64xf32>
    %479 = arith.addf %475, %478 : vector<8x64xf32>
    %480 = arith.mulf %478, %478 : vector<8x64xf32>
    %481 = arith.addf %477, %480 : vector<8x64xf32>
    %c952 = arith.constant 952 : index
    %c0_127 = arith.constant 0 : index
    %482 = vector.load %arg5[%c952, %c0_127] : memref<968x64xf32, #tpu.memory_space<vmem>>, vector<8x64xf32>
    %483 = arith.addf %479, %482 : vector<8x64xf32>
    %484 = arith.mulf %482, %482 : vector<8x64xf32>
    %485 = arith.addf %481, %484 : vector<8x64xf32>
    %c960 = arith.constant 960 : index
    %c0_128 = arith.constant 0 : index
    %486 = vector.load %arg5[%c960, %c0_128] : memref<968x64xf32, #tpu.memory_space<vmem>>, vector<8x64xf32>
    %487 = arith.addf %483, %486 : vector<8x64xf32>
    %488 = arith.mulf %486, %486 : vector<8x64xf32>
    %489 = arith.addf %485, %488 : vector<8x64xf32>
    %cst_129 = arith.constant dense<0.000000e+00> : vector<64xf32>
    %490 = vector.multi_reduction <add>, %487, %cst_129 [0] : vector<8x64xf32> to vector<64xf32>
    %491 = vector.shape_cast %490 : vector<64xf32> to vector<1x64xf32>
    %cst_130 = arith.constant 0.00103305781 : f32
    %492 = vector.broadcast %cst_130 : f32 to vector<1x64xf32>
    %493 = arith.mulf %491, %492 : vector<1x64xf32>
    %cst_131 = arith.constant dense<0.000000e+00> : vector<64xf32>
    %494 = vector.multi_reduction <add>, %489, %cst_131 [0] : vector<8x64xf32> to vector<64xf32>
    %495 = vector.shape_cast %494 : vector<64xf32> to vector<1x64xf32>
    %cst_132 = arith.constant 0.00103305781 : f32
    %496 = vector.broadcast %cst_132 : f32 to vector<1x64xf32>
    %497 = arith.mulf %495, %496 : vector<1x64xf32>
    %498 = arith.mulf %493, %493 : vector<1x64xf32>
    %499 = arith.subf %497, %498 : vector<1x64xf32>
    %c0_133 = arith.constant 0 : index
    %c0_134 = arith.constant 0 : index
    %500 = vector.load %arg2[%c0_133, %c0_134] : memref<1x640xf32, #tpu.memory_space<vmem>>, vector<1x64xf32>
    %c0_135 = arith.constant 0 : index
    %c64_136 = arith.constant 64 : index
    %501 = vector.load %arg2[%c0_135, %c64_136] : memref<1x640xf32, #tpu.memory_space<vmem>>, vector<1x64xf32>
    %cst_137 = arith.constant 9.99999974E-6 : f32
    %502 = vector.broadcast %cst_137 : f32 to vector<1x64xf32>
    %503 = arith.addf %499, %502 : vector<1x64xf32>
    %504 = math.rsqrt %503 : vector<1x64xf32>
    %505 = arith.mulf %500, %504 : vector<1x64xf32>
    %506 = arith.mulf %493, %505 : vector<1x64xf32>
    %507 = arith.subf %501, %506 : vector<1x64xf32>
    %508 = vector.shape_cast %505 : vector<1x64xf32> to vector<1x64xf32>
    %509 = vector.broadcast %508 : vector<1x64xf32> to vector<8x64xf32>
    %510 = vector.shape_cast %507 : vector<1x64xf32> to vector<1x64xf32>
    %511 = vector.broadcast %510 : vector<1x64xf32> to vector<8x64xf32>
    %cst_138 = arith.constant 0.000000e+00 : bf16
    %512 = vector.broadcast %cst_138 : bf16 to vector<8x64xbf16>
    %c0_139 = arith.constant 0 : index
    %c7744 = arith.constant 7744 : index
    %513 = vector.load %arg6[%c0_139, %c7744] : memref<8x7808xbf16, #tpu.memory_space<vmem>>, vector<8x64xbf16>
    tpu.vector_store %arg6[%c0_139, %c7744], %512 {strides = array<i32>} : memref<8x7808xbf16, #tpu.memory_space<vmem>>, vector<8x64xbf16>,
    %c0_140 = arith.constant 0 : index
    %c0_141 = arith.constant 0 : index
    %514 = vector.load %arg5[%c0_140, %c0_141] : memref<968x64xf32, #tpu.memory_space<vmem>>, vector<8x64xf32>
    %515 = arith.mulf %514, %509 : vector<8x64xf32>
    %516 = arith.addf %515, %511 : vector<8x64xf32>
    %cst_142 = arith.constant 0.000000e+00 : f32
    %517 = vector.broadcast %cst_142 : f32 to vector<8x64xf32>
    %518 = arith.cmpf ogt, %516, %517 : vector<8x64xf32>
    %cst_143 = arith.constant 2.000000e-01 : f32
    %519 = vector.broadcast %cst_143 : f32 to vector<8x64xf32>
    %520 = arith.mulf %519, %516 : vector<8x64xf32>
    %521 = arith.select %518, %516, %520 : vector<8x64xi1>, vector<8x64xf32>
    %522 = arith.truncf %521 : vector<8x64xf32> to vector<8x64xbf16>
    %c0_144 = arith.constant 0 : index
    %c0_145 = arith.constant 0 : index
    %523 = vector.load %arg6[%c0_144, %c0_145] : memref<8x7808xbf16, #tpu.memory_space<vmem>>, vector<8x64xbf16>
    tpu.vector_store %arg6[%c0_144, %c0_145], %522 {strides = array<i32>} : memref<8x7808xbf16, #tpu.memory_space<vmem>>, vector<8x64xbf16>,
    %c8_146 = arith.constant 8 : index
    %c0_147 = arith.constant 0 : index
    %524 = vector.load %arg5[%c8_146, %c0_147] : memref<968x64xf32, #tpu.memory_space<vmem>>, vector<8x64xf32>
    %525 = arith.mulf %524, %509 : vector<8x64xf32>
    %526 = arith.addf %525, %511 : vector<8x64xf32>
    %cst_148 = arith.constant 0.000000e+00 : f32
    %527 = vector.broadcast %cst_148 : f32 to vector<8x64xf32>
    %528 = arith.cmpf ogt, %526, %527 : vector<8x64xf32>
    %cst_149 = arith.constant 2.000000e-01 : f32
    %529 = vector.broadcast %cst_149 : f32 to vector<8x64xf32>
    %530 = arith.mulf %529, %526 : vector<8x64xf32>
    %531 = arith.select %528, %526, %530 : vector<8x64xi1>, vector<8x64xf32>
    %532 = arith.truncf %531 : vector<8x64xf32> to vector<8x64xbf16>
    %c0_150 = arith.constant 0 : index
    %c64_151 = arith.constant 64 : index
    %533 = vector.load %arg6[%c0_150, %c64_151] : memref<8x7808xbf16, #tpu.memory_space<vmem>>, vector<8x64xbf16>
    tpu.vector_store %arg6[%c0_150, %c64_151], %532 {strides = array<i32>} : memref<8x7808xbf16, #tpu.memory_space<vmem>>, vector<8x64xbf16>,
    %c16_152 = arith.constant 16 : index
    %c0_153 = arith.constant 0 : index
    %534 = vector.load %arg5[%c16_152, %c0_153] : memref<968x64xf32, #tpu.memory_space<vmem>>, vector<8x64xf32>
    %535 = arith.mulf %534, %509 : vector<8x64xf32>
    %536 = arith.addf %535, %511 : vector<8x64xf32>
    %cst_154 = arith.constant 0.000000e+00 : f32
    %537 = vector.broadcast %cst_154 : f32 to vector<8x64xf32>
    %538 = arith.cmpf ogt, %536, %537 : vector<8x64xf32>
    %cst_155 = arith.constant 2.000000e-01 : f32
    %539 = vector.broadcast %cst_155 : f32 to vector<8x64xf32>
    %540 = arith.mulf %539, %536 : vector<8x64xf32>
    %541 = arith.select %538, %536, %540 : vector<8x64xi1>, vector<8x64xf32>
    %542 = arith.truncf %541 : vector<8x64xf32> to vector<8x64xbf16>
    %c0_156 = arith.constant 0 : index
    %c128_157 = arith.constant 128 : index
    %543 = vector.load %arg6[%c0_156, %c128_157] : memref<8x7808xbf16, #tpu.memory_space<vmem>>, vector<8x64xbf16>
    tpu.vector_store %arg6[%c0_156, %c128_157], %542 {strides = array<i32>} : memref<8x7808xbf16, #tpu.memory_space<vmem>>, vector<8x64xbf16>,
    %c24_158 = arith.constant 24 : index
    %c0_159 = arith.constant 0 : index
    %544 = vector.load %arg5[%c24_158, %c0_159] : memref<968x64xf32, #tpu.memory_space<vmem>>, vector<8x64xf32>
    %545 = arith.mulf %544, %509 : vector<8x64xf32>
    %546 = arith.addf %545, %511 : vector<8x64xf32>
    %cst_160 = arith.constant 0.000000e+00 : f32
    %547 = vector.broadcast %cst_160 : f32 to vector<8x64xf32>
    %548 = arith.cmpf ogt, %546, %547 : vector<8x64xf32>
    %cst_161 = arith.constant 2.000000e-01 : f32
    %549 = vector.broadcast %cst_161 : f32 to vector<8x64xf32>
    %550 = arith.mulf %549, %546 : vector<8x64xf32>
    %551 = arith.select %548, %546, %550 : vector<8x64xi1>, vector<8x64xf32>
    %552 = arith.truncf %551 : vector<8x64xf32> to vector<8x64xbf16>
    %c0_162 = arith.constant 0 : index
    %c192_163 = arith.constant 192 : index
    %553 = vector.load %arg6[%c0_162, %c192_163] : memref<8x7808xbf16, #tpu.memory_space<vmem>>, vector<8x64xbf16>
    tpu.vector_store %arg6[%c0_162, %c192_163], %552 {strides = array<i32>} : memref<8x7808xbf16, #tpu.memory_space<vmem>>, vector<8x64xbf16>,
    %c32_164 = arith.constant 32 : index
    %c0_165 = arith.constant 0 : index
    %554 = vector.load %arg5[%c32_164, %c0_165] : memref<968x64xf32, #tpu.memory_space<vmem>>, vector<8x64xf32>
    %555 = arith.mulf %554, %509 : vector<8x64xf32>
    %556 = arith.addf %555, %511 : vector<8x64xf32>
    %cst_166 = arith.constant 0.000000e+00 : f32
    %557 = vector.broadcast %cst_166 : f32 to vector<8x64xf32>
    %558 = arith.cmpf ogt, %556, %557 : vector<8x64xf32>
    %cst_167 = arith.constant 2.000000e-01 : f32
    %559 = vector.broadcast %cst_167 : f32 to vector<8x64xf32>
    %560 = arith.mulf %559, %556 : vector<8x64xf32>
    %561 = arith.select %558, %556, %560 : vector<8x64xi1>, vector<8x64xf32>
    %562 = arith.truncf %561 : vector<8x64xf32> to vector<8x64xbf16>
    %c0_168 = arith.constant 0 : index
    %c256_169 = arith.constant 256 : index
    %563 = vector.load %arg6[%c0_168, %c256_169] : memref<8x7808xbf16, #tpu.memory_space<vmem>>, vector<8x64xbf16>
    tpu.vector_store %arg6[%c0_168, %c256_169], %562 {strides = array<i32>} : memref<8x7808xbf16, #tpu.memory_space<vmem>>, vector<8x64xbf16>,
    %c40_170 = arith.constant 40 : index
    %c0_171 = arith.constant 0 : index
    %564 = vector.load %arg5[%c40_170, %c0_171] : memref<968x64xf32, #tpu.memory_space<vmem>>, vector<8x64xf32>
    %565 = arith.mulf %564, %509 : vector<8x64xf32>
    %566 = arith.addf %565, %511 : vector<8x64xf32>
    %cst_172 = arith.constant 0.000000e+00 : f32
    %567 = vector.broadcast %cst_172 : f32 to vector<8x64xf32>
    %568 = arith.cmpf ogt, %566, %567 : vector<8x64xf32>
    %cst_173 = arith.constant 2.000000e-01 : f32
    %569 = vector.broadcast %cst_173 : f32 to vector<8x64xf32>
    %570 = arith.mulf %569, %566 : vector<8x64xf32>
    %571 = arith.select %568, %566, %570 : vector<8x64xi1>, vector<8x64xf32>
    %572 = arith.truncf %571 : vector<8x64xf32> to vector<8x64xbf16>
    %c0_174 = arith.constant 0 : index
    %c320_175 = arith.constant 320 : index
    %573 = vector.load %arg6[%c0_174, %c320_175] : memref<8x7808xbf16, #tpu.memory_space<vmem>>, vector<8x64xbf16>
    tpu.vector_store %arg6[%c0_174, %c320_175], %572 {strides = array<i32>} : memref<8x7808xbf16, #tpu.memory_space<vmem>>, vector<8x64xbf16>,
    %c48_176 = arith.constant 48 : index
    %c0_177 = arith.constant 0 : index
    %574 = vector.load %arg5[%c48_176, %c0_177] : memref<968x64xf32, #tpu.memory_space<vmem>>, vector<8x64xf32>
    %575 = arith.mulf %574, %509 : vector<8x64xf32>
    %576 = arith.addf %575, %511 : vector<8x64xf32>
    %cst_178 = arith.constant 0.000000e+00 : f32
    %577 = vector.broadcast %cst_178 : f32 to vector<8x64xf32>
    %578 = arith.cmpf ogt, %576, %577 : vector<8x64xf32>
    %cst_179 = arith.constant 2.000000e-01 : f32
    %579 = vector.broadcast %cst_179 : f32 to vector<8x64xf32>
    %580 = arith.mulf %579, %576 : vector<8x64xf32>
    %581 = arith.select %578, %576, %580 : vector<8x64xi1>, vector<8x64xf32>
    %582 = arith.truncf %581 : vector<8x64xf32> to vector<8x64xbf16>
    %c0_180 = arith.constant 0 : index
    %c384_181 = arith.constant 384 : index
    %583 = vector.load %arg6[%c0_180, %c384_181] : memref<8x7808xbf16, #tpu.memory_space<vmem>>, vector<8x64xbf16>
    tpu.vector_store %arg6[%c0_180, %c384_181], %582 {strides = array<i32>} : memref<8x7808xbf16, #tpu.memory_space<vmem>>, vector<8x64xbf16>,
    %c56_182 = arith.constant 56 : index
    %c0_183 = arith.constant 0 : index
    %584 = vector.load %arg5[%c56_182, %c0_183] : memref<968x64xf32, #tpu.memory_space<vmem>>, vector<8x64xf32>
    %585 = arith.mulf %584, %509 : vector<8x64xf32>
    %586 = arith.addf %585, %511 : vector<8x64xf32>
    %cst_184 = arith.constant 0.000000e+00 : f32
    %587 = vector.broadcast %cst_184 : f32 to vector<8x64xf32>
    %588 = arith.cmpf ogt, %586, %587 : vector<8x64xf32>
    %cst_185 = arith.constant 2.000000e-01 : f32
    %589 = vector.broadcast %cst_185 : f32 to vector<8x64xf32>
    %590 = arith.mulf %589, %586 : vector<8x64xf32>
    %591 = arith.select %588, %586, %590 : vector<8x64xi1>, vector<8x64xf32>
    %592 = arith.truncf %591 : vector<8x64xf32> to vector<8x64xbf16>
    %c0_186 = arith.constant 0 : index
    %c448_187 = arith.constant 448 : index
    %593 = vector.load %arg6[%c0_186, %c448_187] : memref<8x7808xbf16, #tpu.memory_space<vmem>>, vector<8x64xbf16>
    tpu.vector_store %arg6[%c0_186, %c448_187], %592 {strides = array<i32>} : memref<8x7808xbf16, #tpu.memory_space<vmem>>, vector<8x64xbf16>,
    %c64_188 = arith.constant 64 : index
    %c0_189 = arith.constant 0 : index
    %594 = vector.load %arg5[%c64_188, %c0_189] : memref<968x64xf32, #tpu.memory_space<vmem>>, vector<8x64xf32>
    %595 = arith.mulf %594, %509 : vector<8x64xf32>
    %596 = arith.addf %595, %511 : vector<8x64xf32>
    %cst_190 = arith.constant 0.000000e+00 : f32
    %597 = vector.broadcast %cst_190 : f32 to vector<8x64xf32>
    %598 = arith.cmpf ogt, %596, %597 : vector<8x64xf32>
    %cst_191 = arith.constant 2.000000e-01 : f32
    %599 = vector.broadcast %cst_191 : f32 to vector<8x64xf32>
    %600 = arith.mulf %599, %596 : vector<8x64xf32>
    %601 = arith.select %598, %596, %600 : vector<8x64xi1>, vector<8x64xf32>
    %602 = arith.truncf %601 : vector<8x64xf32> to vector<8x64xbf16>
    %c0_192 = arith.constant 0 : index
    %c512_193 = arith.constant 512 : index
    %603 = vector.load %arg6[%c0_192, %c512_193] : memref<8x7808xbf16, #tpu.memory_space<vmem>>, vector<8x64xbf16>
    tpu.vector_store %arg6[%c0_192, %c512_193], %602 {strides = array<i32>} : memref<8x7808xbf16, #tpu.memory_space<vmem>>, vector<8x64xbf16>,
    %c72_194 = arith.constant 72 : index
    %c0_195 = arith.constant 0 : index
    %604 = vector.load %arg5[%c72_194, %c0_195] : memref<968x64xf32, #tpu.memory_space<vmem>>, vector<8x64xf32>
    %605 = arith.mulf %604, %509 : vector<8x64xf32>
    %606 = arith.addf %605, %511 : vector<8x64xf32>
    %cst_196 = arith.constant 0.000000e+00 : f32
    %607 = vector.broadcast %cst_196 : f32 to vector<8x64xf32>
    %608 = arith.cmpf ogt, %606, %607 : vector<8x64xf32>
    %cst_197 = arith.constant 2.000000e-01 : f32
    %609 = vector.broadcast %cst_197 : f32 to vector<8x64xf32>
    %610 = arith.mulf %609, %606 : vector<8x64xf32>
    %611 = arith.select %608, %606, %610 : vector<8x64xi1>, vector<8x64xf32>
    %612 = arith.truncf %611 : vector<8x64xf32> to vector<8x64xbf16>
    %c0_198 = arith.constant 0 : index
    %c576_199 = arith.constant 576 : index
    %613 = vector.load %arg6[%c0_198, %c576_199] : memref<8x7808xbf16, #tpu.memory_space<vmem>>, vector<8x64xbf16>
    tpu.vector_store %arg6[%c0_198, %c576_199], %612 {strides = array<i32>} : memref<8x7808xbf16, #tpu.memory_space<vmem>>, vector<8x64xbf16>,
    %c80_200 = arith.constant 80 : index
    %c0_201 = arith.constant 0 : index
    %614 = vector.load %arg5[%c80_200, %c0_201] : memref<968x64xf32, #tpu.memory_space<vmem>>, vector<8x64xf32>
    %615 = arith.mulf %614, %509 : vector<8x64xf32>
    %616 = arith.addf %615, %511 : vector<8x64xf32>
    %cst_202 = arith.constant 0.000000e+00 : f32
    %617 = vector.broadcast %cst_202 : f32 to vector<8x64xf32>
    %618 = arith.cmpf ogt, %616, %617 : vector<8x64xf32>
    %cst_203 = arith.constant 2.000000e-01 : f32
    %619 = vector.broadcast %cst_203 : f32 to vector<8x64xf32>
    %620 = arith.mulf %619, %616 : vector<8x64xf32>
    %621 = arith.select %618, %616, %620 : vector<8x64xi1>, vector<8x64xf32>
    %622 = arith.truncf %621 : vector<8x64xf32> to vector<8x64xbf16>
    %c0_204 = arith.constant 0 : index
    %c640_205 = arith.constant 640 : index
    %623 = vector.load %arg6[%c0_204, %c640_205] : memref<8x7808xbf16, #tpu.memory_space<vmem>>, vector<8x64xbf16>
    tpu.vector_store %arg6[%c0_204, %c640_205], %622 {strides = array<i32>} : memref<8x7808xbf16, #tpu.memory_space<vmem>>, vector<8x64xbf16>,
    %c88_206 = arith.constant 88 : index
    %c0_207 = arith.constant 0 : index
    %624 = vector.load %arg5[%c88_206, %c0_207] : memref<968x64xf32, #tpu.memory_space<vmem>>, vector<8x64xf32>
    %625 = arith.mulf %624, %509 : vector<8x64xf32>
    %626 = arith.addf %625, %511 : vector<8x64xf32>
    %cst_208 = arith.constant 0.000000e+00 : f32
    %627 = vector.broadcast %cst_208 : f32 to vector<8x64xf32>
    %628 = arith.cmpf ogt, %626, %627 : vector<8x64xf32>
    %cst_209 = arith.constant 2.000000e-01 : f32
    %629 = vector.broadcast %cst_209 : f32 to vector<8x64xf32>
    %630 = arith.mulf %629, %626 : vector<8x64xf32>
    %631 = arith.select %628, %626, %630 : vector<8x64xi1>, vector<8x64xf32>
    %632 = arith.truncf %631 : vector<8x64xf32> to vector<8x64xbf16>
    %c0_210 = arith.constant 0 : index
    %c704_211 = arith.constant 704 : index
    %633 = vector.load %arg6[%c0_210, %c704_211] : memref<8x7808xbf16, #tpu.memory_space<vmem>>, vector<8x64xbf16>
    tpu.vector_store %arg6[%c0_210, %c704_211], %632 {strides = array<i32>} : memref<8x7808xbf16, #tpu.memory_space<vmem>>, vector<8x64xbf16>,
    %c96_212 = arith.constant 96 : index
    %c0_213 = arith.constant 0 : index
    %634 = vector.load %arg5[%c96_212, %c0_213] : memref<968x64xf32, #tpu.memory_space<vmem>>, vector<8x64xf32>
    %635 = arith.mulf %634, %509 : vector<8x64xf32>
    %636 = arith.addf %635, %511 : vector<8x64xf32>
    %cst_214 = arith.constant 0.000000e+00 : f32
    %637 = vector.broadcast %cst_214 : f32 to vector<8x64xf32>
    %638 = arith.cmpf ogt, %636, %637 : vector<8x64xf32>
    %cst_215 = arith.constant 2.000000e-01 : f32
    %639 = vector.broadcast %cst_215 : f32 to vector<8x64xf32>
    %640 = arith.mulf %639, %636 : vector<8x64xf32>
    %641 = arith.select %638, %636, %640 : vector<8x64xi1>, vector<8x64xf32>
    %642 = arith.truncf %641 : vector<8x64xf32> to vector<8x64xbf16>
    %c0_216 = arith.constant 0 : index
    %c768_217 = arith.constant 768 : index
    %643 = vector.load %arg6[%c0_216, %c768_217] : memref<8x7808xbf16, #tpu.memory_space<vmem>>, vector<8x64xbf16>
    tpu.vector_store %arg6[%c0_216, %c768_217], %642 {strides = array<i32>} : memref<8x7808xbf16, #tpu.memory_space<vmem>>, vector<8x64xbf16>,
    %c104_218 = arith.constant 104 : index
    %c0_219 = arith.constant 0 : index
    %644 = vector.load %arg5[%c104_218, %c0_219] : memref<968x64xf32, #tpu.memory_space<vmem>>, vector<8x64xf32>
    %645 = arith.mulf %644, %509 : vector<8x64xf32>
    %646 = arith.addf %645, %511 : vector<8x64xf32>
    %cst_220 = arith.constant 0.000000e+00 : f32
    %647 = vector.broadcast %cst_220 : f32 to vector<8x64xf32>
    %648 = arith.cmpf ogt, %646, %647 : vector<8x64xf32>
    %cst_221 = arith.constant 2.000000e-01 : f32
    %649 = vector.broadcast %cst_221 : f32 to vector<8x64xf32>
    %650 = arith.mulf %649, %646 : vector<8x64xf32>
    %651 = arith.select %648, %646, %650 : vector<8x64xi1>, vector<8x64xf32>
    %652 = arith.truncf %651 : vector<8x64xf32> to vector<8x64xbf16>
    %c0_222 = arith.constant 0 : index
    %c832_223 = arith.constant 832 : index
    %653 = vector.load %arg6[%c0_222, %c832_223] : memref<8x7808xbf16, #tpu.memory_space<vmem>>, vector<8x64xbf16>
    tpu.vector_store %arg6[%c0_222, %c832_223], %652 {strides = array<i32>} : memref<8x7808xbf16, #tpu.memory_space<vmem>>, vector<8x64xbf16>,
    %c112_224 = arith.constant 112 : index
    %c0_225 = arith.constant 0 : index
    %654 = vector.load %arg5[%c112_224, %c0_225] : memref<968x64xf32, #tpu.memory_space<vmem>>, vector<8x64xf32>
    %655 = arith.mulf %654, %509 : vector<8x64xf32>
    %656 = arith.addf %655, %511 : vector<8x64xf32>
    %cst_226 = arith.constant 0.000000e+00 : f32
    %657 = vector.broadcast %cst_226 : f32 to vector<8x64xf32>
    %658 = arith.cmpf ogt, %656, %657 : vector<8x64xf32>
    %cst_227 = arith.constant 2.000000e-01 : f32
    %659 = vector.broadcast %cst_227 : f32 to vector<8x64xf32>
    %660 = arith.mulf %659, %656 : vector<8x64xf32>
    %661 = arith.select %658, %656, %660 : vector<8x64xi1>, vector<8x64xf32>
    %662 = arith.truncf %661 : vector<8x64xf32> to vector<8x64xbf16>
    %c0_228 = arith.constant 0 : index
    %c896_229 = arith.constant 896 : index
    %663 = vector.load %arg6[%c0_228, %c896_229] : memref<8x7808xbf16, #tpu.memory_space<vmem>>, vector<8x64xbf16>
    tpu.vector_store %arg6[%c0_228, %c896_229], %662 {strides = array<i32>} : memref<8x7808xbf16, #tpu.memory_space<vmem>>, vector<8x64xbf16>,
    %c120_230 = arith.constant 120 : index
    %c0_231 = arith.constant 0 : index
    %664 = vector.load %arg5[%c120_230, %c0_231] : memref<968x64xf32, #tpu.memory_space<vmem>>, vector<8x64xf32>
    %665 = arith.mulf %664, %509 : vector<8x64xf32>
    %666 = arith.addf %665, %511 : vector<8x64xf32>
    %cst_232 = arith.constant 0.000000e+00 : f32
    %667 = vector.broadcast %cst_232 : f32 to vector<8x64xf32>
    %668 = arith.cmpf ogt, %666, %667 : vector<8x64xf32>
    %cst_233 = arith.constant 2.000000e-01 : f32
    %669 = vector.broadcast %cst_233 : f32 to vector<8x64xf32>
    %670 = arith.mulf %669, %666 : vector<8x64xf32>
    %671 = arith.select %668, %666, %670 : vector<8x64xi1>, vector<8x64xf32>
    %672 = arith.truncf %671 : vector<8x64xf32> to vector<8x64xbf16>
    %c0_234 = arith.constant 0 : index
    %c960_235 = arith.constant 960 : index
    %673 = vector.load %arg6[%c0_234, %c960_235] : memref<8x7808xbf16, #tpu.memory_space<vmem>>, vector<8x64xbf16>
    tpu.vector_store %arg6[%c0_234, %c960_235], %672 {strides = array<i32>} : memref<8x7808xbf16, #tpu.memory_space<vmem>>, vector<8x64xbf16>,
    %c128_236 = arith.constant 128 : index
    %c0_237 = arith.constant 0 : index
    %674 = vector.load %arg5[%c128_236, %c0_237] : memref<968x64xf32, #tpu.memory_space<vmem>>, vector<8x64xf32>
    %675 = arith.mulf %674, %509 : vector<8x64xf32>
    %676 = arith.addf %675, %511 : vector<8x64xf32>
    %cst_238 = arith.constant 0.000000e+00 : f32
    %677 = vector.broadcast %cst_238 : f32 to vector<8x64xf32>
    %678 = arith.cmpf ogt, %676, %677 : vector<8x64xf32>
    %cst_239 = arith.constant 2.000000e-01 : f32
    %679 = vector.broadcast %cst_239 : f32 to vector<8x64xf32>
    %680 = arith.mulf %679, %676 : vector<8x64xf32>
    %681 = arith.select %678, %676, %680 : vector<8x64xi1>, vector<8x64xf32>
    %682 = arith.truncf %681 : vector<8x64xf32> to vector<8x64xbf16>
    %c0_240 = arith.constant 0 : index
    %c1024 = arith.constant 1024 : index
    %683 = vector.load %arg6[%c0_240, %c1024] : memref<8x7808xbf16, #tpu.memory_space<vmem>>, vector<8x64xbf16>
    tpu.vector_store %arg6[%c0_240, %c1024], %682 {strides = array<i32>} : memref<8x7808xbf16, #tpu.memory_space<vmem>>, vector<8x64xbf16>,
    %c136_241 = arith.constant 136 : index
    %c0_242 = arith.constant 0 : index
    %684 = vector.load %arg5[%c136_241, %c0_242] : memref<968x64xf32, #tpu.memory_space<vmem>>, vector<8x64xf32>
    %685 = arith.mulf %684, %509 : vector<8x64xf32>
    %686 = arith.addf %685, %511 : vector<8x64xf32>
    %cst_243 = arith.constant 0.000000e+00 : f32
    %687 = vector.broadcast %cst_243 : f32 to vector<8x64xf32>
    %688 = arith.cmpf ogt, %686, %687 : vector<8x64xf32>
    %cst_244 = arith.constant 2.000000e-01 : f32
    %689 = vector.broadcast %cst_244 : f32 to vector<8x64xf32>
    %690 = arith.mulf %689, %686 : vector<8x64xf32>
    %691 = arith.select %688, %686, %690 : vector<8x64xi1>, vector<8x64xf32>
    %692 = arith.truncf %691 : vector<8x64xf32> to vector<8x64xbf16>
    %c0_245 = arith.constant 0 : index
    %c1088 = arith.constant 1088 : index
    %693 = vector.load %arg6[%c0_245, %c1088] : memref<8x7808xbf16, #tpu.memory_space<vmem>>, vector<8x64xbf16>
    tpu.vector_store %arg6[%c0_245, %c1088], %692 {strides = array<i32>} : memref<8x7808xbf16, #tpu.memory_space<vmem>>, vector<8x64xbf16>,
    %c144_246 = arith.constant 144 : index
    %c0_247 = arith.constant 0 : index
    %694 = vector.load %arg5[%c144_246, %c0_247] : memref<968x64xf32, #tpu.memory_space<vmem>>, vector<8x64xf32>
    %695 = arith.mulf %694, %509 : vector<8x64xf32>
    %696 = arith.addf %695, %511 : vector<8x64xf32>
    %cst_248 = arith.constant 0.000000e+00 : f32
    %697 = vector.broadcast %cst_248 : f32 to vector<8x64xf32>
    %698 = arith.cmpf ogt, %696, %697 : vector<8x64xf32>
    %cst_249 = arith.constant 2.000000e-01 : f32
    %699 = vector.broadcast %cst_249 : f32 to vector<8x64xf32>
    %700 = arith.mulf %699, %696 : vector<8x64xf32>
    %701 = arith.select %698, %696, %700 : vector<8x64xi1>, vector<8x64xf32>
    %702 = arith.truncf %701 : vector<8x64xf32> to vector<8x64xbf16>
    %c0_250 = arith.constant 0 : index
    %c1152 = arith.constant 1152 : index
    %703 = vector.load %arg6[%c0_250, %c1152] : memref<8x7808xbf16, #tpu.memory_space<vmem>>, vector<8x64xbf16>
    tpu.vector_store %arg6[%c0_250, %c1152], %702 {strides = array<i32>} : memref<8x7808xbf16, #tpu.memory_space<vmem>>, vector<8x64xbf16>,
    %c152_251 = arith.constant 152 : index
    %c0_252 = arith.constant 0 : index
    %704 = vector.load %arg5[%c152_251, %c0_252] : memref<968x64xf32, #tpu.memory_space<vmem>>, vector<8x64xf32>
    %705 = arith.mulf %704, %509 : vector<8x64xf32>
    %706 = arith.addf %705, %511 : vector<8x64xf32>
    %cst_253 = arith.constant 0.000000e+00 : f32
    %707 = vector.broadcast %cst_253 : f32 to vector<8x64xf32>
    %708 = arith.cmpf ogt, %706, %707 : vector<8x64xf32>
    %cst_254 = arith.constant 2.000000e-01 : f32
    %709 = vector.broadcast %cst_254 : f32 to vector<8x64xf32>
    %710 = arith.mulf %709, %706 : vector<8x64xf32>
    %711 = arith.select %708, %706, %710 : vector<8x64xi1>, vector<8x64xf32>
    %712 = arith.truncf %711 : vector<8x64xf32> to vector<8x64xbf16>
    %c0_255 = arith.constant 0 : index
    %c1216 = arith.constant 1216 : index
    %713 = vector.load %arg6[%c0_255, %c1216] : memref<8x7808xbf16, #tpu.memory_space<vmem>>, vector<8x64xbf16>
    tpu.vector_store %arg6[%c0_255, %c1216], %712 {strides = array<i32>} : memref<8x7808xbf16, #tpu.memory_space<vmem>>, vector<8x64xbf16>,
    %c160_256 = arith.constant 160 : index
    %c0_257 = arith.constant 0 : index
    %714 = vector.load %arg5[%c160_256, %c0_257] : memref<968x64xf32, #tpu.memory_space<vmem>>, vector<8x64xf32>
    %715 = arith.mulf %714, %509 : vector<8x64xf32>
    %716 = arith.addf %715, %511 : vector<8x64xf32>
    %cst_258 = arith.constant 0.000000e+00 : f32
    %717 = vector.broadcast %cst_258 : f32 to vector<8x64xf32>
    %718 = arith.cmpf ogt, %716, %717 : vector<8x64xf32>
    %cst_259 = arith.constant 2.000000e-01 : f32
    %719 = vector.broadcast %cst_259 : f32 to vector<8x64xf32>
    %720 = arith.mulf %719, %716 : vector<8x64xf32>
    %721 = arith.select %718, %716, %720 : vector<8x64xi1>, vector<8x64xf32>
    %722 = arith.truncf %721 : vector<8x64xf32> to vector<8x64xbf16>
    %c0_260 = arith.constant 0 : index
    %c1280 = arith.constant 1280 : index
    %723 = vector.load %arg6[%c0_260, %c1280] : memref<8x7808xbf16, #tpu.memory_space<vmem>>, vector<8x64xbf16>
    tpu.vector_store %arg6[%c0_260, %c1280], %722 {strides = array<i32>} : memref<8x7808xbf16, #tpu.memory_space<vmem>>, vector<8x64xbf16>,
    %c168_261 = arith.constant 168 : index
    %c0_262 = arith.constant 0 : index
    %724 = vector.load %arg5[%c168_261, %c0_262] : memref<968x64xf32, #tpu.memory_space<vmem>>, vector<8x64xf32>
    %725 = arith.mulf %724, %509 : vector<8x64xf32>
    %726 = arith.addf %725, %511 : vector<8x64xf32>
    %cst_263 = arith.constant 0.000000e+00 : f32
    %727 = vector.broadcast %cst_263 : f32 to vector<8x64xf32>
    %728 = arith.cmpf ogt, %726, %727 : vector<8x64xf32>
    %cst_264 = arith.constant 2.000000e-01 : f32
    %729 = vector.broadcast %cst_264 : f32 to vector<8x64xf32>
    %730 = arith.mulf %729, %726 : vector<8x64xf32>
    %731 = arith.select %728, %726, %730 : vector<8x64xi1>, vector<8x64xf32>
    %732 = arith.truncf %731 : vector<8x64xf32> to vector<8x64xbf16>
    %c0_265 = arith.constant 0 : index
    %c1344 = arith.constant 1344 : index
    %733 = vector.load %arg6[%c0_265, %c1344] : memref<8x7808xbf16, #tpu.memory_space<vmem>>, vector<8x64xbf16>
    tpu.vector_store %arg6[%c0_265, %c1344], %732 {strides = array<i32>} : memref<8x7808xbf16, #tpu.memory_space<vmem>>, vector<8x64xbf16>,
    %c176_266 = arith.constant 176 : index
    %c0_267 = arith.constant 0 : index
    %734 = vector.load %arg5[%c176_266, %c0_267] : memref<968x64xf32, #tpu.memory_space<vmem>>, vector<8x64xf32>
    %735 = arith.mulf %734, %509 : vector<8x64xf32>
    %736 = arith.addf %735, %511 : vector<8x64xf32>
    %cst_268 = arith.constant 0.000000e+00 : f32
    %737 = vector.broadcast %cst_268 : f32 to vector<8x64xf32>
    %738 = arith.cmpf ogt, %736, %737 : vector<8x64xf32>
    %cst_269 = arith.constant 2.000000e-01 : f32
    %739 = vector.broadcast %cst_269 : f32 to vector<8x64xf32>
    %740 = arith.mulf %739, %736 : vector<8x64xf32>
    %741 = arith.select %738, %736, %740 : vector<8x64xi1>, vector<8x64xf32>
    %742 = arith.truncf %741 : vector<8x64xf32> to vector<8x64xbf16>
    %c0_270 = arith.constant 0 : index
    %c1408 = arith.constant 1408 : index
    %743 = vector.load %arg6[%c0_270, %c1408] : memref<8x7808xbf16, #tpu.memory_space<vmem>>, vector<8x64xbf16>
    tpu.vector_store %arg6[%c0_270, %c1408], %742 {strides = array<i32>} : memref<8x7808xbf16, #tpu.memory_space<vmem>>, vector<8x64xbf16>,
    %c184_271 = arith.constant 184 : index
    %c0_272 = arith.constant 0 : index
    %744 = vector.load %arg5[%c184_271, %c0_272] : memref<968x64xf32, #tpu.memory_space<vmem>>, vector<8x64xf32>
    %745 = arith.mulf %744, %509 : vector<8x64xf32>
    %746 = arith.addf %745, %511 : vector<8x64xf32>
    %cst_273 = arith.constant 0.000000e+00 : f32
    %747 = vector.broadcast %cst_273 : f32 to vector<8x64xf32>
    %748 = arith.cmpf ogt, %746, %747 : vector<8x64xf32>
    %cst_274 = arith.constant 2.000000e-01 : f32
    %749 = vector.broadcast %cst_274 : f32 to vector<8x64xf32>
    %750 = arith.mulf %749, %746 : vector<8x64xf32>
    %751 = arith.select %748, %746, %750 : vector<8x64xi1>, vector<8x64xf32>
    %752 = arith.truncf %751 : vector<8x64xf32> to vector<8x64xbf16>
    %c0_275 = arith.constant 0 : index
    %c1472 = arith.constant 1472 : index
    %753 = vector.load %arg6[%c0_275, %c1472] : memref<8x7808xbf16, #tpu.memory_space<vmem>>, vector<8x64xbf16>
    tpu.vector_store %arg6[%c0_275, %c1472], %752 {strides = array<i32>} : memref<8x7808xbf16, #tpu.memory_space<vmem>>, vector<8x64xbf16>,
    %c192_276 = arith.constant 192 : index
    %c0_277 = arith.constant 0 : index
    %754 = vector.load %arg5[%c192_276, %c0_277] : memref<968x64xf32, #tpu.memory_space<vmem>>, vector<8x64xf32>
    %755 = arith.mulf %754, %509 : vector<8x64xf32>
    %756 = arith.addf %755, %511 : vector<8x64xf32>
    %cst_278 = arith.constant 0.000000e+00 : f32
    %757 = vector.broadcast %cst_278 : f32 to vector<8x64xf32>
    %758 = arith.cmpf ogt, %756, %757 : vector<8x64xf32>
    %cst_279 = arith.constant 2.000000e-01 : f32
    %759 = vector.broadcast %cst_279 : f32 to vector<8x64xf32>
    %760 = arith.mulf %759, %756 : vector<8x64xf32>
    %761 = arith.select %758, %756, %760 : vector<8x64xi1>, vector<8x64xf32>
    %762 = arith.truncf %761 : vector<8x64xf32> to vector<8x64xbf16>
    %c0_280 = arith.constant 0 : index
    %c1536 = arith.constant 1536 : index
    %763 = vector.load %arg6[%c0_280, %c1536] : memref<8x7808xbf16, #tpu.memory_space<vmem>>, vector<8x64xbf16>
    tpu.vector_store %arg6[%c0_280, %c1536], %762 {strides = array<i32>} : memref<8x7808xbf16, #tpu.memory_space<vmem>>, vector<8x64xbf16>,
    %c200_281 = arith.constant 200 : index
    %c0_282 = arith.constant 0 : index
    %764 = vector.load %arg5[%c200_281, %c0_282] : memref<968x64xf32, #tpu.memory_space<vmem>>, vector<8x64xf32>
    %765 = arith.mulf %764, %509 : vector<8x64xf32>
    %766 = arith.addf %765, %511 : vector<8x64xf32>
    %cst_283 = arith.constant 0.000000e+00 : f32
    %767 = vector.broadcast %cst_283 : f32 to vector<8x64xf32>
    %768 = arith.cmpf ogt, %766, %767 : vector<8x64xf32>
    %cst_284 = arith.constant 2.000000e-01 : f32
    %769 = vector.broadcast %cst_284 : f32 to vector<8x64xf32>
    %770 = arith.mulf %769, %766 : vector<8x64xf32>
    %771 = arith.select %768, %766, %770 : vector<8x64xi1>, vector<8x64xf32>
    %772 = arith.truncf %771 : vector<8x64xf32> to vector<8x64xbf16>
    %c0_285 = arith.constant 0 : index
    %c1600 = arith.constant 1600 : index
    %773 = vector.load %arg6[%c0_285, %c1600] : memref<8x7808xbf16, #tpu.memory_space<vmem>>, vector<8x64xbf16>
    tpu.vector_store %arg6[%c0_285, %c1600], %772 {strides = array<i32>} : memref<8x7808xbf16, #tpu.memory_space<vmem>>, vector<8x64xbf16>,
    %c208_286 = arith.constant 208 : index
    %c0_287 = arith.constant 0 : index
    %774 = vector.load %arg5[%c208_286, %c0_287] : memref<968x64xf32, #tpu.memory_space<vmem>>, vector<8x64xf32>
    %775 = arith.mulf %774, %509 : vector<8x64xf32>
    %776 = arith.addf %775, %511 : vector<8x64xf32>
    %cst_288 = arith.constant 0.000000e+00 : f32
    %777 = vector.broadcast %cst_288 : f32 to vector<8x64xf32>
    %778 = arith.cmpf ogt, %776, %777 : vector<8x64xf32>
    %cst_289 = arith.constant 2.000000e-01 : f32
    %779 = vector.broadcast %cst_289 : f32 to vector<8x64xf32>
    %780 = arith.mulf %779, %776 : vector<8x64xf32>
    %781 = arith.select %778, %776, %780 : vector<8x64xi1>, vector<8x64xf32>
    %782 = arith.truncf %781 : vector<8x64xf32> to vector<8x64xbf16>
    %c0_290 = arith.constant 0 : index
    %c1664 = arith.constant 1664 : index
    %783 = vector.load %arg6[%c0_290, %c1664] : memref<8x7808xbf16, #tpu.memory_space<vmem>>, vector<8x64xbf16>
    tpu.vector_store %arg6[%c0_290, %c1664], %782 {strides = array<i32>} : memref<8x7808xbf16, #tpu.memory_space<vmem>>, vector<8x64xbf16>,
    %c216_291 = arith.constant 216 : index
    %c0_292 = arith.constant 0 : index
    %784 = vector.load %arg5[%c216_291, %c0_292] : memref<968x64xf32, #tpu.memory_space<vmem>>, vector<8x64xf32>
    %785 = arith.mulf %784, %509 : vector<8x64xf32>
    %786 = arith.addf %785, %511 : vector<8x64xf32>
    %cst_293 = arith.constant 0.000000e+00 : f32
    %787 = vector.broadcast %cst_293 : f32 to vector<8x64xf32>
    %788 = arith.cmpf ogt, %786, %787 : vector<8x64xf32>
    %cst_294 = arith.constant 2.000000e-01 : f32
    %789 = vector.broadcast %cst_294 : f32 to vector<8x64xf32>
    %790 = arith.mulf %789, %786 : vector<8x64xf32>
    %791 = arith.select %788, %786, %790 : vector<8x64xi1>, vector<8x64xf32>
    %792 = arith.truncf %791 : vector<8x64xf32> to vector<8x64xbf16>
    %c0_295 = arith.constant 0 : index
    %c1728 = arith.constant 1728 : index
    %793 = vector.load %arg6[%c0_295, %c1728] : memref<8x7808xbf16, #tpu.memory_space<vmem>>, vector<8x64xbf16>
    tpu.vector_store %arg6[%c0_295, %c1728], %792 {strides = array<i32>} : memref<8x7808xbf16, #tpu.memory_space<vmem>>, vector<8x64xbf16>,
    %c224_296 = arith.constant 224 : index
    %c0_297 = arith.constant 0 : index
    %794 = vector.load %arg5[%c224_296, %c0_297] : memref<968x64xf32, #tpu.memory_space<vmem>>, vector<8x64xf32>
    %795 = arith.mulf %794, %509 : vector<8x64xf32>
    %796 = arith.addf %795, %511 : vector<8x64xf32>
    %cst_298 = arith.constant 0.000000e+00 : f32
    %797 = vector.broadcast %cst_298 : f32 to vector<8x64xf32>
    %798 = arith.cmpf ogt, %796, %797 : vector<8x64xf32>
    %cst_299 = arith.constant 2.000000e-01 : f32
    %799 = vector.broadcast %cst_299 : f32 to vector<8x64xf32>
    %800 = arith.mulf %799, %796 : vector<8x64xf32>
    %801 = arith.select %798, %796, %800 : vector<8x64xi1>, vector<8x64xf32>
    %802 = arith.truncf %801 : vector<8x64xf32> to vector<8x64xbf16>
    %c0_300 = arith.constant 0 : index
    %c1792 = arith.constant 1792 : index
    %803 = vector.load %arg6[%c0_300, %c1792] : memref<8x7808xbf16, #tpu.memory_space<vmem>>, vector<8x64xbf16>
    tpu.vector_store %arg6[%c0_300, %c1792], %802 {strides = array<i32>} : memref<8x7808xbf16, #tpu.memory_space<vmem>>, vector<8x64xbf16>,
    %c232_301 = arith.constant 232 : index
    %c0_302 = arith.constant 0 : index
    %804 = vector.load %arg5[%c232_301, %c0_302] : memref<968x64xf32, #tpu.memory_space<vmem>>, vector<8x64xf32>
    %805 = arith.mulf %804, %509 : vector<8x64xf32>
    %806 = arith.addf %805, %511 : vector<8x64xf32>
    %cst_303 = arith.constant 0.000000e+00 : f32
    %807 = vector.broadcast %cst_303 : f32 to vector<8x64xf32>
    %808 = arith.cmpf ogt, %806, %807 : vector<8x64xf32>
    %cst_304 = arith.constant 2.000000e-01 : f32
    %809 = vector.broadcast %cst_304 : f32 to vector<8x64xf32>
    %810 = arith.mulf %809, %806 : vector<8x64xf32>
    %811 = arith.select %808, %806, %810 : vector<8x64xi1>, vector<8x64xf32>
    %812 = arith.truncf %811 : vector<8x64xf32> to vector<8x64xbf16>
    %c0_305 = arith.constant 0 : index
    %c1856 = arith.constant 1856 : index
    %813 = vector.load %arg6[%c0_305, %c1856] : memref<8x7808xbf16, #tpu.memory_space<vmem>>, vector<8x64xbf16>
    tpu.vector_store %arg6[%c0_305, %c1856], %812 {strides = array<i32>} : memref<8x7808xbf16, #tpu.memory_space<vmem>>, vector<8x64xbf16>,
    %c240_306 = arith.constant 240 : index
    %c0_307 = arith.constant 0 : index
    %814 = vector.load %arg5[%c240_306, %c0_307] : memref<968x64xf32, #tpu.memory_space<vmem>>, vector<8x64xf32>
    %815 = arith.mulf %814, %509 : vector<8x64xf32>
    %816 = arith.addf %815, %511 : vector<8x64xf32>
    %cst_308 = arith.constant 0.000000e+00 : f32
    %817 = vector.broadcast %cst_308 : f32 to vector<8x64xf32>
    %818 = arith.cmpf ogt, %816, %817 : vector<8x64xf32>
    %cst_309 = arith.constant 2.000000e-01 : f32
    %819 = vector.broadcast %cst_309 : f32 to vector<8x64xf32>
    %820 = arith.mulf %819, %816 : vector<8x64xf32>
    %821 = arith.select %818, %816, %820 : vector<8x64xi1>, vector<8x64xf32>
    %822 = arith.truncf %821 : vector<8x64xf32> to vector<8x64xbf16>
    %c0_310 = arith.constant 0 : index
    %c1920 = arith.constant 1920 : index
    %823 = vector.load %arg6[%c0_310, %c1920] : memref<8x7808xbf16, #tpu.memory_space<vmem>>, vector<8x64xbf16>
    tpu.vector_store %arg6[%c0_310, %c1920], %822 {strides = array<i32>} : memref<8x7808xbf16, #tpu.memory_space<vmem>>, vector<8x64xbf16>,
    %c248_311 = arith.constant 248 : index
    %c0_312 = arith.constant 0 : index
    %824 = vector.load %arg5[%c248_311, %c0_312] : memref<968x64xf32, #tpu.memory_space<vmem>>, vector<8x64xf32>
    %825 = arith.mulf %824, %509 : vector<8x64xf32>
    %826 = arith.addf %825, %511 : vector<8x64xf32>
    %cst_313 = arith.constant 0.000000e+00 : f32
    %827 = vector.broadcast %cst_313 : f32 to vector<8x64xf32>
    %828 = arith.cmpf ogt, %826, %827 : vector<8x64xf32>
    %cst_314 = arith.constant 2.000000e-01 : f32
    %829 = vector.broadcast %cst_314 : f32 to vector<8x64xf32>
    %830 = arith.mulf %829, %826 : vector<8x64xf32>
    %831 = arith.select %828, %826, %830 : vector<8x64xi1>, vector<8x64xf32>
    %832 = arith.truncf %831 : vector<8x64xf32> to vector<8x64xbf16>
    %c0_315 = arith.constant 0 : index
    %c1984 = arith.constant 1984 : index
    %833 = vector.load %arg6[%c0_315, %c1984] : memref<8x7808xbf16, #tpu.memory_space<vmem>>, vector<8x64xbf16>
    tpu.vector_store %arg6[%c0_315, %c1984], %832 {strides = array<i32>} : memref<8x7808xbf16, #tpu.memory_space<vmem>>, vector<8x64xbf16>,
    %c256_316 = arith.constant 256 : index
    %c0_317 = arith.constant 0 : index
    %834 = vector.load %arg5[%c256_316, %c0_317] : memref<968x64xf32, #tpu.memory_space<vmem>>, vector<8x64xf32>
    %835 = arith.mulf %834, %509 : vector<8x64xf32>
    %836 = arith.addf %835, %511 : vector<8x64xf32>
    %cst_318 = arith.constant 0.000000e+00 : f32
    %837 = vector.broadcast %cst_318 : f32 to vector<8x64xf32>
    %838 = arith.cmpf ogt, %836, %837 : vector<8x64xf32>
    %cst_319 = arith.constant 2.000000e-01 : f32
    %839 = vector.broadcast %cst_319 : f32 to vector<8x64xf32>
    %840 = arith.mulf %839, %836 : vector<8x64xf32>
    %841 = arith.select %838, %836, %840 : vector<8x64xi1>, vector<8x64xf32>
    %842 = arith.truncf %841 : vector<8x64xf32> to vector<8x64xbf16>
    %c0_320 = arith.constant 0 : index
    %c2048 = arith.constant 2048 : index
    %843 = vector.load %arg6[%c0_320, %c2048] : memref<8x7808xbf16, #tpu.memory_space<vmem>>, vector<8x64xbf16>
    tpu.vector_store %arg6[%c0_320, %c2048], %842 {strides = array<i32>} : memref<8x7808xbf16, #tpu.memory_space<vmem>>, vector<8x64xbf16>,
    %c264_321 = arith.constant 264 : index
    %c0_322 = arith.constant 0 : index
    %844 = vector.load %arg5[%c264_321, %c0_322] : memref<968x64xf32, #tpu.memory_space<vmem>>, vector<8x64xf32>
    %845 = arith.mulf %844, %509 : vector<8x64xf32>
    %846 = arith.addf %845, %511 : vector<8x64xf32>
    %cst_323 = arith.constant 0.000000e+00 : f32
    %847 = vector.broadcast %cst_323 : f32 to vector<8x64xf32>
    %848 = arith.cmpf ogt, %846, %847 : vector<8x64xf32>
    %cst_324 = arith.constant 2.000000e-01 : f32
    %849 = vector.broadcast %cst_324 : f32 to vector<8x64xf32>
    %850 = arith.mulf %849, %846 : vector<8x64xf32>
    %851 = arith.select %848, %846, %850 : vector<8x64xi1>, vector<8x64xf32>
    %852 = arith.truncf %851 : vector<8x64xf32> to vector<8x64xbf16>
    %c0_325 = arith.constant 0 : index
    %c2112 = arith.constant 2112 : index
    %853 = vector.load %arg6[%c0_325, %c2112] : memref<8x7808xbf16, #tpu.memory_space<vmem>>, vector<8x64xbf16>
    tpu.vector_store %arg6[%c0_325, %c2112], %852 {strides = array<i32>} : memref<8x7808xbf16, #tpu.memory_space<vmem>>, vector<8x64xbf16>,
    %c272_326 = arith.constant 272 : index
    %c0_327 = arith.constant 0 : index
    %854 = vector.load %arg5[%c272_326, %c0_327] : memref<968x64xf32, #tpu.memory_space<vmem>>, vector<8x64xf32>
    %855 = arith.mulf %854, %509 : vector<8x64xf32>
    %856 = arith.addf %855, %511 : vector<8x64xf32>
    %cst_328 = arith.constant 0.000000e+00 : f32
    %857 = vector.broadcast %cst_328 : f32 to vector<8x64xf32>
    %858 = arith.cmpf ogt, %856, %857 : vector<8x64xf32>
    %cst_329 = arith.constant 2.000000e-01 : f32
    %859 = vector.broadcast %cst_329 : f32 to vector<8x64xf32>
    %860 = arith.mulf %859, %856 : vector<8x64xf32>
    %861 = arith.select %858, %856, %860 : vector<8x64xi1>, vector<8x64xf32>
    %862 = arith.truncf %861 : vector<8x64xf32> to vector<8x64xbf16>
    %c0_330 = arith.constant 0 : index
    %c2176 = arith.constant 2176 : index
    %863 = vector.load %arg6[%c0_330, %c2176] : memref<8x7808xbf16, #tpu.memory_space<vmem>>, vector<8x64xbf16>
    tpu.vector_store %arg6[%c0_330, %c2176], %862 {strides = array<i32>} : memref<8x7808xbf16, #tpu.memory_space<vmem>>, vector<8x64xbf16>,
    %c280_331 = arith.constant 280 : index
    %c0_332 = arith.constant 0 : index
    %864 = vector.load %arg5[%c280_331, %c0_332] : memref<968x64xf32, #tpu.memory_space<vmem>>, vector<8x64xf32>
    %865 = arith.mulf %864, %509 : vector<8x64xf32>
    %866 = arith.addf %865, %511 : vector<8x64xf32>
    %cst_333 = arith.constant 0.000000e+00 : f32
    %867 = vector.broadcast %cst_333 : f32 to vector<8x64xf32>
    %868 = arith.cmpf ogt, %866, %867 : vector<8x64xf32>
    %cst_334 = arith.constant 2.000000e-01 : f32
    %869 = vector.broadcast %cst_334 : f32 to vector<8x64xf32>
    %870 = arith.mulf %869, %866 : vector<8x64xf32>
    %871 = arith.select %868, %866, %870 : vector<8x64xi1>, vector<8x64xf32>
    %872 = arith.truncf %871 : vector<8x64xf32> to vector<8x64xbf16>
    %c0_335 = arith.constant 0 : index
    %c2240 = arith.constant 2240 : index
    %873 = vector.load %arg6[%c0_335, %c2240] : memref<8x7808xbf16, #tpu.memory_space<vmem>>, vector<8x64xbf16>
    tpu.vector_store %arg6[%c0_335, %c2240], %872 {strides = array<i32>} : memref<8x7808xbf16, #tpu.memory_space<vmem>>, vector<8x64xbf16>,
    %c288_336 = arith.constant 288 : index
    %c0_337 = arith.constant 0 : index
    %874 = vector.load %arg5[%c288_336, %c0_337] : memref<968x64xf32, #tpu.memory_space<vmem>>, vector<8x64xf32>
    %875 = arith.mulf %874, %509 : vector<8x64xf32>
    %876 = arith.addf %875, %511 : vector<8x64xf32>
    %cst_338 = arith.constant 0.000000e+00 : f32
    %877 = vector.broadcast %cst_338 : f32 to vector<8x64xf32>
    %878 = arith.cmpf ogt, %876, %877 : vector<8x64xf32>
    %cst_339 = arith.constant 2.000000e-01 : f32
    %879 = vector.broadcast %cst_339 : f32 to vector<8x64xf32>
    %880 = arith.mulf %879, %876 : vector<8x64xf32>
    %881 = arith.select %878, %876, %880 : vector<8x64xi1>, vector<8x64xf32>
    %882 = arith.truncf %881 : vector<8x64xf32> to vector<8x64xbf16>
    %c0_340 = arith.constant 0 : index
    %c2304 = arith.constant 2304 : index
    %883 = vector.load %arg6[%c0_340, %c2304] : memref<8x7808xbf16, #tpu.memory_space<vmem>>, vector<8x64xbf16>
    tpu.vector_store %arg6[%c0_340, %c2304], %882 {strides = array<i32>} : memref<8x7808xbf16, #tpu.memory_space<vmem>>, vector<8x64xbf16>,
    %c296_341 = arith.constant 296 : index
    %c0_342 = arith.constant 0 : index
    %884 = vector.load %arg5[%c296_341, %c0_342] : memref<968x64xf32, #tpu.memory_space<vmem>>, vector<8x64xf32>
    %885 = arith.mulf %884, %509 : vector<8x64xf32>
    %886 = arith.addf %885, %511 : vector<8x64xf32>
    %cst_343 = arith.constant 0.000000e+00 : f32
    %887 = vector.broadcast %cst_343 : f32 to vector<8x64xf32>
    %888 = arith.cmpf ogt, %886, %887 : vector<8x64xf32>
    %cst_344 = arith.constant 2.000000e-01 : f32
    %889 = vector.broadcast %cst_344 : f32 to vector<8x64xf32>
    %890 = arith.mulf %889, %886 : vector<8x64xf32>
    %891 = arith.select %888, %886, %890 : vector<8x64xi1>, vector<8x64xf32>
    %892 = arith.truncf %891 : vector<8x64xf32> to vector<8x64xbf16>
    %c0_345 = arith.constant 0 : index
    %c2368 = arith.constant 2368 : index
    %893 = vector.load %arg6[%c0_345, %c2368] : memref<8x7808xbf16, #tpu.memory_space<vmem>>, vector<8x64xbf16>
    tpu.vector_store %arg6[%c0_345, %c2368], %892 {strides = array<i32>} : memref<8x7808xbf16, #tpu.memory_space<vmem>>, vector<8x64xbf16>,
    %c304_346 = arith.constant 304 : index
    %c0_347 = arith.constant 0 : index
    %894 = vector.load %arg5[%c304_346, %c0_347] : memref<968x64xf32, #tpu.memory_space<vmem>>, vector<8x64xf32>
    %895 = arith.mulf %894, %509 : vector<8x64xf32>
    %896 = arith.addf %895, %511 : vector<8x64xf32>
    %cst_348 = arith.constant 0.000000e+00 : f32
    %897 = vector.broadcast %cst_348 : f32 to vector<8x64xf32>
    %898 = arith.cmpf ogt, %896, %897 : vector<8x64xf32>
    %cst_349 = arith.constant 2.000000e-01 : f32
    %899 = vector.broadcast %cst_349 : f32 to vector<8x64xf32>
    %900 = arith.mulf %899, %896 : vector<8x64xf32>
    %901 = arith.select %898, %896, %900 : vector<8x64xi1>, vector<8x64xf32>
    %902 = arith.truncf %901 : vector<8x64xf32> to vector<8x64xbf16>
    %c0_350 = arith.constant 0 : index
    %c2432 = arith.constant 2432 : index
    %903 = vector.load %arg6[%c0_350, %c2432] : memref<8x7808xbf16, #tpu.memory_space<vmem>>, vector<8x64xbf16>
    tpu.vector_store %arg6[%c0_350, %c2432], %902 {strides = array<i32>} : memref<8x7808xbf16, #tpu.memory_space<vmem>>, vector<8x64xbf16>,
    %c312_351 = arith.constant 312 : index
    %c0_352 = arith.constant 0 : index
    %904 = vector.load %arg5[%c312_351, %c0_352] : memref<968x64xf32, #tpu.memory_space<vmem>>, vector<8x64xf32>
    %905 = arith.mulf %904, %509 : vector<8x64xf32>
    %906 = arith.addf %905, %511 : vector<8x64xf32>
    %cst_353 = arith.constant 0.000000e+00 : f32
    %907 = vector.broadcast %cst_353 : f32 to vector<8x64xf32>
    %908 = arith.cmpf ogt, %906, %907 : vector<8x64xf32>
    %cst_354 = arith.constant 2.000000e-01 : f32
    %909 = vector.broadcast %cst_354 : f32 to vector<8x64xf32>
    %910 = arith.mulf %909, %906 : vector<8x64xf32>
    %911 = arith.select %908, %906, %910 : vector<8x64xi1>, vector<8x64xf32>
    %912 = arith.truncf %911 : vector<8x64xf32> to vector<8x64xbf16>
    %c0_355 = arith.constant 0 : index
    %c2496 = arith.constant 2496 : index
    %913 = vector.load %arg6[%c0_355, %c2496] : memref<8x7808xbf16, #tpu.memory_space<vmem>>, vector<8x64xbf16>
    tpu.vector_store %arg6[%c0_355, %c2496], %912 {strides = array<i32>} : memref<8x7808xbf16, #tpu.memory_space<vmem>>, vector<8x64xbf16>,
    %c320_356 = arith.constant 320 : index
    %c0_357 = arith.constant 0 : index
    %914 = vector.load %arg5[%c320_356, %c0_357] : memref<968x64xf32, #tpu.memory_space<vmem>>, vector<8x64xf32>
    %915 = arith.mulf %914, %509 : vector<8x64xf32>
    %916 = arith.addf %915, %511 : vector<8x64xf32>
    %cst_358 = arith.constant 0.000000e+00 : f32
    %917 = vector.broadcast %cst_358 : f32 to vector<8x64xf32>
    %918 = arith.cmpf ogt, %916, %917 : vector<8x64xf32>
    %cst_359 = arith.constant 2.000000e-01 : f32
    %919 = vector.broadcast %cst_359 : f32 to vector<8x64xf32>
    %920 = arith.mulf %919, %916 : vector<8x64xf32>
    %921 = arith.select %918, %916, %920 : vector<8x64xi1>, vector<8x64xf32>
    %922 = arith.truncf %921 : vector<8x64xf32> to vector<8x64xbf16>
    %c0_360 = arith.constant 0 : index
    %c2560 = arith.constant 2560 : index
    %923 = vector.load %arg6[%c0_360, %c2560] : memref<8x7808xbf16, #tpu.memory_space<vmem>>, vector<8x64xbf16>
    tpu.vector_store %arg6[%c0_360, %c2560], %922 {strides = array<i32>} : memref<8x7808xbf16, #tpu.memory_space<vmem>>, vector<8x64xbf16>,
    %c328_361 = arith.constant 328 : index
    %c0_362 = arith.constant 0 : index
    %924 = vector.load %arg5[%c328_361, %c0_362] : memref<968x64xf32, #tpu.memory_space<vmem>>, vector<8x64xf32>
    %925 = arith.mulf %924, %509 : vector<8x64xf32>
    %926 = arith.addf %925, %511 : vector<8x64xf32>
    %cst_363 = arith.constant 0.000000e+00 : f32
    %927 = vector.broadcast %cst_363 : f32 to vector<8x64xf32>
    %928 = arith.cmpf ogt, %926, %927 : vector<8x64xf32>
    %cst_364 = arith.constant 2.000000e-01 : f32
    %929 = vector.broadcast %cst_364 : f32 to vector<8x64xf32>
    %930 = arith.mulf %929, %926 : vector<8x64xf32>
    %931 = arith.select %928, %926, %930 : vector<8x64xi1>, vector<8x64xf32>
    %932 = arith.truncf %931 : vector<8x64xf32> to vector<8x64xbf16>
    %c0_365 = arith.constant 0 : index
    %c2624 = arith.constant 2624 : index
    %933 = vector.load %arg6[%c0_365, %c2624] : memref<8x7808xbf16, #tpu.memory_space<vmem>>, vector<8x64xbf16>
    tpu.vector_store %arg6[%c0_365, %c2624], %932 {strides = array<i32>} : memref<8x7808xbf16, #tpu.memory_space<vmem>>, vector<8x64xbf16>,
    %c336_366 = arith.constant 336 : index
    %c0_367 = arith.constant 0 : index
    %934 = vector.load %arg5[%c336_366, %c0_367] : memref<968x64xf32, #tpu.memory_space<vmem>>, vector<8x64xf32>
    %935 = arith.mulf %934, %509 : vector<8x64xf32>
    %936 = arith.addf %935, %511 : vector<8x64xf32>
    %cst_368 = arith.constant 0.000000e+00 : f32
    %937 = vector.broadcast %cst_368 : f32 to vector<8x64xf32>
    %938 = arith.cmpf ogt, %936, %937 : vector<8x64xf32>
    %cst_369 = arith.constant 2.000000e-01 : f32
    %939 = vector.broadcast %cst_369 : f32 to vector<8x64xf32>
    %940 = arith.mulf %939, %936 : vector<8x64xf32>
    %941 = arith.select %938, %936, %940 : vector<8x64xi1>, vector<8x64xf32>
    %942 = arith.truncf %941 : vector<8x64xf32> to vector<8x64xbf16>
    %c0_370 = arith.constant 0 : index
    %c2688 = arith.constant 2688 : index
    %943 = vector.load %arg6[%c0_370, %c2688] : memref<8x7808xbf16, #tpu.memory_space<vmem>>, vector<8x64xbf16>
    tpu.vector_store %arg6[%c0_370, %c2688], %942 {strides = array<i32>} : memref<8x7808xbf16, #tpu.memory_space<vmem>>, vector<8x64xbf16>,
    %c344_371 = arith.constant 344 : index
    %c0_372 = arith.constant 0 : index
    %944 = vector.load %arg5[%c344_371, %c0_372] : memref<968x64xf32, #tpu.memory_space<vmem>>, vector<8x64xf32>
    %945 = arith.mulf %944, %509 : vector<8x64xf32>
    %946 = arith.addf %945, %511 : vector<8x64xf32>
    %cst_373 = arith.constant 0.000000e+00 : f32
    %947 = vector.broadcast %cst_373 : f32 to vector<8x64xf32>
    %948 = arith.cmpf ogt, %946, %947 : vector<8x64xf32>
    %cst_374 = arith.constant 2.000000e-01 : f32
    %949 = vector.broadcast %cst_374 : f32 to vector<8x64xf32>
    %950 = arith.mulf %949, %946 : vector<8x64xf32>
    %951 = arith.select %948, %946, %950 : vector<8x64xi1>, vector<8x64xf32>
    %952 = arith.truncf %951 : vector<8x64xf32> to vector<8x64xbf16>
    %c0_375 = arith.constant 0 : index
    %c2752 = arith.constant 2752 : index
    %953 = vector.load %arg6[%c0_375, %c2752] : memref<8x7808xbf16, #tpu.memory_space<vmem>>, vector<8x64xbf16>
    tpu.vector_store %arg6[%c0_375, %c2752], %952 {strides = array<i32>} : memref<8x7808xbf16, #tpu.memory_space<vmem>>, vector<8x64xbf16>,
    %c352_376 = arith.constant 352 : index
    %c0_377 = arith.constant 0 : index
    %954 = vector.load %arg5[%c352_376, %c0_377] : memref<968x64xf32, #tpu.memory_space<vmem>>, vector<8x64xf32>
    %955 = arith.mulf %954, %509 : vector<8x64xf32>
    %956 = arith.addf %955, %511 : vector<8x64xf32>
    %cst_378 = arith.constant 0.000000e+00 : f32
    %957 = vector.broadcast %cst_378 : f32 to vector<8x64xf32>
    %958 = arith.cmpf ogt, %956, %957 : vector<8x64xf32>
    %cst_379 = arith.constant 2.000000e-01 : f32
    %959 = vector.broadcast %cst_379 : f32 to vector<8x64xf32>
    %960 = arith.mulf %959, %956 : vector<8x64xf32>
    %961 = arith.select %958, %956, %960 : vector<8x64xi1>, vector<8x64xf32>
    %962 = arith.truncf %961 : vector<8x64xf32> to vector<8x64xbf16>
    %c0_380 = arith.constant 0 : index
    %c2816 = arith.constant 2816 : index
    %963 = vector.load %arg6[%c0_380, %c2816] : memref<8x7808xbf16, #tpu.memory_space<vmem>>, vector<8x64xbf16>
    tpu.vector_store %arg6[%c0_380, %c2816], %962 {strides = array<i32>} : memref<8x7808xbf16, #tpu.memory_space<vmem>>, vector<8x64xbf16>,
    %c360_381 = arith.constant 360 : index
    %c0_382 = arith.constant 0 : index
    %964 = vector.load %arg5[%c360_381, %c0_382] : memref<968x64xf32, #tpu.memory_space<vmem>>, vector<8x64xf32>
    %965 = arith.mulf %964, %509 : vector<8x64xf32>
    %966 = arith.addf %965, %511 : vector<8x64xf32>
    %cst_383 = arith.constant 0.000000e+00 : f32
    %967 = vector.broadcast %cst_383 : f32 to vector<8x64xf32>
    %968 = arith.cmpf ogt, %966, %967 : vector<8x64xf32>
    %cst_384 = arith.constant 2.000000e-01 : f32
    %969 = vector.broadcast %cst_384 : f32 to vector<8x64xf32>
    %970 = arith.mulf %969, %966 : vector<8x64xf32>
    %971 = arith.select %968, %966, %970 : vector<8x64xi1>, vector<8x64xf32>
    %972 = arith.truncf %971 : vector<8x64xf32> to vector<8x64xbf16>
    %c0_385 = arith.constant 0 : index
    %c2880 = arith.constant 2880 : index
    %973 = vector.load %arg6[%c0_385, %c2880] : memref<8x7808xbf16, #tpu.memory_space<vmem>>, vector<8x64xbf16>
    tpu.vector_store %arg6[%c0_385, %c2880], %972 {strides = array<i32>} : memref<8x7808xbf16, #tpu.memory_space<vmem>>, vector<8x64xbf16>,
    %c368_386 = arith.constant 368 : index
    %c0_387 = arith.constant 0 : index
    %974 = vector.load %arg5[%c368_386, %c0_387] : memref<968x64xf32, #tpu.memory_space<vmem>>, vector<8x64xf32>
    %975 = arith.mulf %974, %509 : vector<8x64xf32>
    %976 = arith.addf %975, %511 : vector<8x64xf32>
    %cst_388 = arith.constant 0.000000e+00 : f32
    %977 = vector.broadcast %cst_388 : f32 to vector<8x64xf32>
    %978 = arith.cmpf ogt, %976, %977 : vector<8x64xf32>
    %cst_389 = arith.constant 2.000000e-01 : f32
    %979 = vector.broadcast %cst_389 : f32 to vector<8x64xf32>
    %980 = arith.mulf %979, %976 : vector<8x64xf32>
    %981 = arith.select %978, %976, %980 : vector<8x64xi1>, vector<8x64xf32>
    %982 = arith.truncf %981 : vector<8x64xf32> to vector<8x64xbf16>
    %c0_390 = arith.constant 0 : index
    %c2944 = arith.constant 2944 : index
    %983 = vector.load %arg6[%c0_390, %c2944] : memref<8x7808xbf16, #tpu.memory_space<vmem>>, vector<8x64xbf16>
    tpu.vector_store %arg6[%c0_390, %c2944], %982 {strides = array<i32>} : memref<8x7808xbf16, #tpu.memory_space<vmem>>, vector<8x64xbf16>,
    %c376_391 = arith.constant 376 : index
    %c0_392 = arith.constant 0 : index
    %984 = vector.load %arg5[%c376_391, %c0_392] : memref<968x64xf32, #tpu.memory_space<vmem>>, vector<8x64xf32>
    %985 = arith.mulf %984, %509 : vector<8x64xf32>
    %986 = arith.addf %985, %511 : vector<8x64xf32>
    %cst_393 = arith.constant 0.000000e+00 : f32
    %987 = vector.broadcast %cst_393 : f32 to vector<8x64xf32>
    %988 = arith.cmpf ogt, %986, %987 : vector<8x64xf32>
    %cst_394 = arith.constant 2.000000e-01 : f32
    %989 = vector.broadcast %cst_394 : f32 to vector<8x64xf32>
    %990 = arith.mulf %989, %986 : vector<8x64xf32>
    %991 = arith.select %988, %986, %990 : vector<8x64xi1>, vector<8x64xf32>
    %992 = arith.truncf %991 : vector<8x64xf32> to vector<8x64xbf16>
    %c0_395 = arith.constant 0 : index
    %c3008 = arith.constant 3008 : index
    %993 = vector.load %arg6[%c0_395, %c3008] : memref<8x7808xbf16, #tpu.memory_space<vmem>>, vector<8x64xbf16>
    tpu.vector_store %arg6[%c0_395, %c3008], %992 {strides = array<i32>} : memref<8x7808xbf16, #tpu.memory_space<vmem>>, vector<8x64xbf16>,
    %c384_396 = arith.constant 384 : index
    %c0_397 = arith.constant 0 : index
    %994 = vector.load %arg5[%c384_396, %c0_397] : memref<968x64xf32, #tpu.memory_space<vmem>>, vector<8x64xf32>
    %995 = arith.mulf %994, %509 : vector<8x64xf32>
    %996 = arith.addf %995, %511 : vector<8x64xf32>
    %cst_398 = arith.constant 0.000000e+00 : f32
    %997 = vector.broadcast %cst_398 : f32 to vector<8x64xf32>
    %998 = arith.cmpf ogt, %996, %997 : vector<8x64xf32>
    %cst_399 = arith.constant 2.000000e-01 : f32
    %999 = vector.broadcast %cst_399 : f32 to vector<8x64xf32>
    %1000 = arith.mulf %999, %996 : vector<8x64xf32>
    %1001 = arith.select %998, %996, %1000 : vector<8x64xi1>, vector<8x64xf32>
    %1002 = arith.truncf %1001 : vector<8x64xf32> to vector<8x64xbf16>
    %c0_400 = arith.constant 0 : index
    %c3072 = arith.constant 3072 : index
    %1003 = vector.load %arg6[%c0_400, %c3072] : memref<8x7808xbf16, #tpu.memory_space<vmem>>, vector<8x64xbf16>
    tpu.vector_store %arg6[%c0_400, %c3072], %1002 {strides = array<i32>} : memref<8x7808xbf16, #tpu.memory_space<vmem>>, vector<8x64xbf16>,
    %c392_401 = arith.constant 392 : index
    %c0_402 = arith.constant 0 : index
    %1004 = vector.load %arg5[%c392_401, %c0_402] : memref<968x64xf32, #tpu.memory_space<vmem>>, vector<8x64xf32>
    %1005 = arith.mulf %1004, %509 : vector<8x64xf32>
    %1006 = arith.addf %1005, %511 : vector<8x64xf32>
    %cst_403 = arith.constant 0.000000e+00 : f32
    %1007 = vector.broadcast %cst_403 : f32 to vector<8x64xf32>
    %1008 = arith.cmpf ogt, %1006, %1007 : vector<8x64xf32>
    %cst_404 = arith.constant 2.000000e-01 : f32
    %1009 = vector.broadcast %cst_404 : f32 to vector<8x64xf32>
    %1010 = arith.mulf %1009, %1006 : vector<8x64xf32>
    %1011 = arith.select %1008, %1006, %1010 : vector<8x64xi1>, vector<8x64xf32>
    %1012 = arith.truncf %1011 : vector<8x64xf32> to vector<8x64xbf16>
    %c0_405 = arith.constant 0 : index
    %c3136 = arith.constant 3136 : index
    %1013 = vector.load %arg6[%c0_405, %c3136] : memref<8x7808xbf16, #tpu.memory_space<vmem>>, vector<8x64xbf16>
    tpu.vector_store %arg6[%c0_405, %c3136], %1012 {strides = array<i32>} : memref<8x7808xbf16, #tpu.memory_space<vmem>>, vector<8x64xbf16>,
    %c400_406 = arith.constant 400 : index
    %c0_407 = arith.constant 0 : index
    %1014 = vector.load %arg5[%c400_406, %c0_407] : memref<968x64xf32, #tpu.memory_space<vmem>>, vector<8x64xf32>
    %1015 = arith.mulf %1014, %509 : vector<8x64xf32>
    %1016 = arith.addf %1015, %511 : vector<8x64xf32>
    %cst_408 = arith.constant 0.000000e+00 : f32
    %1017 = vector.broadcast %cst_408 : f32 to vector<8x64xf32>
    %1018 = arith.cmpf ogt, %1016, %1017 : vector<8x64xf32>
    %cst_409 = arith.constant 2.000000e-01 : f32
    %1019 = vector.broadcast %cst_409 : f32 to vector<8x64xf32>
    %1020 = arith.mulf %1019, %1016 : vector<8x64xf32>
    %1021 = arith.select %1018, %1016, %1020 : vector<8x64xi1>, vector<8x64xf32>
    %1022 = arith.truncf %1021 : vector<8x64xf32> to vector<8x64xbf16>
    %c0_410 = arith.constant 0 : index
    %c3200 = arith.constant 3200 : index
    %1023 = vector.load %arg6[%c0_410, %c3200] : memref<8x7808xbf16, #tpu.memory_space<vmem>>, vector<8x64xbf16>
    tpu.vector_store %arg6[%c0_410, %c3200], %1022 {strides = array<i32>} : memref<8x7808xbf16, #tpu.memory_space<vmem>>, vector<8x64xbf16>,
    %c408_411 = arith.constant 408 : index
    %c0_412 = arith.constant 0 : index
    %1024 = vector.load %arg5[%c408_411, %c0_412] : memref<968x64xf32, #tpu.memory_space<vmem>>, vector<8x64xf32>
    %1025 = arith.mulf %1024, %509 : vector<8x64xf32>
    %1026 = arith.addf %1025, %511 : vector<8x64xf32>
    %cst_413 = arith.constant 0.000000e+00 : f32
    %1027 = vector.broadcast %cst_413 : f32 to vector<8x64xf32>
    %1028 = arith.cmpf ogt, %1026, %1027 : vector<8x64xf32>
    %cst_414 = arith.constant 2.000000e-01 : f32
    %1029 = vector.broadcast %cst_414 : f32 to vector<8x64xf32>
    %1030 = arith.mulf %1029, %1026 : vector<8x64xf32>
    %1031 = arith.select %1028, %1026, %1030 : vector<8x64xi1>, vector<8x64xf32>
    %1032 = arith.truncf %1031 : vector<8x64xf32> to vector<8x64xbf16>
    %c0_415 = arith.constant 0 : index
    %c3264 = arith.constant 3264 : index
    %1033 = vector.load %arg6[%c0_415, %c3264] : memref<8x7808xbf16, #tpu.memory_space<vmem>>, vector<8x64xbf16>
    tpu.vector_store %arg6[%c0_415, %c3264], %1032 {strides = array<i32>} : memref<8x7808xbf16, #tpu.memory_space<vmem>>, vector<8x64xbf16>,
    %c416_416 = arith.constant 416 : index
    %c0_417 = arith.constant 0 : index
    %1034 = vector.load %arg5[%c416_416, %c0_417] : memref<968x64xf32, #tpu.memory_space<vmem>>, vector<8x64xf32>
    %1035 = arith.mulf %1034, %509 : vector<8x64xf32>
    %1036 = arith.addf %1035, %511 : vector<8x64xf32>
    %cst_418 = arith.constant 0.000000e+00 : f32
    %1037 = vector.broadcast %cst_418 : f32 to vector<8x64xf32>
    %1038 = arith.cmpf ogt, %1036, %1037 : vector<8x64xf32>
    %cst_419 = arith.constant 2.000000e-01 : f32
    %1039 = vector.broadcast %cst_419 : f32 to vector<8x64xf32>
    %1040 = arith.mulf %1039, %1036 : vector<8x64xf32>
    %1041 = arith.select %1038, %1036, %1040 : vector<8x64xi1>, vector<8x64xf32>
    %1042 = arith.truncf %1041 : vector<8x64xf32> to vector<8x64xbf16>
    %c0_420 = arith.constant 0 : index
    %c3328 = arith.constant 3328 : index
    %1043 = vector.load %arg6[%c0_420, %c3328] : memref<8x7808xbf16, #tpu.memory_space<vmem>>, vector<8x64xbf16>
    tpu.vector_store %arg6[%c0_420, %c3328], %1042 {strides = array<i32>} : memref<8x7808xbf16, #tpu.memory_space<vmem>>, vector<8x64xbf16>,
    %c424_421 = arith.constant 424 : index
    %c0_422 = arith.constant 0 : index
    %1044 = vector.load %arg5[%c424_421, %c0_422] : memref<968x64xf32, #tpu.memory_space<vmem>>, vector<8x64xf32>
    %1045 = arith.mulf %1044, %509 : vector<8x64xf32>
    %1046 = arith.addf %1045, %511 : vector<8x64xf32>
    %cst_423 = arith.constant 0.000000e+00 : f32
    %1047 = vector.broadcast %cst_423 : f32 to vector<8x64xf32>
    %1048 = arith.cmpf ogt, %1046, %1047 : vector<8x64xf32>
    %cst_424 = arith.constant 2.000000e-01 : f32
    %1049 = vector.broadcast %cst_424 : f32 to vector<8x64xf32>
    %1050 = arith.mulf %1049, %1046 : vector<8x64xf32>
    %1051 = arith.select %1048, %1046, %1050 : vector<8x64xi1>, vector<8x64xf32>
    %1052 = arith.truncf %1051 : vector<8x64xf32> to vector<8x64xbf16>
    %c0_425 = arith.constant 0 : index
    %c3392 = arith.constant 3392 : index
    %1053 = vector.load %arg6[%c0_425, %c3392] : memref<8x7808xbf16, #tpu.memory_space<vmem>>, vector<8x64xbf16>
    tpu.vector_store %arg6[%c0_425, %c3392], %1052 {strides = array<i32>} : memref<8x7808xbf16, #tpu.memory_space<vmem>>, vector<8x64xbf16>,
    %c432_426 = arith.constant 432 : index
    %c0_427 = arith.constant 0 : index
    %1054 = vector.load %arg5[%c432_426, %c0_427] : memref<968x64xf32, #tpu.memory_space<vmem>>, vector<8x64xf32>
    %1055 = arith.mulf %1054, %509 : vector<8x64xf32>
    %1056 = arith.addf %1055, %511 : vector<8x64xf32>
    %cst_428 = arith.constant 0.000000e+00 : f32
    %1057 = vector.broadcast %cst_428 : f32 to vector<8x64xf32>
    %1058 = arith.cmpf ogt, %1056, %1057 : vector<8x64xf32>
    %cst_429 = arith.constant 2.000000e-01 : f32
    %1059 = vector.broadcast %cst_429 : f32 to vector<8x64xf32>
    %1060 = arith.mulf %1059, %1056 : vector<8x64xf32>
    %1061 = arith.select %1058, %1056, %1060 : vector<8x64xi1>, vector<8x64xf32>
    %1062 = arith.truncf %1061 : vector<8x64xf32> to vector<8x64xbf16>
    %c0_430 = arith.constant 0 : index
    %c3456 = arith.constant 3456 : index
    %1063 = vector.load %arg6[%c0_430, %c3456] : memref<8x7808xbf16, #tpu.memory_space<vmem>>, vector<8x64xbf16>
    tpu.vector_store %arg6[%c0_430, %c3456], %1062 {strides = array<i32>} : memref<8x7808xbf16, #tpu.memory_space<vmem>>, vector<8x64xbf16>,
    %c440_431 = arith.constant 440 : index
    %c0_432 = arith.constant 0 : index
    %1064 = vector.load %arg5[%c440_431, %c0_432] : memref<968x64xf32, #tpu.memory_space<vmem>>, vector<8x64xf32>
    %1065 = arith.mulf %1064, %509 : vector<8x64xf32>
    %1066 = arith.addf %1065, %511 : vector<8x64xf32>
    %cst_433 = arith.constant 0.000000e+00 : f32
    %1067 = vector.broadcast %cst_433 : f32 to vector<8x64xf32>
    %1068 = arith.cmpf ogt, %1066, %1067 : vector<8x64xf32>
    %cst_434 = arith.constant 2.000000e-01 : f32
    %1069 = vector.broadcast %cst_434 : f32 to vector<8x64xf32>
    %1070 = arith.mulf %1069, %1066 : vector<8x64xf32>
    %1071 = arith.select %1068, %1066, %1070 : vector<8x64xi1>, vector<8x64xf32>
    %1072 = arith.truncf %1071 : vector<8x64xf32> to vector<8x64xbf16>
    %c0_435 = arith.constant 0 : index
    %c3520 = arith.constant 3520 : index
    %1073 = vector.load %arg6[%c0_435, %c3520] : memref<8x7808xbf16, #tpu.memory_space<vmem>>, vector<8x64xbf16>
    tpu.vector_store %arg6[%c0_435, %c3520], %1072 {strides = array<i32>} : memref<8x7808xbf16, #tpu.memory_space<vmem>>, vector<8x64xbf16>,
    %c448_436 = arith.constant 448 : index
    %c0_437 = arith.constant 0 : index
    %1074 = vector.load %arg5[%c448_436, %c0_437] : memref<968x64xf32, #tpu.memory_space<vmem>>, vector<8x64xf32>
    %1075 = arith.mulf %1074, %509 : vector<8x64xf32>
    %1076 = arith.addf %1075, %511 : vector<8x64xf32>
    %cst_438 = arith.constant 0.000000e+00 : f32
    %1077 = vector.broadcast %cst_438 : f32 to vector<8x64xf32>
    %1078 = arith.cmpf ogt, %1076, %1077 : vector<8x64xf32>
    %cst_439 = arith.constant 2.000000e-01 : f32
    %1079 = vector.broadcast %cst_439 : f32 to vector<8x64xf32>
    %1080 = arith.mulf %1079, %1076 : vector<8x64xf32>
    %1081 = arith.select %1078, %1076, %1080 : vector<8x64xi1>, vector<8x64xf32>
    %1082 = arith.truncf %1081 : vector<8x64xf32> to vector<8x64xbf16>
    %c0_440 = arith.constant 0 : index
    %c3584 = arith.constant 3584 : index
    %1083 = vector.load %arg6[%c0_440, %c3584] : memref<8x7808xbf16, #tpu.memory_space<vmem>>, vector<8x64xbf16>
    tpu.vector_store %arg6[%c0_440, %c3584], %1082 {strides = array<i32>} : memref<8x7808xbf16, #tpu.memory_space<vmem>>, vector<8x64xbf16>,
    %c456_441 = arith.constant 456 : index
    %c0_442 = arith.constant 0 : index
    %1084 = vector.load %arg5[%c456_441, %c0_442] : memref<968x64xf32, #tpu.memory_space<vmem>>, vector<8x64xf32>
    %1085 = arith.mulf %1084, %509 : vector<8x64xf32>
    %1086 = arith.addf %1085, %511 : vector<8x64xf32>
    %cst_443 = arith.constant 0.000000e+00 : f32
    %1087 = vector.broadcast %cst_443 : f32 to vector<8x64xf32>
    %1088 = arith.cmpf ogt, %1086, %1087 : vector<8x64xf32>
    %cst_444 = arith.constant 2.000000e-01 : f32
    %1089 = vector.broadcast %cst_444 : f32 to vector<8x64xf32>
    %1090 = arith.mulf %1089, %1086 : vector<8x64xf32>
    %1091 = arith.select %1088, %1086, %1090 : vector<8x64xi1>, vector<8x64xf32>
    %1092 = arith.truncf %1091 : vector<8x64xf32> to vector<8x64xbf16>
    %c0_445 = arith.constant 0 : index
    %c3648 = arith.constant 3648 : index
    %1093 = vector.load %arg6[%c0_445, %c3648] : memref<8x7808xbf16, #tpu.memory_space<vmem>>, vector<8x64xbf16>
    tpu.vector_store %arg6[%c0_445, %c3648], %1092 {strides = array<i32>} : memref<8x7808xbf16, #tpu.memory_space<vmem>>, vector<8x64xbf16>,
    %c464_446 = arith.constant 464 : index
    %c0_447 = arith.constant 0 : index
    %1094 = vector.load %arg5[%c464_446, %c0_447] : memref<968x64xf32, #tpu.memory_space<vmem>>, vector<8x64xf32>
    %1095 = arith.mulf %1094, %509 : vector<8x64xf32>
    %1096 = arith.addf %1095, %511 : vector<8x64xf32>
    %cst_448 = arith.constant 0.000000e+00 : f32
    %1097 = vector.broadcast %cst_448 : f32 to vector<8x64xf32>
    %1098 = arith.cmpf ogt, %1096, %1097 : vector<8x64xf32>
    %cst_449 = arith.constant 2.000000e-01 : f32
    %1099 = vector.broadcast %cst_449 : f32 to vector<8x64xf32>
    %1100 = arith.mulf %1099, %1096 : vector<8x64xf32>
    %1101 = arith.select %1098, %1096, %1100 : vector<8x64xi1>, vector<8x64xf32>
    %1102 = arith.truncf %1101 : vector<8x64xf32> to vector<8x64xbf16>
    %c0_450 = arith.constant 0 : index
    %c3712 = arith.constant 3712 : index
    %1103 = vector.load %arg6[%c0_450, %c3712] : memref<8x7808xbf16, #tpu.memory_space<vmem>>, vector<8x64xbf16>
    tpu.vector_store %arg6[%c0_450, %c3712], %1102 {strides = array<i32>} : memref<8x7808xbf16, #tpu.memory_space<vmem>>, vector<8x64xbf16>,
    %c472_451 = arith.constant 472 : index
    %c0_452 = arith.constant 0 : index
    %1104 = vector.load %arg5[%c472_451, %c0_452] : memref<968x64xf32, #tpu.memory_space<vmem>>, vector<8x64xf32>
    %1105 = arith.mulf %1104, %509 : vector<8x64xf32>
    %1106 = arith.addf %1105, %511 : vector<8x64xf32>
    %cst_453 = arith.constant 0.000000e+00 : f32
    %1107 = vector.broadcast %cst_453 : f32 to vector<8x64xf32>
    %1108 = arith.cmpf ogt, %1106, %1107 : vector<8x64xf32>
    %cst_454 = arith.constant 2.000000e-01 : f32
    %1109 = vector.broadcast %cst_454 : f32 to vector<8x64xf32>
    %1110 = arith.mulf %1109, %1106 : vector<8x64xf32>
    %1111 = arith.select %1108, %1106, %1110 : vector<8x64xi1>, vector<8x64xf32>
    %1112 = arith.truncf %1111 : vector<8x64xf32> to vector<8x64xbf16>
    %c0_455 = arith.constant 0 : index
    %c3776 = arith.constant 3776 : index
    %1113 = vector.load %arg6[%c0_455, %c3776] : memref<8x7808xbf16, #tpu.memory_space<vmem>>, vector<8x64xbf16>
    tpu.vector_store %arg6[%c0_455, %c3776], %1112 {strides = array<i32>} : memref<8x7808xbf16, #tpu.memory_space<vmem>>, vector<8x64xbf16>,
    %c480_456 = arith.constant 480 : index
    %c0_457 = arith.constant 0 : index
    %1114 = vector.load %arg5[%c480_456, %c0_457] : memref<968x64xf32, #tpu.memory_space<vmem>>, vector<8x64xf32>
    %1115 = arith.mulf %1114, %509 : vector<8x64xf32>
    %1116 = arith.addf %1115, %511 : vector<8x64xf32>
    %cst_458 = arith.constant 0.000000e+00 : f32
    %1117 = vector.broadcast %cst_458 : f32 to vector<8x64xf32>
    %1118 = arith.cmpf ogt, %1116, %1117 : vector<8x64xf32>
    %cst_459 = arith.constant 2.000000e-01 : f32
    %1119 = vector.broadcast %cst_459 : f32 to vector<8x64xf32>
    %1120 = arith.mulf %1119, %1116 : vector<8x64xf32>
    %1121 = arith.select %1118, %1116, %1120 : vector<8x64xi1>, vector<8x64xf32>
    %1122 = arith.truncf %1121 : vector<8x64xf32> to vector<8x64xbf16>
    %c0_460 = arith.constant 0 : index
    %c3840 = arith.constant 3840 : index
    %1123 = vector.load %arg6[%c0_460, %c3840] : memref<8x7808xbf16, #tpu.memory_space<vmem>>, vector<8x64xbf16>
    tpu.vector_store %arg6[%c0_460, %c3840], %1122 {strides = array<i32>} : memref<8x7808xbf16, #tpu.memory_space<vmem>>, vector<8x64xbf16>,
    %c488_461 = arith.constant 488 : index
    %c0_462 = arith.constant 0 : index
    %1124 = vector.load %arg5[%c488_461, %c0_462] : memref<968x64xf32, #tpu.memory_space<vmem>>, vector<8x64xf32>
    %1125 = arith.mulf %1124, %509 : vector<8x64xf32>
    %1126 = arith.addf %1125, %511 : vector<8x64xf32>
    %cst_463 = arith.constant 0.000000e+00 : f32
    %1127 = vector.broadcast %cst_463 : f32 to vector<8x64xf32>
    %1128 = arith.cmpf ogt, %1126, %1127 : vector<8x64xf32>
    %cst_464 = arith.constant 2.000000e-01 : f32
    %1129 = vector.broadcast %cst_464 : f32 to vector<8x64xf32>
    %1130 = arith.mulf %1129, %1126 : vector<8x64xf32>
    %1131 = arith.select %1128, %1126, %1130 : vector<8x64xi1>, vector<8x64xf32>
    %1132 = arith.truncf %1131 : vector<8x64xf32> to vector<8x64xbf16>
    %c0_465 = arith.constant 0 : index
    %c3904 = arith.constant 3904 : index
    %1133 = vector.load %arg6[%c0_465, %c3904] : memref<8x7808xbf16, #tpu.memory_space<vmem>>, vector<8x64xbf16>
    tpu.vector_store %arg6[%c0_465, %c3904], %1132 {strides = array<i32>} : memref<8x7808xbf16, #tpu.memory_space<vmem>>, vector<8x64xbf16>,
    %c496_466 = arith.constant 496 : index
    %c0_467 = arith.constant 0 : index
    %1134 = vector.load %arg5[%c496_466, %c0_467] : memref<968x64xf32, #tpu.memory_space<vmem>>, vector<8x64xf32>
    %1135 = arith.mulf %1134, %509 : vector<8x64xf32>
    %1136 = arith.addf %1135, %511 : vector<8x64xf32>
    %cst_468 = arith.constant 0.000000e+00 : f32
    %1137 = vector.broadcast %cst_468 : f32 to vector<8x64xf32>
    %1138 = arith.cmpf ogt, %1136, %1137 : vector<8x64xf32>
    %cst_469 = arith.constant 2.000000e-01 : f32
    %1139 = vector.broadcast %cst_469 : f32 to vector<8x64xf32>
    %1140 = arith.mulf %1139, %1136 : vector<8x64xf32>
    %1141 = arith.select %1138, %1136, %1140 : vector<8x64xi1>, vector<8x64xf32>
    %1142 = arith.truncf %1141 : vector<8x64xf32> to vector<8x64xbf16>
    %c0_470 = arith.constant 0 : index
    %c3968 = arith.constant 3968 : index
    %1143 = vector.load %arg6[%c0_470, %c3968] : memref<8x7808xbf16, #tpu.memory_space<vmem>>, vector<8x64xbf16>
    tpu.vector_store %arg6[%c0_470, %c3968], %1142 {strides = array<i32>} : memref<8x7808xbf16, #tpu.memory_space<vmem>>, vector<8x64xbf16>,
    %c504_471 = arith.constant 504 : index
    %c0_472 = arith.constant 0 : index
    %1144 = vector.load %arg5[%c504_471, %c0_472] : memref<968x64xf32, #tpu.memory_space<vmem>>, vector<8x64xf32>
    %1145 = arith.mulf %1144, %509 : vector<8x64xf32>
    %1146 = arith.addf %1145, %511 : vector<8x64xf32>
    %cst_473 = arith.constant 0.000000e+00 : f32
    %1147 = vector.broadcast %cst_473 : f32 to vector<8x64xf32>
    %1148 = arith.cmpf ogt, %1146, %1147 : vector<8x64xf32>
    %cst_474 = arith.constant 2.000000e-01 : f32
    %1149 = vector.broadcast %cst_474 : f32 to vector<8x64xf32>
    %1150 = arith.mulf %1149, %1146 : vector<8x64xf32>
    %1151 = arith.select %1148, %1146, %1150 : vector<8x64xi1>, vector<8x64xf32>
    %1152 = arith.truncf %1151 : vector<8x64xf32> to vector<8x64xbf16>
    %c0_475 = arith.constant 0 : index
    %c4032 = arith.constant 4032 : index
    %1153 = vector.load %arg6[%c0_475, %c4032] : memref<8x7808xbf16, #tpu.memory_space<vmem>>, vector<8x64xbf16>
    tpu.vector_store %arg6[%c0_475, %c4032], %1152 {strides = array<i32>} : memref<8x7808xbf16, #tpu.memory_space<vmem>>, vector<8x64xbf16>,
    %c512_476 = arith.constant 512 : index
    %c0_477 = arith.constant 0 : index
    %1154 = vector.load %arg5[%c512_476, %c0_477] : memref<968x64xf32, #tpu.memory_space<vmem>>, vector<8x64xf32>
    %1155 = arith.mulf %1154, %509 : vector<8x64xf32>
    %1156 = arith.addf %1155, %511 : vector<8x64xf32>
    %cst_478 = arith.constant 0.000000e+00 : f32
    %1157 = vector.broadcast %cst_478 : f32 to vector<8x64xf32>
    %1158 = arith.cmpf ogt, %1156, %1157 : vector<8x64xf32>
    %cst_479 = arith.constant 2.000000e-01 : f32
    %1159 = vector.broadcast %cst_479 : f32 to vector<8x64xf32>
    %1160 = arith.mulf %1159, %1156 : vector<8x64xf32>
    %1161 = arith.select %1158, %1156, %1160 : vector<8x64xi1>, vector<8x64xf32>
    %1162 = arith.truncf %1161 : vector<8x64xf32> to vector<8x64xbf16>
    %c0_480 = arith.constant 0 : index
    %c4096 = arith.constant 4096 : index
    %1163 = vector.load %arg6[%c0_480, %c4096] : memref<8x7808xbf16, #tpu.memory_space<vmem>>, vector<8x64xbf16>
    tpu.vector_store %arg6[%c0_480, %c4096], %1162 {strides = array<i32>} : memref<8x7808xbf16, #tpu.memory_space<vmem>>, vector<8x64xbf16>,
    %c520_481 = arith.constant 520 : index
    %c0_482 = arith.constant 0 : index
    %1164 = vector.load %arg5[%c520_481, %c0_482] : memref<968x64xf32, #tpu.memory_space<vmem>>, vector<8x64xf32>
    %1165 = arith.mulf %1164, %509 : vector<8x64xf32>
    %1166 = arith.addf %1165, %511 : vector<8x64xf32>
    %cst_483 = arith.constant 0.000000e+00 : f32
    %1167 = vector.broadcast %cst_483 : f32 to vector<8x64xf32>
    %1168 = arith.cmpf ogt, %1166, %1167 : vector<8x64xf32>
    %cst_484 = arith.constant 2.000000e-01 : f32
    %1169 = vector.broadcast %cst_484 : f32 to vector<8x64xf32>
    %1170 = arith.mulf %1169, %1166 : vector<8x64xf32>
    %1171 = arith.select %1168, %1166, %1170 : vector<8x64xi1>, vector<8x64xf32>
    %1172 = arith.truncf %1171 : vector<8x64xf32> to vector<8x64xbf16>
    %c0_485 = arith.constant 0 : index
    %c4160 = arith.constant 4160 : index
    %1173 = vector.load %arg6[%c0_485, %c4160] : memref<8x7808xbf16, #tpu.memory_space<vmem>>, vector<8x64xbf16>
    tpu.vector_store %arg6[%c0_485, %c4160], %1172 {strides = array<i32>} : memref<8x7808xbf16, #tpu.memory_space<vmem>>, vector<8x64xbf16>,
    %c528_486 = arith.constant 528 : index
    %c0_487 = arith.constant 0 : index
    %1174 = vector.load %arg5[%c528_486, %c0_487] : memref<968x64xf32, #tpu.memory_space<vmem>>, vector<8x64xf32>
    %1175 = arith.mulf %1174, %509 : vector<8x64xf32>
    %1176 = arith.addf %1175, %511 : vector<8x64xf32>
    %cst_488 = arith.constant 0.000000e+00 : f32
    %1177 = vector.broadcast %cst_488 : f32 to vector<8x64xf32>
    %1178 = arith.cmpf ogt, %1176, %1177 : vector<8x64xf32>
    %cst_489 = arith.constant 2.000000e-01 : f32
    %1179 = vector.broadcast %cst_489 : f32 to vector<8x64xf32>
    %1180 = arith.mulf %1179, %1176 : vector<8x64xf32>
    %1181 = arith.select %1178, %1176, %1180 : vector<8x64xi1>, vector<8x64xf32>
    %1182 = arith.truncf %1181 : vector<8x64xf32> to vector<8x64xbf16>
    %c0_490 = arith.constant 0 : index
    %c4224 = arith.constant 4224 : index
    %1183 = vector.load %arg6[%c0_490, %c4224] : memref<8x7808xbf16, #tpu.memory_space<vmem>>, vector<8x64xbf16>
    tpu.vector_store %arg6[%c0_490, %c4224], %1182 {strides = array<i32>} : memref<8x7808xbf16, #tpu.memory_space<vmem>>, vector<8x64xbf16>,
    %c536_491 = arith.constant 536 : index
    %c0_492 = arith.constant 0 : index
    %1184 = vector.load %arg5[%c536_491, %c0_492] : memref<968x64xf32, #tpu.memory_space<vmem>>, vector<8x64xf32>
    %1185 = arith.mulf %1184, %509 : vector<8x64xf32>
    %1186 = arith.addf %1185, %511 : vector<8x64xf32>
    %cst_493 = arith.constant 0.000000e+00 : f32
    %1187 = vector.broadcast %cst_493 : f32 to vector<8x64xf32>
    %1188 = arith.cmpf ogt, %1186, %1187 : vector<8x64xf32>
    %cst_494 = arith.constant 2.000000e-01 : f32
    %1189 = vector.broadcast %cst_494 : f32 to vector<8x64xf32>
    %1190 = arith.mulf %1189, %1186 : vector<8x64xf32>
    %1191 = arith.select %1188, %1186, %1190 : vector<8x64xi1>, vector<8x64xf32>
    %1192 = arith.truncf %1191 : vector<8x64xf32> to vector<8x64xbf16>
    %c0_495 = arith.constant 0 : index
    %c4288 = arith.constant 4288 : index
    %1193 = vector.load %arg6[%c0_495, %c4288] : memref<8x7808xbf16, #tpu.memory_space<vmem>>, vector<8x64xbf16>
    tpu.vector_store %arg6[%c0_495, %c4288], %1192 {strides = array<i32>} : memref<8x7808xbf16, #tpu.memory_space<vmem>>, vector<8x64xbf16>,
    %c544_496 = arith.constant 544 : index
    %c0_497 = arith.constant 0 : index
    %1194 = vector.load %arg5[%c544_496, %c0_497] : memref<968x64xf32, #tpu.memory_space<vmem>>, vector<8x64xf32>
    %1195 = arith.mulf %1194, %509 : vector<8x64xf32>
    %1196 = arith.addf %1195, %511 : vector<8x64xf32>
    %cst_498 = arith.constant 0.000000e+00 : f32
    %1197 = vector.broadcast %cst_498 : f32 to vector<8x64xf32>
    %1198 = arith.cmpf ogt, %1196, %1197 : vector<8x64xf32>
    %cst_499 = arith.constant 2.000000e-01 : f32
    %1199 = vector.broadcast %cst_499 : f32 to vector<8x64xf32>
    %1200 = arith.mulf %1199, %1196 : vector<8x64xf32>
    %1201 = arith.select %1198, %1196, %1200 : vector<8x64xi1>, vector<8x64xf32>
    %1202 = arith.truncf %1201 : vector<8x64xf32> to vector<8x64xbf16>
    %c0_500 = arith.constant 0 : index
    %c4352 = arith.constant 4352 : index
    %1203 = vector.load %arg6[%c0_500, %c4352] : memref<8x7808xbf16, #tpu.memory_space<vmem>>, vector<8x64xbf16>
    tpu.vector_store %arg6[%c0_500, %c4352], %1202 {strides = array<i32>} : memref<8x7808xbf16, #tpu.memory_space<vmem>>, vector<8x64xbf16>,
    %c552_501 = arith.constant 552 : index
    %c0_502 = arith.constant 0 : index
    %1204 = vector.load %arg5[%c552_501, %c0_502] : memref<968x64xf32, #tpu.memory_space<vmem>>, vector<8x64xf32>
    %1205 = arith.mulf %1204, %509 : vector<8x64xf32>
    %1206 = arith.addf %1205, %511 : vector<8x64xf32>
    %cst_503 = arith.constant 0.000000e+00 : f32
    %1207 = vector.broadcast %cst_503 : f32 to vector<8x64xf32>
    %1208 = arith.cmpf ogt, %1206, %1207 : vector<8x64xf32>
    %cst_504 = arith.constant 2.000000e-01 : f32
    %1209 = vector.broadcast %cst_504 : f32 to vector<8x64xf32>
    %1210 = arith.mulf %1209, %1206 : vector<8x64xf32>
    %1211 = arith.select %1208, %1206, %1210 : vector<8x64xi1>, vector<8x64xf32>
    %1212 = arith.truncf %1211 : vector<8x64xf32> to vector<8x64xbf16>
    %c0_505 = arith.constant 0 : index
    %c4416 = arith.constant 4416 : index
    %1213 = vector.load %arg6[%c0_505, %c4416] : memref<8x7808xbf16, #tpu.memory_space<vmem>>, vector<8x64xbf16>
    tpu.vector_store %arg6[%c0_505, %c4416], %1212 {strides = array<i32>} : memref<8x7808xbf16, #tpu.memory_space<vmem>>, vector<8x64xbf16>,
    %c560_506 = arith.constant 560 : index
    %c0_507 = arith.constant 0 : index
    %1214 = vector.load %arg5[%c560_506, %c0_507] : memref<968x64xf32, #tpu.memory_space<vmem>>, vector<8x64xf32>
    %1215 = arith.mulf %1214, %509 : vector<8x64xf32>
    %1216 = arith.addf %1215, %511 : vector<8x64xf32>
    %cst_508 = arith.constant 0.000000e+00 : f32
    %1217 = vector.broadcast %cst_508 : f32 to vector<8x64xf32>
    %1218 = arith.cmpf ogt, %1216, %1217 : vector<8x64xf32>
    %cst_509 = arith.constant 2.000000e-01 : f32
    %1219 = vector.broadcast %cst_509 : f32 to vector<8x64xf32>
    %1220 = arith.mulf %1219, %1216 : vector<8x64xf32>
    %1221 = arith.select %1218, %1216, %1220 : vector<8x64xi1>, vector<8x64xf32>
    %1222 = arith.truncf %1221 : vector<8x64xf32> to vector<8x64xbf16>
    %c0_510 = arith.constant 0 : index
    %c4480 = arith.constant 4480 : index
    %1223 = vector.load %arg6[%c0_510, %c4480] : memref<8x7808xbf16, #tpu.memory_space<vmem>>, vector<8x64xbf16>
    tpu.vector_store %arg6[%c0_510, %c4480], %1222 {strides = array<i32>} : memref<8x7808xbf16, #tpu.memory_space<vmem>>, vector<8x64xbf16>,
    %c568_511 = arith.constant 568 : index
    %c0_512 = arith.constant 0 : index
    %1224 = vector.load %arg5[%c568_511, %c0_512] : memref<968x64xf32, #tpu.memory_space<vmem>>, vector<8x64xf32>
    %1225 = arith.mulf %1224, %509 : vector<8x64xf32>
    %1226 = arith.addf %1225, %511 : vector<8x64xf32>
    %cst_513 = arith.constant 0.000000e+00 : f32
    %1227 = vector.broadcast %cst_513 : f32 to vector<8x64xf32>
    %1228 = arith.cmpf ogt, %1226, %1227 : vector<8x64xf32>
    %cst_514 = arith.constant 2.000000e-01 : f32
    %1229 = vector.broadcast %cst_514 : f32 to vector<8x64xf32>
    %1230 = arith.mulf %1229, %1226 : vector<8x64xf32>
    %1231 = arith.select %1228, %1226, %1230 : vector<8x64xi1>, vector<8x64xf32>
    %1232 = arith.truncf %1231 : vector<8x64xf32> to vector<8x64xbf16>
    %c0_515 = arith.constant 0 : index
    %c4544 = arith.constant 4544 : index
    %1233 = vector.load %arg6[%c0_515, %c4544] : memref<8x7808xbf16, #tpu.memory_space<vmem>>, vector<8x64xbf16>
    tpu.vector_store %arg6[%c0_515, %c4544], %1232 {strides = array<i32>} : memref<8x7808xbf16, #tpu.memory_space<vmem>>, vector<8x64xbf16>,
    %c576_516 = arith.constant 576 : index
    %c0_517 = arith.constant 0 : index
    %1234 = vector.load %arg5[%c576_516, %c0_517] : memref<968x64xf32, #tpu.memory_space<vmem>>, vector<8x64xf32>
    %1235 = arith.mulf %1234, %509 : vector<8x64xf32>
    %1236 = arith.addf %1235, %511 : vector<8x64xf32>
    %cst_518 = arith.constant 0.000000e+00 : f32
    %1237 = vector.broadcast %cst_518 : f32 to vector<8x64xf32>
    %1238 = arith.cmpf ogt, %1236, %1237 : vector<8x64xf32>
    %cst_519 = arith.constant 2.000000e-01 : f32
    %1239 = vector.broadcast %cst_519 : f32 to vector<8x64xf32>
    %1240 = arith.mulf %1239, %1236 : vector<8x64xf32>
    %1241 = arith.select %1238, %1236, %1240 : vector<8x64xi1>, vector<8x64xf32>
    %1242 = arith.truncf %1241 : vector<8x64xf32> to vector<8x64xbf16>
    %c0_520 = arith.constant 0 : index
    %c4608 = arith.constant 4608 : index
    %1243 = vector.load %arg6[%c0_520, %c4608] : memref<8x7808xbf16, #tpu.memory_space<vmem>>, vector<8x64xbf16>
    tpu.vector_store %arg6[%c0_520, %c4608], %1242 {strides = array<i32>} : memref<8x7808xbf16, #tpu.memory_space<vmem>>, vector<8x64xbf16>,
    %c584_521 = arith.constant 584 : index
    %c0_522 = arith.constant 0 : index
    %1244 = vector.load %arg5[%c584_521, %c0_522] : memref<968x64xf32, #tpu.memory_space<vmem>>, vector<8x64xf32>
    %1245 = arith.mulf %1244, %509 : vector<8x64xf32>
    %1246 = arith.addf %1245, %511 : vector<8x64xf32>
    %cst_523 = arith.constant 0.000000e+00 : f32
    %1247 = vector.broadcast %cst_523 : f32 to vector<8x64xf32>
    %1248 = arith.cmpf ogt, %1246, %1247 : vector<8x64xf32>
    %cst_524 = arith.constant 2.000000e-01 : f32
    %1249 = vector.broadcast %cst_524 : f32 to vector<8x64xf32>
    %1250 = arith.mulf %1249, %1246 : vector<8x64xf32>
    %1251 = arith.select %1248, %1246, %1250 : vector<8x64xi1>, vector<8x64xf32>
    %1252 = arith.truncf %1251 : vector<8x64xf32> to vector<8x64xbf16>
    %c0_525 = arith.constant 0 : index
    %c4672 = arith.constant 4672 : index
    %1253 = vector.load %arg6[%c0_525, %c4672] : memref<8x7808xbf16, #tpu.memory_space<vmem>>, vector<8x64xbf16>
    tpu.vector_store %arg6[%c0_525, %c4672], %1252 {strides = array<i32>} : memref<8x7808xbf16, #tpu.memory_space<vmem>>, vector<8x64xbf16>,
    %c592_526 = arith.constant 592 : index
    %c0_527 = arith.constant 0 : index
    %1254 = vector.load %arg5[%c592_526, %c0_527] : memref<968x64xf32, #tpu.memory_space<vmem>>, vector<8x64xf32>
    %1255 = arith.mulf %1254, %509 : vector<8x64xf32>
    %1256 = arith.addf %1255, %511 : vector<8x64xf32>
    %cst_528 = arith.constant 0.000000e+00 : f32
    %1257 = vector.broadcast %cst_528 : f32 to vector<8x64xf32>
    %1258 = arith.cmpf ogt, %1256, %1257 : vector<8x64xf32>
    %cst_529 = arith.constant 2.000000e-01 : f32
    %1259 = vector.broadcast %cst_529 : f32 to vector<8x64xf32>
    %1260 = arith.mulf %1259, %1256 : vector<8x64xf32>
    %1261 = arith.select %1258, %1256, %1260 : vector<8x64xi1>, vector<8x64xf32>
    %1262 = arith.truncf %1261 : vector<8x64xf32> to vector<8x64xbf16>
    %c0_530 = arith.constant 0 : index
    %c4736 = arith.constant 4736 : index
    %1263 = vector.load %arg6[%c0_530, %c4736] : memref<8x7808xbf16, #tpu.memory_space<vmem>>, vector<8x64xbf16>
    tpu.vector_store %arg6[%c0_530, %c4736], %1262 {strides = array<i32>} : memref<8x7808xbf16, #tpu.memory_space<vmem>>, vector<8x64xbf16>,
    %c600_531 = arith.constant 600 : index
    %c0_532 = arith.constant 0 : index
    %1264 = vector.load %arg5[%c600_531, %c0_532] : memref<968x64xf32, #tpu.memory_space<vmem>>, vector<8x64xf32>
    %1265 = arith.mulf %1264, %509 : vector<8x64xf32>
    %1266 = arith.addf %1265, %511 : vector<8x64xf32>
    %cst_533 = arith.constant 0.000000e+00 : f32
    %1267 = vector.broadcast %cst_533 : f32 to vector<8x64xf32>
    %1268 = arith.cmpf ogt, %1266, %1267 : vector<8x64xf32>
    %cst_534 = arith.constant 2.000000e-01 : f32
    %1269 = vector.broadcast %cst_534 : f32 to vector<8x64xf32>
    %1270 = arith.mulf %1269, %1266 : vector<8x64xf32>
    %1271 = arith.select %1268, %1266, %1270 : vector<8x64xi1>, vector<8x64xf32>
    %1272 = arith.truncf %1271 : vector<8x64xf32> to vector<8x64xbf16>
    %c0_535 = arith.constant 0 : index
    %c4800 = arith.constant 4800 : index
    %1273 = vector.load %arg6[%c0_535, %c4800] : memref<8x7808xbf16, #tpu.memory_space<vmem>>, vector<8x64xbf16>
    tpu.vector_store %arg6[%c0_535, %c4800], %1272 {strides = array<i32>} : memref<8x7808xbf16, #tpu.memory_space<vmem>>, vector<8x64xbf16>,
    %c608_536 = arith.constant 608 : index
    %c0_537 = arith.constant 0 : index
    %1274 = vector.load %arg5[%c608_536, %c0_537] : memref<968x64xf32, #tpu.memory_space<vmem>>, vector<8x64xf32>
    %1275 = arith.mulf %1274, %509 : vector<8x64xf32>
    %1276 = arith.addf %1275, %511 : vector<8x64xf32>
    %cst_538 = arith.constant 0.000000e+00 : f32
    %1277 = vector.broadcast %cst_538 : f32 to vector<8x64xf32>
    %1278 = arith.cmpf ogt, %1276, %1277 : vector<8x64xf32>
    %cst_539 = arith.constant 2.000000e-01 : f32
    %1279 = vector.broadcast %cst_539 : f32 to vector<8x64xf32>
    %1280 = arith.mulf %1279, %1276 : vector<8x64xf32>
    %1281 = arith.select %1278, %1276, %1280 : vector<8x64xi1>, vector<8x64xf32>
    %1282 = arith.truncf %1281 : vector<8x64xf32> to vector<8x64xbf16>
    %c0_540 = arith.constant 0 : index
    %c4864 = arith.constant 4864 : index
    %1283 = vector.load %arg6[%c0_540, %c4864] : memref<8x7808xbf16, #tpu.memory_space<vmem>>, vector<8x64xbf16>
    tpu.vector_store %arg6[%c0_540, %c4864], %1282 {strides = array<i32>} : memref<8x7808xbf16, #tpu.memory_space<vmem>>, vector<8x64xbf16>,
    %c616_541 = arith.constant 616 : index
    %c0_542 = arith.constant 0 : index
    %1284 = vector.load %arg5[%c616_541, %c0_542] : memref<968x64xf32, #tpu.memory_space<vmem>>, vector<8x64xf32>
    %1285 = arith.mulf %1284, %509 : vector<8x64xf32>
    %1286 = arith.addf %1285, %511 : vector<8x64xf32>
    %cst_543 = arith.constant 0.000000e+00 : f32
    %1287 = vector.broadcast %cst_543 : f32 to vector<8x64xf32>
    %1288 = arith.cmpf ogt, %1286, %1287 : vector<8x64xf32>
    %cst_544 = arith.constant 2.000000e-01 : f32
    %1289 = vector.broadcast %cst_544 : f32 to vector<8x64xf32>
    %1290 = arith.mulf %1289, %1286 : vector<8x64xf32>
    %1291 = arith.select %1288, %1286, %1290 : vector<8x64xi1>, vector<8x64xf32>
    %1292 = arith.truncf %1291 : vector<8x64xf32> to vector<8x64xbf16>
    %c0_545 = arith.constant 0 : index
    %c4928 = arith.constant 4928 : index
    %1293 = vector.load %arg6[%c0_545, %c4928] : memref<8x7808xbf16, #tpu.memory_space<vmem>>, vector<8x64xbf16>
    tpu.vector_store %arg6[%c0_545, %c4928], %1292 {strides = array<i32>} : memref<8x7808xbf16, #tpu.memory_space<vmem>>, vector<8x64xbf16>,
    %c624_546 = arith.constant 624 : index
    %c0_547 = arith.constant 0 : index
    %1294 = vector.load %arg5[%c624_546, %c0_547] : memref<968x64xf32, #tpu.memory_space<vmem>>, vector<8x64xf32>
    %1295 = arith.mulf %1294, %509 : vector<8x64xf32>
    %1296 = arith.addf %1295, %511 : vector<8x64xf32>
    %cst_548 = arith.constant 0.000000e+00 : f32
    %1297 = vector.broadcast %cst_548 : f32 to vector<8x64xf32>
    %1298 = arith.cmpf ogt, %1296, %1297 : vector<8x64xf32>
    %cst_549 = arith.constant 2.000000e-01 : f32
    %1299 = vector.broadcast %cst_549 : f32 to vector<8x64xf32>
    %1300 = arith.mulf %1299, %1296 : vector<8x64xf32>
    %1301 = arith.select %1298, %1296, %1300 : vector<8x64xi1>, vector<8x64xf32>
    %1302 = arith.truncf %1301 : vector<8x64xf32> to vector<8x64xbf16>
    %c0_550 = arith.constant 0 : index
    %c4992 = arith.constant 4992 : index
    %1303 = vector.load %arg6[%c0_550, %c4992] : memref<8x7808xbf16, #tpu.memory_space<vmem>>, vector<8x64xbf16>
    tpu.vector_store %arg6[%c0_550, %c4992], %1302 {strides = array<i32>} : memref<8x7808xbf16, #tpu.memory_space<vmem>>, vector<8x64xbf16>,
    %c632_551 = arith.constant 632 : index
    %c0_552 = arith.constant 0 : index
    %1304 = vector.load %arg5[%c632_551, %c0_552] : memref<968x64xf32, #tpu.memory_space<vmem>>, vector<8x64xf32>
    %1305 = arith.mulf %1304, %509 : vector<8x64xf32>
    %1306 = arith.addf %1305, %511 : vector<8x64xf32>
    %cst_553 = arith.constant 0.000000e+00 : f32
    %1307 = vector.broadcast %cst_553 : f32 to vector<8x64xf32>
    %1308 = arith.cmpf ogt, %1306, %1307 : vector<8x64xf32>
    %cst_554 = arith.constant 2.000000e-01 : f32
    %1309 = vector.broadcast %cst_554 : f32 to vector<8x64xf32>
    %1310 = arith.mulf %1309, %1306 : vector<8x64xf32>
    %1311 = arith.select %1308, %1306, %1310 : vector<8x64xi1>, vector<8x64xf32>
    %1312 = arith.truncf %1311 : vector<8x64xf32> to vector<8x64xbf16>
    %c0_555 = arith.constant 0 : index
    %c5056 = arith.constant 5056 : index
    %1313 = vector.load %arg6[%c0_555, %c5056] : memref<8x7808xbf16, #tpu.memory_space<vmem>>, vector<8x64xbf16>
    tpu.vector_store %arg6[%c0_555, %c5056], %1312 {strides = array<i32>} : memref<8x7808xbf16, #tpu.memory_space<vmem>>, vector<8x64xbf16>,
    %c640_556 = arith.constant 640 : index
    %c0_557 = arith.constant 0 : index
    %1314 = vector.load %arg5[%c640_556, %c0_557] : memref<968x64xf32, #tpu.memory_space<vmem>>, vector<8x64xf32>
    %1315 = arith.mulf %1314, %509 : vector<8x64xf32>
    %1316 = arith.addf %1315, %511 : vector<8x64xf32>
    %cst_558 = arith.constant 0.000000e+00 : f32
    %1317 = vector.broadcast %cst_558 : f32 to vector<8x64xf32>
    %1318 = arith.cmpf ogt, %1316, %1317 : vector<8x64xf32>
    %cst_559 = arith.constant 2.000000e-01 : f32
    %1319 = vector.broadcast %cst_559 : f32 to vector<8x64xf32>
    %1320 = arith.mulf %1319, %1316 : vector<8x64xf32>
    %1321 = arith.select %1318, %1316, %1320 : vector<8x64xi1>, vector<8x64xf32>
    %1322 = arith.truncf %1321 : vector<8x64xf32> to vector<8x64xbf16>
    %c0_560 = arith.constant 0 : index
    %c5120 = arith.constant 5120 : index
    %1323 = vector.load %arg6[%c0_560, %c5120] : memref<8x7808xbf16, #tpu.memory_space<vmem>>, vector<8x64xbf16>
    tpu.vector_store %arg6[%c0_560, %c5120], %1322 {strides = array<i32>} : memref<8x7808xbf16, #tpu.memory_space<vmem>>, vector<8x64xbf16>,
    %c648_561 = arith.constant 648 : index
    %c0_562 = arith.constant 0 : index
    %1324 = vector.load %arg5[%c648_561, %c0_562] : memref<968x64xf32, #tpu.memory_space<vmem>>, vector<8x64xf32>
    %1325 = arith.mulf %1324, %509 : vector<8x64xf32>
    %1326 = arith.addf %1325, %511 : vector<8x64xf32>
    %cst_563 = arith.constant 0.000000e+00 : f32
    %1327 = vector.broadcast %cst_563 : f32 to vector<8x64xf32>
    %1328 = arith.cmpf ogt, %1326, %1327 : vector<8x64xf32>
    %cst_564 = arith.constant 2.000000e-01 : f32
    %1329 = vector.broadcast %cst_564 : f32 to vector<8x64xf32>
    %1330 = arith.mulf %1329, %1326 : vector<8x64xf32>
    %1331 = arith.select %1328, %1326, %1330 : vector<8x64xi1>, vector<8x64xf32>
    %1332 = arith.truncf %1331 : vector<8x64xf32> to vector<8x64xbf16>
    %c0_565 = arith.constant 0 : index
    %c5184 = arith.constant 5184 : index
    %1333 = vector.load %arg6[%c0_565, %c5184] : memref<8x7808xbf16, #tpu.memory_space<vmem>>, vector<8x64xbf16>
    tpu.vector_store %arg6[%c0_565, %c5184], %1332 {strides = array<i32>} : memref<8x7808xbf16, #tpu.memory_space<vmem>>, vector<8x64xbf16>,
    %c656_566 = arith.constant 656 : index
    %c0_567 = arith.constant 0 : index
    %1334 = vector.load %arg5[%c656_566, %c0_567] : memref<968x64xf32, #tpu.memory_space<vmem>>, vector<8x64xf32>
    %1335 = arith.mulf %1334, %509 : vector<8x64xf32>
    %1336 = arith.addf %1335, %511 : vector<8x64xf32>
    %cst_568 = arith.constant 0.000000e+00 : f32
    %1337 = vector.broadcast %cst_568 : f32 to vector<8x64xf32>
    %1338 = arith.cmpf ogt, %1336, %1337 : vector<8x64xf32>
    %cst_569 = arith.constant 2.000000e-01 : f32
    %1339 = vector.broadcast %cst_569 : f32 to vector<8x64xf32>
    %1340 = arith.mulf %1339, %1336 : vector<8x64xf32>
    %1341 = arith.select %1338, %1336, %1340 : vector<8x64xi1>, vector<8x64xf32>
    %1342 = arith.truncf %1341 : vector<8x64xf32> to vector<8x64xbf16>
    %c0_570 = arith.constant 0 : index
    %c5248 = arith.constant 5248 : index
    %1343 = vector.load %arg6[%c0_570, %c5248] : memref<8x7808xbf16, #tpu.memory_space<vmem>>, vector<8x64xbf16>
    tpu.vector_store %arg6[%c0_570, %c5248], %1342 {strides = array<i32>} : memref<8x7808xbf16, #tpu.memory_space<vmem>>, vector<8x64xbf16>,
    %c664_571 = arith.constant 664 : index
    %c0_572 = arith.constant 0 : index
    %1344 = vector.load %arg5[%c664_571, %c0_572] : memref<968x64xf32, #tpu.memory_space<vmem>>, vector<8x64xf32>
    %1345 = arith.mulf %1344, %509 : vector<8x64xf32>
    %1346 = arith.addf %1345, %511 : vector<8x64xf32>
    %cst_573 = arith.constant 0.000000e+00 : f32
    %1347 = vector.broadcast %cst_573 : f32 to vector<8x64xf32>
    %1348 = arith.cmpf ogt, %1346, %1347 : vector<8x64xf32>
    %cst_574 = arith.constant 2.000000e-01 : f32
    %1349 = vector.broadcast %cst_574 : f32 to vector<8x64xf32>
    %1350 = arith.mulf %1349, %1346 : vector<8x64xf32>
    %1351 = arith.select %1348, %1346, %1350 : vector<8x64xi1>, vector<8x64xf32>
    %1352 = arith.truncf %1351 : vector<8x64xf32> to vector<8x64xbf16>
    %c0_575 = arith.constant 0 : index
    %c5312 = arith.constant 5312 : index
    %1353 = vector.load %arg6[%c0_575, %c5312] : memref<8x7808xbf16, #tpu.memory_space<vmem>>, vector<8x64xbf16>
    tpu.vector_store %arg6[%c0_575, %c5312], %1352 {strides = array<i32>} : memref<8x7808xbf16, #tpu.memory_space<vmem>>, vector<8x64xbf16>,
    %c672_576 = arith.constant 672 : index
    %c0_577 = arith.constant 0 : index
    %1354 = vector.load %arg5[%c672_576, %c0_577] : memref<968x64xf32, #tpu.memory_space<vmem>>, vector<8x64xf32>
    %1355 = arith.mulf %1354, %509 : vector<8x64xf32>
    %1356 = arith.addf %1355, %511 : vector<8x64xf32>
    %cst_578 = arith.constant 0.000000e+00 : f32
    %1357 = vector.broadcast %cst_578 : f32 to vector<8x64xf32>
    %1358 = arith.cmpf ogt, %1356, %1357 : vector<8x64xf32>
    %cst_579 = arith.constant 2.000000e-01 : f32
    %1359 = vector.broadcast %cst_579 : f32 to vector<8x64xf32>
    %1360 = arith.mulf %1359, %1356 : vector<8x64xf32>
    %1361 = arith.select %1358, %1356, %1360 : vector<8x64xi1>, vector<8x64xf32>
    %1362 = arith.truncf %1361 : vector<8x64xf32> to vector<8x64xbf16>
    %c0_580 = arith.constant 0 : index
    %c5376 = arith.constant 5376 : index
    %1363 = vector.load %arg6[%c0_580, %c5376] : memref<8x7808xbf16, #tpu.memory_space<vmem>>, vector<8x64xbf16>
    tpu.vector_store %arg6[%c0_580, %c5376], %1362 {strides = array<i32>} : memref<8x7808xbf16, #tpu.memory_space<vmem>>, vector<8x64xbf16>,
    %c680_581 = arith.constant 680 : index
    %c0_582 = arith.constant 0 : index
    %1364 = vector.load %arg5[%c680_581, %c0_582] : memref<968x64xf32, #tpu.memory_space<vmem>>, vector<8x64xf32>
    %1365 = arith.mulf %1364, %509 : vector<8x64xf32>
    %1366 = arith.addf %1365, %511 : vector<8x64xf32>
    %cst_583 = arith.constant 0.000000e+00 : f32
    %1367 = vector.broadcast %cst_583 : f32 to vector<8x64xf32>
    %1368 = arith.cmpf ogt, %1366, %1367 : vector<8x64xf32>
    %cst_584 = arith.constant 2.000000e-01 : f32
    %1369 = vector.broadcast %cst_584 : f32 to vector<8x64xf32>
    %1370 = arith.mulf %1369, %1366 : vector<8x64xf32>
    %1371 = arith.select %1368, %1366, %1370 : vector<8x64xi1>, vector<8x64xf32>
    %1372 = arith.truncf %1371 : vector<8x64xf32> to vector<8x64xbf16>
    %c0_585 = arith.constant 0 : index
    %c5440 = arith.constant 5440 : index
    %1373 = vector.load %arg6[%c0_585, %c5440] : memref<8x7808xbf16, #tpu.memory_space<vmem>>, vector<8x64xbf16>
    tpu.vector_store %arg6[%c0_585, %c5440], %1372 {strides = array<i32>} : memref<8x7808xbf16, #tpu.memory_space<vmem>>, vector<8x64xbf16>,
    %c688_586 = arith.constant 688 : index
    %c0_587 = arith.constant 0 : index
    %1374 = vector.load %arg5[%c688_586, %c0_587] : memref<968x64xf32, #tpu.memory_space<vmem>>, vector<8x64xf32>
    %1375 = arith.mulf %1374, %509 : vector<8x64xf32>
    %1376 = arith.addf %1375, %511 : vector<8x64xf32>
    %cst_588 = arith.constant 0.000000e+00 : f32
    %1377 = vector.broadcast %cst_588 : f32 to vector<8x64xf32>
    %1378 = arith.cmpf ogt, %1376, %1377 : vector<8x64xf32>
    %cst_589 = arith.constant 2.000000e-01 : f32
    %1379 = vector.broadcast %cst_589 : f32 to vector<8x64xf32>
    %1380 = arith.mulf %1379, %1376 : vector<8x64xf32>
    %1381 = arith.select %1378, %1376, %1380 : vector<8x64xi1>, vector<8x64xf32>
    %1382 = arith.truncf %1381 : vector<8x64xf32> to vector<8x64xbf16>
    %c0_590 = arith.constant 0 : index
    %c5504 = arith.constant 5504 : index
    %1383 = vector.load %arg6[%c0_590, %c5504] : memref<8x7808xbf16, #tpu.memory_space<vmem>>, vector<8x64xbf16>
    tpu.vector_store %arg6[%c0_590, %c5504], %1382 {strides = array<i32>} : memref<8x7808xbf16, #tpu.memory_space<vmem>>, vector<8x64xbf16>,
    %c696_591 = arith.constant 696 : index
    %c0_592 = arith.constant 0 : index
    %1384 = vector.load %arg5[%c696_591, %c0_592] : memref<968x64xf32, #tpu.memory_space<vmem>>, vector<8x64xf32>
    %1385 = arith.mulf %1384, %509 : vector<8x64xf32>
    %1386 = arith.addf %1385, %511 : vector<8x64xf32>
    %cst_593 = arith.constant 0.000000e+00 : f32
    %1387 = vector.broadcast %cst_593 : f32 to vector<8x64xf32>
    %1388 = arith.cmpf ogt, %1386, %1387 : vector<8x64xf32>
    %cst_594 = arith.constant 2.000000e-01 : f32
    %1389 = vector.broadcast %cst_594 : f32 to vector<8x64xf32>
    %1390 = arith.mulf %1389, %1386 : vector<8x64xf32>
    %1391 = arith.select %1388, %1386, %1390 : vector<8x64xi1>, vector<8x64xf32>
    %1392 = arith.truncf %1391 : vector<8x64xf32> to vector<8x64xbf16>
    %c0_595 = arith.constant 0 : index
    %c5568 = arith.constant 5568 : index
    %1393 = vector.load %arg6[%c0_595, %c5568] : memref<8x7808xbf16, #tpu.memory_space<vmem>>, vector<8x64xbf16>
    tpu.vector_store %arg6[%c0_595, %c5568], %1392 {strides = array<i32>} : memref<8x7808xbf16, #tpu.memory_space<vmem>>, vector<8x64xbf16>,
    %c704_596 = arith.constant 704 : index
    %c0_597 = arith.constant 0 : index
    %1394 = vector.load %arg5[%c704_596, %c0_597] : memref<968x64xf32, #tpu.memory_space<vmem>>, vector<8x64xf32>
    %1395 = arith.mulf %1394, %509 : vector<8x64xf32>
    %1396 = arith.addf %1395, %511 : vector<8x64xf32>
    %cst_598 = arith.constant 0.000000e+00 : f32
    %1397 = vector.broadcast %cst_598 : f32 to vector<8x64xf32>
    %1398 = arith.cmpf ogt, %1396, %1397 : vector<8x64xf32>
    %cst_599 = arith.constant 2.000000e-01 : f32
    %1399 = vector.broadcast %cst_599 : f32 to vector<8x64xf32>
    %1400 = arith.mulf %1399, %1396 : vector<8x64xf32>
    %1401 = arith.select %1398, %1396, %1400 : vector<8x64xi1>, vector<8x64xf32>
    %1402 = arith.truncf %1401 : vector<8x64xf32> to vector<8x64xbf16>
    %c0_600 = arith.constant 0 : index
    %c5632 = arith.constant 5632 : index
    %1403 = vector.load %arg6[%c0_600, %c5632] : memref<8x7808xbf16, #tpu.memory_space<vmem>>, vector<8x64xbf16>
    tpu.vector_store %arg6[%c0_600, %c5632], %1402 {strides = array<i32>} : memref<8x7808xbf16, #tpu.memory_space<vmem>>, vector<8x64xbf16>,
    %c712_601 = arith.constant 712 : index
    %c0_602 = arith.constant 0 : index
    %1404 = vector.load %arg5[%c712_601, %c0_602] : memref<968x64xf32, #tpu.memory_space<vmem>>, vector<8x64xf32>
    %1405 = arith.mulf %1404, %509 : vector<8x64xf32>
    %1406 = arith.addf %1405, %511 : vector<8x64xf32>
    %cst_603 = arith.constant 0.000000e+00 : f32
    %1407 = vector.broadcast %cst_603 : f32 to vector<8x64xf32>
    %1408 = arith.cmpf ogt, %1406, %1407 : vector<8x64xf32>
    %cst_604 = arith.constant 2.000000e-01 : f32
    %1409 = vector.broadcast %cst_604 : f32 to vector<8x64xf32>
    %1410 = arith.mulf %1409, %1406 : vector<8x64xf32>
    %1411 = arith.select %1408, %1406, %1410 : vector<8x64xi1>, vector<8x64xf32>
    %1412 = arith.truncf %1411 : vector<8x64xf32> to vector<8x64xbf16>
    %c0_605 = arith.constant 0 : index
    %c5696 = arith.constant 5696 : index
    %1413 = vector.load %arg6[%c0_605, %c5696] : memref<8x7808xbf16, #tpu.memory_space<vmem>>, vector<8x64xbf16>
    tpu.vector_store %arg6[%c0_605, %c5696], %1412 {strides = array<i32>} : memref<8x7808xbf16, #tpu.memory_space<vmem>>, vector<8x64xbf16>,
    %c720_606 = arith.constant 720 : index
    %c0_607 = arith.constant 0 : index
    %1414 = vector.load %arg5[%c720_606, %c0_607] : memref<968x64xf32, #tpu.memory_space<vmem>>, vector<8x64xf32>
    %1415 = arith.mulf %1414, %509 : vector<8x64xf32>
    %1416 = arith.addf %1415, %511 : vector<8x64xf32>
    %cst_608 = arith.constant 0.000000e+00 : f32
    %1417 = vector.broadcast %cst_608 : f32 to vector<8x64xf32>
    %1418 = arith.cmpf ogt, %1416, %1417 : vector<8x64xf32>
    %cst_609 = arith.constant 2.000000e-01 : f32
    %1419 = vector.broadcast %cst_609 : f32 to vector<8x64xf32>
    %1420 = arith.mulf %1419, %1416 : vector<8x64xf32>
    %1421 = arith.select %1418, %1416, %1420 : vector<8x64xi1>, vector<8x64xf32>
    %1422 = arith.truncf %1421 : vector<8x64xf32> to vector<8x64xbf16>
    %c0_610 = arith.constant 0 : index
    %c5760 = arith.constant 5760 : index
    %1423 = vector.load %arg6[%c0_610, %c5760] : memref<8x7808xbf16, #tpu.memory_space<vmem>>, vector<8x64xbf16>
    tpu.vector_store %arg6[%c0_610, %c5760], %1422 {strides = array<i32>} : memref<8x7808xbf16, #tpu.memory_space<vmem>>, vector<8x64xbf16>,
    %c728_611 = arith.constant 728 : index
    %c0_612 = arith.constant 0 : index
    %1424 = vector.load %arg5[%c728_611, %c0_612] : memref<968x64xf32, #tpu.memory_space<vmem>>, vector<8x64xf32>
    %1425 = arith.mulf %1424, %509 : vector<8x64xf32>
    %1426 = arith.addf %1425, %511 : vector<8x64xf32>
    %cst_613 = arith.constant 0.000000e+00 : f32
    %1427 = vector.broadcast %cst_613 : f32 to vector<8x64xf32>
    %1428 = arith.cmpf ogt, %1426, %1427 : vector<8x64xf32>
    %cst_614 = arith.constant 2.000000e-01 : f32
    %1429 = vector.broadcast %cst_614 : f32 to vector<8x64xf32>
    %1430 = arith.mulf %1429, %1426 : vector<8x64xf32>
    %1431 = arith.select %1428, %1426, %1430 : vector<8x64xi1>, vector<8x64xf32>
    %1432 = arith.truncf %1431 : vector<8x64xf32> to vector<8x64xbf16>
    %c0_615 = arith.constant 0 : index
    %c5824 = arith.constant 5824 : index
    %1433 = vector.load %arg6[%c0_615, %c5824] : memref<8x7808xbf16, #tpu.memory_space<vmem>>, vector<8x64xbf16>
    tpu.vector_store %arg6[%c0_615, %c5824], %1432 {strides = array<i32>} : memref<8x7808xbf16, #tpu.memory_space<vmem>>, vector<8x64xbf16>,
    %c736_616 = arith.constant 736 : index
    %c0_617 = arith.constant 0 : index
    %1434 = vector.load %arg5[%c736_616, %c0_617] : memref<968x64xf32, #tpu.memory_space<vmem>>, vector<8x64xf32>
    %1435 = arith.mulf %1434, %509 : vector<8x64xf32>
    %1436 = arith.addf %1435, %511 : vector<8x64xf32>
    %cst_618 = arith.constant 0.000000e+00 : f32
    %1437 = vector.broadcast %cst_618 : f32 to vector<8x64xf32>
    %1438 = arith.cmpf ogt, %1436, %1437 : vector<8x64xf32>
    %cst_619 = arith.constant 2.000000e-01 : f32
    %1439 = vector.broadcast %cst_619 : f32 to vector<8x64xf32>
    %1440 = arith.mulf %1439, %1436 : vector<8x64xf32>
    %1441 = arith.select %1438, %1436, %1440 : vector<8x64xi1>, vector<8x64xf32>
    %1442 = arith.truncf %1441 : vector<8x64xf32> to vector<8x64xbf16>
    %c0_620 = arith.constant 0 : index
    %c5888 = arith.constant 5888 : index
    %1443 = vector.load %arg6[%c0_620, %c5888] : memref<8x7808xbf16, #tpu.memory_space<vmem>>, vector<8x64xbf16>
    tpu.vector_store %arg6[%c0_620, %c5888], %1442 {strides = array<i32>} : memref<8x7808xbf16, #tpu.memory_space<vmem>>, vector<8x64xbf16>,
    %c744_621 = arith.constant 744 : index
    %c0_622 = arith.constant 0 : index
    %1444 = vector.load %arg5[%c744_621, %c0_622] : memref<968x64xf32, #tpu.memory_space<vmem>>, vector<8x64xf32>
    %1445 = arith.mulf %1444, %509 : vector<8x64xf32>
    %1446 = arith.addf %1445, %511 : vector<8x64xf32>
    %cst_623 = arith.constant 0.000000e+00 : f32
    %1447 = vector.broadcast %cst_623 : f32 to vector<8x64xf32>
    %1448 = arith.cmpf ogt, %1446, %1447 : vector<8x64xf32>
    %cst_624 = arith.constant 2.000000e-01 : f32
    %1449 = vector.broadcast %cst_624 : f32 to vector<8x64xf32>
    %1450 = arith.mulf %1449, %1446 : vector<8x64xf32>
    %1451 = arith.select %1448, %1446, %1450 : vector<8x64xi1>, vector<8x64xf32>
    %1452 = arith.truncf %1451 : vector<8x64xf32> to vector<8x64xbf16>
    %c0_625 = arith.constant 0 : index
    %c5952 = arith.constant 5952 : index
    %1453 = vector.load %arg6[%c0_625, %c5952] : memref<8x7808xbf16, #tpu.memory_space<vmem>>, vector<8x64xbf16>
    tpu.vector_store %arg6[%c0_625, %c5952], %1452 {strides = array<i32>} : memref<8x7808xbf16, #tpu.memory_space<vmem>>, vector<8x64xbf16>,
    %c752_626 = arith.constant 752 : index
    %c0_627 = arith.constant 0 : index
    %1454 = vector.load %arg5[%c752_626, %c0_627] : memref<968x64xf32, #tpu.memory_space<vmem>>, vector<8x64xf32>
    %1455 = arith.mulf %1454, %509 : vector<8x64xf32>
    %1456 = arith.addf %1455, %511 : vector<8x64xf32>
    %cst_628 = arith.constant 0.000000e+00 : f32
    %1457 = vector.broadcast %cst_628 : f32 to vector<8x64xf32>
    %1458 = arith.cmpf ogt, %1456, %1457 : vector<8x64xf32>
    %cst_629 = arith.constant 2.000000e-01 : f32
    %1459 = vector.broadcast %cst_629 : f32 to vector<8x64xf32>
    %1460 = arith.mulf %1459, %1456 : vector<8x64xf32>
    %1461 = arith.select %1458, %1456, %1460 : vector<8x64xi1>, vector<8x64xf32>
    %1462 = arith.truncf %1461 : vector<8x64xf32> to vector<8x64xbf16>
    %c0_630 = arith.constant 0 : index
    %c6016 = arith.constant 6016 : index
    %1463 = vector.load %arg6[%c0_630, %c6016] : memref<8x7808xbf16, #tpu.memory_space<vmem>>, vector<8x64xbf16>
    tpu.vector_store %arg6[%c0_630, %c6016], %1462 {strides = array<i32>} : memref<8x7808xbf16, #tpu.memory_space<vmem>>, vector<8x64xbf16>,
    %c760_631 = arith.constant 760 : index
    %c0_632 = arith.constant 0 : index
    %1464 = vector.load %arg5[%c760_631, %c0_632] : memref<968x64xf32, #tpu.memory_space<vmem>>, vector<8x64xf32>
    %1465 = arith.mulf %1464, %509 : vector<8x64xf32>
    %1466 = arith.addf %1465, %511 : vector<8x64xf32>
    %cst_633 = arith.constant 0.000000e+00 : f32
    %1467 = vector.broadcast %cst_633 : f32 to vector<8x64xf32>
    %1468 = arith.cmpf ogt, %1466, %1467 : vector<8x64xf32>
    %cst_634 = arith.constant 2.000000e-01 : f32
    %1469 = vector.broadcast %cst_634 : f32 to vector<8x64xf32>
    %1470 = arith.mulf %1469, %1466 : vector<8x64xf32>
    %1471 = arith.select %1468, %1466, %1470 : vector<8x64xi1>, vector<8x64xf32>
    %1472 = arith.truncf %1471 : vector<8x64xf32> to vector<8x64xbf16>
    %c0_635 = arith.constant 0 : index
    %c6080 = arith.constant 6080 : index
    %1473 = vector.load %arg6[%c0_635, %c6080] : memref<8x7808xbf16, #tpu.memory_space<vmem>>, vector<8x64xbf16>
    tpu.vector_store %arg6[%c0_635, %c6080], %1472 {strides = array<i32>} : memref<8x7808xbf16, #tpu.memory_space<vmem>>, vector<8x64xbf16>,
    %c768_636 = arith.constant 768 : index
    %c0_637 = arith.constant 0 : index
    %1474 = vector.load %arg5[%c768_636, %c0_637] : memref<968x64xf32, #tpu.memory_space<vmem>>, vector<8x64xf32>
    %1475 = arith.mulf %1474, %509 : vector<8x64xf32>
    %1476 = arith.addf %1475, %511 : vector<8x64xf32>
    %cst_638 = arith.constant 0.000000e+00 : f32
    %1477 = vector.broadcast %cst_638 : f32 to vector<8x64xf32>
    %1478 = arith.cmpf ogt, %1476, %1477 : vector<8x64xf32>
    %cst_639 = arith.constant 2.000000e-01 : f32
    %1479 = vector.broadcast %cst_639 : f32 to vector<8x64xf32>
    %1480 = arith.mulf %1479, %1476 : vector<8x64xf32>
    %1481 = arith.select %1478, %1476, %1480 : vector<8x64xi1>, vector<8x64xf32>
    %1482 = arith.truncf %1481 : vector<8x64xf32> to vector<8x64xbf16>
    %c0_640 = arith.constant 0 : index
    %c6144 = arith.constant 6144 : index
    %1483 = vector.load %arg6[%c0_640, %c6144] : memref<8x7808xbf16, #tpu.memory_space<vmem>>, vector<8x64xbf16>
    tpu.vector_store %arg6[%c0_640, %c6144], %1482 {strides = array<i32>} : memref<8x7808xbf16, #tpu.memory_space<vmem>>, vector<8x64xbf16>,
    %c776_641 = arith.constant 776 : index
    %c0_642 = arith.constant 0 : index
    %1484 = vector.load %arg5[%c776_641, %c0_642] : memref<968x64xf32, #tpu.memory_space<vmem>>, vector<8x64xf32>
    %1485 = arith.mulf %1484, %509 : vector<8x64xf32>
    %1486 = arith.addf %1485, %511 : vector<8x64xf32>
    %cst_643 = arith.constant 0.000000e+00 : f32
    %1487 = vector.broadcast %cst_643 : f32 to vector<8x64xf32>
    %1488 = arith.cmpf ogt, %1486, %1487 : vector<8x64xf32>
    %cst_644 = arith.constant 2.000000e-01 : f32
    %1489 = vector.broadcast %cst_644 : f32 to vector<8x64xf32>
    %1490 = arith.mulf %1489, %1486 : vector<8x64xf32>
    %1491 = arith.select %1488, %1486, %1490 : vector<8x64xi1>, vector<8x64xf32>
    %1492 = arith.truncf %1491 : vector<8x64xf32> to vector<8x64xbf16>
    %c0_645 = arith.constant 0 : index
    %c6208 = arith.constant 6208 : index
    %1493 = vector.load %arg6[%c0_645, %c6208] : memref<8x7808xbf16, #tpu.memory_space<vmem>>, vector<8x64xbf16>
    tpu.vector_store %arg6[%c0_645, %c6208], %1492 {strides = array<i32>} : memref<8x7808xbf16, #tpu.memory_space<vmem>>, vector<8x64xbf16>,
    %c784_646 = arith.constant 784 : index
    %c0_647 = arith.constant 0 : index
    %1494 = vector.load %arg5[%c784_646, %c0_647] : memref<968x64xf32, #tpu.memory_space<vmem>>, vector<8x64xf32>
    %1495 = arith.mulf %1494, %509 : vector<8x64xf32>
    %1496 = arith.addf %1495, %511 : vector<8x64xf32>
    %cst_648 = arith.constant 0.000000e+00 : f32
    %1497 = vector.broadcast %cst_648 : f32 to vector<8x64xf32>
    %1498 = arith.cmpf ogt, %1496, %1497 : vector<8x64xf32>
    %cst_649 = arith.constant 2.000000e-01 : f32
    %1499 = vector.broadcast %cst_649 : f32 to vector<8x64xf32>
    %1500 = arith.mulf %1499, %1496 : vector<8x64xf32>
    %1501 = arith.select %1498, %1496, %1500 : vector<8x64xi1>, vector<8x64xf32>
    %1502 = arith.truncf %1501 : vector<8x64xf32> to vector<8x64xbf16>
    %c0_650 = arith.constant 0 : index
    %c6272 = arith.constant 6272 : index
    %1503 = vector.load %arg6[%c0_650, %c6272] : memref<8x7808xbf16, #tpu.memory_space<vmem>>, vector<8x64xbf16>
    tpu.vector_store %arg6[%c0_650, %c6272], %1502 {strides = array<i32>} : memref<8x7808xbf16, #tpu.memory_space<vmem>>, vector<8x64xbf16>,
    %c792_651 = arith.constant 792 : index
    %c0_652 = arith.constant 0 : index
    %1504 = vector.load %arg5[%c792_651, %c0_652] : memref<968x64xf32, #tpu.memory_space<vmem>>, vector<8x64xf32>
    %1505 = arith.mulf %1504, %509 : vector<8x64xf32>
    %1506 = arith.addf %1505, %511 : vector<8x64xf32>
    %cst_653 = arith.constant 0.000000e+00 : f32
    %1507 = vector.broadcast %cst_653 : f32 to vector<8x64xf32>
    %1508 = arith.cmpf ogt, %1506, %1507 : vector<8x64xf32>
    %cst_654 = arith.constant 2.000000e-01 : f32
    %1509 = vector.broadcast %cst_654 : f32 to vector<8x64xf32>
    %1510 = arith.mulf %1509, %1506 : vector<8x64xf32>
    %1511 = arith.select %1508, %1506, %1510 : vector<8x64xi1>, vector<8x64xf32>
    %1512 = arith.truncf %1511 : vector<8x64xf32> to vector<8x64xbf16>
    %c0_655 = arith.constant 0 : index
    %c6336 = arith.constant 6336 : index
    %1513 = vector.load %arg6[%c0_655, %c6336] : memref<8x7808xbf16, #tpu.memory_space<vmem>>, vector<8x64xbf16>
    tpu.vector_store %arg6[%c0_655, %c6336], %1512 {strides = array<i32>} : memref<8x7808xbf16, #tpu.memory_space<vmem>>, vector<8x64xbf16>,
    %c800_656 = arith.constant 800 : index
    %c0_657 = arith.constant 0 : index
    %1514 = vector.load %arg5[%c800_656, %c0_657] : memref<968x64xf32, #tpu.memory_space<vmem>>, vector<8x64xf32>
    %1515 = arith.mulf %1514, %509 : vector<8x64xf32>
    %1516 = arith.addf %1515, %511 : vector<8x64xf32>
    %cst_658 = arith.constant 0.000000e+00 : f32
    %1517 = vector.broadcast %cst_658 : f32 to vector<8x64xf32>
    %1518 = arith.cmpf ogt, %1516, %1517 : vector<8x64xf32>
    %cst_659 = arith.constant 2.000000e-01 : f32
    %1519 = vector.broadcast %cst_659 : f32 to vector<8x64xf32>
    %1520 = arith.mulf %1519, %1516 : vector<8x64xf32>
    %1521 = arith.select %1518, %1516, %1520 : vector<8x64xi1>, vector<8x64xf32>
    %1522 = arith.truncf %1521 : vector<8x64xf32> to vector<8x64xbf16>
    %c0_660 = arith.constant 0 : index
    %c6400 = arith.constant 6400 : index
    %1523 = vector.load %arg6[%c0_660, %c6400] : memref<8x7808xbf16, #tpu.memory_space<vmem>>, vector<8x64xbf16>
    tpu.vector_store %arg6[%c0_660, %c6400], %1522 {strides = array<i32>} : memref<8x7808xbf16, #tpu.memory_space<vmem>>, vector<8x64xbf16>,
    %c808_661 = arith.constant 808 : index
    %c0_662 = arith.constant 0 : index
    %1524 = vector.load %arg5[%c808_661, %c0_662] : memref<968x64xf32, #tpu.memory_space<vmem>>, vector<8x64xf32>
    %1525 = arith.mulf %1524, %509 : vector<8x64xf32>
    %1526 = arith.addf %1525, %511 : vector<8x64xf32>
    %cst_663 = arith.constant 0.000000e+00 : f32
    %1527 = vector.broadcast %cst_663 : f32 to vector<8x64xf32>
    %1528 = arith.cmpf ogt, %1526, %1527 : vector<8x64xf32>
    %cst_664 = arith.constant 2.000000e-01 : f32
    %1529 = vector.broadcast %cst_664 : f32 to vector<8x64xf32>
    %1530 = arith.mulf %1529, %1526 : vector<8x64xf32>
    %1531 = arith.select %1528, %1526, %1530 : vector<8x64xi1>, vector<8x64xf32>
    %1532 = arith.truncf %1531 : vector<8x64xf32> to vector<8x64xbf16>
    %c0_665 = arith.constant 0 : index
    %c6464 = arith.constant 6464 : index
    %1533 = vector.load %arg6[%c0_665, %c6464] : memref<8x7808xbf16, #tpu.memory_space<vmem>>, vector<8x64xbf16>
    tpu.vector_store %arg6[%c0_665, %c6464], %1532 {strides = array<i32>} : memref<8x7808xbf16, #tpu.memory_space<vmem>>, vector<8x64xbf16>,
    %c816_666 = arith.constant 816 : index
    %c0_667 = arith.constant 0 : index
    %1534 = vector.load %arg5[%c816_666, %c0_667] : memref<968x64xf32, #tpu.memory_space<vmem>>, vector<8x64xf32>
    %1535 = arith.mulf %1534, %509 : vector<8x64xf32>
    %1536 = arith.addf %1535, %511 : vector<8x64xf32>
    %cst_668 = arith.constant 0.000000e+00 : f32
    %1537 = vector.broadcast %cst_668 : f32 to vector<8x64xf32>
    %1538 = arith.cmpf ogt, %1536, %1537 : vector<8x64xf32>
    %cst_669 = arith.constant 2.000000e-01 : f32
    %1539 = vector.broadcast %cst_669 : f32 to vector<8x64xf32>
    %1540 = arith.mulf %1539, %1536 : vector<8x64xf32>
    %1541 = arith.select %1538, %1536, %1540 : vector<8x64xi1>, vector<8x64xf32>
    %1542 = arith.truncf %1541 : vector<8x64xf32> to vector<8x64xbf16>
    %c0_670 = arith.constant 0 : index
    %c6528 = arith.constant 6528 : index
    %1543 = vector.load %arg6[%c0_670, %c6528] : memref<8x7808xbf16, #tpu.memory_space<vmem>>, vector<8x64xbf16>
    tpu.vector_store %arg6[%c0_670, %c6528], %1542 {strides = array<i32>} : memref<8x7808xbf16, #tpu.memory_space<vmem>>, vector<8x64xbf16>,
    %c824_671 = arith.constant 824 : index
    %c0_672 = arith.constant 0 : index
    %1544 = vector.load %arg5[%c824_671, %c0_672] : memref<968x64xf32, #tpu.memory_space<vmem>>, vector<8x64xf32>
    %1545 = arith.mulf %1544, %509 : vector<8x64xf32>
    %1546 = arith.addf %1545, %511 : vector<8x64xf32>
    %cst_673 = arith.constant 0.000000e+00 : f32
    %1547 = vector.broadcast %cst_673 : f32 to vector<8x64xf32>
    %1548 = arith.cmpf ogt, %1546, %1547 : vector<8x64xf32>
    %cst_674 = arith.constant 2.000000e-01 : f32
    %1549 = vector.broadcast %cst_674 : f32 to vector<8x64xf32>
    %1550 = arith.mulf %1549, %1546 : vector<8x64xf32>
    %1551 = arith.select %1548, %1546, %1550 : vector<8x64xi1>, vector<8x64xf32>
    %1552 = arith.truncf %1551 : vector<8x64xf32> to vector<8x64xbf16>
    %c0_675 = arith.constant 0 : index
    %c6592 = arith.constant 6592 : index
    %1553 = vector.load %arg6[%c0_675, %c6592] : memref<8x7808xbf16, #tpu.memory_space<vmem>>, vector<8x64xbf16>
    tpu.vector_store %arg6[%c0_675, %c6592], %1552 {strides = array<i32>} : memref<8x7808xbf16, #tpu.memory_space<vmem>>, vector<8x64xbf16>,
    %c832_676 = arith.constant 832 : index
    %c0_677 = arith.constant 0 : index
    %1554 = vector.load %arg5[%c832_676, %c0_677] : memref<968x64xf32, #tpu.memory_space<vmem>>, vector<8x64xf32>
    %1555 = arith.mulf %1554, %509 : vector<8x64xf32>
    %1556 = arith.addf %1555, %511 : vector<8x64xf32>
    %cst_678 = arith.constant 0.000000e+00 : f32
    %1557 = vector.broadcast %cst_678 : f32 to vector<8x64xf32>
    %1558 = arith.cmpf ogt, %1556, %1557 : vector<8x64xf32>
    %cst_679 = arith.constant 2.000000e-01 : f32
    %1559 = vector.broadcast %cst_679 : f32 to vector<8x64xf32>
    %1560 = arith.mulf %1559, %1556 : vector<8x64xf32>
    %1561 = arith.select %1558, %1556, %1560 : vector<8x64xi1>, vector<8x64xf32>
    %1562 = arith.truncf %1561 : vector<8x64xf32> to vector<8x64xbf16>
    %c0_680 = arith.constant 0 : index
    %c6656 = arith.constant 6656 : index
    %1563 = vector.load %arg6[%c0_680, %c6656] : memref<8x7808xbf16, #tpu.memory_space<vmem>>, vector<8x64xbf16>
    tpu.vector_store %arg6[%c0_680, %c6656], %1562 {strides = array<i32>} : memref<8x7808xbf16, #tpu.memory_space<vmem>>, vector<8x64xbf16>,
    %c840_681 = arith.constant 840 : index
    %c0_682 = arith.constant 0 : index
    %1564 = vector.load %arg5[%c840_681, %c0_682] : memref<968x64xf32, #tpu.memory_space<vmem>>, vector<8x64xf32>
    %1565 = arith.mulf %1564, %509 : vector<8x64xf32>
    %1566 = arith.addf %1565, %511 : vector<8x64xf32>
    %cst_683 = arith.constant 0.000000e+00 : f32
    %1567 = vector.broadcast %cst_683 : f32 to vector<8x64xf32>
    %1568 = arith.cmpf ogt, %1566, %1567 : vector<8x64xf32>
    %cst_684 = arith.constant 2.000000e-01 : f32
    %1569 = vector.broadcast %cst_684 : f32 to vector<8x64xf32>
    %1570 = arith.mulf %1569, %1566 : vector<8x64xf32>
    %1571 = arith.select %1568, %1566, %1570 : vector<8x64xi1>, vector<8x64xf32>
    %1572 = arith.truncf %1571 : vector<8x64xf32> to vector<8x64xbf16>
    %c0_685 = arith.constant 0 : index
    %c6720 = arith.constant 6720 : index
    %1573 = vector.load %arg6[%c0_685, %c6720] : memref<8x7808xbf16, #tpu.memory_space<vmem>>, vector<8x64xbf16>
    tpu.vector_store %arg6[%c0_685, %c6720], %1572 {strides = array<i32>} : memref<8x7808xbf16, #tpu.memory_space<vmem>>, vector<8x64xbf16>,
    %c848_686 = arith.constant 848 : index
    %c0_687 = arith.constant 0 : index
    %1574 = vector.load %arg5[%c848_686, %c0_687] : memref<968x64xf32, #tpu.memory_space<vmem>>, vector<8x64xf32>
    %1575 = arith.mulf %1574, %509 : vector<8x64xf32>
    %1576 = arith.addf %1575, %511 : vector<8x64xf32>
    %cst_688 = arith.constant 0.000000e+00 : f32
    %1577 = vector.broadcast %cst_688 : f32 to vector<8x64xf32>
    %1578 = arith.cmpf ogt, %1576, %1577 : vector<8x64xf32>
    %cst_689 = arith.constant 2.000000e-01 : f32
    %1579 = vector.broadcast %cst_689 : f32 to vector<8x64xf32>
    %1580 = arith.mulf %1579, %1576 : vector<8x64xf32>
    %1581 = arith.select %1578, %1576, %1580 : vector<8x64xi1>, vector<8x64xf32>
    %1582 = arith.truncf %1581 : vector<8x64xf32> to vector<8x64xbf16>
    %c0_690 = arith.constant 0 : index
    %c6784 = arith.constant 6784 : index
    %1583 = vector.load %arg6[%c0_690, %c6784] : memref<8x7808xbf16, #tpu.memory_space<vmem>>, vector<8x64xbf16>
    tpu.vector_store %arg6[%c0_690, %c6784], %1582 {strides = array<i32>} : memref<8x7808xbf16, #tpu.memory_space<vmem>>, vector<8x64xbf16>,
    %c856_691 = arith.constant 856 : index
    %c0_692 = arith.constant 0 : index
    %1584 = vector.load %arg5[%c856_691, %c0_692] : memref<968x64xf32, #tpu.memory_space<vmem>>, vector<8x64xf32>
    %1585 = arith.mulf %1584, %509 : vector<8x64xf32>
    %1586 = arith.addf %1585, %511 : vector<8x64xf32>
    %cst_693 = arith.constant 0.000000e+00 : f32
    %1587 = vector.broadcast %cst_693 : f32 to vector<8x64xf32>
    %1588 = arith.cmpf ogt, %1586, %1587 : vector<8x64xf32>
    %cst_694 = arith.constant 2.000000e-01 : f32
    %1589 = vector.broadcast %cst_694 : f32 to vector<8x64xf32>
    %1590 = arith.mulf %1589, %1586 : vector<8x64xf32>
    %1591 = arith.select %1588, %1586, %1590 : vector<8x64xi1>, vector<8x64xf32>
    %1592 = arith.truncf %1591 : vector<8x64xf32> to vector<8x64xbf16>
    %c0_695 = arith.constant 0 : index
    %c6848 = arith.constant 6848 : index
    %1593 = vector.load %arg6[%c0_695, %c6848] : memref<8x7808xbf16, #tpu.memory_space<vmem>>, vector<8x64xbf16>
    tpu.vector_store %arg6[%c0_695, %c6848], %1592 {strides = array<i32>} : memref<8x7808xbf16, #tpu.memory_space<vmem>>, vector<8x64xbf16>,
    %c864_696 = arith.constant 864 : index
    %c0_697 = arith.constant 0 : index
    %1594 = vector.load %arg5[%c864_696, %c0_697] : memref<968x64xf32, #tpu.memory_space<vmem>>, vector<8x64xf32>
    %1595 = arith.mulf %1594, %509 : vector<8x64xf32>
    %1596 = arith.addf %1595, %511 : vector<8x64xf32>
    %cst_698 = arith.constant 0.000000e+00 : f32
    %1597 = vector.broadcast %cst_698 : f32 to vector<8x64xf32>
    %1598 = arith.cmpf ogt, %1596, %1597 : vector<8x64xf32>
    %cst_699 = arith.constant 2.000000e-01 : f32
    %1599 = vector.broadcast %cst_699 : f32 to vector<8x64xf32>
    %1600 = arith.mulf %1599, %1596 : vector<8x64xf32>
    %1601 = arith.select %1598, %1596, %1600 : vector<8x64xi1>, vector<8x64xf32>
    %1602 = arith.truncf %1601 : vector<8x64xf32> to vector<8x64xbf16>
    %c0_700 = arith.constant 0 : index
    %c6912 = arith.constant 6912 : index
    %1603 = vector.load %arg6[%c0_700, %c6912] : memref<8x7808xbf16, #tpu.memory_space<vmem>>, vector<8x64xbf16>
    tpu.vector_store %arg6[%c0_700, %c6912], %1602 {strides = array<i32>} : memref<8x7808xbf16, #tpu.memory_space<vmem>>, vector<8x64xbf16>,
    %c872_701 = arith.constant 872 : index
    %c0_702 = arith.constant 0 : index
    %1604 = vector.load %arg5[%c872_701, %c0_702] : memref<968x64xf32, #tpu.memory_space<vmem>>, vector<8x64xf32>
    %1605 = arith.mulf %1604, %509 : vector<8x64xf32>
    %1606 = arith.addf %1605, %511 : vector<8x64xf32>
    %cst_703 = arith.constant 0.000000e+00 : f32
    %1607 = vector.broadcast %cst_703 : f32 to vector<8x64xf32>
    %1608 = arith.cmpf ogt, %1606, %1607 : vector<8x64xf32>
    %cst_704 = arith.constant 2.000000e-01 : f32
    %1609 = vector.broadcast %cst_704 : f32 to vector<8x64xf32>
    %1610 = arith.mulf %1609, %1606 : vector<8x64xf32>
    %1611 = arith.select %1608, %1606, %1610 : vector<8x64xi1>, vector<8x64xf32>
    %1612 = arith.truncf %1611 : vector<8x64xf32> to vector<8x64xbf16>
    %c0_705 = arith.constant 0 : index
    %c6976 = arith.constant 6976 : index
    %1613 = vector.load %arg6[%c0_705, %c6976] : memref<8x7808xbf16, #tpu.memory_space<vmem>>, vector<8x64xbf16>
    tpu.vector_store %arg6[%c0_705, %c6976], %1612 {strides = array<i32>} : memref<8x7808xbf16, #tpu.memory_space<vmem>>, vector<8x64xbf16>,
    %c880_706 = arith.constant 880 : index
    %c0_707 = arith.constant 0 : index
    %1614 = vector.load %arg5[%c880_706, %c0_707] : memref<968x64xf32, #tpu.memory_space<vmem>>, vector<8x64xf32>
    %1615 = arith.mulf %1614, %509 : vector<8x64xf32>
    %1616 = arith.addf %1615, %511 : vector<8x64xf32>
    %cst_708 = arith.constant 0.000000e+00 : f32
    %1617 = vector.broadcast %cst_708 : f32 to vector<8x64xf32>
    %1618 = arith.cmpf ogt, %1616, %1617 : vector<8x64xf32>
    %cst_709 = arith.constant 2.000000e-01 : f32
    %1619 = vector.broadcast %cst_709 : f32 to vector<8x64xf32>
    %1620 = arith.mulf %1619, %1616 : vector<8x64xf32>
    %1621 = arith.select %1618, %1616, %1620 : vector<8x64xi1>, vector<8x64xf32>
    %1622 = arith.truncf %1621 : vector<8x64xf32> to vector<8x64xbf16>
    %c0_710 = arith.constant 0 : index
    %c7040 = arith.constant 7040 : index
    %1623 = vector.load %arg6[%c0_710, %c7040] : memref<8x7808xbf16, #tpu.memory_space<vmem>>, vector<8x64xbf16>
    tpu.vector_store %arg6[%c0_710, %c7040], %1622 {strides = array<i32>} : memref<8x7808xbf16, #tpu.memory_space<vmem>>, vector<8x64xbf16>,
    %c888_711 = arith.constant 888 : index
    %c0_712 = arith.constant 0 : index
    %1624 = vector.load %arg5[%c888_711, %c0_712] : memref<968x64xf32, #tpu.memory_space<vmem>>, vector<8x64xf32>
    %1625 = arith.mulf %1624, %509 : vector<8x64xf32>
    %1626 = arith.addf %1625, %511 : vector<8x64xf32>
    %cst_713 = arith.constant 0.000000e+00 : f32
    %1627 = vector.broadcast %cst_713 : f32 to vector<8x64xf32>
    %1628 = arith.cmpf ogt, %1626, %1627 : vector<8x64xf32>
    %cst_714 = arith.constant 2.000000e-01 : f32
    %1629 = vector.broadcast %cst_714 : f32 to vector<8x64xf32>
    %1630 = arith.mulf %1629, %1626 : vector<8x64xf32>
    %1631 = arith.select %1628, %1626, %1630 : vector<8x64xi1>, vector<8x64xf32>
    %1632 = arith.truncf %1631 : vector<8x64xf32> to vector<8x64xbf16>
    %c0_715 = arith.constant 0 : index
    %c7104 = arith.constant 7104 : index
    %1633 = vector.load %arg6[%c0_715, %c7104] : memref<8x7808xbf16, #tpu.memory_space<vmem>>, vector<8x64xbf16>
    tpu.vector_store %arg6[%c0_715, %c7104], %1632 {strides = array<i32>} : memref<8x7808xbf16, #tpu.memory_space<vmem>>, vector<8x64xbf16>,
    %c896_716 = arith.constant 896 : index
    %c0_717 = arith.constant 0 : index
    %1634 = vector.load %arg5[%c896_716, %c0_717] : memref<968x64xf32, #tpu.memory_space<vmem>>, vector<8x64xf32>
    %1635 = arith.mulf %1634, %509 : vector<8x64xf32>
    %1636 = arith.addf %1635, %511 : vector<8x64xf32>
    %cst_718 = arith.constant 0.000000e+00 : f32
    %1637 = vector.broadcast %cst_718 : f32 to vector<8x64xf32>
    %1638 = arith.cmpf ogt, %1636, %1637 : vector<8x64xf32>
    %cst_719 = arith.constant 2.000000e-01 : f32
    %1639 = vector.broadcast %cst_719 : f32 to vector<8x64xf32>
    %1640 = arith.mulf %1639, %1636 : vector<8x64xf32>
    %1641 = arith.select %1638, %1636, %1640 : vector<8x64xi1>, vector<8x64xf32>
    %1642 = arith.truncf %1641 : vector<8x64xf32> to vector<8x64xbf16>
    %c0_720 = arith.constant 0 : index
    %c7168 = arith.constant 7168 : index
    %1643 = vector.load %arg6[%c0_720, %c7168] : memref<8x7808xbf16, #tpu.memory_space<vmem>>, vector<8x64xbf16>
    tpu.vector_store %arg6[%c0_720, %c7168], %1642 {strides = array<i32>} : memref<8x7808xbf16, #tpu.memory_space<vmem>>, vector<8x64xbf16>,
    %c904_721 = arith.constant 904 : index
    %c0_722 = arith.constant 0 : index
    %1644 = vector.load %arg5[%c904_721, %c0_722] : memref<968x64xf32, #tpu.memory_space<vmem>>, vector<8x64xf32>
    %1645 = arith.mulf %1644, %509 : vector<8x64xf32>
    %1646 = arith.addf %1645, %511 : vector<8x64xf32>
    %cst_723 = arith.constant 0.000000e+00 : f32
    %1647 = vector.broadcast %cst_723 : f32 to vector<8x64xf32>
    %1648 = arith.cmpf ogt, %1646, %1647 : vector<8x64xf32>
    %cst_724 = arith.constant 2.000000e-01 : f32
    %1649 = vector.broadcast %cst_724 : f32 to vector<8x64xf32>
    %1650 = arith.mulf %1649, %1646 : vector<8x64xf32>
    %1651 = arith.select %1648, %1646, %1650 : vector<8x64xi1>, vector<8x64xf32>
    %1652 = arith.truncf %1651 : vector<8x64xf32> to vector<8x64xbf16>
    %c0_725 = arith.constant 0 : index
    %c7232 = arith.constant 7232 : index
    %1653 = vector.load %arg6[%c0_725, %c7232] : memref<8x7808xbf16, #tpu.memory_space<vmem>>, vector<8x64xbf16>
    tpu.vector_store %arg6[%c0_725, %c7232], %1652 {strides = array<i32>} : memref<8x7808xbf16, #tpu.memory_space<vmem>>, vector<8x64xbf16>,
    %c912_726 = arith.constant 912 : index
    %c0_727 = arith.constant 0 : index
    %1654 = vector.load %arg5[%c912_726, %c0_727] : memref<968x64xf32, #tpu.memory_space<vmem>>, vector<8x64xf32>
    %1655 = arith.mulf %1654, %509 : vector<8x64xf32>
    %1656 = arith.addf %1655, %511 : vector<8x64xf32>
    %cst_728 = arith.constant 0.000000e+00 : f32
    %1657 = vector.broadcast %cst_728 : f32 to vector<8x64xf32>
    %1658 = arith.cmpf ogt, %1656, %1657 : vector<8x64xf32>
    %cst_729 = arith.constant 2.000000e-01 : f32
    %1659 = vector.broadcast %cst_729 : f32 to vector<8x64xf32>
    %1660 = arith.mulf %1659, %1656 : vector<8x64xf32>
    %1661 = arith.select %1658, %1656, %1660 : vector<8x64xi1>, vector<8x64xf32>
    %1662 = arith.truncf %1661 : vector<8x64xf32> to vector<8x64xbf16>
    %c0_730 = arith.constant 0 : index
    %c7296 = arith.constant 7296 : index
    %1663 = vector.load %arg6[%c0_730, %c7296] : memref<8x7808xbf16, #tpu.memory_space<vmem>>, vector<8x64xbf16>
    tpu.vector_store %arg6[%c0_730, %c7296], %1662 {strides = array<i32>} : memref<8x7808xbf16, #tpu.memory_space<vmem>>, vector<8x64xbf16>,
    %c920_731 = arith.constant 920 : index
    %c0_732 = arith.constant 0 : index
    %1664 = vector.load %arg5[%c920_731, %c0_732] : memref<968x64xf32, #tpu.memory_space<vmem>>, vector<8x64xf32>
    %1665 = arith.mulf %1664, %509 : vector<8x64xf32>
    %1666 = arith.addf %1665, %511 : vector<8x64xf32>
    %cst_733 = arith.constant 0.000000e+00 : f32
    %1667 = vector.broadcast %cst_733 : f32 to vector<8x64xf32>
    %1668 = arith.cmpf ogt, %1666, %1667 : vector<8x64xf32>
    %cst_734 = arith.constant 2.000000e-01 : f32
    %1669 = vector.broadcast %cst_734 : f32 to vector<8x64xf32>
    %1670 = arith.mulf %1669, %1666 : vector<8x64xf32>
    %1671 = arith.select %1668, %1666, %1670 : vector<8x64xi1>, vector<8x64xf32>
    %1672 = arith.truncf %1671 : vector<8x64xf32> to vector<8x64xbf16>
    %c0_735 = arith.constant 0 : index
    %c7360 = arith.constant 7360 : index
    %1673 = vector.load %arg6[%c0_735, %c7360] : memref<8x7808xbf16, #tpu.memory_space<vmem>>, vector<8x64xbf16>
    tpu.vector_store %arg6[%c0_735, %c7360], %1672 {strides = array<i32>} : memref<8x7808xbf16, #tpu.memory_space<vmem>>, vector<8x64xbf16>,
    %c928_736 = arith.constant 928 : index
    %c0_737 = arith.constant 0 : index
    %1674 = vector.load %arg5[%c928_736, %c0_737] : memref<968x64xf32, #tpu.memory_space<vmem>>, vector<8x64xf32>
    %1675 = arith.mulf %1674, %509 : vector<8x64xf32>
    %1676 = arith.addf %1675, %511 : vector<8x64xf32>
    %cst_738 = arith.constant 0.000000e+00 : f32
    %1677 = vector.broadcast %cst_738 : f32 to vector<8x64xf32>
    %1678 = arith.cmpf ogt, %1676, %1677 : vector<8x64xf32>
    %cst_739 = arith.constant 2.000000e-01 : f32
    %1679 = vector.broadcast %cst_739 : f32 to vector<8x64xf32>
    %1680 = arith.mulf %1679, %1676 : vector<8x64xf32>
    %1681 = arith.select %1678, %1676, %1680 : vector<8x64xi1>, vector<8x64xf32>
    %1682 = arith.truncf %1681 : vector<8x64xf32> to vector<8x64xbf16>
    %c0_740 = arith.constant 0 : index
    %c7424 = arith.constant 7424 : index
    %1683 = vector.load %arg6[%c0_740, %c7424] : memref<8x7808xbf16, #tpu.memory_space<vmem>>, vector<8x64xbf16>
    tpu.vector_store %arg6[%c0_740, %c7424], %1682 {strides = array<i32>} : memref<8x7808xbf16, #tpu.memory_space<vmem>>, vector<8x64xbf16>,
    %c936_741 = arith.constant 936 : index
    %c0_742 = arith.constant 0 : index
    %1684 = vector.load %arg5[%c936_741, %c0_742] : memref<968x64xf32, #tpu.memory_space<vmem>>, vector<8x64xf32>
    %1685 = arith.mulf %1684, %509 : vector<8x64xf32>
    %1686 = arith.addf %1685, %511 : vector<8x64xf32>
    %cst_743 = arith.constant 0.000000e+00 : f32
    %1687 = vector.broadcast %cst_743 : f32 to vector<8x64xf32>
    %1688 = arith.cmpf ogt, %1686, %1687 : vector<8x64xf32>
    %cst_744 = arith.constant 2.000000e-01 : f32
    %1689 = vector.broadcast %cst_744 : f32 to vector<8x64xf32>
    %1690 = arith.mulf %1689, %1686 : vector<8x64xf32>
    %1691 = arith.select %1688, %1686, %1690 : vector<8x64xi1>, vector<8x64xf32>
    %1692 = arith.truncf %1691 : vector<8x64xf32> to vector<8x64xbf16>
    %c0_745 = arith.constant 0 : index
    %c7488 = arith.constant 7488 : index
    %1693 = vector.load %arg6[%c0_745, %c7488] : memref<8x7808xbf16, #tpu.memory_space<vmem>>, vector<8x64xbf16>
    tpu.vector_store %arg6[%c0_745, %c7488], %1692 {strides = array<i32>} : memref<8x7808xbf16, #tpu.memory_space<vmem>>, vector<8x64xbf16>,
    %c944_746 = arith.constant 944 : index
    %c0_747 = arith.constant 0 : index
    %1694 = vector.load %arg5[%c944_746, %c0_747] : memref<968x64xf32, #tpu.memory_space<vmem>>, vector<8x64xf32>
    %1695 = arith.mulf %1694, %509 : vector<8x64xf32>
    %1696 = arith.addf %1695, %511 : vector<8x64xf32>
    %cst_748 = arith.constant 0.000000e+00 : f32
    %1697 = vector.broadcast %cst_748 : f32 to vector<8x64xf32>
    %1698 = arith.cmpf ogt, %1696, %1697 : vector<8x64xf32>
    %cst_749 = arith.constant 2.000000e-01 : f32
    %1699 = vector.broadcast %cst_749 : f32 to vector<8x64xf32>
    %1700 = arith.mulf %1699, %1696 : vector<8x64xf32>
    %1701 = arith.select %1698, %1696, %1700 : vector<8x64xi1>, vector<8x64xf32>
    %1702 = arith.truncf %1701 : vector<8x64xf32> to vector<8x64xbf16>
    %c0_750 = arith.constant 0 : index
    %c7552 = arith.constant 7552 : index
    %1703 = vector.load %arg6[%c0_750, %c7552] : memref<8x7808xbf16, #tpu.memory_space<vmem>>, vector<8x64xbf16>
    tpu.vector_store %arg6[%c0_750, %c7552], %1702 {strides = array<i32>} : memref<8x7808xbf16, #tpu.memory_space<vmem>>, vector<8x64xbf16>,
    %c952_751 = arith.constant 952 : index
    %c0_752 = arith.constant 0 : index
    %1704 = vector.load %arg5[%c952_751, %c0_752] : memref<968x64xf32, #tpu.memory_space<vmem>>, vector<8x64xf32>
    %1705 = arith.mulf %1704, %509 : vector<8x64xf32>
    %1706 = arith.addf %1705, %511 : vector<8x64xf32>
    %cst_753 = arith.constant 0.000000e+00 : f32
    %1707 = vector.broadcast %cst_753 : f32 to vector<8x64xf32>
    %1708 = arith.cmpf ogt, %1706, %1707 : vector<8x64xf32>
    %cst_754 = arith.constant 2.000000e-01 : f32
    %1709 = vector.broadcast %cst_754 : f32 to vector<8x64xf32>
    %1710 = arith.mulf %1709, %1706 : vector<8x64xf32>
    %1711 = arith.select %1708, %1706, %1710 : vector<8x64xi1>, vector<8x64xf32>
    %1712 = arith.truncf %1711 : vector<8x64xf32> to vector<8x64xbf16>
    %c0_755 = arith.constant 0 : index
    %c7616 = arith.constant 7616 : index
    %1713 = vector.load %arg6[%c0_755, %c7616] : memref<8x7808xbf16, #tpu.memory_space<vmem>>, vector<8x64xbf16>
    tpu.vector_store %arg6[%c0_755, %c7616], %1712 {strides = array<i32>} : memref<8x7808xbf16, #tpu.memory_space<vmem>>, vector<8x64xbf16>,
    %c960_756 = arith.constant 960 : index
    %c0_757 = arith.constant 0 : index
    %1714 = vector.load %arg5[%c960_756, %c0_757] : memref<968x64xf32, #tpu.memory_space<vmem>>, vector<8x64xf32>
    %1715 = arith.mulf %1714, %509 : vector<8x64xf32>
    %1716 = arith.addf %1715, %511 : vector<8x64xf32>
    %cst_758 = arith.constant 0.000000e+00 : f32
    %1717 = vector.broadcast %cst_758 : f32 to vector<8x64xf32>
    %1718 = arith.cmpf ogt, %1716, %1717 : vector<8x64xf32>
    %cst_759 = arith.constant 2.000000e-01 : f32
    %1719 = vector.broadcast %cst_759 : f32 to vector<8x64xf32>
    %1720 = arith.mulf %1719, %1716 : vector<8x64xf32>
    %1721 = arith.select %1718, %1716, %1720 : vector<8x64xi1>, vector<8x64xf32>
    %1722 = arith.truncf %1721 : vector<8x64xf32> to vector<8x64xbf16>
    %c0_760 = arith.constant 0 : index
    %c7680 = arith.constant 7680 : index
    %1723 = vector.load %arg6[%c0_760, %c7680] : memref<8x7808xbf16, #tpu.memory_space<vmem>>, vector<8x64xbf16>
    tpu.vector_store %arg6[%c0_760, %c7680], %1722 {strides = array<i32>} : memref<8x7808xbf16, #tpu.memory_space<vmem>>, vector<8x64xbf16>,
    tpu.wait_dma2 semaphore(%arg8 : memref<!tpu.dma_semaphore, #tpu.memory_space<semaphore_mem>>) src(%arg3 : memref<7808x128xbf16, #tpu.memory_space<any>>) dst(%arg7 : memref<7808x128xbf16, #tpu.memory_space<vmem>>)
    %c0_761 = arith.constant 0 : index
    %c0_762 = arith.constant 0 : index
    %1724 = vector.load %arg6[%c0_761, %c0_762] : memref<8x7808xbf16, #tpu.memory_space<vmem>>, vector<8x7808xbf16>
    %c0_763 = arith.constant 0 : index
    %c0_764 = arith.constant 0 : index
    %1725 = vector.load %arg7[%c0_763, %c0_764] : memref<7808x128xbf16, #tpu.memory_space<vmem>>, vector<7808x128xbf16>
    %cst_765 = arith.constant dense<0.000000e+00> : vector<8x128xf32>
    %1726 = tpu.matmul %1724, %1725, %cst_765 {dimension_numbers = #tpu.dot_dimension_numbers<[1], [0], [0], [1], [0, 0, 1, 1], [], []>} : vector<8x7808xbf16>, vector<7808x128xbf16>, vector<8x128xf32> -> vector<8x128xf32>
    %c0_766 = arith.constant 0 : index
    %c128_767 = arith.constant 128 : index
    %1727 = vector.load %arg2[%c0_766, %c128_767] : memref<1x640xf32, #tpu.memory_space<vmem>>, vector<1x128xf32>
    %c0_768 = arith.constant 0 : index
    %c256_769 = arith.constant 256 : index
    %1728 = vector.load %arg2[%c0_768, %c256_769] : memref<1x640xf32, #tpu.memory_space<vmem>>, vector<1x128xf32>
    %cst_770 = arith.constant dense<0.000000e+00> : vector<128xf32>
    %1729 = vector.multi_reduction <add>, %1726, %cst_770 [0] : vector<8x128xf32> to vector<128xf32>
    %1730 = vector.shape_cast %1729 : vector<128xf32> to vector<1x128xf32>
    %cst_771 = arith.constant 8.000000e+00 : f32
    %1731 = vector.broadcast %cst_771 : f32 to vector<1x128xf32>
    %1732 = arith.divf %1730, %1731 : vector<1x128xf32>
    %1733 = arith.mulf %1726, %1726 : vector<8x128xf32>
    %cst_772 = arith.constant dense<0.000000e+00> : vector<128xf32>
    %1734 = vector.multi_reduction <add>, %1733, %cst_772 [0] : vector<8x128xf32> to vector<128xf32>
    %1735 = vector.shape_cast %1734 : vector<128xf32> to vector<1x128xf32>
    %cst_773 = arith.constant 8.000000e+00 : f32
    %1736 = vector.broadcast %cst_773 : f32 to vector<1x128xf32>
    %1737 = arith.divf %1735, %1736 : vector<1x128xf32>
    %1738 = arith.mulf %1732, %1732 : vector<1x128xf32>
    %1739 = arith.subf %1737, %1738 : vector<1x128xf32>
    %1740 = vector.broadcast %1732 : vector<1x128xf32> to vector<8x128xf32>
    %1741 = arith.subf %1726, %1740 : vector<8x128xf32>
    %cst_774 = arith.constant 9.99999974E-6 : f32
    %1742 = vector.broadcast %cst_774 : f32 to vector<1x128xf32>
    %1743 = arith.addf %1739, %1742 : vector<1x128xf32>
    %1744 = math.rsqrt %1743 : vector<1x128xf32>
    %1745 = vector.broadcast %1744 : vector<1x128xf32> to vector<8x128xf32>
    %1746 = arith.mulf %1741, %1745 : vector<8x128xf32>
    %1747 = vector.broadcast %1727 : vector<1x128xf32> to vector<8x128xf32>
    %1748 = arith.mulf %1746, %1747 : vector<8x128xf32>
    %1749 = vector.broadcast %1728 : vector<1x128xf32> to vector<8x128xf32>
    %1750 = arith.addf %1748, %1749 : vector<8x128xf32>
    %cst_775 = arith.constant 0.000000e+00 : f32
    %1751 = vector.broadcast %cst_775 : f32 to vector<8x128xf32>
    %1752 = arith.cmpf ogt, %1750, %1751 : vector<8x128xf32>
    %cst_776 = arith.constant 2.000000e-01 : f32
    %1753 = vector.broadcast %cst_776 : f32 to vector<8x128xf32>
    %1754 = arith.mulf %1753, %1750 : vector<8x128xf32>
    %1755 = arith.select %1752, %1750, %1754 : vector<8x128xi1>, vector<8x128xf32>
    %c0_777 = arith.constant 0 : index
    %c384_778 = arith.constant 384 : index
    %1756 = vector.load %arg2[%c0_777, %c384_778] : memref<1x640xf32, #tpu.memory_space<vmem>>, vector<1x128xf32>
    %c0_779 = arith.constant 0 : index
    %c512_780 = arith.constant 512 : index
    %1757 = vector.load %arg2[%c0_779, %c512_780] : memref<1x640xf32, #tpu.memory_space<vmem>>, vector<1x1xf32>
    %1758 = vector.broadcast %1756 : vector<1x128xf32> to vector<8x128xf32>
    %1759 = arith.mulf %1755, %1758 : vector<8x128xf32>
    %cst_781 = arith.constant dense<0.000000e+00> : vector<8xf32>
    %1760 = vector.multi_reduction <add>, %1759, %cst_781 [1] : vector<8x128xf32> to vector<8xf32>
    %1761 = vector.shape_cast %1760 : vector<8xf32> to vector<8x1xf32>
    %1762 = vector.broadcast %1757 : vector<1x1xf32> to vector<8x1xf32>
    %1763 = arith.addf %1761, %1762 : vector<8x1xf32>
    %1764 = arith.negf %1763 : vector<8x1xf32>
    %1765 = math.exp %1764 : vector<8x1xf32>
    %cst_782 = arith.constant 1.000000e+00 : f32
    %1766 = vector.broadcast %cst_782 : f32 to vector<8x1xf32>
    %1767 = arith.addf %1766, %1765 : vector<8x1xf32>
    %1768 = arith.divf %1766, %1767 : vector<8x1xf32>
    %c0_783 = arith.constant 0 : index
    %c0_784 = arith.constant 0 : index
    %1769 = vector.load %arg4[%c0_783, %c0_784] : memref<8x1xf32, #tpu.memory_space<vmem>>, vector<8x1xf32>
    tpu.vector_store %arg4[%c0_783, %c0_784], %1768 {strides = array<i32>} : memref<8x1xf32, #tpu.memory_space<vmem>>, vector<8x1xf32>,
    return
  }
}

</mosaic_0001>

<llo_original>
// kernel: discriminator_forward.1
$region0: #{discriminator_forward.1}
  #allocation0 [shape = 'u32[]', space=smem, size = 0x4, offset = 0x4, fixed_abs, tag = 'smem constant byte address 0x4 - core index']
  #allocation1 [shape = 'u32[144,128]{1,0:T(1,128)}', space=vmem, size = 0x12000, scoped, tag = 'internal scratch']
  #allocation2 [shape = 'f32[968,64]{1,0:T(8,128)}', space=vmem, size = 0x79000, scoped, tag = 'scratch operand']
  #allocation3 [shape = 'bf16[8,7808]{1,0:T(8,128)(2,1)}', space=vmem, size = 0x1e800, scoped, tag = 'scratch operand']
  #allocation4 [shape = 'bf16[7808,128]{1,0:T(16,128)(2,1)}', space=vmem, size = 0x1e8000, scoped, tag = 'scratch operand']
  #allocation5 [shape = 's32[1]{0}', space=sflag, size = 0x4, scoped, tag = 'scratch operand']
  #allocation6 [shape = 's32[]', space=sflag, size = 0x4, offset = 0, fixed_abs, tag = 'sflag constant byte address 0x0 - dummy sync flag']
  %s0 = inlined_call_operand.vmem [shape: bf16[968,384], index: 0, kind: input, shape index: {}]
  %s1 = inlined_call_operand.vmem [shape: bf16[384,64], index: 1, kind: input, shape index: {}]
  %s2 = inlined_call_operand.vmem [shape: f32[1,640], index: 2, kind: input, shape index: {}]
  %s3 = inlined_call_operand.vmem [shape: bf16[7808,128], index: 3, kind: input, shape index: {}]
  %s4 = inlined_call_operand.vmem [shape: f32[8,1], index: 4, kind: output, shape index: {}]
  %s5 = sld [smem:[#allocation0]]
  $region56: #{discriminator_forward.1} parent=0
    _
  %s7 = ssub.s32 1, %s5
  %s8 = scalar_select 0, %s7, %s5
  // Predicated region
  $region2: #{discriminator_forward.1} parent=0 // pred_check
    _
  $region3: #{discriminator_forward.1} parent=0 // pred_check_branch
    %10 = sbr.rel (0) target = $region5
  $region4: #{discriminator_forward.1} parent=0 // pred_region
    _
  $region5: #{discriminator_forward.1} parent=0 // pred_fallthru
    _
  // Predicated region
  $region6: #{discriminator_forward.1} parent=0 // pred_check
    _
  $region7: #{discriminator_forward.1} parent=0 // pred_check_branch
    %12 = sbr.rel (0) target = $region9
  $region8: #{discriminator_forward.1} parent=0 // pred_region
    _
  $region9: #{discriminator_forward.1} parent=0 // pred_fallthru
    _
  // Predicated region
  $region10: #{discriminator_forward.1} parent=0 // pred_check
    _
  $region11: #{discriminator_forward.1} parent=0 // pred_check_branch
    %14 = sbr.rel (0) target = $region13
  $region12: #{discriminator_forward.1} parent=0 // pred_region
    _
  $region13: #{discriminator_forward.1} parent=0 // pred_fallthru
    _
  %p17 = scmp.lt.u32.totalorder 3904, 8
  %p18 = pneg %p17
  // Predicated region
  $region14: #{discriminator_forward.1} parent=0 // pred_check
    _
  $region15: #{discriminator_forward.1} parent=0 // pred_check_branch
    %20 = sbr.rel (%p17) target = $region17
  $region16: #{discriminator_forward.1} parent=0 // pred_region
    %s35 = sand.u32 3904, 7
    %p36 = scmp.eq.s32.totalorder %s35, 0
    // Predicated region
    $region29: #{discriminator_forward.1} parent=16 // pred_check
      %p37 = pneg %p36
    $region30: #{discriminator_forward.1} parent=16 // pred_check_branch
      %39 = sbr.rel (%p37) target = $region32
    $region31: #{discriminator_forward.1} parent=16 // pred_region
      loop: start=0, step=1, limit=1
      $region33: #{discriminator_forward.1} parent=31 // loop_pre_header
        _
      $region34: #{discriminator_forward.1} parent=31 // loop_header
        %s41 = sphi 0, %s45
        %p42 = scmp.ge.s32.totalorder %s41, 1
        %s46 = sphi %s3, %s3
        %s47 = sphi [#allocation4], [#allocation4]
      $region35: #{discriminator_forward.1} parent=31 // loop_header_branch
        %44 = sbr.rel (%p42) target = $region39
      $region36: #{discriminator_forward.1} parent=31 // loop_body
        %v48 = vld [vmem:[%s46] sm:$0xff]
        %49 = vst [vmem:[%s47] sm:$0xff] %v48
        %v50 = vld [vmem:[%s46 + $0x8] sm:$0xff]
        %51 = vst [vmem:[%s47 + $0x8] sm:$0xff] %v50
        %v52 = vld [vmem:[%s46 + $0x10] sm:$0xff]
        %53 = vst [vmem:[%s47 + $0x10] sm:$0xff] %v52
        %v54 = vld [vmem:[%s46 + $0x18] sm:$0xff]
        %55 = vst [vmem:[%s47 + $0x18] sm:$0xff] %v54
        %v56 = vld [vmem:[%s46 + $0x20] sm:$0xff]
        %57 = vst [vmem:[%s47 + $0x20] sm:$0xff] %v56
        %v58 = vld [vmem:[%s46 + $0x28] sm:$0xff]
        %59 = vst [vmem:[%s47 + $0x28] sm:$0xff] %v58
        %v60 = vld [vmem:[%s46 + $0x30] sm:$0xff]
        %61 = vst [vmem:[%s47 + $0x30] sm:$0xff] %v60
        %v62 = vld [vmem:[%s46 + $0x38] sm:$0xff]
        %63 = vst [vmem:[%s47 + $0x38] sm:$0xff] %v62
        %v64 = vld [vmem:[%s46 + $0x40] sm:$0xff]
        %65 = vst [vmem:[%s47 + $0x40] sm:$0xff] %v64
        %v66 = vld [vmem:[%s46 + $0x48] sm:$0xff]
        %67 = vst [vmem:[%s47 + $0x48] sm:$0xff] %v66
        %v68 = vld [vmem:[%s46 + $0x50] sm:$0xff]
        %69 = vst [vmem:[%s47 + $0x50] sm:$0xff] %v68
        %v70 = vld [vmem:[%s46 + $0x58] sm:$0xff]
        %71 = vst [vmem:[%s47 + $0x58] sm:$0xff] %v70
        %v72 = vld [vmem:[%s46 + $0x60] sm:$0xff]
        %73 = vst [vmem:[%s47 + $0x60] sm:$0xff] %v72
        %v74 = vld [vmem:[%s46 + $0x68] sm:$0xff]
        %75 = vst [vmem:[%s47 + $0x68] sm:$0xff] %v74
        %v76 = vld [vmem:[%s46 + $0x70] sm:$0xff]
        %77 = vst [vmem:[%s47 + $0x70] sm:$0xff] %v76
        %v78 = vld [vmem:[%s46 + $0x78] sm:$0xff]
        %79 = vst [vmem:[%s47 + $0x78] sm:$0xff] %v78
        %v80 = vld [vmem:[%s46 + $0x80] sm:$0xff]
        %81 = vst [vmem:[%s47 + $0x80] sm:$0xff] %v80
        %v82 = vld [vmem:[%s46 + $0x88] sm:$0xff]
        %83 = vst [vmem:[%s47 + $0x88] sm:$0xff] %v82
        %v84 = vld [vmem:[%s46 + $0x90] sm:$0xff]
        %85 = vst [vmem:[%s47 + $0x90] sm:$0xff] %v84
        %v86 = vld [vmem:[%s46 + $0x98] sm:$0xff]
        %87 = vst [vmem:[%s47 + $0x98] sm:$0xff] %v86
        %v88 = vld [vmem:[%s46 + $0xa0] sm:$0xff]
        %89 = vst [vmem:[%s47 + $0xa0] sm:$0xff] %v88
        %v90 = vld [vmem:[%s46 + $0xa8] sm:$0xff]
        %91 = vst [vmem:[%s47 + $0xa8] sm:$0xff] %v90
        %v92 = vld [vmem:[%s46 + $0xb0] sm:$0xff]
        %93 = vst [vmem:[%s47 + $0xb0] sm:$0xff] %v92
        %v94 = vld [vmem:[%s46 + $0xb8] sm:$0xff]
        %95 = vst [vmem:[%s47 + $0xb8] sm:$0xff] %v94
        %v96 = vld [vmem:[%s46 + $0xc0] sm:$0xff]
        %97 = vst [vmem:[%s47 + $0xc0] sm:$0xff] %v96
        %v98 = vld [vmem:[%s46 + $0xc8] sm:$0xff]
        %99 = vst [vmem:[%s47 + $0xc8] sm:$0xff] %v98
        %v100 = vld [vmem:[%s46 + $0xd0] sm:$0xff]
        %101 = vst [vmem:[%s47 + $0xd0] sm:$0xff] %v100
        %v102 = vld [vmem:[%s46 + $0xd8] sm:$0xff]
        %103 = vst [vmem:[%s47 + $0xd8] sm:$0xff] %v102
        %v104 = vld [vmem:[%s46 + $0xe0] sm:$0xff]
        %105 = vst [vmem:[%s47 + $0xe0] sm:$0xff] %v104
        %v106 = vld [vmem:[%s46 + $0xe8] sm:$0xff]
        %107 = vst [vmem:[%s47 + $0xe8] sm:$0xff] %v106
        %v108 = vld [vmem:[%s46 + $0xf0] sm:$0xff]
        %109 = vst [vmem:[%s47 + $0xf0] sm:$0xff] %v108
        %v110 = vld [vmem:[%s46 + $0xf8] sm:$0xff]
        %111 = vst [vmem:[%s47 + $0xf8] sm:$0xff] %v110
        %v112 = vld [vmem:[%s46 + $0x100] sm:$0xff]
        %113 = vst [vmem:[%s47 + $0x100] sm:$0xff] %v112
        %v114 = vld [vmem:[%s46 + $0x108] sm:$0xff]
        %115 = vst [vmem:[%s47 + $0x108] sm:$0xff] %v114
        %v116 = vld [vmem:[%s46 + $0x110] sm:$0xff]
        %117 = vst [vmem:[%s47 + $0x110] sm:$0xff] %v116
        %v118 = vld [vmem:[%s46 + $0x118] sm:$0xff]
        %119 = vst [vmem:[%s47 + $0x118] sm:$0xff] %v118
        %v120 = vld [vmem:[%s46 + $0x120] sm:$0xff]
        %121 = vst [vmem:[%s47 + $0x120] sm:$0xff] %v120
        %v122 = vld [vmem:[%s46 + $0x128] sm:$0xff]
        %123 = vst [vmem:[%s47 + $0x128] sm:$0xff] %v122
        %v124 = vld [vmem:[%s46 + $0x130] sm:$0xff]
        %125 = vst [vmem:[%s47 + $0x130] sm:$0xff] %v124
        %v126 = vld [vmem:[%s46 + $0x138] sm:$0xff]
        %127 = vst [vmem:[%s47 + $0x138] sm:$0xff] %v126
        %v128 = vld [vmem:[%s46 + $0x140] sm:$0xff]
        %129 = vst [vmem:[%s47 + $0x140] sm:$0xff] %v128
        %v130 = vld [vmem:[%s46 + $0x148] sm:$0xff]
        %131 = vst [vmem:[%s47 + $0x148] sm:$0xff] %v130
        %v132 = vld [vmem:[%s46 + $0x150] sm:$0xff]
        %133 = vst [vmem:[%s47 + $0x150] sm:$0xff] %v132
        %v134 = vld [vmem:[%s46 + $0x158] sm:$0xff]
        %135 = vst [vmem:[%s47 + $0x158] sm:$0xff] %v134
        %v136 = vld [vmem:[%s46 + $0x160] sm:$0xff]
        %137 = vst [vmem:[%s47 + $0x160] sm:$0xff] %v136
        %v138 = vld [vmem:[%s46 + $0x168] sm:$0xff]
        %139 = vst [vmem:[%s47 + $0x168] sm:$0xff] %v138
        %v140 = vld [vmem:[%s46 + $0x170] sm:$0xff]
        %141 = vst [vmem:[%s47 + $0x170] sm:$0xff] %v140
        %v142 = vld [vmem:[%s46 + $0x178] sm:$0xff]
        %143 = vst [vmem:[%s47 + $0x178] sm:$0xff] %v142
        %v144 = vld [vmem:[%s46 + $0x180] sm:$0xff]
        %145 = vst [vmem:[%s47 + $0x180] sm:$0xff] %v144
        %v146 = vld [vmem:[%s46 + $0x188] sm:$0xff]
        %147 = vst [vmem:[%s47 + $0x188] sm:$0xff] %v146
        %v148 = vld [vmem:[%s46 + $0x190] sm:$0xff]
        %149 = vst [vmem:[%s47 + $0x190] sm:$0xff] %v148
        %v150 = vld [vmem:[%s46 + $0x198] sm:$0xff]
        %151 = vst [vmem:[%s47 + $0x198] sm:$0xff] %v150
        %v152 = vld [vmem:[%s46 + $0x1a0] sm:$0xff]
        %153 = vst [vmem:[%s47 + $0x1a0] sm:$0xff] %v152
        %v154 = vld [vmem:[%s46 + $0x1a8] sm:$0xff]
        %155 = vst [vmem:[%s47 + $0x1a8] sm:$0xff] %v154
        %v156 = vld [vmem:[%s46 + $0x1b0] sm:$0xff]
        %157 = vst [vmem:[%s47 + $0x1b0] sm:$0xff] %v156
        %v158 = vld [vmem:[%s46 + $0x1b8] sm:$0xff]
        %159 = vst [vmem:[%s47 + $0x1b8] sm:$0xff] %v158
        %v160 = vld [vmem:[%s46 + $0x1c0] sm:$0xff]
        %161 = vst [vmem:[%s47 + $0x1c0] sm:$0xff] %v160
        %v162 = vld [vmem:[%s46 + $0x1c8] sm:$0xff]
        %163 = vst [vmem:[%s47 + $0x1c8] sm:$0xff] %v162
        %v164 = vld [vmem:[%s46 + $0x1d0] sm:$0xff]
        %165 = vst [vmem:[%s47 + $0x1d0] sm:$0xff] %v164
        %v166 = vld [vmem:[%s46 + $0x1d8] sm:$0xff]
        %167 = vst [vmem:[%s47 + $0x1d8] sm:$0xff] %v166
        %v168 = vld [vmem:[%s46 + $0x1e0] sm:$0xff]
        %169 = vst [vmem:[%s47 + $0x1e0] sm:$0xff] %v168
        %v170 = vld [vmem:[%s46 + $0x1e8] sm:$0xff]
        %171 = vst [vmem:[%s47 + $0x1e8] sm:$0xff] %v170
        %v172 = vld [vmem:[%s46 + $0x1f0] sm:$0xff]
        %173 = vst [vmem:[%s47 + $0x1f0] sm:$0xff] %v172
        %v174 = vld [vmem:[%s46 + $0x1f8] sm:$0xff]
        %175 = vst [vmem:[%s47 + $0x1f8] sm:$0xff] %v174
        %v176 = vld [vmem:[%s46 + $0x200] sm:$0xff]
        %177 = vst [vmem:[%s47 + $0x200] sm:$0xff] %v176
        %v178 = vld [vmem:[%s46 + $0x208] sm:$0xff]
        %179 = vst [vmem:[%s47 + $0x208] sm:$0xff] %v178
        %v180 = vld [vmem:[%s46 + $0x210] sm:$0xff]
        %181 = vst [vmem:[%s47 + $0x210] sm:$0xff] %v180
        %v182 = vld [vmem:[%s46 + $0x218] sm:$0xff]
        %183 = vst [vmem:[%s47 + $0x218] sm:$0xff] %v182
        %v184 = vld [vmem:[%s46 + $0x220] sm:$0xff]
        %185 = vst [vmem:[%s47 + $0x220] sm:$0xff] %v184
        %v186 = vld [vmem:[%s46 + $0x228] sm:$0xff]
        %187 = vst [vmem:[%s47 + $0x228] sm:$0xff] %v186
        %v188 = vld [vmem:[%s46 + $0x230] sm:$0xff]
        %189 = vst [vmem:[%s47 + $0x230] sm:$0xff] %v188
        %v190 = vld [vmem:[%s46 + $0x238] sm:$0xff]
        %191 = vst [vmem:[%s47 + $0x238] sm:$0xff] %v190
        %v192 = vld [vmem:[%s46 + $0x240] sm:$0xff]
        %193 = vst [vmem:[%s47 + $0x240] sm:$0xff] %v192
        %v194 = vld [vmem:[%s46 + $0x248] sm:$0xff]
        %195 = vst [vmem:[%s47 + $0x248] sm:$0xff] %v194
        %v196 = vld [vmem:[%s46 + $0x250] sm:$0xff]
        %197 = vst [vmem:[%s47 + $0x250] sm:$0xff] %v196
        %v198 = vld [vmem:[%s46 + $0x258] sm:$0xff]
        %199 = vst [vmem:[%s47 + $0x258] sm:$0xff] %v198
        %v200 = vld [vmem:[%s46 + $0x260] sm:$0xff]
        %201 = vst [vmem:[%s47 + $0x260] sm:$0xff] %v200
        %v202 = vld [vmem:[%s46 + $0x268] sm:$0xff]
        %203 = vst [vmem:[%s47 + $0x268] sm:$0xff] %v202
        %v204 = vld [vmem:[%s46 + $0x270] sm:$0xff]
        %205 = vst [vmem:[%s47 + $0x270] sm:$0xff] %v204
        %v206 = vld [vmem:[%s46 + $0x278] sm:$0xff]
        %207 = vst [vmem:[%s47 + $0x278] sm:$0xff] %v206
        %v208 = vld [vmem:[%s46 + $0x280] sm:$0xff]
        %209 = vst [vmem:[%s47 + $0x280] sm:$0xff] %v208
        %v210 = vld [vmem:[%s46 + $0x288] sm:$0xff]
        %211 = vst [vmem:[%s47 + $0x288] sm:$0xff] %v210
        %v212 = vld [vmem:[%s46 + $0x290] sm:$0xff]
        %213 = vst [vmem:[%s47 + $0x290] sm:$0xff] %v212
        %v214 = vld [vmem:[%s46 + $0x298] sm:$0xff]
        %215 = vst [vmem:[%s47 + $0x298] sm:$0xff] %v214
        %v216 = vld [vmem:[%s46 + $0x2a0] sm:$0xff]
        %217 = vst [vmem:[%s47 + $0x2a0] sm:$0xff] %v216
        %v218 = vld [vmem:[%s46 + $0x2a8] sm:$0xff]
        %219 = vst [vmem:[%s47 + $0x2a8] sm:$0xff] %v218
        %v220 = vld [vmem:[%s46 + $0x2b0] sm:$0xff]
        %221 = vst [vmem:[%s47 + $0x2b0] sm:$0xff] %v220
        %v222 = vld [vmem:[%s46 + $0x2b8] sm:$0xff]
        %223 = vst [vmem:[%s47 + $0x2b8] sm:$0xff] %v222
        %v224 = vld [vmem:[%s46 + $0x2c0] sm:$0xff]
        %225 = vst [vmem:[%s47 + $0x2c0] sm:$0xff] %v224
        %v226 = vld [vmem:[%s46 + $0x2c8] sm:$0xff]
        %227 = vst [vmem:[%s47 + $0x2c8] sm:$0xff] %v226
        %v228 = vld [vmem:[%s46 + $0x2d0] sm:$0xff]
        %229 = vst [vmem:[%s47 + $0x2d0] sm:$0xff] %v228
        %v230 = vld [vmem:[%s46 + $0x2d8] sm:$0xff]
        %231 = vst [vmem:[%s47 + $0x2d8] sm:$0xff] %v230
        %v232 = vld [vmem:[%s46 + $0x2e0] sm:$0xff]
        %233 = vst [vmem:[%s47 + $0x2e0] sm:$0xff] %v232
        %v234 = vld [vmem:[%s46 + $0x2e8] sm:$0xff]
        %235 = vst [vmem:[%s47 + $0x2e8] sm:$0xff] %v234
        %v236 = vld [vmem:[%s46 + $0x2f0] sm:$0xff]
        %237 = vst [vmem:[%s47 + $0x2f0] sm:$0xff] %v236
        %v238 = vld [vmem:[%s46 + $0x2f8] sm:$0xff]
        %239 = vst [vmem:[%s47 + $0x2f8] sm:$0xff] %v238
        %v240 = vld [vmem:[%s46 + $0x300] sm:$0xff]
        %241 = vst [vmem:[%s47 + $0x300] sm:$0xff] %v240
        %v242 = vld [vmem:[%s46 + $0x308] sm:$0xff]
        %243 = vst [vmem:[%s47 + $0x308] sm:$0xff] %v242
        %v244 = vld [vmem:[%s46 + $0x310] sm:$0xff]
        %245 = vst [vmem:[%s47 + $0x310] sm:$0xff] %v244
        %v246 = vld [vmem:[%s46 + $0x318] sm:$0xff]
        %247 = vst [vmem:[%s47 + $0x318] sm:$0xff] %v246
        %v248 = vld [vmem:[%s46 + $0x320] sm:$0xff]
        %249 = vst [vmem:[%s47 + $0x320] sm:$0xff] %v248
        %v250 = vld [vmem:[%s46 + $0x328] sm:$0xff]
        %251 = vst [vmem:[%s47 + $0x328] sm:$0xff] %v250
        %v252 = vld [vmem:[%s46 + $0x330] sm:$0xff]
        %253 = vst [vmem:[%s47 + $0x330] sm:$0xff] %v252
        %v254 = vld [vmem:[%s46 + $0x338] sm:$0xff]
        %255 = vst [vmem:[%s47 + $0x338] sm:$0xff] %v254
        %v256 = vld [vmem:[%s46 + $0x340] sm:$0xff]
        %257 = vst [vmem:[%s47 + $0x340] sm:$0xff] %v256
        %v258 = vld [vmem:[%s46 + $0x348] sm:$0xff]
        %259 = vst [vmem:[%s47 + $0x348] sm:$0xff] %v258
        %v260 = vld [vmem:[%s46 + $0x350] sm:$0xff]
        %261 = vst [vmem:[%s47 + $0x350] sm:$0xff] %v260
        %v262 = vld [vmem:[%s46 + $0x358] sm:$0xff]
        %263 = vst [vmem:[%s47 + $0x358] sm:$0xff] %v262
        %v264 = vld [vmem:[%s46 + $0x360] sm:$0xff]
        %265 = vst [vmem:[%s47 + $0x360] sm:$0xff] %v264
        %v266 = vld [vmem:[%s46 + $0x368] sm:$0xff]
        %267 = vst [vmem:[%s47 + $0x368] sm:$0xff] %v266
        %v268 = vld [vmem:[%s46 + $0x370] sm:$0xff]
        %269 = vst [vmem:[%s47 + $0x370] sm:$0xff] %v268
        %v270 = vld [vmem:[%s46 + $0x378] sm:$0xff]
        %271 = vst [vmem:[%s47 + $0x378] sm:$0xff] %v270
        %v272 = vld [vmem:[%s46 + $0x380] sm:$0xff]
        %273 = vst [vmem:[%s47 + $0x380] sm:$0xff] %v272
        %v274 = vld [vmem:[%s46 + $0x388] sm:$0xff]
        %275 = vst [vmem:[%s47 + $0x388] sm:$0xff] %v274
        %v276 = vld [vmem:[%s46 + $0x390] sm:$0xff]
        %277 = vst [vmem:[%s47 + $0x390] sm:$0xff] %v276
        %v278 = vld [vmem:[%s46 + $0x398] sm:$0xff]
        %279 = vst [vmem:[%s47 + $0x398] sm:$0xff] %v278
        %v280 = vld [vmem:[%s46 + $0x3a0] sm:$0xff]
        %281 = vst [vmem:[%s47 + $0x3a0] sm:$0xff] %v280
        %v282 = vld [vmem:[%s46 + $0x3a8] sm:$0xff]
        %283 = vst [vmem:[%s47 + $0x3a8] sm:$0xff] %v282
        %v284 = vld [vmem:[%s46 + $0x3b0] sm:$0xff]
        %285 = vst [vmem:[%s47 + $0x3b0] sm:$0xff] %v284
        %v286 = vld [vmem:[%s46 + $0x3b8] sm:$0xff]
        %287 = vst [vmem:[%s47 + $0x3b8] sm:$0xff] %v286
        %v288 = vld [vmem:[%s46 + $0x3c0] sm:$0xff]
        %289 = vst [vmem:[%s47 + $0x3c0] sm:$0xff] %v288
        %v290 = vld [vmem:[%s46 + $0x3c8] sm:$0xff]
        %291 = vst [vmem:[%s47 + $0x3c8] sm:$0xff] %v290
        %v292 = vld [vmem:[%s46 + $0x3d0] sm:$0xff]
        %293 = vst [vmem:[%s47 + $0x3d0] sm:$0xff] %v292
        %v294 = vld [vmem:[%s46 + $0x3d8] sm:$0xff]
        %295 = vst [vmem:[%s47 + $0x3d8] sm:$0xff] %v294
        %v296 = vld [vmem:[%s46 + $0x3e0] sm:$0xff]
        %297 = vst [vmem:[%s47 + $0x3e0] sm:$0xff] %v296
        %v298 = vld [vmem:[%s46 + $0x3e8] sm:$0xff]
        %299 = vst [vmem:[%s47 + $0x3e8] sm:$0xff] %v298
        %v300 = vld [vmem:[%s46 + $0x3f0] sm:$0xff]
        %301 = vst [vmem:[%s47 + $0x3f0] sm:$0xff] %v300
        %v302 = vld [vmem:[%s46 + $0x3f8] sm:$0xff]
        %303 = vst [vmem:[%s47 + $0x3f8] sm:$0xff] %v302
        %v304 = vld [vmem:[%s46 + $0x400] sm:$0xff]
        %305 = vst [vmem:[%s47 + $0x400] sm:$0xff] %v304
        %v306 = vld [vmem:[%s46 + $0x408] sm:$0xff]
        %307 = vst [vmem:[%s47 + $0x408] sm:$0xff] %v306
        %v308 = vld [vmem:[%s46 + $0x410] sm:$0xff]
        %309 = vst [vmem:[%s47 + $0x410] sm:$0xff] %v308
        %v310 = vld [vmem:[%s46 + $0x418] sm:$0xff]
        %311 = vst [vmem:[%s47 + $0x418] sm:$0xff] %v310
        %v312 = vld [vmem:[%s46 + $0x420] sm:$0xff]
        %313 = vst [vmem:[%s47 + $0x420] sm:$0xff] %v312
        %v314 = vld [vmem:[%s46 + $0x428] sm:$0xff]
        %315 = vst [vmem:[%s47 + $0x428] sm:$0xff] %v314
        %v316 = vld [vmem:[%s46 + $0x430] sm:$0xff]
        %317 = vst [vmem:[%s47 + $0x430] sm:$0xff] %v316
        %v318 = vld [vmem:[%s46 + $0x438] sm:$0xff]
        %319 = vst [vmem:[%s47 + $0x438] sm:$0xff] %v318
        %v320 = vld [vmem:[%s46 + $0x440] sm:$0xff]
        %321 = vst [vmem:[%s47 + $0x440] sm:$0xff] %v320
        %v322 = vld [vmem:[%s46 + $0x448] sm:$0xff]
        %323 = vst [vmem:[%s47 + $0x448] sm:$0xff] %v322
        %v324 = vld [vmem:[%s46 + $0x450] sm:$0xff]
        %325 = vst [vmem:[%s47 + $0x450] sm:$0xff] %v324
        %v326 = vld [vmem:[%s46 + $0x458] sm:$0xff]
        %327 = vst [vmem:[%s47 + $0x458] sm:$0xff] %v326
        %v328 = vld [vmem:[%s46 + $0x460] sm:$0xff]
        %329 = vst [vmem:[%s47 + $0x460] sm:$0xff] %v328
        %v330 = vld [vmem:[%s46 + $0x468] sm:$0xff]
        %331 = vst [vmem:[%s47 + $0x468] sm:$0xff] %v330
        %v332 = vld [vmem:[%s46 + $0x470] sm:$0xff]
        %333 = vst [vmem:[%s47 + $0x470] sm:$0xff] %v332
        %v334 = vld [vmem:[%s46 + $0x478] sm:$0xff]
        %335 = vst [vmem:[%s47 + $0x478] sm:$0xff] %v334
        %v336 = vld [vmem:[%s46 + $0x480] sm:$0xff]
        %337 = vst [vmem:[%s47 + $0x480] sm:$0xff] %v336
        %v338 = vld [vmem:[%s46 + $0x488] sm:$0xff]
        %339 = vst [vmem:[%s47 + $0x488] sm:$0xff] %v338
        %v340 = vld [vmem:[%s46 + $0x490] sm:$0xff]
        %341 = vst [vmem:[%s47 + $0x490] sm:$0xff] %v340
        %v342 = vld [vmem:[%s46 + $0x498] sm:$0xff]
        %343 = vst [vmem:[%s47 + $0x498] sm:$0xff] %v342
        %v344 = vld [vmem:[%s46 + $0x4a0] sm:$0xff]
        %345 = vst [vmem:[%s47 + $0x4a0] sm:$0xff] %v344
        %v346 = vld [vmem:[%s46 + $0x4a8] sm:$0xff]
        %347 = vst [vmem:[%s47 + $0x4a8] sm:$0xff] %v346
        %v348 = vld [vmem:[%s46 + $0x4b0] sm:$0xff]
        %349 = vst [vmem:[%s47 + $0x4b0] sm:$0xff] %v348
        %v350 = vld [vmem:[%s46 + $0x4b8] sm:$0xff]
        %351 = vst [vmem:[%s47 + $0x4b8] sm:$0xff] %v350
        %v352 = vld [vmem:[%s46 + $0x4c0] sm:$0xff]
        %353 = vst [vmem:[%s47 + $0x4c0] sm:$0xff] %v352
        %v354 = vld [vmem:[%s46 + $0x4c8] sm:$0xff]
        %355 = vst [vmem:[%s47 + $0x4c8] sm:$0xff] %v354
        %v356 = vld [vmem:[%s46 + $0x4d0] sm:$0xff]
        %357 = vst [vmem:[%s47 + $0x4d0] sm:$0xff] %v356
        %v358 = vld [vmem:[%s46 + $0x4d8] sm:$0xff]
        %359 = vst [vmem:[%s47 + $0x4d8] sm:$0xff] %v358
        %v360 = vld [vmem:[%s46 + $0x4e0] sm:$0xff]
        %361 = vst [vmem:[%s47 + $0x4e0] sm:$0xff] %v360
        %v362 = vld [vmem:[%s46 + $0x4e8] sm:$0xff]
        %363 = vst [vmem:[%s47 + $0x4e8] sm:$0xff] %v362
        %v364 = vld [vmem:[%s46 + $0x4f0] sm:$0xff]
        %365 = vst [vmem:[%s47 + $0x4f0] sm:$0xff] %v364
        %v366 = vld [vmem:[%s46 + $0x4f8] sm:$0xff]
        %367 = vst [vmem:[%s47 + $0x4f8] sm:$0xff] %v366
        %v368 = vld [vmem:[%s46 + $0x500] sm:$0xff]
        %369 = vst [vmem:[%s47 + $0x500] sm:$0xff] %v368
        %v370 = vld [vmem:[%s46 + $0x508] sm:$0xff]
        %371 = vst [vmem:[%s47 + $0x508] sm:$0xff] %v370
        %v372 = vld [vmem:[%s46 + $0x510] sm:$0xff]
        %373 = vst [vmem:[%s47 + $0x510] sm:$0xff] %v372
        %v374 = vld [vmem:[%s46 + $0x518] sm:$0xff]
        %375 = vst [vmem:[%s47 + $0x518] sm:$0xff] %v374
        %v376 = vld [vmem:[%s46 + $0x520] sm:$0xff]
        %377 = vst [vmem:[%s47 + $0x520] sm:$0xff] %v376
        %v378 = vld [vmem:[%s46 + $0x528] sm:$0xff]
        %379 = vst [vmem:[%s47 + $0x528] sm:$0xff] %v378
        %v380 = vld [vmem:[%s46 + $0x530] sm:$0xff]
        %381 = vst [vmem:[%s47 + $0x530] sm:$0xff] %v380
        %v382 = vld [vmem:[%s46 + $0x538] sm:$0xff]
        %383 = vst [vmem:[%s47 + $0x538] sm:$0xff] %v382
        %v384 = vld [vmem:[%s46 + $0x540] sm:$0xff]
        %385 = vst [vmem:[%s47 + $0x540] sm:$0xff] %v384
        %v386 = vld [vmem:[%s46 + $0x548] sm:$0xff]
        %387 = vst [vmem:[%s47 + $0x548] sm:$0xff] %v386
        %v388 = vld [vmem:[%s46 + $0x550] sm:$0xff]
        %389 = vst [vmem:[%s47 + $0x550] sm:$0xff] %v388
        %v390 = vld [vmem:[%s46 + $0x558] sm:$0xff]
        %391 = vst [vmem:[%s47 + $0x558] sm:$0xff] %v390
        %v392 = vld [vmem:[%s46 + $0x560] sm:$0xff]
        %393 = vst [vmem:[%s47 + $0x560] sm:$0xff] %v392
        %v394 = vld [vmem:[%s46 + $0x568] sm:$0xff]
        %395 = vst [vmem:[%s47 + $0x568] sm:$0xff] %v394
        %v396 = vld [vmem:[%s46 + $0x570] sm:$0xff]
        %397 = vst [vmem:[%s47 + $0x570] sm:$0xff] %v396
        %v398 = vld [vmem:[%s46 + $0x578] sm:$0xff]
        %399 = vst [vmem:[%s47 + $0x578] sm:$0xff] %v398
        %v400 = vld [vmem:[%s46 + $0x580] sm:$0xff]
        %401 = vst [vmem:[%s47 + $0x580] sm:$0xff] %v400
        %v402 = vld [vmem:[%s46 + $0x588] sm:$0xff]
        %403 = vst [vmem:[%s47 + $0x588] sm:$0xff] %v402
        %v404 = vld [vmem:[%s46 + $0x590] sm:$0xff]
        %405 = vst [vmem:[%s47 + $0x590] sm:$0xff] %v404
        %v406 = vld [vmem:[%s46 + $0x598] sm:$0xff]
        %407 = vst [vmem:[%s47 + $0x598] sm:$0xff] %v406
        %v408 = vld [vmem:[%s46 + $0x5a0] sm:$0xff]
        %409 = vst [vmem:[%s47 + $0x5a0] sm:$0xff] %v408
        %v410 = vld [vmem:[%s46 + $0x5a8] sm:$0xff]
        %411 = vst [vmem:[%s47 + $0x5a8] sm:$0xff] %v410
        %v412 = vld [vmem:[%s46 + $0x5b0] sm:$0xff]
        %413 = vst [vmem:[%s47 + $0x5b0] sm:$0xff] %v412
        %v414 = vld [vmem:[%s46 + $0x5b8] sm:$0xff]
        %415 = vst [vmem:[%s47 + $0x5b8] sm:$0xff] %v414
        %v416 = vld [vmem:[%s46 + $0x5c0] sm:$0xff]
        %417 = vst [vmem:[%s47 + $0x5c0] sm:$0xff] %v416
        %v418 = vld [vmem:[%s46 + $0x5c8] sm:$0xff]
        %419 = vst [vmem:[%s47 + $0x5c8] sm:$0xff] %v418
        %v420 = vld [vmem:[%s46 + $0x5d0] sm:$0xff]
        %421 = vst [vmem:[%s47 + $0x5d0] sm:$0xff] %v420
        %v422 = vld [vmem:[%s46 + $0x5d8] sm:$0xff]
        %423 = vst [vmem:[%s47 + $0x5d8] sm:$0xff] %v422
        %v424 = vld [vmem:[%s46 + $0x5e0] sm:$0xff]
        %425 = vst [vmem:[%s47 + $0x5e0] sm:$0xff] %v424
        %v426 = vld [vmem:[%s46 + $0x5e8] sm:$0xff]
        %427 = vst [vmem:[%s47 + $0x5e8] sm:$0xff] %v426
        %v428 = vld [vmem:[%s46 + $0x5f0] sm:$0xff]
        %429 = vst [vmem:[%s47 + $0x5f0] sm:$0xff] %v428
        %v430 = vld [vmem:[%s46 + $0x5f8] sm:$0xff]
        %431 = vst [vmem:[%s47 + $0x5f8] sm:$0xff] %v430
        %v432 = vld [vmem:[%s46 + $0x600] sm:$0xff]
        %433 = vst [vmem:[%s47 + $0x600] sm:$0xff] %v432
        %v434 = vld [vmem:[%s46 + $0x608] sm:$0xff]
        %435 = vst [vmem:[%s47 + $0x608] sm:$0xff] %v434
        %v436 = vld [vmem:[%s46 + $0x610] sm:$0xff]
        %437 = vst [vmem:[%s47 + $0x610] sm:$0xff] %v436
        %v438 = vld [vmem:[%s46 + $0x618] sm:$0xff]
        %439 = vst [vmem:[%s47 + $0x618] sm:$0xff] %v438
        %v440 = vld [vmem:[%s46 + $0x620] sm:$0xff]
        %441 = vst [vmem:[%s47 + $0x620] sm:$0xff] %v440
        %v442 = vld [vmem:[%s46 + $0x628] sm:$0xff]
        %443 = vst [vmem:[%s47 + $0x628] sm:$0xff] %v442
        %v444 = vld [vmem:[%s46 + $0x630] sm:$0xff]
        %445 = vst [vmem:[%s47 + $0x630] sm:$0xff] %v444
        %v446 = vld [vmem:[%s46 + $0x638] sm:$0xff]
        %447 = vst [vmem:[%s47 + $0x638] sm:$0xff] %v446
        %v448 = vld [vmem:[%s46 + $0x640] sm:$0xff]
        %449 = vst [vmem:[%s47 + $0x640] sm:$0xff] %v448
        %v450 = vld [vmem:[%s46 + $0x648] sm:$0xff]
        %451 = vst [vmem:[%s47 + $0x648] sm:$0xff] %v450
        %v452 = vld [vmem:[%s46 + $0x650] sm:$0xff]
        %453 = vst [vmem:[%s47 + $0x650] sm:$0xff] %v452
        %v454 = vld [vmem:[%s46 + $0x658] sm:$0xff]
        %455 = vst [vmem:[%s47 + $0x658] sm:$0xff] %v454
        %v456 = vld [vmem:[%s46 + $0x660] sm:$0xff]
        %457 = vst [vmem:[%s47 + $0x660] sm:$0xff] %v456
        %v458 = vld [vmem:[%s46 + $0x668] sm:$0xff]
        %459 = vst [vmem:[%s47 + $0x668] sm:$0xff] %v458
        %v460 = vld [vmem:[%s46 + $0x670] sm:$0xff]
        %461 = vst [vmem:[%s47 + $0x670] sm:$0xff] %v460
        %v462 = vld [vmem:[%s46 + $0x678] sm:$0xff]
        %463 = vst [vmem:[%s47 + $0x678] sm:$0xff] %v462
        %v464 = vld [vmem:[%s46 + $0x680] sm:$0xff]
        %465 = vst [vmem:[%s47 + $0x680] sm:$0xff] %v464
        %v466 = vld [vmem:[%s46 + $0x688] sm:$0xff]
        %467 = vst [vmem:[%s47 + $0x688] sm:$0xff] %v466
        %v468 = vld [vmem:[%s46 + $0x690] sm:$0xff]
        %469 = vst [vmem:[%s47 + $0x690] sm:$0xff] %v468
        %v470 = vld [vmem:[%s46 + $0x698] sm:$0xff]
        %471 = vst [vmem:[%s47 + $0x698] sm:$0xff] %v470
        %v472 = vld [vmem:[%s46 + $0x6a0] sm:$0xff]
        %473 = vst [vmem:[%s47 + $0x6a0] sm:$0xff] %v472
        %v474 = vld [vmem:[%s46 + $0x6a8] sm:$0xff]
        %475 = vst [vmem:[%s47 + $0x6a8] sm:$0xff] %v474
        %v476 = vld [vmem:[%s46 + $0x6b0] sm:$0xff]
        %477 = vst [vmem:[%s47 + $0x6b0] sm:$0xff] %v476
        %v478 = vld [vmem:[%s46 + $0x6b8] sm:$0xff]
        %479 = vst [vmem:[%s47 + $0x6b8] sm:$0xff] %v478
        %v480 = vld [vmem:[%s46 + $0x6c0] sm:$0xff]
        %481 = vst [vmem:[%s47 + $0x6c0] sm:$0xff] %v480
        %v482 = vld [vmem:[%s46 + $0x6c8] sm:$0xff]
        %483 = vst [vmem:[%s47 + $0x6c8] sm:$0xff] %v482
        %v484 = vld [vmem:[%s46 + $0x6d0] sm:$0xff]
        %485 = vst [vmem:[%s47 + $0x6d0] sm:$0xff] %v484
        %v486 = vld [vmem:[%s46 + $0x6d8] sm:$0xff]
        %487 = vst [vmem:[%s47 + $0x6d8] sm:$0xff] %v486
        %v488 = vld [vmem:[%s46 + $0x6e0] sm:$0xff]
        %489 = vst [vmem:[%s47 + $0x6e0] sm:$0xff] %v488
        %v490 = vld [vmem:[%s46 + $0x6e8] sm:$0xff]
        %491 = vst [vmem:[%s47 + $0x6e8] sm:$0xff] %v490
        %v492 = vld [vmem:[%s46 + $0x6f0] sm:$0xff]
        %493 = vst [vmem:[%s47 + $0x6f0] sm:$0xff] %v492
        %v494 = vld [vmem:[%s46 + $0x6f8] sm:$0xff]
        %495 = vst [vmem:[%s47 + $0x6f8] sm:$0xff] %v494
        %v496 = vld [vmem:[%s46 + $0x700] sm:$0xff]
        %497 = vst [vmem:[%s47 + $0x700] sm:$0xff] %v496
        %v498 = vld [vmem:[%s46 + $0x708] sm:$0xff]
        %499 = vst [vmem:[%s47 + $0x708] sm:$0xff] %v498
        %v500 = vld [vmem:[%s46 + $0x710] sm:$0xff]
        %501 = vst [vmem:[%s47 + $0x710] sm:$0xff] %v500
        %v502 = vld [vmem:[%s46 + $0x718] sm:$0xff]
        %503 = vst [vmem:[%s47 + $0x718] sm:$0xff] %v502
        %v504 = vld [vmem:[%s46 + $0x720] sm:$0xff]
        %505 = vst [vmem:[%s47 + $0x720] sm:$0xff] %v504
        %v506 = vld [vmem:[%s46 + $0x728] sm:$0xff]
        %507 = vst [vmem:[%s47 + $0x728] sm:$0xff] %v506
        %v508 = vld [vmem:[%s46 + $0x730] sm:$0xff]
        %509 = vst [vmem:[%s47 + $0x730] sm:$0xff] %v508
        %v510 = vld [vmem:[%s46 + $0x738] sm:$0xff]
        %511 = vst [vmem:[%s47 + $0x738] sm:$0xff] %v510
        %v512 = vld [vmem:[%s46 + $0x740] sm:$0xff]
        %513 = vst [vmem:[%s47 + $0x740] sm:$0xff] %v512
        %v514 = vld [vmem:[%s46 + $0x748] sm:$0xff]
        %515 = vst [vmem:[%s47 + $0x748] sm:$0xff] %v514
        %v516 = vld [vmem:[%s46 + $0x750] sm:$0xff]
        %517 = vst [vmem:[%s47 + $0x750] sm:$0xff] %v516
        %v518 = vld [vmem:[%s46 + $0x758] sm:$0xff]
        %519 = vst [vmem:[%s47 + $0x758] sm:$0xff] %v518
        %v520 = vld [vmem:[%s46 + $0x760] sm:$0xff]
        %521 = vst [vmem:[%s47 + $0x760] sm:$0xff] %v520
        %v522 = vld [vmem:[%s46 + $0x768] sm:$0xff]
        %523 = vst [vmem:[%s47 + $0x768] sm:$0xff] %v522
        %v524 = vld [vmem:[%s46 + $0x770] sm:$0xff]
        %525 = vst [vmem:[%s47 + $0x770] sm:$0xff] %v524
        %v526 = vld [vmem:[%s46 + $0x778] sm:$0xff]
        %527 = vst [vmem:[%s47 + $0x778] sm:$0xff] %v526
        %v528 = vld [vmem:[%s46 + $0x780] sm:$0xff]
        %529 = vst [vmem:[%s47 + $0x780] sm:$0xff] %v528
        %v530 = vld [vmem:[%s46 + $0x788] sm:$0xff]
        %531 = vst [vmem:[%s47 + $0x788] sm:$0xff] %v530
        %v532 = vld [vmem:[%s46 + $0x790] sm:$0xff]
        %533 = vst [vmem:[%s47 + $0x790] sm:$0xff] %v532
        %v534 = vld [vmem:[%s46 + $0x798] sm:$0xff]
        %535 = vst [vmem:[%s47 + $0x798] sm:$0xff] %v534
        %v536 = vld [vmem:[%s46 + $0x7a0] sm:$0xff]
        %537 = vst [vmem:[%s47 + $0x7a0] sm:$0xff] %v536
        %v538 = vld [vmem:[%s46 + $0x7a8] sm:$0xff]
        %539 = vst [vmem:[%s47 + $0x7a8] sm:$0xff] %v538
        %v540 = vld [vmem:[%s46 + $0x7b0] sm:$0xff]
        %541 = vst [vmem:[%s47 + $0x7b0] sm:$0xff] %v540
        %v542 = vld [vmem:[%s46 + $0x7b8] sm:$0xff]
        %543 = vst [vmem:[%s47 + $0x7b8] sm:$0xff] %v542
        %v544 = vld [vmem:[%s46 + $0x7c0] sm:$0xff]
        %545 = vst [vmem:[%s47 + $0x7c0] sm:$0xff] %v544
        %v546 = vld [vmem:[%s46 + $0x7c8] sm:$0xff]
        %547 = vst [vmem:[%s47 + $0x7c8] sm:$0xff] %v546
        %v548 = vld [vmem:[%s46 + $0x7d0] sm:$0xff]
        %549 = vst [vmem:[%s47 + $0x7d0] sm:$0xff] %v548
        %v550 = vld [vmem:[%s46 + $0x7d8] sm:$0xff]
        %551 = vst [vmem:[%s47 + $0x7d8] sm:$0xff] %v550
        %v552 = vld [vmem:[%s46 + $0x7e0] sm:$0xff]
        %553 = vst [vmem:[%s47 + $0x7e0] sm:$0xff] %v552
        %v554 = vld [vmem:[%s46 + $0x7e8] sm:$0xff]
        %555 = vst [vmem:[%s47 + $0x7e8] sm:$0xff] %v554
        %v556 = vld [vmem:[%s46 + $0x7f0] sm:$0xff]
        %557 = vst [vmem:[%s47 + $0x7f0] sm:$0xff] %v556
        %v558 = vld [vmem:[%s46 + $0x7f8] sm:$0xff]
        %559 = vst [vmem:[%s47 + $0x7f8] sm:$0xff] %v558
        %v560 = vld [vmem:[%s46 + $0x800] sm:$0xff]
        %561 = vst [vmem:[%s47 + $0x800] sm:$0xff] %v560
        %v562 = vld [vmem:[%s46 + $0x808] sm:$0xff]
        %563 = vst [vmem:[%s47 + $0x808] sm:$0xff] %v562
        %v564 = vld [vmem:[%s46 + $0x810] sm:$0xff]
        %565 = vst [vmem:[%s47 + $0x810] sm:$0xff] %v564
        %v566 = vld [vmem:[%s46 + $0x818] sm:$0xff]
        %567 = vst [vmem:[%s47 + $0x818] sm:$0xff] %v566
        %v568 = vld [vmem:[%s46 + $0x820] sm:$0xff]
        %569 = vst [vmem:[%s47 + $0x820] sm:$0xff] %v568
        %v570 = vld [vmem:[%s46 + $0x828] sm:$0xff]
        %571 = vst [vmem:[%s47 + $0x828] sm:$0xff] %v570
        %v572 = vld [vmem:[%s46 + $0x830] sm:$0xff]
        %573 = vst [vmem:[%s47 + $0x830] sm:$0xff] %v572
        %v574 = vld [vmem:[%s46 + $0x838] sm:$0xff]
        %575 = vst [vmem:[%s47 + $0x838] sm:$0xff] %v574
        %v576 = vld [vmem:[%s46 + $0x840] sm:$0xff]
        %577 = vst [vmem:[%s47 + $0x840] sm:$0xff] %v576
        %v578 = vld [vmem:[%s46 + $0x848] sm:$0xff]
        %579 = vst [vmem:[%s47 + $0x848] sm:$0xff] %v578
        %v580 = vld [vmem:[%s46 + $0x850] sm:$0xff]
        %581 = vst [vmem:[%s47 + $0x850] sm:$0xff] %v580
        %v582 = vld [vmem:[%s46 + $0x858] sm:$0xff]
        %583 = vst [vmem:[%s47 + $0x858] sm:$0xff] %v582
        %v584 = vld [vmem:[%s46 + $0x860] sm:$0xff]
        %585 = vst [vmem:[%s47 + $0x860] sm:$0xff] %v584
        %v586 = vld [vmem:[%s46 + $0x868] sm:$0xff]
        %587 = vst [vmem:[%s47 + $0x868] sm:$0xff] %v586
        %v588 = vld [vmem:[%s46 + $0x870] sm:$0xff]
        %589 = vst [vmem:[%s47 + $0x870] sm:$0xff] %v588
        %v590 = vld [vmem:[%s46 + $0x878] sm:$0xff]
        %591 = vst [vmem:[%s47 + $0x878] sm:$0xff] %v590
        %v592 = vld [vmem:[%s46 + $0x880] sm:$0xff]
        %593 = vst [vmem:[%s47 + $0x880] sm:$0xff] %v592
        %v594 = vld [vmem:[%s46 + $0x888] sm:$0xff]
        %595 = vst [vmem:[%s47 + $0x888] sm:$0xff] %v594
        %v596 = vld [vmem:[%s46 + $0x890] sm:$0xff]
        %597 = vst [vmem:[%s47 + $0x890] sm:$0xff] %v596
        %v598 = vld [vmem:[%s46 + $0x898] sm:$0xff]
        %599 = vst [vmem:[%s47 + $0x898] sm:$0xff] %v598
        %v600 = vld [vmem:[%s46 + $0x8a0] sm:$0xff]
        %601 = vst [vmem:[%s47 + $0x8a0] sm:$0xff] %v600
        %v602 = vld [vmem:[%s46 + $0x8a8] sm:$0xff]
        %603 = vst [vmem:[%s47 + $0x8a8] sm:$0xff] %v602
        %v604 = vld [vmem:[%s46 + $0x8b0] sm:$0xff]
        %605 = vst [vmem:[%s47 + $0x8b0] sm:$0xff] %v604
        %v606 = vld [vmem:[%s46 + $0x8b8] sm:$0xff]
        %607 = vst [vmem:[%s47 + $0x8b8] sm:$0xff] %v606
        %v608 = vld [vmem:[%s46 + $0x8c0] sm:$0xff]
        %609 = vst [vmem:[%s47 + $0x8c0] sm:$0xff] %v608
        %v610 = vld [vmem:[%s46 + $0x8c8] sm:$0xff]
        %611 = vst [vmem:[%s47 + $0x8c8] sm:$0xff] %v610
        %v612 = vld [vmem:[%s46 + $0x8d0] sm:$0xff]
        %613 = vst [vmem:[%s47 + $0x8d0] sm:$0xff] %v612
        %v614 = vld [vmem:[%s46 + $0x8d8] sm:$0xff]
        %615 = vst [vmem:[%s47 + $0x8d8] sm:$0xff] %v614
        %v616 = vld [vmem:[%s46 + $0x8e0] sm:$0xff]
        %617 = vst [vmem:[%s47 + $0x8e0] sm:$0xff] %v616
        %v618 = vld [vmem:[%s46 + $0x8e8] sm:$0xff]
        %619 = vst [vmem:[%s47 + $0x8e8] sm:$0xff] %v618
        %v620 = vld [vmem:[%s46 + $0x8f0] sm:$0xff]
        %621 = vst [vmem:[%s47 + $0x8f0] sm:$0xff] %v620
        %v622 = vld [vmem:[%s46 + $0x8f8] sm:$0xff]
        %623 = vst [vmem:[%s47 + $0x8f8] sm:$0xff] %v622
        %v624 = vld [vmem:[%s46 + $0x900] sm:$0xff]
        %625 = vst [vmem:[%s47 + $0x900] sm:$0xff] %v624
        %v626 = vld [vmem:[%s46 + $0x908] sm:$0xff]
        %627 = vst [vmem:[%s47 + $0x908] sm:$0xff] %v626
        %v628 = vld [vmem:[%s46 + $0x910] sm:$0xff]
        %629 = vst [vmem:[%s47 + $0x910] sm:$0xff] %v628
        %v630 = vld [vmem:[%s46 + $0x918] sm:$0xff]
        %631 = vst [vmem:[%s47 + $0x918] sm:$0xff] %v630
        %v632 = vld [vmem:[%s46 + $0x920] sm:$0xff]
        %633 = vst [vmem:[%s47 + $0x920] sm:$0xff] %v632
        %v634 = vld [vmem:[%s46 + $0x928] sm:$0xff]
        %635 = vst [vmem:[%s47 + $0x928] sm:$0xff] %v634
        %v636 = vld [vmem:[%s46 + $0x930] sm:$0xff]
        %637 = vst [vmem:[%s47 + $0x930] sm:$0xff] %v636
        %v638 = vld [vmem:[%s46 + $0x938] sm:$0xff]
        %639 = vst [vmem:[%s47 + $0x938] sm:$0xff] %v638
        %v640 = vld [vmem:[%s46 + $0x940] sm:$0xff]
        %641 = vst [vmem:[%s47 + $0x940] sm:$0xff] %v640
        %v642 = vld [vmem:[%s46 + $0x948] sm:$0xff]
        %643 = vst [vmem:[%s47 + $0x948] sm:$0xff] %v642
        %v644 = vld [vmem:[%s46 + $0x950] sm:$0xff]
        %645 = vst [vmem:[%s47 + $0x950] sm:$0xff] %v644
        %v646 = vld [vmem:[%s46 + $0x958] sm:$0xff]
        %647 = vst [vmem:[%s47 + $0x958] sm:$0xff] %v646
        %v648 = vld [vmem:[%s46 + $0x960] sm:$0xff]
        %649 = vst [vmem:[%s47 + $0x960] sm:$0xff] %v648
        %v650 = vld [vmem:[%s46 + $0x968] sm:$0xff]
        %651 = vst [vmem:[%s47 + $0x968] sm:$0xff] %v650
        %v652 = vld [vmem:[%s46 + $0x970] sm:$0xff]
        %653 = vst [vmem:[%s47 + $0x970] sm:$0xff] %v652
        %v654 = vld [vmem:[%s46 + $0x978] sm:$0xff]
        %655 = vst [vmem:[%s47 + $0x978] sm:$0xff] %v654
        %v656 = vld [vmem:[%s46 + $0x980] sm:$0xff]
        %657 = vst [vmem:[%s47 + $0x980] sm:$0xff] %v656
        %v658 = vld [vmem:[%s46 + $0x988] sm:$0xff]
        %659 = vst [vmem:[%s47 + $0x988] sm:$0xff] %v658
        %v660 = vld [vmem:[%s46 + $0x990] sm:$0xff]
        %661 = vst [vmem:[%s47 + $0x990] sm:$0xff] %v660
        %v662 = vld [vmem:[%s46 + $0x998] sm:$0xff]
        %663 = vst [vmem:[%s47 + $0x998] sm:$0xff] %v662
        %v664 = vld [vmem:[%s46 + $0x9a0] sm:$0xff]
        %665 = vst [vmem:[%s47 + $0x9a0] sm:$0xff] %v664
        %v666 = vld [vmem:[%s46 + $0x9a8] sm:$0xff]
        %667 = vst [vmem:[%s47 + $0x9a8] sm:$0xff] %v666
        %v668 = vld [vmem:[%s46 + $0x9b0] sm:$0xff]
        %669 = vst [vmem:[%s47 + $0x9b0] sm:$0xff] %v668
        %v670 = vld [vmem:[%s46 + $0x9b8] sm:$0xff]
        %671 = vst [vmem:[%s47 + $0x9b8] sm:$0xff] %v670
        %v672 = vld [vmem:[%s46 + $0x9c0] sm:$0xff]
        %673 = vst [vmem:[%s47 + $0x9c0] sm:$0xff] %v672
        %v674 = vld [vmem:[%s46 + $0x9c8] sm:$0xff]
        %675 = vst [vmem:[%s47 + $0x9c8] sm:$0xff] %v674
        %v676 = vld [vmem:[%s46 + $0x9d0] sm:$0xff]
        %677 = vst [vmem:[%s47 + $0x9d0] sm:$0xff] %v676
        %v678 = vld [vmem:[%s46 + $0x9d8] sm:$0xff]
        %679 = vst [vmem:[%s47 + $0x9d8] sm:$0xff] %v678
        %v680 = vld [vmem:[%s46 + $0x9e0] sm:$0xff]
        %681 = vst [vmem:[%s47 + $0x9e0] sm:$0xff] %v680
        %v682 = vld [vmem:[%s46 + $0x9e8] sm:$0xff]
        %683 = vst [vmem:[%s47 + $0x9e8] sm:$0xff] %v682
        %v684 = vld [vmem:[%s46 + $0x9f0] sm:$0xff]
        %685 = vst [vmem:[%s47 + $0x9f0] sm:$0xff] %v684
        %v686 = vld [vmem:[%s46 + $0x9f8] sm:$0xff]
        %687 = vst [vmem:[%s47 + $0x9f8] sm:$0xff] %v686
        %v688 = vld [vmem:[%s46 + $0xa00] sm:$0xff]
        %689 = vst [vmem:[%s47 + $0xa00] sm:$0xff] %v688
        %v690 = vld [vmem:[%s46 + $0xa08] sm:$0xff]
        %691 = vst [vmem:[%s47 + $0xa08] sm:$0xff] %v690
        %v692 = vld [vmem:[%s46 + $0xa10] sm:$0xff]
        %693 = vst [vmem:[%s47 + $0xa10] sm:$0xff] %v692
        %v694 = vld [vmem:[%s46 + $0xa18] sm:$0xff]
        %695 = vst [vmem:[%s47 + $0xa18] sm:$0xff] %v694
        %v696 = vld [vmem:[%s46 + $0xa20] sm:$0xff]
        %697 = vst [vmem:[%s47 + $0xa20] sm:$0xff] %v696
        %v698 = vld [vmem:[%s46 + $0xa28] sm:$0xff]
        %699 = vst [vmem:[%s47 + $0xa28] sm:$0xff] %v698
        %v700 = vld [vmem:[%s46 + $0xa30] sm:$0xff]
        %701 = vst [vmem:[%s47 + $0xa30] sm:$0xff] %v700
        %v702 = vld [vmem:[%s46 + $0xa38] sm:$0xff]
        %703 = vst [vmem:[%s47 + $0xa38] sm:$0xff] %v702
        %v704 = vld [vmem:[%s46 + $0xa40] sm:$0xff]
        %705 = vst [vmem:[%s47 + $0xa40] sm:$0xff] %v704
        %v706 = vld [vmem:[%s46 + $0xa48] sm:$0xff]
        %707 = vst [vmem:[%s47 + $0xa48] sm:$0xff] %v706
        %v708 = vld [vmem:[%s46 + $0xa50] sm:$0xff]
        %709 = vst [vmem:[%s47 + $0xa50] sm:$0xff] %v708
        %v710 = vld [vmem:[%s46 + $0xa58] sm:$0xff]
        %711 = vst [vmem:[%s47 + $0xa58] sm:$0xff] %v710
        %v712 = vld [vmem:[%s46 + $0xa60] sm:$0xff]
        %713 = vst [vmem:[%s47 + $0xa60] sm:$0xff] %v712
        %v714 = vld [vmem:[%s46 + $0xa68] sm:$0xff]
        %715 = vst [vmem:[%s47 + $0xa68] sm:$0xff] %v714
        %v716 = vld [vmem:[%s46 + $0xa70] sm:$0xff]
        %717 = vst [vmem:[%s47 + $0xa70] sm:$0xff] %v716
        %v718 = vld [vmem:[%s46 + $0xa78] sm:$0xff]
        %719 = vst [vmem:[%s47 + $0xa78] sm:$0xff] %v718
        %v720 = vld [vmem:[%s46 + $0xa80] sm:$0xff]
        %721 = vst [vmem:[%s47 + $0xa80] sm:$0xff] %v720
        %v722 = vld [vmem:[%s46 + $0xa88] sm:$0xff]
        %723 = vst [vmem:[%s47 + $0xa88] sm:$0xff] %v722
        %v724 = vld [vmem:[%s46 + $0xa90] sm:$0xff]
        %725 = vst [vmem:[%s47 + $0xa90] sm:$0xff] %v724
        %v726 = vld [vmem:[%s46 + $0xa98] sm:$0xff]
        %727 = vst [vmem:[%s47 + $0xa98] sm:$0xff] %v726
        %v728 = vld [vmem:[%s46 + $0xaa0] sm:$0xff]
        %729 = vst [vmem:[%s47 + $0xaa0] sm:$0xff] %v728
        %v730 = vld [vmem:[%s46 + $0xaa8] sm:$0xff]
        %731 = vst [vmem:[%s47 + $0xaa8] sm:$0xff] %v730
        %v732 = vld [vmem:[%s46 + $0xab0] sm:$0xff]
        %733 = vst [vmem:[%s47 + $0xab0] sm:$0xff] %v732
        %v734 = vld [vmem:[%s46 + $0xab8] sm:$0xff]
        %735 = vst [vmem:[%s47 + $0xab8] sm:$0xff] %v734
        %v736 = vld [vmem:[%s46 + $0xac0] sm:$0xff]
        %737 = vst [vmem:[%s47 + $0xac0] sm:$0xff] %v736
        %v738 = vld [vmem:[%s46 + $0xac8] sm:$0xff]
        %739 = vst [vmem:[%s47 + $0xac8] sm:$0xff] %v738
        %v740 = vld [vmem:[%s46 + $0xad0] sm:$0xff]
        %741 = vst [vmem:[%s47 + $0xad0] sm:$0xff] %v740
        %v742 = vld [vmem:[%s46 + $0xad8] sm:$0xff]
        %743 = vst [vmem:[%s47 + $0xad8] sm:$0xff] %v742
        %v744 = vld [vmem:[%s46 + $0xae0] sm:$0xff]
        %745 = vst [vmem:[%s47 + $0xae0] sm:$0xff] %v744
        %v746 = vld [vmem:[%s46 + $0xae8] sm:$0xff]
        %747 = vst [vmem:[%s47 + $0xae8] sm:$0xff] %v746
        %v748 = vld [vmem:[%s46 + $0xaf0] sm:$0xff]
        %749 = vst [vmem:[%s47 + $0xaf0] sm:$0xff] %v748
        %v750 = vld [vmem:[%s46 + $0xaf8] sm:$0xff]
        %751 = vst [vmem:[%s47 + $0xaf8] sm:$0xff] %v750
        %v752 = vld [vmem:[%s46 + $0xb00] sm:$0xff]
        %753 = vst [vmem:[%s47 + $0xb00] sm:$0xff] %v752
        %v754 = vld [vmem:[%s46 + $0xb08] sm:$0xff]
        %755 = vst [vmem:[%s47 + $0xb08] sm:$0xff] %v754
        %v756 = vld [vmem:[%s46 + $0xb10] sm:$0xff]
        %757 = vst [vmem:[%s47 + $0xb10] sm:$0xff] %v756
        %v758 = vld [vmem:[%s46 + $0xb18] sm:$0xff]
        %759 = vst [vmem:[%s47 + $0xb18] sm:$0xff] %v758
        %v760 = vld [vmem:[%s46 + $0xb20] sm:$0xff]
        %761 = vst [vmem:[%s47 + $0xb20] sm:$0xff] %v760
        %v762 = vld [vmem:[%s46 + $0xb28] sm:$0xff]
        %763 = vst [vmem:[%s47 + $0xb28] sm:$0xff] %v762
        %v764 = vld [vmem:[%s46 + $0xb30] sm:$0xff]
        %765 = vst [vmem:[%s47 + $0xb30] sm:$0xff] %v764
        %v766 = vld [vmem:[%s46 + $0xb38] sm:$0xff]
        %767 = vst [vmem:[%s47 + $0xb38] sm:$0xff] %v766
        %v768 = vld [vmem:[%s46 + $0xb40] sm:$0xff]
        %769 = vst [vmem:[%s47 + $0xb40] sm:$0xff] %v768
        %v770 = vld [vmem:[%s46 + $0xb48] sm:$0xff]
        %771 = vst [vmem:[%s47 + $0xb48] sm:$0xff] %v770
        %v772 = vld [vmem:[%s46 + $0xb50] sm:$0xff]
        %773 = vst [vmem:[%s47 + $0xb50] sm:$0xff] %v772
        %v774 = vld [vmem:[%s46 + $0xb58] sm:$0xff]
        %775 = vst [vmem:[%s47 + $0xb58] sm:$0xff] %v774
        %v776 = vld [vmem:[%s46 + $0xb60] sm:$0xff]
        %777 = vst [vmem:[%s47 + $0xb60] sm:$0xff] %v776
        %v778 = vld [vmem:[%s46 + $0xb68] sm:$0xff]
        %779 = vst [vmem:[%s47 + $0xb68] sm:$0xff] %v778
        %v780 = vld [vmem:[%s46 + $0xb70] sm:$0xff]
        %781 = vst [vmem:[%s47 + $0xb70] sm:$0xff] %v780
        %v782 = vld [vmem:[%s46 + $0xb78] sm:$0xff]
        %783 = vst [vmem:[%s47 + $0xb78] sm:$0xff] %v782
        %v784 = vld [vmem:[%s46 + $0xb80] sm:$0xff]
        %785 = vst [vmem:[%s47 + $0xb80] sm:$0xff] %v784
        %v786 = vld [vmem:[%s46 + $0xb88] sm:$0xff]
        %787 = vst [vmem:[%s47 + $0xb88] sm:$0xff] %v786
        %v788 = vld [vmem:[%s46 + $0xb90] sm:$0xff]
        %789 = vst [vmem:[%s47 + $0xb90] sm:$0xff] %v788
        %v790 = vld [vmem:[%s46 + $0xb98] sm:$0xff]
        %791 = vst [vmem:[%s47 + $0xb98] sm:$0xff] %v790
        %v792 = vld [vmem:[%s46 + $0xba0] sm:$0xff]
        %793 = vst [vmem:[%s47 + $0xba0] sm:$0xff] %v792
        %v794 = vld [vmem:[%s46 + $0xba8] sm:$0xff]
        %795 = vst [vmem:[%s47 + $0xba8] sm:$0xff] %v794
        %v796 = vld [vmem:[%s46 + $0xbb0] sm:$0xff]
        %797 = vst [vmem:[%s47 + $0xbb0] sm:$0xff] %v796
        %v798 = vld [vmem:[%s46 + $0xbb8] sm:$0xff]
        %799 = vst [vmem:[%s47 + $0xbb8] sm:$0xff] %v798
        %v800 = vld [vmem:[%s46 + $0xbc0] sm:$0xff]
        %801 = vst [vmem:[%s47 + $0xbc0] sm:$0xff] %v800
        %v802 = vld [vmem:[%s46 + $0xbc8] sm:$0xff]
        %803 = vst [vmem:[%s47 + $0xbc8] sm:$0xff] %v802
        %v804 = vld [vmem:[%s46 + $0xbd0] sm:$0xff]
        %805 = vst [vmem:[%s47 + $0xbd0] sm:$0xff] %v804
        %v806 = vld [vmem:[%s46 + $0xbd8] sm:$0xff]
        %807 = vst [vmem:[%s47 + $0xbd8] sm:$0xff] %v806
        %v808 = vld [vmem:[%s46 + $0xbe0] sm:$0xff]
        %809 = vst [vmem:[%s47 + $0xbe0] sm:$0xff] %v808
        %v810 = vld [vmem:[%s46 + $0xbe8] sm:$0xff]
        %811 = vst [vmem:[%s47 + $0xbe8] sm:$0xff] %v810
        %v812 = vld [vmem:[%s46 + $0xbf0] sm:$0xff]
        %813 = vst [vmem:[%s47 + $0xbf0] sm:$0xff] %v812
        %v814 = vld [vmem:[%s46 + $0xbf8] sm:$0xff]
        %815 = vst [vmem:[%s47 + $0xbf8] sm:$0xff] %v814
        %v816 = vld [vmem:[%s46 + $0xc00] sm:$0xff]
        %817 = vst [vmem:[%s47 + $0xc00] sm:$0xff] %v816
        %v818 = vld [vmem:[%s46 + $0xc08] sm:$0xff]
        %819 = vst [vmem:[%s47 + $0xc08] sm:$0xff] %v818
        %v820 = vld [vmem:[%s46 + $0xc10] sm:$0xff]
        %821 = vst [vmem:[%s47 + $0xc10] sm:$0xff] %v820
        %v822 = vld [vmem:[%s46 + $0xc18] sm:$0xff]
        %823 = vst [vmem:[%s47 + $0xc18] sm:$0xff] %v822
        %v824 = vld [vmem:[%s46 + $0xc20] sm:$0xff]
        %825 = vst [vmem:[%s47 + $0xc20] sm:$0xff] %v824
        %v826 = vld [vmem:[%s46 + $0xc28] sm:$0xff]
        %827 = vst [vmem:[%s47 + $0xc28] sm:$0xff] %v826
        %v828 = vld [vmem:[%s46 + $0xc30] sm:$0xff]
        %829 = vst [vmem:[%s47 + $0xc30] sm:$0xff] %v828
        %v830 = vld [vmem:[%s46 + $0xc38] sm:$0xff]
        %831 = vst [vmem:[%s47 + $0xc38] sm:$0xff] %v830
        %v832 = vld [vmem:[%s46 + $0xc40] sm:$0xff]
        %833 = vst [vmem:[%s47 + $0xc40] sm:$0xff] %v832
        %v834 = vld [vmem:[%s46 + $0xc48] sm:$0xff]
        %835 = vst [vmem:[%s47 + $0xc48] sm:$0xff] %v834
        %v836 = vld [vmem:[%s46 + $0xc50] sm:$0xff]
        %837 = vst [vmem:[%s47 + $0xc50] sm:$0xff] %v836
        %v838 = vld [vmem:[%s46 + $0xc58] sm:$0xff]
        %839 = vst [vmem:[%s47 + $0xc58] sm:$0xff] %v838
        %v840 = vld [vmem:[%s46 + $0xc60] sm:$0xff]
        %841 = vst [vmem:[%s47 + $0xc60] sm:$0xff] %v840
        %v842 = vld [vmem:[%s46 + $0xc68] sm:$0xff]
        %843 = vst [vmem:[%s47 + $0xc68] sm:$0xff] %v842
        %v844 = vld [vmem:[%s46 + $0xc70] sm:$0xff]
        %845 = vst [vmem:[%s47 + $0xc70] sm:$0xff] %v844
        %v846 = vld [vmem:[%s46 + $0xc78] sm:$0xff]
        %847 = vst [vmem:[%s47 + $0xc78] sm:$0xff] %v846
        %v848 = vld [vmem:[%s46 + $0xc80] sm:$0xff]
        %849 = vst [vmem:[%s47 + $0xc80] sm:$0xff] %v848
        %v850 = vld [vmem:[%s46 + $0xc88] sm:$0xff]
        %851 = vst [vmem:[%s47 + $0xc88] sm:$0xff] %v850
        %v852 = vld [vmem:[%s46 + $0xc90] sm:$0xff]
        %853 = vst [vmem:[%s47 + $0xc90] sm:$0xff] %v852
        %v854 = vld [vmem:[%s46 + $0xc98] sm:$0xff]
        %855 = vst [vmem:[%s47 + $0xc98] sm:$0xff] %v854
        %v856 = vld [vmem:[%s46 + $0xca0] sm:$0xff]
        %857 = vst [vmem:[%s47 + $0xca0] sm:$0xff] %v856
        %v858 = vld [vmem:[%s46 + $0xca8] sm:$0xff]
        %859 = vst [vmem:[%s47 + $0xca8] sm:$0xff] %v858
        %v860 = vld [vmem:[%s46 + $0xcb0] sm:$0xff]
        %861 = vst [vmem:[%s47 + $0xcb0] sm:$0xff] %v860
        %v862 = vld [vmem:[%s46 + $0xcb8] sm:$0xff]
        %863 = vst [vmem:[%s47 + $0xcb8] sm:$0xff] %v862
        %v864 = vld [vmem:[%s46 + $0xcc0] sm:$0xff]
        %865 = vst [vmem:[%s47 + $0xcc0] sm:$0xff] %v864
        %v866 = vld [vmem:[%s46 + $0xcc8] sm:$0xff]
        %867 = vst [vmem:[%s47 + $0xcc8] sm:$0xff] %v866
        %v868 = vld [vmem:[%s46 + $0xcd0] sm:$0xff]
        %869 = vst [vmem:[%s47 + $0xcd0] sm:$0xff] %v868
        %v870 = vld [vmem:[%s46 + $0xcd8] sm:$0xff]
        %871 = vst [vmem:[%s47 + $0xcd8] sm:$0xff] %v870
        %v872 = vld [vmem:[%s46 + $0xce0] sm:$0xff]
        %873 = vst [vmem:[%s47 + $0xce0] sm:$0xff] %v872
        %v874 = vld [vmem:[%s46 + $0xce8] sm:$0xff]
        %875 = vst [vmem:[%s47 + $0xce8] sm:$0xff] %v874
        %v876 = vld [vmem:[%s46 + $0xcf0] sm:$0xff]
        %877 = vst [vmem:[%s47 + $0xcf0] sm:$0xff] %v876
        %v878 = vld [vmem:[%s46 + $0xcf8] sm:$0xff]
        %879 = vst [vmem:[%s47 + $0xcf8] sm:$0xff] %v878
        %v880 = vld [vmem:[%s46 + $0xd00] sm:$0xff]
        %881 = vst [vmem:[%s47 + $0xd00] sm:$0xff] %v880
        %v882 = vld [vmem:[%s46 + $0xd08] sm:$0xff]
        %883 = vst [vmem:[%s47 + $0xd08] sm:$0xff] %v882
        %v884 = vld [vmem:[%s46 + $0xd10] sm:$0xff]
        %885 = vst [vmem:[%s47 + $0xd10] sm:$0xff] %v884
        %v886 = vld [vmem:[%s46 + $0xd18] sm:$0xff]
        %887 = vst [vmem:[%s47 + $0xd18] sm:$0xff] %v886
        %v888 = vld [vmem:[%s46 + $0xd20] sm:$0xff]
        %889 = vst [vmem:[%s47 + $0xd20] sm:$0xff] %v888
        %v890 = vld [vmem:[%s46 + $0xd28] sm:$0xff]
        %891 = vst [vmem:[%s47 + $0xd28] sm:$0xff] %v890
        %v892 = vld [vmem:[%s46 + $0xd30] sm:$0xff]
        %893 = vst [vmem:[%s47 + $0xd30] sm:$0xff] %v892
        %v894 = vld [vmem:[%s46 + $0xd38] sm:$0xff]
        %895 = vst [vmem:[%s47 + $0xd38] sm:$0xff] %v894
        %v896 = vld [vmem:[%s46 + $0xd40] sm:$0xff]
        %897 = vst [vmem:[%s47 + $0xd40] sm:$0xff] %v896
        %v898 = vld [vmem:[%s46 + $0xd48] sm:$0xff]
        %899 = vst [vmem:[%s47 + $0xd48] sm:$0xff] %v898
        %v900 = vld [vmem:[%s46 + $0xd50] sm:$0xff]
        %901 = vst [vmem:[%s47 + $0xd50] sm:$0xff] %v900
        %v902 = vld [vmem:[%s46 + $0xd58] sm:$0xff]
        %903 = vst [vmem:[%s47 + $0xd58] sm:$0xff] %v902
        %v904 = vld [vmem:[%s46 + $0xd60] sm:$0xff]
        %905 = vst [vmem:[%s47 + $0xd60] sm:$0xff] %v904
        %v906 = vld [vmem:[%s46 + $0xd68] sm:$0xff]
        %907 = vst [vmem:[%s47 + $0xd68] sm:$0xff] %v906
        %v908 = vld [vmem:[%s46 + $0xd70] sm:$0xff]
        %909 = vst [vmem:[%s47 + $0xd70] sm:$0xff] %v908
        %v910 = vld [vmem:[%s46 + $0xd78] sm:$0xff]
        %911 = vst [vmem:[%s47 + $0xd78] sm:$0xff] %v910
        %v912 = vld [vmem:[%s46 + $0xd80] sm:$0xff]
        %913 = vst [vmem:[%s47 + $0xd80] sm:$0xff] %v912
        %v914 = vld [vmem:[%s46 + $0xd88] sm:$0xff]
        %915 = vst [vmem:[%s47 + $0xd88] sm:$0xff] %v914
        %v916 = vld [vmem:[%s46 + $0xd90] sm:$0xff]
        %917 = vst [vmem:[%s47 + $0xd90] sm:$0xff] %v916
        %v918 = vld [vmem:[%s46 + $0xd98] sm:$0xff]
        %919 = vst [vmem:[%s47 + $0xd98] sm:$0xff] %v918
        %v920 = vld [vmem:[%s46 + $0xda0] sm:$0xff]
        %921 = vst [vmem:[%s47 + $0xda0] sm:$0xff] %v920
        %v922 = vld [vmem:[%s46 + $0xda8] sm:$0xff]
        %923 = vst [vmem:[%s47 + $0xda8] sm:$0xff] %v922
        %v924 = vld [vmem:[%s46 + $0xdb0] sm:$0xff]
        %925 = vst [vmem:[%s47 + $0xdb0] sm:$0xff] %v924
        %v926 = vld [vmem:[%s46 + $0xdb8] sm:$0xff]
        %927 = vst [vmem:[%s47 + $0xdb8] sm:$0xff] %v926
        %v928 = vld [vmem:[%s46 + $0xdc0] sm:$0xff]
        %929 = vst [vmem:[%s47 + $0xdc0] sm:$0xff] %v928
        %v930 = vld [vmem:[%s46 + $0xdc8] sm:$0xff]
        %931 = vst [vmem:[%s47 + $0xdc8] sm:$0xff] %v930
        %v932 = vld [vmem:[%s46 + $0xdd0] sm:$0xff]
        %933 = vst [vmem:[%s47 + $0xdd0] sm:$0xff] %v932
        %v934 = vld [vmem:[%s46 + $0xdd8] sm:$0xff]
        %935 = vst [vmem:[%s47 + $0xdd8] sm:$0xff] %v934
        %v936 = vld [vmem:[%s46 + $0xde0] sm:$0xff]
        %937 = vst [vmem:[%s47 + $0xde0] sm:$0xff] %v936
        %v938 = vld [vmem:[%s46 + $0xde8] sm:$0xff]
        %939 = vst [vmem:[%s47 + $0xde8] sm:$0xff] %v938
        %v940 = vld [vmem:[%s46 + $0xdf0] sm:$0xff]
        %941 = vst [vmem:[%s47 + $0xdf0] sm:$0xff] %v940
        %v942 = vld [vmem:[%s46 + $0xdf8] sm:$0xff]
        %943 = vst [vmem:[%s47 + $0xdf8] sm:$0xff] %v942
        %v944 = vld [vmem:[%s46 + $0xe00] sm:$0xff]
        %945 = vst [vmem:[%s47 + $0xe00] sm:$0xff] %v944
        %v946 = vld [vmem:[%s46 + $0xe08] sm:$0xff]
        %947 = vst [vmem:[%s47 + $0xe08] sm:$0xff] %v946
        %v948 = vld [vmem:[%s46 + $0xe10] sm:$0xff]
        %949 = vst [vmem:[%s47 + $0xe10] sm:$0xff] %v948
        %v950 = vld [vmem:[%s46 + $0xe18] sm:$0xff]
        %951 = vst [vmem:[%s47 + $0xe18] sm:$0xff] %v950
        %v952 = vld [vmem:[%s46 + $0xe20] sm:$0xff]
        %953 = vst [vmem:[%s47 + $0xe20] sm:$0xff] %v952
        %v954 = vld [vmem:[%s46 + $0xe28] sm:$0xff]
        %955 = vst [vmem:[%s47 + $0xe28] sm:$0xff] %v954
        %v956 = vld [vmem:[%s46 + $0xe30] sm:$0xff]
        %957 = vst [vmem:[%s47 + $0xe30] sm:$0xff] %v956
        %v958 = vld [vmem:[%s46 + $0xe38] sm:$0xff]
        %959 = vst [vmem:[%s47 + $0xe38] sm:$0xff] %v958
        %v960 = vld [vmem:[%s46 + $0xe40] sm:$0xff]
        %961 = vst [vmem:[%s47 + $0xe40] sm:$0xff] %v960
        %v962 = vld [vmem:[%s46 + $0xe48] sm:$0xff]
        %963 = vst [vmem:[%s47 + $0xe48] sm:$0xff] %v962
        %v964 = vld [vmem:[%s46 + $0xe50] sm:$0xff]
        %965 = vst [vmem:[%s47 + $0xe50] sm:$0xff] %v964
        %v966 = vld [vmem:[%s46 + $0xe58] sm:$0xff]
        %967 = vst [vmem:[%s47 + $0xe58] sm:$0xff] %v966
        %v968 = vld [vmem:[%s46 + $0xe60] sm:$0xff]
        %969 = vst [vmem:[%s47 + $0xe60] sm:$0xff] %v968
        %v970 = vld [vmem:[%s46 + $0xe68] sm:$0xff]
        %971 = vst [vmem:[%s47 + $0xe68] sm:$0xff] %v970
        %v972 = vld [vmem:[%s46 + $0xe70] sm:$0xff]
        %973 = vst [vmem:[%s47 + $0xe70] sm:$0xff] %v972
        %v974 = vld [vmem:[%s46 + $0xe78] sm:$0xff]
        %975 = vst [vmem:[%s47 + $0xe78] sm:$0xff] %v974
        %v976 = vld [vmem:[%s46 + $0xe80] sm:$0xff]
        %977 = vst [vmem:[%s47 + $0xe80] sm:$0xff] %v976
        %v978 = vld [vmem:[%s46 + $0xe88] sm:$0xff]
        %979 = vst [vmem:[%s47 + $0xe88] sm:$0xff] %v978
        %v980 = vld [vmem:[%s46 + $0xe90] sm:$0xff]
        %981 = vst [vmem:[%s47 + $0xe90] sm:$0xff] %v980
        %v982 = vld [vmem:[%s46 + $0xe98] sm:$0xff]
        %983 = vst [vmem:[%s47 + $0xe98] sm:$0xff] %v982
        %v984 = vld [vmem:[%s46 + $0xea0] sm:$0xff]
        %985 = vst [vmem:[%s47 + $0xea0] sm:$0xff] %v984
        %v986 = vld [vmem:[%s46 + $0xea8] sm:$0xff]
        %987 = vst [vmem:[%s47 + $0xea8] sm:$0xff] %v986
        %v988 = vld [vmem:[%s46 + $0xeb0] sm:$0xff]
        %989 = vst [vmem:[%s47 + $0xeb0] sm:$0xff] %v988
        %v990 = vld [vmem:[%s46 + $0xeb8] sm:$0xff]
        %991 = vst [vmem:[%s47 + $0xeb8] sm:$0xff] %v990
        %v992 = vld [vmem:[%s46 + $0xec0] sm:$0xff]
        %993 = vst [vmem:[%s47 + $0xec0] sm:$0xff] %v992
        %v994 = vld [vmem:[%s46 + $0xec8] sm:$0xff]
        %995 = vst [vmem:[%s47 + $0xec8] sm:$0xff] %v994
        %v996 = vld [vmem:[%s46 + $0xed0] sm:$0xff]
        %997 = vst [vmem:[%s47 + $0xed0] sm:$0xff] %v996
        %v998 = vld [vmem:[%s46 + $0xed8] sm:$0xff]
        %999 = vst [vmem:[%s47 + $0xed8] sm:$0xff] %v998
        %v1000 = vld [vmem:[%s46 + $0xee0] sm:$0xff]
        %1001 = vst [vmem:[%s47 + $0xee0] sm:$0xff] %v1000
        %v1002 = vld [vmem:[%s46 + $0xee8] sm:$0xff]
        %1003 = vst [vmem:[%s47 + $0xee8] sm:$0xff] %v1002
        %v1004 = vld [vmem:[%s46 + $0xef0] sm:$0xff]
        %1005 = vst [vmem:[%s47 + $0xef0] sm:$0xff] %v1004
        %v1006 = vld [vmem:[%s46 + $0xef8] sm:$0xff]
        %1007 = vst [vmem:[%s47 + $0xef8] sm:$0xff] %v1006
        %v1008 = vld [vmem:[%s46 + $0xf00] sm:$0xff]
        %1009 = vst [vmem:[%s47 + $0xf00] sm:$0xff] %v1008
        %v1010 = vld [vmem:[%s46 + $0xf08] sm:$0xff]
        %1011 = vst [vmem:[%s47 + $0xf08] sm:$0xff] %v1010
        %v1012 = vld [vmem:[%s46 + $0xf10] sm:$0xff]
        %1013 = vst [vmem:[%s47 + $0xf10] sm:$0xff] %v1012
        %v1014 = vld [vmem:[%s46 + $0xf18] sm:$0xff]
        %1015 = vst [vmem:[%s47 + $0xf18] sm:$0xff] %v1014
        %v1016 = vld [vmem:[%s46 + $0xf20] sm:$0xff]
        %1017 = vst [vmem:[%s47 + $0xf20] sm:$0xff] %v1016
        %v1018 = vld [vmem:[%s46 + $0xf28] sm:$0xff]
        %1019 = vst [vmem:[%s47 + $0xf28] sm:$0xff] %v1018
        %v1020 = vld [vmem:[%s46 + $0xf30] sm:$0xff]
        %1021 = vst [vmem:[%s47 + $0xf30] sm:$0xff] %v1020
        %v1022 = vld [vmem:[%s46 + $0xf38] sm:$0xff]
        %1023 = vst [vmem:[%s47 + $0xf38] sm:$0xff] %v1022
      $region37: #{discriminator_forward.1} parent=31 // loop_footer
        %s45 = sadd.s32 1, %s41
      $region38: #{discriminator_forward.1} parent=31 // loop_footer_branch
        %40 = sbr.rel target = $region34
      $region39: #{discriminator_forward.1} parent=31 // loop_exit
        _
    $region32: #{discriminator_forward.1} parent=16 // pred_fallthru
      _
    %p1024 = pneg %p36
    // Predicated region
    $region40: #{discriminator_forward.1} parent=16 // pred_check
      _
    $region41: #{discriminator_forward.1} parent=16 // pred_check_branch
      %1026 = sbr.rel (%p36) target = $region43
    $region42: #{discriminator_forward.1} parent=16 // pred_region
      %s1027 = sand.u32 3904, 7
    $region43: #{discriminator_forward.1} parent=16 // pred_fallthru
      _
  $region17: #{discriminator_forward.1} parent=0 // pred_fallthru
    _
  // Predicated region
  $region18: #{discriminator_forward.1} parent=0 // pred_check
    %p21 = pneg %p17
  $region19: #{discriminator_forward.1} parent=0 // pred_check_branch
    %23 = sbr.rel (%p21) target = $region21
  $region20: #{discriminator_forward.1} parent=0 // pred_region
    %s24 = sshllo.u32 0, 3904
    loop: start=0, step=1, limit=1
    $region22: #{discriminator_forward.1} parent=20 // loop_pre_header
      _
    $region23: #{discriminator_forward.1} parent=20 // loop_header
      %s26 = sphi 0, %s30
      %p27 = scmp.ge.s32.totalorder %s26, 1
      %s31 = sphi %s3, %s3
      %s32 = sphi [#allocation4], [#allocation4]
    $region24: #{discriminator_forward.1} parent=20 // loop_header_branch
      %29 = sbr.rel (%p27) target = $region28
    $region25: #{discriminator_forward.1} parent=20 // loop_body
      %v33 = vld [vmem:[%s31] sm:%s24]
      %34 = vst [vmem:[%s32] sm:%s24] %v33
    $region26: #{discriminator_forward.1} parent=20 // loop_footer
      %s30 = sadd.s32 1, %s26
    $region27: #{discriminator_forward.1} parent=20 // loop_footer_branch
      %25 = sbr.rel target = $region23
    $region28: #{discriminator_forward.1} parent=20 // loop_exit
      _
  $region21: #{discriminator_forward.1} parent=0 // pred_fallthru
    _
  // Predicated region
  $region44: #{discriminator_forward.1} parent=0 // pred_check
    _
  $region45: #{discriminator_forward.1} parent=0 // pred_check_branch
    %1030 = sbr.rel (0) target = $region47
  $region46: #{discriminator_forward.1} parent=0 // pred_region
    %1031 = vsyncadd [#allocation5], 62464
  $region47: #{discriminator_forward.1} parent=0 // pred_fallthru
    _
  %v1032 = vld [vmem:[%s0] sm:$0xff]
  %v1033 = vld [vmem:[%s0 + $0x8] sm:$0xf]
  %v1034 = vld [vmem:[%s0 + $0xc] sm:$0xff]
  %v1035 = vld [vmem:[%s0 + $0x14] sm:$0xf]
  %v1036 = vld [vmem:[%s0 + $0x18] sm:$0xff]
  %v1037 = vld [vmem:[%s0 + $0x20] sm:$0xf]
  %v1038 = vld [vmem:[%s0 + $0x24] sm:$0xff]
  %v1039 = vld [vmem:[%s0 + $0x2c] sm:$0xf]
  %v1040 = vld [vmem:[%s0 + $0x30] sm:$0xff]
  %v1041 = vld [vmem:[%s0 + $0x38] sm:$0xf]
  %v1042 = vld [vmem:[%s0 + $0x3c] sm:$0xff]
  %v1043 = vld [vmem:[%s0 + $0x44] sm:$0xf]
  %v1044 = vld [vmem:[%s0 + $0x48] sm:$0xff]
  %v1045 = vld [vmem:[%s0 + $0x50] sm:$0xf]
  %v1046 = vld [vmem:[%s0 + $0x54] sm:$0xff]
  %v1047 = vld [vmem:[%s0 + $0x5c] sm:$0xf]
  %v1048 = vld [vmem:[%s0 + $0x60] sm:$0xff]
  %v1049 = vld [vmem:[%s0 + $0x68] sm:$0xf]
  %v1050 = vld [vmem:[%s0 + $0x6c] sm:$0xff]
  %v1051 = vld [vmem:[%s0 + $0x74] sm:$0xf]
  %v1052 = vld [vmem:[%s0 + $0x78] sm:$0xff]
  %v1053 = vld [vmem:[%s0 + $0x80] sm:$0xf]
  %v1054 = vld [vmem:[%s0 + $0x84] sm:$0xff]
  %v1055 = vld [vmem:[%s0 + $0x8c] sm:$0xf]
  %v1056 = vld [vmem:[%s0 + $0x90] sm:$0xff]
  %v1057 = vld [vmem:[%s0 + $0x98] sm:$0xf]
  %v1058 = vld [vmem:[%s0 + $0x9c] sm:$0xff]
  %v1059 = vld [vmem:[%s0 + $0xa4] sm:$0xf]
  %v1060 = vld [vmem:[%s0 + $0xa8] sm:$0xff]
  %v1061 = vld [vmem:[%s0 + $0xb0] sm:$0xf]
  %v1062 = vld [vmem:[%s0 + $0xb4] sm:$0xff]
  %v1063 = vld [vmem:[%s0 + $0xbc] sm:$0xf]
  %v1064 = vld [vmem:[%s0 + $0xc0] sm:$0xff]
  %v1065 = vld [vmem:[%s0 + $0xc8] sm:$0xf]
  %v1066 = vld [vmem:[%s0 + $0xcc] sm:$0xff]
  %v1067 = vld [vmem:[%s0 + $0xd4] sm:$0xf]
  %v1068 = vld [vmem:[%s0 + $0xd8] sm:$0xff]
  %v1069 = vld [vmem:[%s0 + $0xe0] sm:$0xf]
  %v1070 = vld [vmem:[%s0 + $0xe4] sm:$0xff]
  %v1071 = vld [vmem:[%s0 + $0xec] sm:$0xf]
  %v1072 = vld [vmem:[%s0 + $0xf0] sm:$0xff]
  %v1073 = vld [vmem:[%s0 + $0xf8] sm:$0xf]
  %v1074 = vld [vmem:[%s0 + $0xfc] sm:$0xff]
  %v1075 = vld [vmem:[%s0 + $0x104] sm:$0xf]
  %v1076 = vld [vmem:[%s0 + $0x108] sm:$0xff]
  %v1077 = vld [vmem:[%s0 + $0x110] sm:$0xf]
  %v1078 = vld [vmem:[%s0 + $0x114] sm:$0xff]
  %v1079 = vld [vmem:[%s0 + $0x11c] sm:$0xf]
  %v1080 = vld [vmem:[%s0 + $0x120] sm:$0xff]
  %v1081 = vld [vmem:[%s0 + $0x128] sm:$0xf]
  %v1082 = vld [vmem:[%s0 + $0x12c] sm:$0xff]
  %v1083 = vld [vmem:[%s0 + $0x134] sm:$0xf]
  %v1084 = vld [vmem:[%s0 + $0x138] sm:$0xff]
  %v1085 = vld [vmem:[%s0 + $0x140] sm:$0xf]
  %v1086 = vld [vmem:[%s0 + $0x144] sm:$0xff]
  %v1087 = vld [vmem:[%s0 + $0x14c] sm:$0xf]
  %v1088 = vld [vmem:[%s0 + $0x150] sm:$0xff]
  %v1089 = vld [vmem:[%s0 + $0x158] sm:$0xf]
  %v1090 = vld [vmem:[%s0 + $0x15c] sm:$0xff]
  %v1091 = vld [vmem:[%s0 + $0x164] sm:$0xf]
  %v1092 = vld [vmem:[%s0 + $0x168] sm:$0xff]
  %v1093 = vld [vmem:[%s0 + $0x170] sm:$0xf]
  %v1094 = vld [vmem:[%s0 + $0x174] sm:$0xff]
  %v1095 = vld [vmem:[%s0 + $0x17c] sm:$0xf]
  %v1096 = vld [vmem:[%s0 + $0x180] sm:$0xff]
  %v1097 = vld [vmem:[%s0 + $0x188] sm:$0xf]
  %v1098 = vld [vmem:[%s0 + $0x18c] sm:$0xff]
  %v1099 = vld [vmem:[%s0 + $0x194] sm:$0xf]
  %v1100 = vld [vmem:[%s0 + $0x198] sm:$0xff]
  %v1101 = vld [vmem:[%s0 + $0x1a0] sm:$0xf]
  %v1102 = vld [vmem:[%s0 + $0x1a4] sm:$0xff]
  %v1103 = vld [vmem:[%s0 + $0x1ac] sm:$0xf]
  %v1104 = vld [vmem:[%s0 + $0x1b0] sm:$0xff]
  %v1105 = vld [vmem:[%s0 + $0x1b8] sm:$0xf]
  %v1106 = vld [vmem:[%s0 + $0x1bc] sm:$0xff]
  %v1107 = vld [vmem:[%s0 + $0x1c4] sm:$0xf]
  %v1108 = vld [vmem:[%s0 + $0x1c8] sm:$0xff]
  %v1109 = vld [vmem:[%s0 + $0x1d0] sm:$0xf]
  %v1110 = vld [vmem:[%s0 + $0x1d4] sm:$0xff]
  %v1111 = vld [vmem:[%s0 + $0x1dc] sm:$0xf]
  %v1112 = vld [vmem:[%s0 + $0x1e0] sm:$0xff]
  %v1113 = vld [vmem:[%s0 + $0x1e8] sm:$0xf]
  %v1114 = vld [vmem:[%s0 + $0x1ec] sm:$0xff]
  %v1115 = vld [vmem:[%s0 + $0x1f4] sm:$0xf]
  %v1116 = vld [vmem:[%s0 + $0x1f8] sm:$0xff]
  %v1117 = vld [vmem:[%s0 + $0x200] sm:$0xf]
  %v1118 = vld [vmem:[%s0 + $0x204] sm:$0xff]
  %v1119 = vld [vmem:[%s0 + $0x20c] sm:$0xf]
  %v1120 = vld [vmem:[%s0 + $0x210] sm:$0xff]
  %v1121 = vld [vmem:[%s0 + $0x218] sm:$0xf]
  %v1122 = vld [vmem:[%s0 + $0x21c] sm:$0xff]
  %v1123 = vld [vmem:[%s0 + $0x224] sm:$0xf]
  %v1124 = vld [vmem:[%s0 + $0x228] sm:$0xff]
  %v1125 = vld [vmem:[%s0 + $0x230] sm:$0xf]
  %v1126 = vld [vmem:[%s0 + $0x234] sm:$0xff]
  %v1127 = vld [vmem:[%s0 + $0x23c] sm:$0xf]
  %v1128 = vld [vmem:[%s0 + $0x240] sm:$0xff]
  %v1129 = vld [vmem:[%s0 + $0x248] sm:$0xf]
  %v1130 = vld [vmem:[%s0 + $0x24c] sm:$0xff]
  %v1131 = vld [vmem:[%s0 + $0x254] sm:$0xf]
  %v1132 = vld [vmem:[%s0 + $0x258] sm:$0xff]
  %v1133 = vld [vmem:[%s0 + $0x260] sm:$0xf]
  %v1134 = vld [vmem:[%s0 + $0x264] sm:$0xff]
  %v1135 = vld [vmem:[%s0 + $0x26c] sm:$0xf]
  %v1136 = vld [vmem:[%s0 + $0x270] sm:$0xff]
  %v1137 = vld [vmem:[%s0 + $0x278] sm:$0xf]
  %v1138 = vld [vmem:[%s0 + $0x27c] sm:$0xff]
  %v1139 = vld [vmem:[%s0 + $0x284] sm:$0xf]
  %v1140 = vld [vmem:[%s0 + $0x288] sm:$0xff]
  %v1141 = vld [vmem:[%s0 + $0x290] sm:$0xf]
  %v1142 = vld [vmem:[%s0 + $0x294] sm:$0xff]
  %v1143 = vld [vmem:[%s0 + $0x29c] sm:$0xf]
  %v1144 = vld [vmem:[%s0 + $0x2a0] sm:$0xff]
  %v1145 = vld [vmem:[%s0 + $0x2a8] sm:$0xf]
  %v1146 = vld [vmem:[%s0 + $0x2ac] sm:$0xff]
  %v1147 = vld [vmem:[%s0 + $0x2b4] sm:$0xf]
  %v1148 = vld [vmem:[%s0 + $0x2b8] sm:$0xff]
  %v1149 = vld [vmem:[%s0 + $0x2c0] sm:$0xf]
  %v1150 = vld [vmem:[%s0 + $0x2c4] sm:$0xff]
  %v1151 = vld [vmem:[%s0 + $0x2cc] sm:$0xf]
  %v1152 = vld [vmem:[%s0 + $0x2d0] sm:$0xff]
  %v1153 = vld [vmem:[%s0 + $0x2d8] sm:$0xf]
  %v1154 = vld [vmem:[%s0 + $0x2dc] sm:$0xff]
  %v1155 = vld [vmem:[%s0 + $0x2e4] sm:$0xf]
  %v1156 = vld [vmem:[%s0 + $0x2e8] sm:$0xff]
  %v1157 = vld [vmem:[%s0 + $0x2f0] sm:$0xf]
  %v1158 = vld [vmem:[%s0 + $0x2f4] sm:$0xff]
  %v1159 = vld [vmem:[%s0 + $0x2fc] sm:$0xf]
  %v1160 = vld [vmem:[%s0 + $0x300] sm:$0xff]
  %v1161 = vld [vmem:[%s0 + $0x308] sm:$0xf]
  %v1162 = vld [vmem:[%s0 + $0x30c] sm:$0xff]
  %v1163 = vld [vmem:[%s0 + $0x314] sm:$0xf]
  %v1164 = vld [vmem:[%s0 + $0x318] sm:$0xff]
  %v1165 = vld [vmem:[%s0 + $0x320] sm:$0xf]
  %v1166 = vld [vmem:[%s0 + $0x324] sm:$0xff]
  %v1167 = vld [vmem:[%s0 + $0x32c] sm:$0xf]
  %v1168 = vld [vmem:[%s0 + $0x330] sm:$0xff]
  %v1169 = vld [vmem:[%s0 + $0x338] sm:$0xf]
  %v1170 = vld [vmem:[%s0 + $0x33c] sm:$0xff]
  %v1171 = vld [vmem:[%s0 + $0x344] sm:$0xf]
  %v1172 = vld [vmem:[%s0 + $0x348] sm:$0xff]
  %v1173 = vld [vmem:[%s0 + $0x350] sm:$0xf]
  %v1174 = vld [vmem:[%s0 + $0x354] sm:$0xff]
  %v1175 = vld [vmem:[%s0 + $0x35c] sm:$0xf]
  %v1176 = vld [vmem:[%s0 + $0x360] sm:$0xff]
  %v1177 = vld [vmem:[%s0 + $0x368] sm:$0xf]
  %v1178 = vld [vmem:[%s0 + $0x36c] sm:$0xff]
  %v1179 = vld [vmem:[%s0 + $0x374] sm:$0xf]
  %v1180 = vld [vmem:[%s0 + $0x378] sm:$0xff]
  %v1181 = vld [vmem:[%s0 + $0x380] sm:$0xf]
  %v1182 = vld [vmem:[%s0 + $0x384] sm:$0xff]
  %v1183 = vld [vmem:[%s0 + $0x38c] sm:$0xf]
  %v1184 = vld [vmem:[%s0 + $0x390] sm:$0xff]
  %v1185 = vld [vmem:[%s0 + $0x398] sm:$0xf]
  %v1186 = vld [vmem:[%s0 + $0x39c] sm:$0xff]
  %v1187 = vld [vmem:[%s0 + $0x3a4] sm:$0xf]
  %v1188 = vld [vmem:[%s0 + $0x3a8] sm:$0xff]
  %v1189 = vld [vmem:[%s0 + $0x3b0] sm:$0xf]
  %v1190 = vld [vmem:[%s0 + $0x3b4] sm:$0xff]
  %v1191 = vld [vmem:[%s0 + $0x3bc] sm:$0xf]
  %v1192 = vld [vmem:[%s0 + $0x3c0] sm:$0xff]
  %v1193 = vld [vmem:[%s0 + $0x3c8] sm:$0xf]
  %v1194 = vld [vmem:[%s0 + $0x3cc] sm:$0xff]
  %v1195 = vld [vmem:[%s0 + $0x3d4] sm:$0xf]
  %v1196 = vld [vmem:[%s0 + $0x3d8] sm:$0xff]
  %v1197 = vld [vmem:[%s0 + $0x3e0] sm:$0xf]
  %v1198 = vld [vmem:[%s0 + $0x3e4] sm:$0xff]
  %v1199 = vld [vmem:[%s0 + $0x3ec] sm:$0xf]
  %v1200 = vld [vmem:[%s0 + $0x3f0] sm:$0xff]
  %v1201 = vld [vmem:[%s0 + $0x3f8] sm:$0xf]
  %v1202 = vld [vmem:[%s0 + $0x3fc] sm:$0xff]
  %v1203 = vld [vmem:[%s0 + $0x404] sm:$0xf]
  %v1204 = vld [vmem:[%s0 + $0x408] sm:$0xff]
  %v1205 = vld [vmem:[%s0 + $0x410] sm:$0xf]
  %v1206 = vld [vmem:[%s0 + $0x414] sm:$0xff]
  %v1207 = vld [vmem:[%s0 + $0x41c] sm:$0xf]
  %v1208 = vld [vmem:[%s0 + $0x420] sm:$0xff]
  %v1209 = vld [vmem:[%s0 + $0x428] sm:$0xf]
  %v1210 = vld [vmem:[%s0 + $0x42c] sm:$0xff]
  %v1211 = vld [vmem:[%s0 + $0x434] sm:$0xf]
  %v1212 = vld [vmem:[%s0 + $0x438] sm:$0xff]
  %v1213 = vld [vmem:[%s0 + $0x440] sm:$0xf]
  %v1214 = vld [vmem:[%s0 + $0x444] sm:$0xff]
  %v1215 = vld [vmem:[%s0 + $0x44c] sm:$0xf]
  %v1216 = vld [vmem:[%s0 + $0x450] sm:$0xff]
  %v1217 = vld [vmem:[%s0 + $0x458] sm:$0xf]
  %v1218 = vld [vmem:[%s0 + $0x45c] sm:$0xff]
  %v1219 = vld [vmem:[%s0 + $0x464] sm:$0xf]
  %v1220 = vld [vmem:[%s0 + $0x468] sm:$0xff]
  %v1221 = vld [vmem:[%s0 + $0x470] sm:$0xf]
  %v1222 = vld [vmem:[%s0 + $0x474] sm:$0xff]
  %v1223 = vld [vmem:[%s0 + $0x47c] sm:$0xf]
  %v1224 = vld [vmem:[%s0 + $0x480] sm:$0xff]
  %v1225 = vld [vmem:[%s0 + $0x488] sm:$0xf]
  %v1226 = vld [vmem:[%s0 + $0x48c] sm:$0xff]
  %v1227 = vld [vmem:[%s0 + $0x494] sm:$0xf]
  %v1228 = vld [vmem:[%s0 + $0x498] sm:$0xff]
  %v1229 = vld [vmem:[%s0 + $0x4a0] sm:$0xf]
  %v1230 = vld [vmem:[%s0 + $0x4a4] sm:$0xff]
  %v1231 = vld [vmem:[%s0 + $0x4ac] sm:$0xf]
  %v1232 = vld [vmem:[%s0 + $0x4b0] sm:$0xff]
  %v1233 = vld [vmem:[%s0 + $0x4b8] sm:$0xf]
  %v1234 = vld [vmem:[%s0 + $0x4bc] sm:$0xff]
  %v1235 = vld [vmem:[%s0 + $0x4c4] sm:$0xf]
  %v1236 = vld [vmem:[%s0 + $0x4c8] sm:$0xff]
  %v1237 = vld [vmem:[%s0 + $0x4d0] sm:$0xf]
  %v1238 = vld [vmem:[%s0 + $0x4d4] sm:$0xff]
  %v1239 = vld [vmem:[%s0 + $0x4dc] sm:$0xf]
  %v1240 = vld [vmem:[%s0 + $0x4e0] sm:$0xff]
  %v1241 = vld [vmem:[%s0 + $0x4e8] sm:$0xf]
  %v1242 = vld [vmem:[%s0 + $0x4ec] sm:$0xff]
  %v1243 = vld [vmem:[%s0 + $0x4f4] sm:$0xf]
  %v1244 = vld [vmem:[%s0 + $0x4f8] sm:$0xff]
  %v1245 = vld [vmem:[%s0 + $0x500] sm:$0xf]
  %v1246 = vld [vmem:[%s0 + $0x504] sm:$0xff]
  %v1247 = vld [vmem:[%s0 + $0x50c] sm:$0xf]
  %v1248 = vld [vmem:[%s0 + $0x510] sm:$0xff]
  %v1249 = vld [vmem:[%s0 + $0x518] sm:$0xf]
  %v1250 = vld [vmem:[%s0 + $0x51c] sm:$0xff]
  %v1251 = vld [vmem:[%s0 + $0x524] sm:$0xf]
  %v1252 = vld [vmem:[%s0 + $0x528] sm:$0xff]
  %v1253 = vld [vmem:[%s0 + $0x530] sm:$0xf]
  %v1254 = vld [vmem:[%s0 + $0x534] sm:$0xff]
  %v1255 = vld [vmem:[%s0 + $0x53c] sm:$0xf]
  %v1256 = vld [vmem:[%s0 + $0x540] sm:$0xff]
  %v1257 = vld [vmem:[%s0 + $0x548] sm:$0xf]
  %v1258 = vld [vmem:[%s0 + $0x54c] sm:$0xff]
  %v1259 = vld [vmem:[%s0 + $0x554] sm:$0xf]
  %v1260 = vld [vmem:[%s0 + $0x558] sm:$0xff]
  %v1261 = vld [vmem:[%s0 + $0x560] sm:$0xf]
  %v1262 = vld [vmem:[%s0 + $0x564] sm:$0xff]
  %v1263 = vld [vmem:[%s0 + $0x56c] sm:$0xf]
  %v1264 = vld [vmem:[%s0 + $0x570] sm:$0xff]
  %v1265 = vld [vmem:[%s0 + $0x578] sm:$0xf]
  %v1266 = vld [vmem:[%s0 + $0x57c] sm:$0xff]
  %v1267 = vld [vmem:[%s0 + $0x584] sm:$0xf]
  %v1268 = vld [vmem:[%s0 + $0x588] sm:$0xff]
  %v1269 = vld [vmem:[%s0 + $0x590] sm:$0xf]
  %v1270 = vld [vmem:[%s0 + $0x594] sm:$0xff]
  %v1271 = vld [vmem:[%s0 + $0x59c] sm:$0xf]
  %v1272 = vld [vmem:[%s0 + $0x5a0] sm:$0xff]
  %v1273 = vld [vmem:[%s0 + $0x5a8] sm:$0xf]
  %v1274 = vld [vmem:[%s1] sm:$0xf]
  %v1275 = vld [vmem:[%s1 + $0x4] sm:$0xf]
  %v1276 = vld [vmem:[%s1 + $0x8] sm:$0xf]
  %v1277 = vld [vmem:[%s1 + $0xc] sm:$0xf]
  %v1278 = vld [vmem:[%s1 + $0x10] sm:$0xf]
  %v1279 = vld [vmem:[%s1 + $0x14] sm:$0xf]
  %v1280 = vld [vmem:[%s1 + $0x18] sm:$0xf]
  %v1281 = vld [vmem:[%s1 + $0x1c] sm:$0xf]
  %v1282 = vld [vmem:[%s1 + $0x20] sm:$0xf]
  %v1283 = vld [vmem:[%s1 + $0x24] sm:$0xf]
  %v1284 = vld [vmem:[%s1 + $0x28] sm:$0xf]
  %v1285 = vld [vmem:[%s1 + $0x2c] sm:$0xf]
  %v1286 = vld [vmem:[%s1 + $0x30] sm:$0xf]
  %v1287 = vld [vmem:[%s1 + $0x34] sm:$0xf]
  %v1288 = vld [vmem:[%s1 + $0x38] sm:$0xf]
  %v1289 = vld [vmem:[%s1 + $0x3c] sm:$0xf]
  %v1290 = vld [vmem:[%s1 + $0x40] sm:$0xf]
  %v1291 = vld [vmem:[%s1 + $0x44] sm:$0xf]
  %v1292 = vld [vmem:[%s1 + $0x48] sm:$0xf]
  %v1293 = vld [vmem:[%s1 + $0x4c] sm:$0xf]
  %v1294 = vld [vmem:[%s1 + $0x50] sm:$0xf]
  %v1295 = vld [vmem:[%s1 + $0x54] sm:$0xf]
  %v1296 = vld [vmem:[%s1 + $0x58] sm:$0xf]
  %v1297 = vld [vmem:[%s1 + $0x5c] sm:$0xf]
  %v1298 = vld [vmem:[%s1 + $0x60] sm:$0xf]
  %v1299 = vld [vmem:[%s1 + $0x64] sm:$0xf]
  %v1300 = vld [vmem:[%s1 + $0x68] sm:$0xf]
  %v1301 = vld [vmem:[%s1 + $0x6c] sm:$0xf]
  %v1302 = vld [vmem:[%s1 + $0x70] sm:$0xf]
  %v1303 = vld [vmem:[%s1 + $0x74] sm:$0xf]
  %v1304 = vld [vmem:[%s1 + $0x78] sm:$0xf]
  %v1305 = vld [vmem:[%s1 + $0x7c] sm:$0xf]
  %v1306 = vld [vmem:[%s1 + $0x80] sm:$0xf]
  %v1307 = vld [vmem:[%s1 + $0x84] sm:$0xf]
  %v1308 = vld [vmem:[%s1 + $0x88] sm:$0xf]
  %v1309 = vld [vmem:[%s1 + $0x8c] sm:$0xf]
  %v1310 = vld [vmem:[%s1 + $0x90] sm:$0xf]
  %v1311 = vld [vmem:[%s1 + $0x94] sm:$0xf]
  %v1312 = vld [vmem:[%s1 + $0x98] sm:$0xf]
  %v1313 = vld [vmem:[%s1 + $0x9c] sm:$0xf]
  %v1314 = vld [vmem:[%s1 + $0xa0] sm:$0xf]
  %v1315 = vld [vmem:[%s1 + $0xa4] sm:$0xf]
  %v1316 = vld [vmem:[%s1 + $0xa8] sm:$0xf]
  %v1317 = vld [vmem:[%s1 + $0xac] sm:$0xf]
  %v1318 = vld [vmem:[%s1 + $0xb0] sm:$0xf]
  %v1319 = vld [vmem:[%s1 + $0xb4] sm:$0xf]
  %v1320 = vld [vmem:[%s1 + $0xb8] sm:$0xf]
  %v1321 = vld [vmem:[%s1 + $0xbc] sm:$0xf]
  %v1564 = vunpack.c.l.b16 %v1032
  %v1565 = vunpack.c.h.b16 %v1032
  %v1566 = vunpack.c.l.b16 %v1033
  %v1567 = vunpack.c.l.b16 %v1034
  %v1568 = vunpack.c.h.b16 %v1034
  %v1569 = vunpack.c.l.b16 %v1035
  %v1570 = vunpack.c.l.b16 %v1036
  %v1571 = vunpack.c.h.b16 %v1036
  %v1572 = vunpack.c.l.b16 %v1037
  %v1573 = vunpack.c.l.b16 %v1038
  %v1574 = vunpack.c.h.b16 %v1038
  %v1575 = vunpack.c.l.b16 %v1039
  %v1576 = vunpack.c.l.b16 %v1040
  %v1577 = vunpack.c.h.b16 %v1040
  %v1578 = vunpack.c.l.b16 %v1041
  %v1579 = vunpack.c.l.b16 %v1042
  %v1580 = vunpack.c.h.b16 %v1042
  %v1581 = vunpack.c.l.b16 %v1043
  %v1582 = vunpack.c.l.b16 %v1044
  %v1583 = vunpack.c.h.b16 %v1044
  %v1584 = vunpack.c.l.b16 %v1045
  %v1585 = vunpack.c.l.b16 %v1046
  %v1586 = vunpack.c.h.b16 %v1046
  %v1587 = vunpack.c.l.b16 %v1047
  %v1588 = vunpack.c.l.b16 %v1048
  %v1589 = vunpack.c.h.b16 %v1048
  %v1590 = vunpack.c.l.b16 %v1049
  %v1591 = vunpack.c.l.b16 %v1050
  %v1592 = vunpack.c.h.b16 %v1050
  %v1593 = vunpack.c.l.b16 %v1051
  %v1594 = vunpack.c.l.b16 %v1052
  %v1595 = vunpack.c.h.b16 %v1052
  %v1596 = vunpack.c.l.b16 %v1053
  %v1597 = vunpack.c.l.b16 %v1054
  %v1598 = vunpack.c.h.b16 %v1054
  %v1599 = vunpack.c.l.b16 %v1055
  %v1600 = vunpack.c.l.b16 %v1056
  %v1601 = vunpack.c.h.b16 %v1056
  %v1602 = vunpack.c.l.b16 %v1057
  %v1603 = vunpack.c.l.b16 %v1058
  %v1604 = vunpack.c.h.b16 %v1058
  %v1605 = vunpack.c.l.b16 %v1059
  %v1606 = vunpack.c.l.b16 %v1060
  %v1607 = vunpack.c.h.b16 %v1060
  %v1608 = vunpack.c.l.b16 %v1061
  %v1609 = vunpack.c.l.b16 %v1062
  %v1610 = vunpack.c.h.b16 %v1062
  %v1611 = vunpack.c.l.b16 %v1063
  %v1612 = vunpack.c.l.b16 %v1064
  %v1613 = vunpack.c.h.b16 %v1064
  %v1614 = vunpack.c.l.b16 %v1065
  %v1615 = vunpack.c.l.b16 %v1066
  %v1616 = vunpack.c.h.b16 %v1066
  %v1617 = vunpack.c.l.b16 %v1067
  %v1618 = vunpack.c.l.b16 %v1068
  %v1619 = vunpack.c.h.b16 %v1068
  %v1620 = vunpack.c.l.b16 %v1069
  %v1621 = vunpack.c.l.b16 %v1070
  %v1622 = vunpack.c.h.b16 %v1070
  %v1623 = vunpack.c.l.b16 %v1071
  %v1624 = vunpack.c.l.b16 %v1072
  %v1625 = vunpack.c.h.b16 %v1072
  %v1626 = vunpack.c.l.b16 %v1073
  %v1627 = vunpack.c.l.b16 %v1074
  %v1628 = vunpack.c.h.b16 %v1074
  %v1629 = vunpack.c.l.b16 %v1075
  %v1630 = vunpack.c.l.b16 %v1076
  %v1631 = vunpack.c.h.b16 %v1076
  %v1632 = vunpack.c.l.b16 %v1077
  %v1633 = vunpack.c.l.b16 %v1078
  %v1634 = vunpack.c.h.b16 %v1078
  %v1635 = vunpack.c.l.b16 %v1079
  %v1636 = vunpack.c.l.b16 %v1080
  %v1637 = vunpack.c.h.b16 %v1080
  %v1638 = vunpack.c.l.b16 %v1081
  %v1639 = vunpack.c.l.b16 %v1082
  %v1640 = vunpack.c.h.b16 %v1082
  %v1641 = vunpack.c.l.b16 %v1083
  %v1642 = vunpack.c.l.b16 %v1084
  %v1643 = vunpack.c.h.b16 %v1084
  %v1644 = vunpack.c.l.b16 %v1085
  %v1645 = vunpack.c.l.b16 %v1086
  %v1646 = vunpack.c.h.b16 %v1086
  %v1647 = vunpack.c.l.b16 %v1087
  %v1648 = vunpack.c.l.b16 %v1088
  %v1649 = vunpack.c.h.b16 %v1088
  %v1650 = vunpack.c.l.b16 %v1089
  %v1651 = vunpack.c.l.b16 %v1090
  %v1652 = vunpack.c.h.b16 %v1090
  %v1653 = vunpack.c.l.b16 %v1091
  %v1654 = vunpack.c.l.b16 %v1092
  %v1655 = vunpack.c.h.b16 %v1092
  %v1656 = vunpack.c.l.b16 %v1093
  %v1657 = vunpack.c.l.b16 %v1094
  %v1658 = vunpack.c.h.b16 %v1094
  %v1659 = vunpack.c.l.b16 %v1095
  %v1660 = vunpack.c.l.b16 %v1096
  %v1661 = vunpack.c.h.b16 %v1096
  %v1662 = vunpack.c.l.b16 %v1097
  %v1663 = vunpack.c.l.b16 %v1098
  %v1664 = vunpack.c.h.b16 %v1098
  %v1665 = vunpack.c.l.b16 %v1099
  %v1666 = vunpack.c.l.b16 %v1100
  %v1667 = vunpack.c.h.b16 %v1100
  %v1668 = vunpack.c.l.b16 %v1101
  %v1669 = vunpack.c.l.b16 %v1102
  %v1670 = vunpack.c.h.b16 %v1102
  %v1671 = vunpack.c.l.b16 %v1103
  %v1672 = vunpack.c.l.b16 %v1104
  %v1673 = vunpack.c.h.b16 %v1104
  %v1674 = vunpack.c.l.b16 %v1105
  %v1675 = vunpack.c.l.b16 %v1106
  %v1676 = vunpack.c.h.b16 %v1106
  %v1677 = vunpack.c.l.b16 %v1107
  %v1678 = vunpack.c.l.b16 %v1108
  %v1679 = vunpack.c.h.b16 %v1108
  %v1680 = vunpack.c.l.b16 %v1109
  %v1681 = vunpack.c.l.b16 %v1110
  %v1682 = vunpack.c.h.b16 %v1110
  %v1683 = vunpack.c.l.b16 %v1111
  %v1684 = vunpack.c.l.b16 %v1112
  %v1685 = vunpack.c.h.b16 %v1112
  %v1686 = vunpack.c.l.b16 %v1113
  %v1687 = vunpack.c.l.b16 %v1114
  %v1688 = vunpack.c.h.b16 %v1114
  %v1689 = vunpack.c.l.b16 %v1115
  %v1690 = vunpack.c.l.b16 %v1116
  %v1691 = vunpack.c.h.b16 %v1116
  %v1692 = vunpack.c.l.b16 %v1117
  %v1693 = vunpack.c.l.b16 %v1118
  %v1694 = vunpack.c.h.b16 %v1118
  %v1695 = vunpack.c.l.b16 %v1119
  %v1696 = vunpack.c.l.b16 %v1120
  %v1697 = vunpack.c.h.b16 %v1120
  %v1698 = vunpack.c.l.b16 %v1121
  %v1699 = vunpack.c.l.b16 %v1122
  %v1700 = vunpack.c.h.b16 %v1122
  %v1701 = vunpack.c.l.b16 %v1123
  %v1702 = vunpack.c.l.b16 %v1124
  %v1703 = vunpack.c.h.b16 %v1124
  %v1704 = vunpack.c.l.b16 %v1125
  %v1705 = vunpack.c.l.b16 %v1126
  %v1706 = vunpack.c.h.b16 %v1126
  %v1707 = vunpack.c.l.b16 %v1127
  %v1708 = vunpack.c.l.b16 %v1128
  %v1709 = vunpack.c.h.b16 %v1128
  %v1710 = vunpack.c.l.b16 %v1129
  %v1711 = vunpack.c.l.b16 %v1130
  %v1712 = vunpack.c.h.b16 %v1130
  %v1713 = vunpack.c.l.b16 %v1131
  %v1714 = vunpack.c.l.b16 %v1132
  %v1715 = vunpack.c.h.b16 %v1132
  %v1716 = vunpack.c.l.b16 %v1133
  %v1717 = vunpack.c.l.b16 %v1134
  %v1718 = vunpack.c.h.b16 %v1134
  %v1719 = vunpack.c.l.b16 %v1135
  %v1720 = vunpack.c.l.b16 %v1136
  %v1721 = vunpack.c.h.b16 %v1136
  %v1722 = vunpack.c.l.b16 %v1137
  %v1723 = vunpack.c.l.b16 %v1138
  %v1724 = vunpack.c.h.b16 %v1138
  %v1725 = vunpack.c.l.b16 %v1139
  %v1726 = vunpack.c.l.b16 %v1140
  %v1727 = vunpack.c.h.b16 %v1140
  %v1728 = vunpack.c.l.b16 %v1141
  %v1729 = vunpack.c.l.b16 %v1142
  %v1730 = vunpack.c.h.b16 %v1142
  %v1731 = vunpack.c.l.b16 %v1143
  %v1732 = vunpack.c.l.b16 %v1144
  %v1733 = vunpack.c.h.b16 %v1144
  %v1734 = vunpack.c.l.b16 %v1145
  %v1735 = vunpack.c.l.b16 %v1146
  %v1736 = vunpack.c.h.b16 %v1146
  %v1737 = vunpack.c.l.b16 %v1147
  %v1738 = vunpack.c.l.b16 %v1148
  %v1739 = vunpack.c.h.b16 %v1148
  %v1740 = vunpack.c.l.b16 %v1149
  %v1741 = vunpack.c.l.b16 %v1150
  %v1742 = vunpack.c.h.b16 %v1150
  %v1743 = vunpack.c.l.b16 %v1151
  %v1744 = vunpack.c.l.b16 %v1152
  %v1745 = vunpack.c.h.b16 %v1152
  %v1746 = vunpack.c.l.b16 %v1153
  %v1747 = vunpack.c.l.b16 %v1154
  %v1748 = vunpack.c.h.b16 %v1154
  %v1749 = vunpack.c.l.b16 %v1155
  %v1750 = vunpack.c.l.b16 %v1156
  %v1751 = vunpack.c.h.b16 %v1156
  %v1752 = vunpack.c.l.b16 %v1157
  %v1753 = vunpack.c.l.b16 %v1158
  %v1754 = vunpack.c.h.b16 %v1158
  %v1755 = vunpack.c.l.b16 %v1159
  %v1756 = vunpack.c.l.b16 %v1160
  %v1757 = vunpack.c.h.b16 %v1160
  %v1758 = vunpack.c.l.b16 %v1161
  %v1759 = vunpack.c.l.b16 %v1162
  %v1760 = vunpack.c.h.b16 %v1162
  %v1761 = vunpack.c.l.b16 %v1163
  %v1762 = vunpack.c.l.b16 %v1164
  %v1763 = vunpack.c.h.b16 %v1164
  %v1764 = vunpack.c.l.b16 %v1165
  %v1765 = vunpack.c.l.b16 %v1166
  %v1766 = vunpack.c.h.b16 %v1166
  %v1767 = vunpack.c.l.b16 %v1167
  %v1768 = vunpack.c.l.b16 %v1168
  %v1769 = vunpack.c.h.b16 %v1168
  %v1770 = vunpack.c.l.b16 %v1169
  %v1771 = vunpack.c.l.b16 %v1170
  %v1772 = vunpack.c.h.b16 %v1170
  %v1773 = vunpack.c.l.b16 %v1171
  %v1774 = vunpack.c.l.b16 %v1172
  %v1775 = vunpack.c.h.b16 %v1172
  %v1776 = vunpack.c.l.b16 %v1173
  %v1777 = vunpack.c.l.b16 %v1174
  %v1778 = vunpack.c.h.b16 %v1174
  %v1779 = vunpack.c.l.b16 %v1175
  %v1780 = vunpack.c.l.b16 %v1176
  %v1781 = vunpack.c.h.b16 %v1176
  %v1782 = vunpack.c.l.b16 %v1177
  %v1783 = vunpack.c.l.b16 %v1178
  %v1784 = vunpack.c.h.b16 %v1178
  %v1785 = vunpack.c.l.b16 %v1179
  %v1786 = vunpack.c.l.b16 %v1180
  %v1787 = vunpack.c.h.b16 %v1180
  %v1788 = vunpack.c.l.b16 %v1181
  %v1789 = vunpack.c.l.b16 %v1182
  %v1790 = vunpack.c.h.b16 %v1182
  %v1791 = vunpack.c.l.b16 %v1183
  %v1792 = vunpack.c.l.b16 %v1184
  %v1793 = vunpack.c.h.b16 %v1184
  %v1794 = vunpack.c.l.b16 %v1185
  %v1795 = vunpack.c.l.b16 %v1186
  %v1796 = vunpack.c.h.b16 %v1186
  %v1797 = vunpack.c.l.b16 %v1187
  %v1798 = vunpack.c.l.b16 %v1188
  %v1799 = vunpack.c.h.b16 %v1188
  %v1800 = vunpack.c.l.b16 %v1189
  %v1801 = vunpack.c.l.b16 %v1190
  %v1802 = vunpack.c.h.b16 %v1190
  %v1803 = vunpack.c.l.b16 %v1191
  %v1804 = vunpack.c.l.b16 %v1192
  %v1805 = vunpack.c.h.b16 %v1192
  %v1806 = vunpack.c.l.b16 %v1193
  %v1807 = vunpack.c.l.b16 %v1194
  %v1808 = vunpack.c.h.b16 %v1194
  %v1809 = vunpack.c.l.b16 %v1195
  %v1810 = vunpack.c.l.b16 %v1196
  %v1811 = vunpack.c.h.b16 %v1196
  %v1812 = vunpack.c.l.b16 %v1197
  %v1813 = vunpack.c.l.b16 %v1198
  %v1814 = vunpack.c.h.b16 %v1198
  %v1815 = vunpack.c.l.b16 %v1199
  %v1816 = vunpack.c.l.b16 %v1200
  %v1817 = vunpack.c.h.b16 %v1200
  %v1818 = vunpack.c.l.b16 %v1201
  %v1819 = vunpack.c.l.b16 %v1202
  %v1820 = vunpack.c.h.b16 %v1202
  %v1821 = vunpack.c.l.b16 %v1203
  %v1822 = vunpack.c.l.b16 %v1204
  %v1823 = vunpack.c.h.b16 %v1204
  %v1824 = vunpack.c.l.b16 %v1205
  %v1825 = vunpack.c.l.b16 %v1206
  %v1826 = vunpack.c.h.b16 %v1206
  %v1827 = vunpack.c.l.b16 %v1207
  %v1828 = vunpack.c.l.b16 %v1208
  %v1829 = vunpack.c.h.b16 %v1208
  %v1830 = vunpack.c.l.b16 %v1209
  %v1831 = vunpack.c.l.b16 %v1210
  %v1832 = vunpack.c.h.b16 %v1210
  %v1833 = vunpack.c.l.b16 %v1211
  %v1834 = vunpack.c.l.b16 %v1212
  %v1835 = vunpack.c.h.b16 %v1212
  %v1836 = vunpack.c.l.b16 %v1213
  %v1837 = vunpack.c.l.b16 %v1214
  %v1838 = vunpack.c.h.b16 %v1214
  %v1839 = vunpack.c.l.b16 %v1215
  %v1840 = vunpack.c.l.b16 %v1216
  %v1841 = vunpack.c.h.b16 %v1216
  %v1842 = vunpack.c.l.b16 %v1217
  %v1843 = vunpack.c.l.b16 %v1218
  %v1844 = vunpack.c.h.b16 %v1218
  %v1845 = vunpack.c.l.b16 %v1219
  %v1846 = vunpack.c.l.b16 %v1220
  %v1847 = vunpack.c.h.b16 %v1220
  %v1848 = vunpack.c.l.b16 %v1221
  %v1849 = vunpack.c.l.b16 %v1222
  %v1850 = vunpack.c.h.b16 %v1222
  %v1851 = vunpack.c.l.b16 %v1223
  %v1852 = vunpack.c.l.b16 %v1224
  %v1853 = vunpack.c.h.b16 %v1224
  %v1854 = vunpack.c.l.b16 %v1225
  %v1855 = vunpack.c.l.b16 %v1226
  %v1856 = vunpack.c.h.b16 %v1226
  %v1857 = vunpack.c.l.b16 %v1227
  %v1858 = vunpack.c.l.b16 %v1228
  %v1859 = vunpack.c.h.b16 %v1228
  %v1860 = vunpack.c.l.b16 %v1229
  %v1861 = vunpack.c.l.b16 %v1230
  %v1862 = vunpack.c.h.b16 %v1230
  %v1863 = vunpack.c.l.b16 %v1231
  %v1864 = vunpack.c.l.b16 %v1232
  %v1865 = vunpack.c.h.b16 %v1232
  %v1866 = vunpack.c.l.b16 %v1233
  %v1867 = vunpack.c.l.b16 %v1234
  %v1868 = vunpack.c.h.b16 %v1234
  %v1869 = vunpack.c.l.b16 %v1235
  %v1870 = vunpack.c.l.b16 %v1236
  %v1871 = vunpack.c.h.b16 %v1236
  %v1872 = vunpack.c.l.b16 %v1237
  %v1873 = vunpack.c.l.b16 %v1238
  %v1874 = vunpack.c.h.b16 %v1238
  %v1875 = vunpack.c.l.b16 %v1239
  %v1876 = vunpack.c.l.b16 %v1240
  %v1877 = vunpack.c.h.b16 %v1240
  %v1878 = vunpack.c.l.b16 %v1241
  %v1879 = vunpack.c.l.b16 %v1242
  %v1880 = vunpack.c.h.b16 %v1242
  %v1881 = vunpack.c.l.b16 %v1243
  %v1882 = vunpack.c.l.b16 %v1244
  %v1883 = vunpack.c.h.b16 %v1244
  %v1884 = vunpack.c.l.b16 %v1245
  %v1885 = vunpack.c.l.b16 %v1246
  %v1886 = vunpack.c.h.b16 %v1246
  %v1887 = vunpack.c.l.b16 %v1247
  %v1888 = vunpack.c.l.b16 %v1248
  %v1889 = vunpack.c.h.b16 %v1248
  %v1890 = vunpack.c.l.b16 %v1249
  %v1891 = vunpack.c.l.b16 %v1250
  %v1892 = vunpack.c.h.b16 %v1250
  %v1893 = vunpack.c.l.b16 %v1251
  %v1894 = vunpack.c.l.b16 %v1252
  %v1895 = vunpack.c.h.b16 %v1252
  %v1896 = vunpack.c.l.b16 %v1253
  %v1897 = vunpack.c.l.b16 %v1254
  %v1898 = vunpack.c.h.b16 %v1254
  %v1899 = vunpack.c.l.b16 %v1255
  %v1900 = vunpack.c.l.b16 %v1256
  %v1901 = vunpack.c.h.b16 %v1256
  %v1902 = vunpack.c.l.b16 %v1257
  %v1903 = vunpack.c.l.b16 %v1258
  %v1904 = vunpack.c.h.b16 %v1258
  %v1905 = vunpack.c.l.b16 %v1259
  %v1906 = vunpack.c.l.b16 %v1260
  %v1907 = vunpack.c.h.b16 %v1260
  %v1908 = vunpack.c.l.b16 %v1261
  %v1909 = vunpack.c.l.b16 %v1262
  %v1910 = vunpack.c.h.b16 %v1262
  %v1911 = vunpack.c.l.b16 %v1263
  %v1912 = vunpack.c.l.b16 %v1264
  %v1913 = vunpack.c.h.b16 %v1264
  %v1914 = vunpack.c.l.b16 %v1265
  %v1915 = vunpack.c.l.b16 %v1266
  %v1916 = vunpack.c.h.b16 %v1266
  %v1917 = vunpack.c.l.b16 %v1267
  %v1918 = vunpack.c.l.b16 %v1268
  %v1919 = vunpack.c.h.b16 %v1268
  %v1920 = vunpack.c.l.b16 %v1269
  %v1921 = vunpack.c.l.b16 %v1270
  %v1922 = vunpack.c.h.b16 %v1270
  %v1923 = vunpack.c.l.b16 %v1271
  %v1924 = vunpack.c.l.b16 %v1272
  %v1925 = vunpack.c.h.b16 %v1272
  %v1926 = vunpack.c.l.b16 %v1273
  %v1927 = vpack.c.b16 %v1567, %v1564
  %v1928 = vpack.c.b16 %v1568, %v1565
  %v1929 = vpack.c.b16 %v1569, %v1566
  %v1930 = vpack.c.b16 %v1573, %v1570
  %v1931 = vpack.c.b16 %v1574, %v1571
  %v1932 = vpack.c.b16 %v1575, %v1572
  %v1933 = vpack.c.b16 %v1579, %v1576
  %v1934 = vpack.c.b16 %v1580, %v1577
  %v1935 = vpack.c.b16 %v1581, %v1578
  %v1936 = vpack.c.b16 %v1585, %v1582
  %v1937 = vpack.c.b16 %v1586, %v1583
  %v1938 = vpack.c.b16 %v1587, %v1584
  %v1939 = vpack.c.b16 %v1591, %v1588
  %v1940 = vpack.c.b16 %v1592, %v1589
  %v1941 = vpack.c.b16 %v1593, %v1590
  %v1942 = vpack.c.b16 %v1597, %v1594
  %v1943 = vpack.c.b16 %v1598, %v1595
  %v1944 = vpack.c.b16 %v1599, %v1596
  %v1945 = vpack.c.b16 %v1603, %v1600
  %v1946 = vpack.c.b16 %v1604, %v1601
  %v1947 = vpack.c.b16 %v1605, %v1602
  %v1948 = vpack.c.b16 %v1609, %v1606
  %v1949 = vpack.c.b16 %v1610, %v1607
  %v1950 = vpack.c.b16 %v1611, %v1608
  %v1951 = vpack.c.b16 %v1615, %v1612
  %v1952 = vpack.c.b16 %v1616, %v1613
  %v1953 = vpack.c.b16 %v1617, %v1614
  %v1954 = vpack.c.b16 %v1621, %v1618
  %v1955 = vpack.c.b16 %v1622, %v1619
  %v1956 = vpack.c.b16 %v1623, %v1620
  %v1957 = vpack.c.b16 %v1627, %v1624
  %v1958 = vpack.c.b16 %v1628, %v1625
  %v1959 = vpack.c.b16 %v1629, %v1626
  %v1960 = vpack.c.b16 %v1633, %v1630
  %v1961 = vpack.c.b16 %v1634, %v1631
  %v1962 = vpack.c.b16 %v1635, %v1632
  %v1963 = vpack.c.b16 %v1639, %v1636
  %v1964 = vpack.c.b16 %v1640, %v1637
  %v1965 = vpack.c.b16 %v1641, %v1638
  %v1966 = vpack.c.b16 %v1645, %v1642
  %v1967 = vpack.c.b16 %v1646, %v1643
  %v1968 = vpack.c.b16 %v1647, %v1644
  %v1969 = vpack.c.b16 %v1651, %v1648
  %v1970 = vpack.c.b16 %v1652, %v1649
  %v1971 = vpack.c.b16 %v1653, %v1650
  %v1972 = vpack.c.b16 %v1657, %v1654
  %v1973 = vpack.c.b16 %v1658, %v1655
  %v1974 = vpack.c.b16 %v1659, %v1656
  %v1975 = vpack.c.b16 %v1663, %v1660
  %v1976 = vpack.c.b16 %v1664, %v1661
  %v1977 = vpack.c.b16 %v1665, %v1662
  %v1978 = vpack.c.b16 %v1669, %v1666
  %v1979 = vpack.c.b16 %v1670, %v1667
  %v1980 = vpack.c.b16 %v1671, %v1668
  %v1981 = vpack.c.b16 %v1675, %v1672
  %v1982 = vpack.c.b16 %v1676, %v1673
  %v1983 = vpack.c.b16 %v1677, %v1674
  %v1984 = vpack.c.b16 %v1681, %v1678
  %v1985 = vpack.c.b16 %v1682, %v1679
  %v1986 = vpack.c.b16 %v1683, %v1680
  %v1987 = vpack.c.b16 %v1687, %v1684
  %v1988 = vpack.c.b16 %v1688, %v1685
  %v1989 = vpack.c.b16 %v1689, %v1686
  %v1990 = vpack.c.b16 %v1693, %v1690
  %v1991 = vpack.c.b16 %v1694, %v1691
  %v1992 = vpack.c.b16 %v1695, %v1692
  %v1993 = vpack.c.b16 %v1699, %v1696
  %v1994 = vpack.c.b16 %v1700, %v1697
  %v1995 = vpack.c.b16 %v1701, %v1698
  %v1996 = vpack.c.b16 %v1705, %v1702
  %v1997 = vpack.c.b16 %v1706, %v1703
  %v1998 = vpack.c.b16 %v1707, %v1704
  %v1999 = vpack.c.b16 %v1711, %v1708
  %v2000 = vpack.c.b16 %v1712, %v1709
  %v2001 = vpack.c.b16 %v1713, %v1710
  %v2002 = vpack.c.b16 %v1717, %v1714
  %v2003 = vpack.c.b16 %v1718, %v1715
  %v2004 = vpack.c.b16 %v1719, %v1716
  %v2005 = vpack.c.b16 %v1723, %v1720
  %v2006 = vpack.c.b16 %v1724, %v1721
  %v2007 = vpack.c.b16 %v1725, %v1722
  %v2008 = vpack.c.b16 %v1729, %v1726
  %v2009 = vpack.c.b16 %v1730, %v1727
  %v2010 = vpack.c.b16 %v1731, %v1728
  %v2011 = vpack.c.b16 %v1735, %v1732
  %v2012 = vpack.c.b16 %v1736, %v1733
  %v2013 = vpack.c.b16 %v1737, %v1734
  %v2014 = vpack.c.b16 %v1741, %v1738
  %v2015 = vpack.c.b16 %v1742, %v1739
  %v2016 = vpack.c.b16 %v1743, %v1740
  %v2017 = vpack.c.b16 %v1747, %v1744
  %v2018 = vpack.c.b16 %v1748, %v1745
  %v2019 = vpack.c.b16 %v1749, %v1746
  %v2020 = vpack.c.b16 %v1753, %v1750
  %v2021 = vpack.c.b16 %v1754, %v1751
  %v2022 = vpack.c.b16 %v1755, %v1752
  %v2023 = vpack.c.b16 %v1759, %v1756
  %v2024 = vpack.c.b16 %v1760, %v1757
  %v2025 = vpack.c.b16 %v1761, %v1758
  %v2026 = vpack.c.b16 %v1765, %v1762
  %v2027 = vpack.c.b16 %v1766, %v1763
  %v2028 = vpack.c.b16 %v1767, %v1764
  %v2029 = vpack.c.b16 %v1771, %v1768
  %v2030 = vpack.c.b16 %v1772, %v1769
  %v2031 = vpack.c.b16 %v1773, %v1770
  %v2032 = vpack.c.b16 %v1777, %v1774
  %v2033 = vpack.c.b16 %v1778, %v1775
  %v2034 = vpack.c.b16 %v1779, %v1776
  %v2035 = vpack.c.b16 %v1783, %v1780
  %v2036 = vpack.c.b16 %v1784, %v1781
  %v2037 = vpack.c.b16 %v1785, %v1782
  %v2038 = vpack.c.b16 %v1789, %v1786
  %v2039 = vpack.c.b16 %v1790, %v1787
  %v2040 = vpack.c.b16 %v1791, %v1788
  %v2041 = vpack.c.b16 %v1795, %v1792
  %v2042 = vpack.c.b16 %v1796, %v1793
  %v2043 = vpack.c.b16 %v1797, %v1794
  %v2044 = vpack.c.b16 %v1801, %v1798
  %v2045 = vpack.c.b16 %v1802, %v1799
  %v2046 = vpack.c.b16 %v1803, %v1800
  %v2047 = vpack.c.b16 %v1807, %v1804
  %v2048 = vpack.c.b16 %v1808, %v1805
  %v2049 = vpack.c.b16 %v1809, %v1806
  %v2050 = vpack.c.b16 %v1813, %v1810
  %v2051 = vpack.c.b16 %v1814, %v1811
  %v2052 = vpack.c.b16 %v1815, %v1812
  %v2053 = vpack.c.b16 %v1819, %v1816
  %v2054 = vpack.c.b16 %v1820, %v1817
  %v2055 = vpack.c.b16 %v1821, %v1818
  %v2056 = vpack.c.b16 %v1825, %v1822
  %v2057 = vpack.c.b16 %v1826, %v1823
  %v2058 = vpack.c.b16 %v1827, %v1824
  %v2059 = vpack.c.b16 %v1831, %v1828
  %v2060 = vpack.c.b16 %v1832, %v1829
  %v2061 = vpack.c.b16 %v1833, %v1830
  %v2062 = vpack.c.b16 %v1837, %v1834
  %v2063 = vpack.c.b16 %v1838, %v1835
  %v2064 = vpack.c.b16 %v1839, %v1836
  %v2065 = vpack.c.b16 %v1843, %v1840
  %v2066 = vpack.c.b16 %v1844, %v1841
  %v2067 = vpack.c.b16 %v1845, %v1842
  %v2068 = vpack.c.b16 %v1849, %v1846
  %v2069 = vpack.c.b16 %v1850, %v1847
  %v2070 = vpack.c.b16 %v1851, %v1848
  %v2071 = vpack.c.b16 %v1855, %v1852
  %v2072 = vpack.c.b16 %v1856, %v1853
  %v2073 = vpack.c.b16 %v1857, %v1854
  %v2074 = vpack.c.b16 %v1861, %v1858
  %v2075 = vpack.c.b16 %v1862, %v1859
  %v2076 = vpack.c.b16 %v1863, %v1860
  %v2077 = vpack.c.b16 %v1867, %v1864
  %v2078 = vpack.c.b16 %v1868, %v1865
  %v2079 = vpack.c.b16 %v1869, %v1866
  %v2080 = vpack.c.b16 %v1873, %v1870
  %v2081 = vpack.c.b16 %v1874, %v1871
  %v2082 = vpack.c.b16 %v1875, %v1872
  %v2083 = vpack.c.b16 %v1879, %v1876
  %v2084 = vpack.c.b16 %v1880, %v1877
  %v2085 = vpack.c.b16 %v1881, %v1878
  %v2086 = vpack.c.b16 %v1885, %v1882
  %v2087 = vpack.c.b16 %v1886, %v1883
  %v2088 = vpack.c.b16 %v1887, %v1884
  %v2089 = vpack.c.b16 %v1891, %v1888
  %v2090 = vpack.c.b16 %v1892, %v1889
  %v2091 = vpack.c.b16 %v1893, %v1890
  %v2092 = vpack.c.b16 %v1897, %v1894
  %v2093 = vpack.c.b16 %v1898, %v1895
  %v2094 = vpack.c.b16 %v1899, %v1896
  %v2095 = vpack.c.b16 %v1903, %v1900
  %v2096 = vpack.c.b16 %v1904, %v1901
  %v2097 = vpack.c.b16 %v1905, %v1902
  %v2098 = vpack.c.b16 %v1909, %v1906
  %v2099 = vpack.c.b16 %v1910, %v1907
  %v2100 = vpack.c.b16 %v1911, %v1908
  %v2101 = vpack.c.b16 %v1915, %v1912
  %v2102 = vpack.c.b16 %v1916, %v1913
  %v2103 = vpack.c.b16 %v1917, %v1914
  %v2104 = vpack.c.b16 %v1921, %v1918
  %v2105 = vpack.c.b16 %v1922, %v1919
  %v2106 = vpack.c.b16 %v1923, %v1920
  %v2107 = vpack.c.b16 %v1924, %v1924
  %v2108 = vpack.c.b16 %v1925, %v1925
  %v2109 = vpack.c.b16 %v1926, %v1926
  %v2341 = vunpack.c.l.b16 %v1274
  %v2342 = vunpack.c.l.b16 %v1275
  %v2343 = vunpack.c.l.b16 %v1276
  %v2344 = vunpack.c.l.b16 %v1277
  %v2345 = vunpack.c.l.b16 %v1278
  %v2346 = vunpack.c.l.b16 %v1279
  %v2347 = vunpack.c.l.b16 %v1280
  %v2348 = vunpack.c.l.b16 %v1281
  %v2349 = vunpack.c.l.b16 %v1282
  %v2350 = vunpack.c.l.b16 %v1283
  %v2351 = vunpack.c.l.b16 %v1284
  %v2352 = vunpack.c.l.b16 %v1285
  %v2353 = vunpack.c.l.b16 %v1286
  %v2354 = vunpack.c.l.b16 %v1287
  %v2355 = vunpack.c.l.b16 %v1288
  %v2356 = vunpack.c.l.b16 %v1289
  %v2357 = vunpack.c.l.b16 %v1290
  %v2358 = vunpack.c.l.b16 %v1291
  %v2359 = vunpack.c.l.b16 %v1292
  %v2360 = vunpack.c.l.b16 %v1293
  %v2361 = vunpack.c.l.b16 %v1294
  %v2362 = vunpack.c.l.b16 %v1295
  %v2363 = vunpack.c.l.b16 %v1296
  %v2364 = vunpack.c.l.b16 %v1297
  %v2365 = vunpack.c.l.b16 %v1298
  %v2366 = vunpack.c.l.b16 %v1299
  %v2367 = vunpack.c.l.b16 %v1300
  %v2368 = vunpack.c.l.b16 %v1301
  %v2369 = vunpack.c.l.b16 %v1302
  %v2370 = vunpack.c.l.b16 %v1303
  %v2371 = vunpack.c.l.b16 %v1304
  %v2372 = vunpack.c.l.b16 %v1305
  %v2373 = vunpack.c.l.b16 %v1306
  %v2374 = vunpack.c.l.b16 %v1307
  %v2375 = vunpack.c.l.b16 %v1308
  %v2376 = vunpack.c.l.b16 %v1309
  %v2377 = vunpack.c.l.b16 %v1310
  %v2378 = vunpack.c.l.b16 %v1311
  %v2379 = vunpack.c.l.b16 %v1312
  %v2380 = vunpack.c.l.b16 %v1313
  %v2381 = vunpack.c.l.b16 %v1314
  %v2382 = vunpack.c.l.b16 %v1315
  %v2383 = vunpack.c.l.b16 %v1316
  %v2384 = vunpack.c.l.b16 %v1317
  %v2385 = vunpack.c.l.b16 %v1318
  %v2386 = vunpack.c.l.b16 %v1319
  %v2387 = vunpack.c.l.b16 %v1320
  %v2388 = vunpack.c.l.b16 %v1321
  %v2389 = vpack.c.b16 %v2342, %v2341
  %v2390 = vpack.c.b16 %v2344, %v2343
  %v2391 = vpack.c.b16 %v2346, %v2345
  %v2392 = vpack.c.b16 %v2348, %v2347
  %v2393 = vpack.c.b16 %v2350, %v2349
  %v2394 = vpack.c.b16 %v2352, %v2351
  %v2395 = vpack.c.b16 %v2354, %v2353
  %v2396 = vpack.c.b16 %v2356, %v2355
  %v2397 = vpack.c.b16 %v2358, %v2357
  %v2398 = vpack.c.b16 %v2360, %v2359
  %v2399 = vpack.c.b16 %v2362, %v2361
  %v2400 = vpack.c.b16 %v2364, %v2363
  %v2401 = vpack.c.b16 %v2366, %v2365
  %v2402 = vpack.c.b16 %v2368, %v2367
  %v2403 = vpack.c.b16 %v2370, %v2369
  %v2404 = vpack.c.b16 %v2372, %v2371
  %v2405 = vpack.c.b16 %v2374, %v2373
  %v2406 = vpack.c.b16 %v2376, %v2375
  %v2407 = vpack.c.b16 %v2378, %v2377
  %v2408 = vpack.c.b16 %v2380, %v2379
  %v2409 = vpack.c.b16 %v2382, %v2381
  %v2410 = vpack.c.b16 %v2384, %v2383
  %v2411 = vpack.c.b16 %v2386, %v2385
  %v2412 = vpack.c.b16 %v2388, %v2387
  %2437 = vmatprep.subr.bf16.mxu0 0
  %2438 = vmatpush1.bf16.msra.mxu0 %v2389
  %2439 = vmatprep.subr.bf16.mxu0 0
  %2440 = vmatpush1.bf16.msra.mxu0 %v2390
  %2441 = vmatprep.subr.bf16.mxu0 0
  %2442 = vmatpush1.bf16.msra.mxu0 %v2391
  %2443 = vmatprep.subr.bf16.mxu0 0
  %2444 = vmatpush1.bf16.msra.mxu0 %v2392
  %2445 = vmatprep.subr.bf16.mxu0 0
  %2446 = vmatpush1.bf16.msra.mxu0 %v2393
  %2447 = vmatprep.subr.bf16.mxu0 0
  %2448 = vmatpush1.bf16.msra.mxu0 %v2394
  %2449 = vmatprep.subr.bf16.mxu0 0
  %2450 = vmatpush1.bf16.msra.mxu0 %v2395
  %2451 = vmatprep.subr.bf16.mxu0 0
  %2452 = vmatpush1.bf16.msra.mxu0 %v2396
  %2453 = vmatprep.subr.bf16.mxu0 0
  %2454 = vmatpush1.bf16.msra.mxu0 %v2397
  %2455 = vmatprep.subr.bf16.mxu0 0
  %2456 = vmatpush1.bf16.msra.mxu0 %v2398
  %2457 = vmatprep.subr.bf16.mxu0 0
  %2458 = vmatpush1.bf16.msra.mxu0 %v2399
  %2459 = vmatprep.subr.bf16.mxu0 0
  %2460 = vmatpush1.bf16.msra.mxu0 %v2400
  %2461 = vmatprep.subr.bf16.mxu0 0
  %2462 = vmatpush1.bf16.msra.mxu0 %v2401
  %2463 = vmatprep.subr.bf16.mxu0 0
  %2464 = vmatpush1.bf16.msra.mxu0 %v2402
  %2465 = vmatprep.subr.bf16.mxu0 0
  %2466 = vmatpush1.bf16.msra.mxu0 %v2403
  %2467 = vmatprep.subr.bf16.mxu0 0
  %2468 = vmatpush1.bf16.msra.mxu0 %v2404
  %2469 = vmatprep.mubr.bf16.mxu0 %v1928
  %2470 = vmatmul.mubr.bf16.gmra.mrb[0].mxu0 %v1927
  %v2471 = vpop.f32.mrb[0].mxu0
  %v2472 = vadd.f32 0.0, %v2471
  %v2473 = vpop.f32.mrb[0].mxu0
  %v2474 = vpop.f32.mrb[0].mxu0
  %v2475 = vadd.f32 0.0, %v2474
  %v2476 = vpop.f32.mrb[0].mxu0
  %2477 = vmatprep.mubr.bf16.mxu0 %v1931
  %2478 = vmatmul.mubr.bf16.gmra.mrb[0].mxu0 %v1930
  %v2479 = vpop.f32.mrb[0].mxu0
  %v2480 = vadd.f32 0.0, %v2479
  %v2481 = vpop.f32.mrb[0].mxu0
  %v2482 = vpop.f32.mrb[0].mxu0
  %v2483 = vadd.f32 0.0, %v2482
  %v2484 = vpop.f32.mrb[0].mxu0
  %2485 = vmatprep.mubr.bf16.mxu0 %v1934
  %2486 = vmatmul.mubr.bf16.gmra.mrb[0].mxu0 %v1933
  %v2487 = vpop.f32.mrb[0].mxu0
  %v2488 = vadd.f32 0.0, %v2487
  %v2489 = vpop.f32.mrb[0].mxu0
  %v2490 = vpop.f32.mrb[0].mxu0
  %v2491 = vadd.f32 0.0, %v2490
  %v2492 = vpop.f32.mrb[0].mxu0
  %2493 = vmatprep.mubr.bf16.mxu0 %v1937
  %2494 = vmatmul.mubr.bf16.gmra.mrb[0].mxu0 %v1936
  %v2495 = vpop.f32.mrb[0].mxu0
  %v2496 = vadd.f32 0.0, %v2495
  %v2497 = vpop.f32.mrb[0].mxu0
  %v2498 = vpop.f32.mrb[0].mxu0
  %v2499 = vadd.f32 0.0, %v2498
  %v2500 = vpop.f32.mrb[0].mxu0
  %2501 = vmatprep.mubr.bf16.mxu0 %v1940
  %2502 = vmatmul.mubr.bf16.gmra.mrb[0].mxu0 %v1939
  %v2503 = vpop.f32.mrb[0].mxu0
  %v2504 = vadd.f32 0.0, %v2503
  %v2505 = vpop.f32.mrb[0].mxu0
  %v2506 = vpop.f32.mrb[0].mxu0
  %v2507 = vadd.f32 0.0, %v2506
  %v2508 = vpop.f32.mrb[0].mxu0
  %2509 = vmatprep.mubr.bf16.mxu0 %v1943
  %2510 = vmatmul.mubr.bf16.gmra.mrb[0].mxu0 %v1942
  %v2511 = vpop.f32.mrb[0].mxu0
  %v2512 = vadd.f32 0.0, %v2511
  %v2513 = vpop.f32.mrb[0].mxu0
  %v2514 = vpop.f32.mrb[0].mxu0
  %v2515 = vadd.f32 0.0, %v2514
  %v2516 = vpop.f32.mrb[0].mxu0
  %2517 = vmatprep.mubr.bf16.mxu0 %v1946
  %2518 = vmatmul.mubr.bf16.gmra.mrb[0].mxu0 %v1945
  %v2519 = vpop.f32.mrb[0].mxu0
  %v2520 = vadd.f32 0.0, %v2519
  %v2521 = vpop.f32.mrb[0].mxu0
  %v2522 = vpop.f32.mrb[0].mxu0
  %v2523 = vadd.f32 0.0, %v2522
  %v2524 = vpop.f32.mrb[0].mxu0
  %2525 = vmatprep.mubr.bf16.mxu0 %v1949
  %2526 = vmatmul.mubr.bf16.gmra.mrb[0].mxu0 %v1948
  %v2527 = vpop.f32.mrb[0].mxu0
  %v2528 = vadd.f32 0.0, %v2527
  %v2529 = vpop.f32.mrb[0].mxu0
  %v2530 = vpop.f32.mrb[0].mxu0
  %v2531 = vadd.f32 0.0, %v2530
  %v2532 = vpop.f32.mrb[0].mxu0
  %2533 = vmatprep.mubr.bf16.mxu0 %v1952
  %2534 = vmatmul.mubr.bf16.gmra.mrb[0].mxu0 %v1951
  %v2535 = vpop.f32.mrb[0].mxu0
  %v2536 = vadd.f32 0.0, %v2535
  %v2537 = vpop.f32.mrb[0].mxu0
  %v2538 = vpop.f32.mrb[0].mxu0
  %v2539 = vadd.f32 0.0, %v2538
  %v2540 = vpop.f32.mrb[0].mxu0
  %2541 = vmatprep.mubr.bf16.mxu0 %v1955
  %2542 = vmatmul.mubr.bf16.gmra.mrb[0].mxu0 %v1954
  %v2543 = vpop.f32.mrb[0].mxu0
  %v2544 = vadd.f32 0.0, %v2543
  %v2545 = vpop.f32.mrb[0].mxu0
  %v2546 = vpop.f32.mrb[0].mxu0
  %v2547 = vadd.f32 0.0, %v2546
  %v2548 = vpop.f32.mrb[0].mxu0
  %2549 = vmatprep.mubr.bf16.mxu0 %v1958
  %2550 = vmatmul.mubr.bf16.gmra.mrb[0].mxu0 %v1957
  %v2551 = vpop.f32.mrb[0].mxu0
  %v2552 = vadd.f32 0.0, %v2551
  %v2553 = vpop.f32.mrb[0].mxu0
  %v2554 = vpop.f32.mrb[0].mxu0
  %v2555 = vadd.f32 0.0, %v2554
  %v2556 = vpop.f32.mrb[0].mxu0
  %2557 = vmatprep.mubr.bf16.mxu0 %v1961
  %2558 = vmatmul.mubr.bf16.gmra.mrb[0].mxu0 %v1960
  %v2559 = vpop.f32.mrb[0].mxu0
  %v2560 = vadd.f32 0.0, %v2559
  %v2561 = vpop.f32.mrb[0].mxu0
  %v2562 = vpop.f32.mrb[0].mxu0
  %v2563 = vadd.f32 0.0, %v2562
  %v2564 = vpop.f32.mrb[0].mxu0
  %2565 = vmatprep.mubr.bf16.mxu0 %v1964
  %2566 = vmatmul.mubr.bf16.gmra.mrb[0].mxu0 %v1963
  %v2567 = vpop.f32.mrb[0].mxu0
  %v2568 = vadd.f32 0.0, %v2567
  %v2569 = vpop.f32.mrb[0].mxu0
  %v2570 = vpop.f32.mrb[0].mxu0
  %v2571 = vadd.f32 0.0, %v2570
  %v2572 = vpop.f32.mrb[0].mxu0
  %2573 = vmatprep.mubr.bf16.mxu0 %v1967
  %2574 = vmatmul.mubr.bf16.gmra.mrb[0].mxu0 %v1966
  %v2575 = vpop.f32.mrb[0].mxu0
  %v2576 = vadd.f32 0.0, %v2575
  %v2577 = vpop.f32.mrb[0].mxu0
  %v2578 = vpop.f32.mrb[0].mxu0
  %v2579 = vadd.f32 0.0, %v2578
  %v2580 = vpop.f32.mrb[0].mxu0
  %2581 = vmatprep.mubr.bf16.mxu0 %v1970
  %2582 = vmatmul.mubr.bf16.gmra.mrb[0].mxu0 %v1969
  %v2583 = vpop.f32.mrb[0].mxu0
  %v2584 = vadd.f32 0.0, %v2583
  %v2585 = vpop.f32.mrb[0].mxu0
  %v2586 = vpop.f32.mrb[0].mxu0
  %v2587 = vadd.f32 0.0, %v2586
  %v2588 = vpop.f32.mrb[0].mxu0
  %2589 = vmatprep.mubr.bf16.mxu0 %v1973
  %2590 = vmatmul.mubr.bf16.gmra.mrb[0].mxu0 %v1972
  %v2591 = vpop.f32.mrb[0].mxu0
  %v2592 = vadd.f32 0.0, %v2591
  %v2593 = vpop.f32.mrb[0].mxu0
  %v2594 = vpop.f32.mrb[0].mxu0
  %v2595 = vadd.f32 0.0, %v2594
  %v2596 = vpop.f32.mrb[0].mxu0
  %2597 = vmatprep.mubr.bf16.mxu0 %v1976
  %2598 = vmatmul.mubr.bf16.gmra.mrb[0].mxu0 %v1975
  %v2599 = vpop.f32.mrb[0].mxu0
  %v2600 = vadd.f32 0.0, %v2599
  %v2601 = vpop.f32.mrb[0].mxu0
  %v2602 = vpop.f32.mrb[0].mxu0
  %v2603 = vadd.f32 0.0, %v2602
  %v2604 = vpop.f32.mrb[0].mxu0
  %2605 = vmatprep.mubr.bf16.mxu0 %v1979
  %2606 = vmatmul.mubr.bf16.gmra.mrb[0].mxu0 %v1978
  %v2607 = vpop.f32.mrb[0].mxu0
  %v2608 = vadd.f32 0.0, %v2607
  %v2609 = vpop.f32.mrb[0].mxu0
  %v2610 = vpop.f32.mrb[0].mxu0
  %v2611 = vadd.f32 0.0, %v2610
  %v2612 = vpop.f32.mrb[0].mxu0
  %2613 = vmatprep.mubr.bf16.mxu0 %v1982
  %2614 = vmatmul.mubr.bf16.gmra.mrb[0].mxu0 %v1981
  %v2615 = vpop.f32.mrb[0].mxu0
  %v2616 = vadd.f32 0.0, %v2615
  %v2617 = vpop.f32.mrb[0].mxu0
  %v2618 = vpop.f32.mrb[0].mxu0
  %v2619 = vadd.f32 0.0, %v2618
  %v2620 = vpop.f32.mrb[0].mxu0
  %2621 = vmatprep.mubr.bf16.mxu0 %v1985
  %2622 = vmatmul.mubr.bf16.gmra.mrb[0].mxu0 %v1984
  %v2623 = vpop.f32.mrb[0].mxu0
  %v2624 = vadd.f32 0.0, %v2623
  %v2625 = vpop.f32.mrb[0].mxu0
  %v2626 = vpop.f32.mrb[0].mxu0
  %v2627 = vadd.f32 0.0, %v2626
  %v2628 = vpop.f32.mrb[0].mxu0
  %2629 = vmatprep.mubr.bf16.mxu0 %v1988
  %2630 = vmatmul.mubr.bf16.gmra.mrb[0].mxu0 %v1987
  %v2631 = vpop.f32.mrb[0].mxu0
  %v2632 = vadd.f32 0.0, %v2631
  %v2633 = vpop.f32.mrb[0].mxu0
  %v2634 = vpop.f32.mrb[0].mxu0
  %v2635 = vadd.f32 0.0, %v2634
  %v2636 = vpop.f32.mrb[0].mxu0
  %2637 = vmatprep.mubr.bf16.mxu0 %v1991
  %2638 = vmatmul.mubr.bf16.gmra.mrb[0].mxu0 %v1990
  %v2639 = vpop.f32.mrb[0].mxu0
  %v2640 = vadd.f32 0.0, %v2639
  %v2641 = vpop.f32.mrb[0].mxu0
  %v2642 = vpop.f32.mrb[0].mxu0
  %v2643 = vadd.f32 0.0, %v2642
  %v2644 = vpop.f32.mrb[0].mxu0
  %2645 = vmatprep.mubr.bf16.mxu0 %v1994
  %2646 = vmatmul.mubr.bf16.gmra.mrb[0].mxu0 %v1993
  %v2647 = vpop.f32.mrb[0].mxu0
  %v2648 = vadd.f32 0.0, %v2647
  %v2649 = vpop.f32.mrb[0].mxu0
  %v2650 = vpop.f32.mrb[0].mxu0
  %v2651 = vadd.f32 0.0, %v2650
  %v2652 = vpop.f32.mrb[0].mxu0
  %2653 = vmatprep.mubr.bf16.mxu0 %v1997
  %2654 = vmatmul.mubr.bf16.gmra.mrb[0].mxu0 %v1996
  %v2655 = vpop.f32.mrb[0].mxu0
  %v2656 = vadd.f32 0.0, %v2655
  %v2657 = vpop.f32.mrb[0].mxu0
  %v2658 = vpop.f32.mrb[0].mxu0
  %v2659 = vadd.f32 0.0, %v2658
  %v2660 = vpop.f32.mrb[0].mxu0
  %2661 = vmatprep.mubr.bf16.mxu0 %v2000
  %2662 = vmatmul.mubr.bf16.gmra.mrb[0].mxu0 %v1999
  %v2663 = vpop.f32.mrb[0].mxu0
  %v2664 = vadd.f32 0.0, %v2663
  %v2665 = vpop.f32.mrb[0].mxu0
  %v2666 = vpop.f32.mrb[0].mxu0
  %v2667 = vadd.f32 0.0, %v2666
  %v2668 = vpop.f32.mrb[0].mxu0
  %2669 = vmatprep.mubr.bf16.mxu0 %v2003
  %2670 = vmatmul.mubr.bf16.gmra.mrb[0].mxu0 %v2002
  %v2671 = vpop.f32.mrb[0].mxu0
  %v2672 = vadd.f32 0.0, %v2671
  %v2673 = vpop.f32.mrb[0].mxu0
  %v2674 = vpop.f32.mrb[0].mxu0
  %v2675 = vadd.f32 0.0, %v2674
  %v2676 = vpop.f32.mrb[0].mxu0
  %2677 = vmatprep.mubr.bf16.mxu0 %v2006
  %2678 = vmatmul.mubr.bf16.gmra.mrb[0].mxu0 %v2005
  %v2679 = vpop.f32.mrb[0].mxu0
  %v2680 = vadd.f32 0.0, %v2679
  %v2681 = vpop.f32.mrb[0].mxu0
  %v2682 = vpop.f32.mrb[0].mxu0
  %v2683 = vadd.f32 0.0, %v2682
  %v2684 = vpop.f32.mrb[0].mxu0
  %2685 = vmatprep.mubr.bf16.mxu0 %v2009
  %2686 = vmatmul.mubr.bf16.gmra.mrb[0].mxu0 %v2008
  %v2687 = vpop.f32.mrb[0].mxu0
  %v2688 = vadd.f32 0.0, %v2687
  %v2689 = vpop.f32.mrb[0].mxu0
  %v2690 = vpop.f32.mrb[0].mxu0
  %v2691 = vadd.f32 0.0, %v2690
  %v2692 = vpop.f32.mrb[0].mxu0
  %2693 = vmatprep.mubr.bf16.mxu0 %v2012
  %2694 = vmatmul.mubr.bf16.gmra.mrb[0].mxu0 %v2011
  %v2695 = vpop.f32.mrb[0].mxu0
  %v2696 = vadd.f32 0.0, %v2695
  %v2697 = vpop.f32.mrb[0].mxu0
  %v2698 = vpop.f32.mrb[0].mxu0
  %v2699 = vadd.f32 0.0, %v2698
  %v2700 = vpop.f32.mrb[0].mxu0
  %2701 = vmatprep.mubr.bf16.mxu0 %v2015
  %2702 = vmatmul.mubr.bf16.gmra.mrb[0].mxu0 %v2014
  %v2703 = vpop.f32.mrb[0].mxu0
  %v2704 = vadd.f32 0.0, %v2703
  %v2705 = vpop.f32.mrb[0].mxu0
  %v2706 = vpop.f32.mrb[0].mxu0
  %v2707 = vadd.f32 0.0, %v2706
  %v2708 = vpop.f32.mrb[0].mxu0
  %2709 = vmatprep.mubr.bf16.mxu0 %v2018
  %2710 = vmatmul.mubr.bf16.gmra.mrb[0].mxu0 %v2017
  %v2711 = vpop.f32.mrb[0].mxu0
  %v2712 = vadd.f32 0.0, %v2711
  %v2713 = vpop.f32.mrb[0].mxu0
  %v2714 = vpop.f32.mrb[0].mxu0
  %v2715 = vadd.f32 0.0, %v2714
  %v2716 = vpop.f32.mrb[0].mxu0
  %2717 = vmatprep.mubr.bf16.mxu0 %v2021
  %2718 = vmatmul.mubr.bf16.gmra.mrb[0].mxu0 %v2020
  %v2719 = vpop.f32.mrb[0].mxu0
  %v2720 = vadd.f32 0.0, %v2719
  %v2721 = vpop.f32.mrb[0].mxu0
  %v2722 = vpop.f32.mrb[0].mxu0
  %v2723 = vadd.f32 0.0, %v2722
  %v2724 = vpop.f32.mrb[0].mxu0
  %2725 = vmatprep.mubr.bf16.mxu0 %v2024
  %2726 = vmatmul.mubr.bf16.gmra.mrb[0].mxu0 %v2023
  %v2727 = vpop.f32.mrb[0].mxu0
  %v2728 = vadd.f32 0.0, %v2727
  %v2729 = vpop.f32.mrb[0].mxu0
  %v2730 = vpop.f32.mrb[0].mxu0
  %v2731 = vadd.f32 0.0, %v2730
  %v2732 = vpop.f32.mrb[0].mxu0
  %2733 = vmatprep.mubr.bf16.mxu0 %v2027
  %2734 = vmatmul.mubr.bf16.gmra.mrb[0].mxu0 %v2026
  %v2735 = vpop.f32.mrb[0].mxu0
  %v2736 = vadd.f32 0.0, %v2735
  %v2737 = vpop.f32.mrb[0].mxu0
  %v2738 = vpop.f32.mrb[0].mxu0
  %v2739 = vadd.f32 0.0, %v2738
  %v2740 = vpop.f32.mrb[0].mxu0
  %2741 = vmatprep.mubr.bf16.mxu0 %v2030
  %2742 = vmatmul.mubr.bf16.gmra.mrb[0].mxu0 %v2029
  %v2743 = vpop.f32.mrb[0].mxu0
  %v2744 = vadd.f32 0.0, %v2743
  %v2745 = vpop.f32.mrb[0].mxu0
  %v2746 = vpop.f32.mrb[0].mxu0
  %v2747 = vadd.f32 0.0, %v2746
  %v2748 = vpop.f32.mrb[0].mxu0
  %2749 = vmatprep.mubr.bf16.mxu0 %v2033
  %2750 = vmatmul.mubr.bf16.gmra.mrb[0].mxu0 %v2032
  %v2751 = vpop.f32.mrb[0].mxu0
  %v2752 = vadd.f32 0.0, %v2751
  %v2753 = vpop.f32.mrb[0].mxu0
  %v2754 = vpop.f32.mrb[0].mxu0
  %v2755 = vadd.f32 0.0, %v2754
  %v2756 = vpop.f32.mrb[0].mxu0
  %2757 = vmatprep.mubr.bf16.mxu0 %v2036
  %2758 = vmatmul.mubr.bf16.gmra.mrb[0].mxu0 %v2035
  %v2759 = vpop.f32.mrb[0].mxu0
  %v2760 = vadd.f32 0.0, %v2759
  %v2761 = vpop.f32.mrb[0].mxu0
  %v2762 = vpop.f32.mrb[0].mxu0
  %v2763 = vadd.f32 0.0, %v2762
  %v2764 = vpop.f32.mrb[0].mxu0
  %2765 = vmatprep.mubr.bf16.mxu0 %v2039
  %2766 = vmatmul.mubr.bf16.gmra.mrb[0].mxu0 %v2038
  %v2767 = vpop.f32.mrb[0].mxu0
  %v2768 = vadd.f32 0.0, %v2767
  %v2769 = vpop.f32.mrb[0].mxu0
  %v2770 = vpop.f32.mrb[0].mxu0
  %v2771 = vadd.f32 0.0, %v2770
  %v2772 = vpop.f32.mrb[0].mxu0
  %2773 = vmatprep.mubr.bf16.mxu0 %v2042
  %2774 = vmatmul.mubr.bf16.gmra.mrb[0].mxu0 %v2041
  %v2775 = vpop.f32.mrb[0].mxu0
  %v2776 = vadd.f32 0.0, %v2775
  %v2777 = vpop.f32.mrb[0].mxu0
  %v2778 = vpop.f32.mrb[0].mxu0
  %v2779 = vadd.f32 0.0, %v2778
  %v2780 = vpop.f32.mrb[0].mxu0
  %2781 = vmatprep.mubr.bf16.mxu0 %v2045
  %2782 = vmatmul.mubr.bf16.gmra.mrb[0].mxu0 %v2044
  %v2783 = vpop.f32.mrb[0].mxu0
  %v2784 = vadd.f32 0.0, %v2783
  %v2785 = vpop.f32.mrb[0].mxu0
  %v2786 = vpop.f32.mrb[0].mxu0
  %v2787 = vadd.f32 0.0, %v2786
  %v2788 = vpop.f32.mrb[0].mxu0
  %2789 = vmatprep.mubr.bf16.mxu0 %v2048
  %2790 = vmatmul.mubr.bf16.gmra.mrb[0].mxu0 %v2047
  %v2791 = vpop.f32.mrb[0].mxu0
  %v2792 = vadd.f32 0.0, %v2791
  %v2793 = vpop.f32.mrb[0].mxu0
  %v2794 = vpop.f32.mrb[0].mxu0
  %v2795 = vadd.f32 0.0, %v2794
  %v2796 = vpop.f32.mrb[0].mxu0
  %2797 = vmatprep.mubr.bf16.mxu0 %v2051
  %2798 = vmatmul.mubr.bf16.gmra.mrb[0].mxu0 %v2050
  %v2799 = vpop.f32.mrb[0].mxu0
  %v2800 = vadd.f32 0.0, %v2799
  %v2801 = vpop.f32.mrb[0].mxu0
  %v2802 = vpop.f32.mrb[0].mxu0
  %v2803 = vadd.f32 0.0, %v2802
  %v2804 = vpop.f32.mrb[0].mxu0
  %2805 = vmatprep.mubr.bf16.mxu0 %v2054
  %2806 = vmatmul.mubr.bf16.gmra.mrb[0].mxu0 %v2053
  %v2807 = vpop.f32.mrb[0].mxu0
  %v2808 = vadd.f32 0.0, %v2807
  %v2809 = vpop.f32.mrb[0].mxu0
  %v2810 = vpop.f32.mrb[0].mxu0
  %v2811 = vadd.f32 0.0, %v2810
  %v2812 = vpop.f32.mrb[0].mxu0
  %2813 = vmatprep.mubr.bf16.mxu0 %v2057
  %2814 = vmatmul.mubr.bf16.gmra.mrb[0].mxu0 %v2056
  %v2815 = vpop.f32.mrb[0].mxu0
  %v2816 = vadd.f32 0.0, %v2815
  %v2817 = vpop.f32.mrb[0].mxu0
  %v2818 = vpop.f32.mrb[0].mxu0
  %v2819 = vadd.f32 0.0, %v2818
  %v2820 = vpop.f32.mrb[0].mxu0
  %2821 = vmatprep.mubr.bf16.mxu0 %v2060
  %2822 = vmatmul.mubr.bf16.gmra.mrb[0].mxu0 %v2059
  %v2823 = vpop.f32.mrb[0].mxu0
  %v2824 = vadd.f32 0.0, %v2823
  %v2825 = vpop.f32.mrb[0].mxu0
  %v2826 = vpop.f32.mrb[0].mxu0
  %v2827 = vadd.f32 0.0, %v2826
  %v2828 = vpop.f32.mrb[0].mxu0
  %2829 = vmatprep.mubr.bf16.mxu0 %v2063
  %2830 = vmatmul.mubr.bf16.gmra.mrb[0].mxu0 %v2062
  %v2831 = vpop.f32.mrb[0].mxu0
  %v2832 = vadd.f32 0.0, %v2831
  %v2833 = vpop.f32.mrb[0].mxu0
  %v2834 = vpop.f32.mrb[0].mxu0
  %v2835 = vadd.f32 0.0, %v2834
  %v2836 = vpop.f32.mrb[0].mxu0
  %2837 = vmatprep.mubr.bf16.mxu0 %v2066
  %2838 = vmatmul.mubr.bf16.gmra.mrb[0].mxu0 %v2065
  %v2839 = vpop.f32.mrb[0].mxu0
  %v2840 = vadd.f32 0.0, %v2839
  %v2841 = vpop.f32.mrb[0].mxu0
  %v2842 = vpop.f32.mrb[0].mxu0
  %v2843 = vadd.f32 0.0, %v2842
  %v2844 = vpop.f32.mrb[0].mxu0
  %2845 = vmatprep.mubr.bf16.mxu0 %v2069
  %2846 = vmatmul.mubr.bf16.gmra.mrb[0].mxu0 %v2068
  %v2847 = vpop.f32.mrb[0].mxu0
  %v2848 = vadd.f32 0.0, %v2847
  %v2849 = vpop.f32.mrb[0].mxu0
  %v2850 = vpop.f32.mrb[0].mxu0
  %v2851 = vadd.f32 0.0, %v2850
  %v2852 = vpop.f32.mrb[0].mxu0
  %2853 = vmatprep.mubr.bf16.mxu0 %v2072
  %2854 = vmatmul.mubr.bf16.gmra.mrb[0].mxu0 %v2071
  %v2855 = vpop.f32.mrb[0].mxu0
  %v2856 = vadd.f32 0.0, %v2855
  %v2857 = vpop.f32.mrb[0].mxu0
  %v2858 = vpop.f32.mrb[0].mxu0
  %v2859 = vadd.f32 0.0, %v2858
  %v2860 = vpop.f32.mrb[0].mxu0
  %2861 = vmatprep.mubr.bf16.mxu0 %v2075
  %2862 = vmatmul.mubr.bf16.gmra.mrb[0].mxu0 %v2074
  %v2863 = vpop.f32.mrb[0].mxu0
  %v2864 = vadd.f32 0.0, %v2863
  %v2865 = vpop.f32.mrb[0].mxu0
  %v2866 = vpop.f32.mrb[0].mxu0
  %v2867 = vadd.f32 0.0, %v2866
  %v2868 = vpop.f32.mrb[0].mxu0
  %2869 = vmatprep.mubr.bf16.mxu0 %v2078
  %2870 = vmatmul.mubr.bf16.gmra.mrb[0].mxu0 %v2077
  %v2871 = vpop.f32.mrb[0].mxu0
  %v2872 = vadd.f32 0.0, %v2871
  %v2873 = vpop.f32.mrb[0].mxu0
  %v2874 = vpop.f32.mrb[0].mxu0
  %v2875 = vadd.f32 0.0, %v2874
  %v2876 = vpop.f32.mrb[0].mxu0
  %2877 = vmatprep.mubr.bf16.mxu0 %v2081
  %2878 = vmatmul.mubr.bf16.gmra.mrb[0].mxu0 %v2080
  %v2879 = vpop.f32.mrb[0].mxu0
  %v2880 = vadd.f32 0.0, %v2879
  %v2881 = vpop.f32.mrb[0].mxu0
  %v2882 = vpop.f32.mrb[0].mxu0
  %v2883 = vadd.f32 0.0, %v2882
  %v2884 = vpop.f32.mrb[0].mxu0
  %2885 = vmatprep.mubr.bf16.mxu0 %v2084
  %2886 = vmatmul.mubr.bf16.gmra.mrb[0].mxu0 %v2083
  %v2887 = vpop.f32.mrb[0].mxu0
  %v2888 = vadd.f32 0.0, %v2887
  %v2889 = vpop.f32.mrb[0].mxu0
  %v2890 = vpop.f32.mrb[0].mxu0
  %v2891 = vadd.f32 0.0, %v2890
  %v2892 = vpop.f32.mrb[0].mxu0
  %2893 = vmatprep.mubr.bf16.mxu0 %v2087
  %2894 = vmatmul.mubr.bf16.gmra.mrb[0].mxu0 %v2086
  %v2895 = vpop.f32.mrb[0].mxu0
  %v2896 = vadd.f32 0.0, %v2895
  %v2897 = vpop.f32.mrb[0].mxu0
  %v2898 = vpop.f32.mrb[0].mxu0
  %v2899 = vadd.f32 0.0, %v2898
  %v2900 = vpop.f32.mrb[0].mxu0
  %2901 = vmatprep.mubr.bf16.mxu0 %v2090
  %2902 = vmatmul.mubr.bf16.gmra.mrb[0].mxu0 %v2089
  %v2903 = vpop.f32.mrb[0].mxu0
  %v2904 = vadd.f32 0.0, %v2903
  %v2905 = vpop.f32.mrb[0].mxu0
  %v2906 = vpop.f32.mrb[0].mxu0
  %v2907 = vadd.f32 0.0, %v2906
  %v2908 = vpop.f32.mrb[0].mxu0
  %2909 = vmatprep.mubr.bf16.mxu0 %v2093
  %2910 = vmatmul.mubr.bf16.gmra.mrb[0].mxu0 %v2092
  %v2911 = vpop.f32.mrb[0].mxu0
  %v2912 = vadd.f32 0.0, %v2911
  %v2913 = vpop.f32.mrb[0].mxu0
  %v2914 = vpop.f32.mrb[0].mxu0
  %v2915 = vadd.f32 0.0, %v2914
  %v2916 = vpop.f32.mrb[0].mxu0
  %2917 = vmatprep.mubr.bf16.mxu0 %v2096
  %2918 = vmatmul.mubr.bf16.gmra.mrb[0].mxu0 %v2095
  %v2919 = vpop.f32.mrb[0].mxu0
  %v2920 = vadd.f32 0.0, %v2919
  %v2921 = vpop.f32.mrb[0].mxu0
  %v2922 = vpop.f32.mrb[0].mxu0
  %v2923 = vadd.f32 0.0, %v2922
  %v2924 = vpop.f32.mrb[0].mxu0
  %2925 = vmatprep.mubr.bf16.mxu0 %v2099
  %2926 = vmatmul.mubr.bf16.gmra.mrb[0].mxu0 %v2098
  %v2927 = vpop.f32.mrb[0].mxu0
  %v2928 = vadd.f32 0.0, %v2927
  %v2929 = vpop.f32.mrb[0].mxu0
  %v2930 = vpop.f32.mrb[0].mxu0
  %v2931 = vadd.f32 0.0, %v2930
  %v2932 = vpop.f32.mrb[0].mxu0
  %2933 = vmatprep.mubr.bf16.mxu0 %v2102
  %2934 = vmatmul.mubr.bf16.gmra.mrb[0].mxu0 %v2101
  %v2935 = vpop.f32.mrb[0].mxu0
  %v2936 = vadd.f32 0.0, %v2935
  %v2937 = vpop.f32.mrb[0].mxu0
  %v2938 = vpop.f32.mrb[0].mxu0
  %v2939 = vadd.f32 0.0, %v2938
  %v2940 = vpop.f32.mrb[0].mxu0
  %2941 = vmatprep.mubr.bf16.mxu0 %v2105
  %2942 = vmatmul.mubr.bf16.gmra.mrb[0].mxu0 %v2104
  %v2943 = vpop.f32.mrb[0].mxu0
  %v2944 = vadd.f32 0.0, %v2943
  %v2945 = vpop.f32.mrb[0].mxu0
  %v2946 = vpop.f32.mrb[0].mxu0
  %v2947 = vadd.f32 0.0, %v2946
  %v2948 = vpop.f32.mrb[0].mxu0
  %2949 = vmatprep.mubr.bf16.mxu0 %v2108
  %2950 = vmatmul.mubr.bf16.gmra.mrb[0].mxu0 %v2107
  %v2951 = vpop.f32.mrb[0].mxu0
  %v2952 = vadd.f32 0.0, %v2951
  %v2953 = vpop.f32.mrb[0].mxu0
  %v2954 = vpop.f32.mrb[0].mxu0
  %v2955 = vpop.f32.mrb[0].mxu0
  %2956 = vdwg.mxu0
  %2957 = vmatprep.subr.bf16.mxu0 0
  %2958 = vmatpush1.bf16.msra.mxu0 %v2405
  %2959 = vmatprep.subr.bf16.mxu0 0
  %2960 = vmatpush1.bf16.msra.mxu0 %v2406
  %2961 = vmatprep.subr.bf16.mxu0 0
  %2962 = vmatpush1.bf16.msra.mxu0 %v2407
  %2963 = vmatprep.subr.bf16.mxu0 0
  %2964 = vmatpush1.bf16.msra.mxu0 %v2408
  %2965 = vmatprep.subr.bf16.mxu0 0
  %2966 = vmatpush1.bf16.msra.mxu0 %v2409
  %2967 = vmatprep.subr.bf16.mxu0 0
  %2968 = vmatpush1.bf16.msra.mxu0 %v2410
  %2969 = vmatprep.subr.bf16.mxu0 0
  %2970 = vmatpush1.bf16.msra.mxu0 %v2411
  %2971 = vmatprep.subr.bf16.mxu0 0
  %2972 = vmatpush1.bf16.msra.mxu0 %v2412
  %2973 = vmatprep.subr.bf16.mxu0 0
  %2974 = vmatpush1.bf16.msra.mxu0 0
  %2975 = vmatprep.subr.bf16.mxu0 0
  %2976 = vmatpush1.bf16.msra.mxu0 0
  %2977 = vmatprep.subr.bf16.mxu0 0
  %2978 = vmatpush1.bf16.msra.mxu0 0
  %2979 = vmatprep.subr.bf16.mxu0 0
  %2980 = vmatpush1.bf16.msra.mxu0 0
  %2981 = vmatprep.subr.bf16.mxu0 0
  %2982 = vmatpush1.bf16.msra.mxu0 0
  %2983 = vmatprep.subr.bf16.mxu0 0
  %2984 = vmatpush1.bf16.msra.mxu0 0
  %2985 = vmatprep.subr.bf16.mxu0 0
  %2986 = vmatpush1.bf16.msra.mxu0 0
  %2987 = vmatprep.subr.bf16.mxu0 0
  %2988 = vmatpush1.bf16.msra.mxu0 0
  %2989 = vmatprep.mubr.bf16.mxu0 0
  %2990 = vmatmul.mubr.bf16.gmra.mrb[0].mxu0 %v1929
  %v2991 = vpop.f32.mrb[0].mxu0
  %v2992 = vadd.f32 %v2472, %v2991
  %v2993 = vpop.f32.mrb[0].mxu0
  %v2994 = vpop.f32.mrb[0].mxu0
  %v2995 = vadd.f32 %v2475, %v2994
  %v2996 = vpop.f32.mrb[0].mxu0
  %2997 = vmatprep.mubr.bf16.mxu0 0
  %2998 = vmatmul.mubr.bf16.gmra.mrb[0].mxu0 %v1932
  %v2999 = vpop.f32.mrb[0].mxu0
  %v3000 = vadd.f32 %v2480, %v2999
  %v3001 = vpop.f32.mrb[0].mxu0
  %v3002 = vpop.f32.mrb[0].mxu0
  %v3003 = vadd.f32 %v2483, %v3002
  %v3004 = vpop.f32.mrb[0].mxu0
  %3005 = vmatprep.mubr.bf16.mxu0 0
  %3006 = vmatmul.mubr.bf16.gmra.mrb[0].mxu0 %v1935
  %v3007 = vpop.f32.mrb[0].mxu0
  %v3008 = vadd.f32 %v2488, %v3007
  %v3009 = vpop.f32.mrb[0].mxu0
  %v3010 = vpop.f32.mrb[0].mxu0
  %v3011 = vadd.f32 %v2491, %v3010
  %v3012 = vpop.f32.mrb[0].mxu0
  %3013 = vmatprep.mubr.bf16.mxu0 0
  %3014 = vmatmul.mubr.bf16.gmra.mrb[0].mxu0 %v1938
  %v3015 = vpop.f32.mrb[0].mxu0
  %v3016 = vadd.f32 %v2496, %v3015
  %v3017 = vpop.f32.mrb[0].mxu0
  %v3018 = vpop.f32.mrb[0].mxu0
  %v3019 = vadd.f32 %v2499, %v3018
  %v3020 = vpop.f32.mrb[0].mxu0
  %3021 = vmatprep.mubr.bf16.mxu0 0
  %3022 = vmatmul.mubr.bf16.gmra.mrb[0].mxu0 %v1941
  %v3023 = vpop.f32.mrb[0].mxu0
  %v3024 = vadd.f32 %v2504, %v3023
  %v3025 = vpop.f32.mrb[0].mxu0
  %v3026 = vpop.f32.mrb[0].mxu0
  %v3027 = vadd.f32 %v2507, %v3026
  %v3028 = vpop.f32.mrb[0].mxu0
  %3029 = vmatprep.mubr.bf16.mxu0 0
  %3030 = vmatmul.mubr.bf16.gmra.mrb[0].mxu0 %v1944
  %v3031 = vpop.f32.mrb[0].mxu0
  %v3032 = vadd.f32 %v2512, %v3031
  %v3033 = vpop.f32.mrb[0].mxu0
  %v3034 = vpop.f32.mrb[0].mxu0
  %v3035 = vadd.f32 %v2515, %v3034
  %v3036 = vpop.f32.mrb[0].mxu0
  %3037 = vmatprep.mubr.bf16.mxu0 0
  %3038 = vmatmul.mubr.bf16.gmra.mrb[0].mxu0 %v1947
  %v3039 = vpop.f32.mrb[0].mxu0
  %v3040 = vadd.f32 %v2520, %v3039
  %v3041 = vpop.f32.mrb[0].mxu0
  %v3042 = vpop.f32.mrb[0].mxu0
  %v3043 = vadd.f32 %v2523, %v3042
  %v3044 = vpop.f32.mrb[0].mxu0
  %3045 = vmatprep.mubr.bf16.mxu0 0
  %3046 = vmatmul.mubr.bf16.gmra.mrb[0].mxu0 %v1950
  %v3047 = vpop.f32.mrb[0].mxu0
  %v3048 = vadd.f32 %v2528, %v3047
  %v3049 = vpop.f32.mrb[0].mxu0
  %v3050 = vpop.f32.mrb[0].mxu0
  %v3051 = vadd.f32 %v2531, %v3050
  %v3052 = vpop.f32.mrb[0].mxu0
  %3053 = vmatprep.mubr.bf16.mxu0 0
  %3054 = vmatmul.mubr.bf16.gmra.mrb[0].mxu0 %v1953
  %v3055 = vpop.f32.mrb[0].mxu0
  %v3056 = vadd.f32 %v2536, %v3055
  %v3057 = vpop.f32.mrb[0].mxu0
  %v3058 = vpop.f32.mrb[0].mxu0
  %v3059 = vadd.f32 %v2539, %v3058
  %v3060 = vpop.f32.mrb[0].mxu0
  %3061 = vmatprep.mubr.bf16.mxu0 0
  %3062 = vmatmul.mubr.bf16.gmra.mrb[0].mxu0 %v1956
  %v3063 = vpop.f32.mrb[0].mxu0
  %v3064 = vadd.f32 %v2544, %v3063
  %v3065 = vpop.f32.mrb[0].mxu0
  %v3066 = vpop.f32.mrb[0].mxu0
  %v3067 = vadd.f32 %v2547, %v3066
  %v3068 = vpop.f32.mrb[0].mxu0
  %3069 = vmatprep.mubr.bf16.mxu0 0
  %3070 = vmatmul.mubr.bf16.gmra.mrb[0].mxu0 %v1959
  %v3071 = vpop.f32.mrb[0].mxu0
  %v3072 = vadd.f32 %v2552, %v3071
  %v3073 = vpop.f32.mrb[0].mxu0
  %v3074 = vpop.f32.mrb[0].mxu0
  %v3075 = vadd.f32 %v2555, %v3074
  %v3076 = vpop.f32.mrb[0].mxu0
  %3077 = vmatprep.mubr.bf16.mxu0 0
  %3078 = vmatmul.mubr.bf16.gmra.mrb[0].mxu0 %v1962
  %v3079 = vpop.f32.mrb[0].mxu0
  %v3080 = vadd.f32 %v2560, %v3079
  %v3081 = vpop.f32.mrb[0].mxu0
  %v3082 = vpop.f32.mrb[0].mxu0
  %v3083 = vadd.f32 %v2563, %v3082
  %v3084 = vpop.f32.mrb[0].mxu0
  %3085 = vmatprep.mubr.bf16.mxu0 0
  %3086 = vmatmul.mubr.bf16.gmra.mrb[0].mxu0 %v1965
  %v3087 = vpop.f32.mrb[0].mxu0
  %v3088 = vadd.f32 %v2568, %v3087
  %v3089 = vpop.f32.mrb[0].mxu0
  %v3090 = vpop.f32.mrb[0].mxu0
  %v3091 = vadd.f32 %v2571, %v3090
  %v3092 = vpop.f32.mrb[0].mxu0
  %3093 = vmatprep.mubr.bf16.mxu0 0
  %3094 = vmatmul.mubr.bf16.gmra.mrb[0].mxu0 %v1968
  %v3095 = vpop.f32.mrb[0].mxu0
  %v3096 = vadd.f32 %v2576, %v3095
  %v3097 = vpop.f32.mrb[0].mxu0
  %v3098 = vpop.f32.mrb[0].mxu0
  %v3099 = vadd.f32 %v2579, %v3098
  %v3100 = vpop.f32.mrb[0].mxu0
  %3101 = vmatprep.mubr.bf16.mxu0 0
  %3102 = vmatmul.mubr.bf16.gmra.mrb[0].mxu0 %v1971
  %v3103 = vpop.f32.mrb[0].mxu0
  %v3104 = vadd.f32 %v2584, %v3103
  %v3105 = vpop.f32.mrb[0].mxu0
  %v3106 = vpop.f32.mrb[0].mxu0
  %v3107 = vadd.f32 %v2587, %v3106
  %v3108 = vpop.f32.mrb[0].mxu0
  %3109 = vmatprep.mubr.bf16.mxu0 0
  %3110 = vmatmul.mubr.bf16.gmra.mrb[0].mxu0 %v1974
  %v3111 = vpop.f32.mrb[0].mxu0
  %v3112 = vadd.f32 %v2592, %v3111
  %v3113 = vpop.f32.mrb[0].mxu0
  %v3114 = vpop.f32.mrb[0].mxu0
  %v3115 = vadd.f32 %v2595, %v3114
  %v3116 = vpop.f32.mrb[0].mxu0
  %3117 = vmatprep.mubr.bf16.mxu0 0
  %3118 = vmatmul.mubr.bf16.gmra.mrb[0].mxu0 %v1977
  %v3119 = vpop.f32.mrb[0].mxu0
  %v3120 = vadd.f32 %v2600, %v3119
  %v3121 = vpop.f32.mrb[0].mxu0
  %v3122 = vpop.f32.mrb[0].mxu0
  %v3123 = vadd.f32 %v2603, %v3122
  %v3124 = vpop.f32.mrb[0].mxu0
  %3125 = vmatprep.mubr.bf16.mxu0 0
  %3126 = vmatmul.mubr.bf16.gmra.mrb[0].mxu0 %v1980
  %v3127 = vpop.f32.mrb[0].mxu0
  %v3128 = vadd.f32 %v2608, %v3127
  %v3129 = vpop.f32.mrb[0].mxu0
  %v3130 = vpop.f32.mrb[0].mxu0
  %v3131 = vadd.f32 %v2611, %v3130
  %v3132 = vpop.f32.mrb[0].mxu0
  %3133 = vmatprep.mubr.bf16.mxu0 0
  %3134 = vmatmul.mubr.bf16.gmra.mrb[0].mxu0 %v1983
  %v3135 = vpop.f32.mrb[0].mxu0
  %v3136 = vadd.f32 %v2616, %v3135
  %v3137 = vpop.f32.mrb[0].mxu0
  %v3138 = vpop.f32.mrb[0].mxu0
  %v3139 = vadd.f32 %v2619, %v3138
  %v3140 = vpop.f32.mrb[0].mxu0
  %3141 = vmatprep.mubr.bf16.mxu0 0
  %3142 = vmatmul.mubr.bf16.gmra.mrb[0].mxu0 %v1986
  %v3143 = vpop.f32.mrb[0].mxu0
  %v3144 = vadd.f32 %v2624, %v3143
  %v3145 = vpop.f32.mrb[0].mxu0
  %v3146 = vpop.f32.mrb[0].mxu0
  %v3147 = vadd.f32 %v2627, %v3146
  %v3148 = vpop.f32.mrb[0].mxu0
  %3149 = vmatprep.mubr.bf16.mxu0 0
  %3150 = vmatmul.mubr.bf16.gmra.mrb[0].mxu0 %v1989
  %v3151 = vpop.f32.mrb[0].mxu0
  %v3152 = vadd.f32 %v2632, %v3151
  %v3153 = vpop.f32.mrb[0].mxu0
  %v3154 = vpop.f32.mrb[0].mxu0
  %v3155 = vadd.f32 %v2635, %v3154
  %v3156 = vpop.f32.mrb[0].mxu0
  %3157 = vmatprep.mubr.bf16.mxu0 0
  %3158 = vmatmul.mubr.bf16.gmra.mrb[0].mxu0 %v1992
  %v3159 = vpop.f32.mrb[0].mxu0
  %v3160 = vadd.f32 %v2640, %v3159
  %v3161 = vpop.f32.mrb[0].mxu0
  %v3162 = vpop.f32.mrb[0].mxu0
  %v3163 = vadd.f32 %v2643, %v3162
  %v3164 = vpop.f32.mrb[0].mxu0
  %3165 = vmatprep.mubr.bf16.mxu0 0
  %3166 = vmatmul.mubr.bf16.gmra.mrb[0].mxu0 %v1995
  %v3167 = vpop.f32.mrb[0].mxu0
  %v3168 = vadd.f32 %v2648, %v3167
  %v3169 = vpop.f32.mrb[0].mxu0
  %v3170 = vpop.f32.mrb[0].mxu0
  %v3171 = vadd.f32 %v2651, %v3170
  %v3172 = vpop.f32.mrb[0].mxu0
  %3173 = vmatprep.mubr.bf16.mxu0 0
  %3174 = vmatmul.mubr.bf16.gmra.mrb[0].mxu0 %v1998
  %v3175 = vpop.f32.mrb[0].mxu0
  %v3176 = vadd.f32 %v2656, %v3175
  %v3177 = vpop.f32.mrb[0].mxu0
  %v3178 = vpop.f32.mrb[0].mxu0
  %v3179 = vadd.f32 %v2659, %v3178
  %v3180 = vpop.f32.mrb[0].mxu0
  %3181 = vmatprep.mubr.bf16.mxu0 0
  %3182 = vmatmul.mubr.bf16.gmra.mrb[0].mxu0 %v2001
  %v3183 = vpop.f32.mrb[0].mxu0
  %v3184 = vadd.f32 %v2664, %v3183
  %v3185 = vpop.f32.mrb[0].mxu0
  %v3186 = vpop.f32.mrb[0].mxu0
  %v3187 = vadd.f32 %v2667, %v3186
  %v3188 = vpop.f32.mrb[0].mxu0
  %3189 = vmatprep.mubr.bf16.mxu0 0
  %3190 = vmatmul.mubr.bf16.gmra.mrb[0].mxu0 %v2004
  %v3191 = vpop.f32.mrb[0].mxu0
  %v3192 = vadd.f32 %v2672, %v3191
  %v3193 = vpop.f32.mrb[0].mxu0
  %v3194 = vpop.f32.mrb[0].mxu0
  %v3195 = vadd.f32 %v2675, %v3194
  %v3196 = vpop.f32.mrb[0].mxu0
  %3197 = vmatprep.mubr.bf16.mxu0 0
  %3198 = vmatmul.mubr.bf16.gmra.mrb[0].mxu0 %v2007
  %v3199 = vpop.f32.mrb[0].mxu0
  %v3200 = vadd.f32 %v2680, %v3199
  %v3201 = vpop.f32.mrb[0].mxu0
  %v3202 = vpop.f32.mrb[0].mxu0
  %v3203 = vadd.f32 %v2683, %v3202
  %v3204 = vpop.f32.mrb[0].mxu0
  %3205 = vmatprep.mubr.bf16.mxu0 0
  %3206 = vmatmul.mubr.bf16.gmra.mrb[0].mxu0 %v2010
  %v3207 = vpop.f32.mrb[0].mxu0
  %v3208 = vadd.f32 %v2688, %v3207
  %v3209 = vpop.f32.mrb[0].mxu0
  %v3210 = vpop.f32.mrb[0].mxu0
  %v3211 = vadd.f32 %v2691, %v3210
  %v3212 = vpop.f32.mrb[0].mxu0
  %3213 = vmatprep.mubr.bf16.mxu0 0
  %3214 = vmatmul.mubr.bf16.gmra.mrb[0].mxu0 %v2013
  %v3215 = vpop.f32.mrb[0].mxu0
  %v3216 = vadd.f32 %v2696, %v3215
  %v3217 = vpop.f32.mrb[0].mxu0
  %v3218 = vpop.f32.mrb[0].mxu0
  %v3219 = vadd.f32 %v2699, %v3218
  %v3220 = vpop.f32.mrb[0].mxu0
  %3221 = vmatprep.mubr.bf16.mxu0 0
  %3222 = vmatmul.mubr.bf16.gmra.mrb[0].mxu0 %v2016
  %v3223 = vpop.f32.mrb[0].mxu0
  %v3224 = vadd.f32 %v2704, %v3223
  %v3225 = vpop.f32.mrb[0].mxu0
  %v3226 = vpop.f32.mrb[0].mxu0
  %v3227 = vadd.f32 %v2707, %v3226
  %v3228 = vpop.f32.mrb[0].mxu0
  %3229 = vmatprep.mubr.bf16.mxu0 0
  %3230 = vmatmul.mubr.bf16.gmra.mrb[0].mxu0 %v2019
  %v3231 = vpop.f32.mrb[0].mxu0
  %v3232 = vadd.f32 %v2712, %v3231
  %v3233 = vpop.f32.mrb[0].mxu0
  %v3234 = vpop.f32.mrb[0].mxu0
  %v3235 = vadd.f32 %v2715, %v3234
  %v3236 = vpop.f32.mrb[0].mxu0
  %3237 = vmatprep.mubr.bf16.mxu0 0
  %3238 = vmatmul.mubr.bf16.gmra.mrb[0].mxu0 %v2022
  %v3239 = vpop.f32.mrb[0].mxu0
  %v3240 = vadd.f32 %v2720, %v3239
  %v3241 = vpop.f32.mrb[0].mxu0
  %v3242 = vpop.f32.mrb[0].mxu0
  %v3243 = vadd.f32 %v2723, %v3242
  %v3244 = vpop.f32.mrb[0].mxu0
  %3245 = vmatprep.mubr.bf16.mxu0 0
  %3246 = vmatmul.mubr.bf16.gmra.mrb[0].mxu0 %v2025
  %v3247 = vpop.f32.mrb[0].mxu0
  %v3248 = vadd.f32 %v2728, %v3247
  %v3249 = vpop.f32.mrb[0].mxu0
  %v3250 = vpop.f32.mrb[0].mxu0
  %v3251 = vadd.f32 %v2731, %v3250
  %v3252 = vpop.f32.mrb[0].mxu0
  %3253 = vmatprep.mubr.bf16.mxu0 0
  %3254 = vmatmul.mubr.bf16.gmra.mrb[0].mxu0 %v2028
  %v3255 = vpop.f32.mrb[0].mxu0
  %v3256 = vadd.f32 %v2736, %v3255
  %v3257 = vpop.f32.mrb[0].mxu0
  %v3258 = vpop.f32.mrb[0].mxu0
  %v3259 = vadd.f32 %v2739, %v3258
  %v3260 = vpop.f32.mrb[0].mxu0
  %3261 = vmatprep.mubr.bf16.mxu0 0
  %3262 = vmatmul.mubr.bf16.gmra.mrb[0].mxu0 %v2031
  %v3263 = vpop.f32.mrb[0].mxu0
  %v3264 = vadd.f32 %v2744, %v3263
  %v3265 = vpop.f32.mrb[0].mxu0
  %v3266 = vpop.f32.mrb[0].mxu0
  %v3267 = vadd.f32 %v2747, %v3266
  %v3268 = vpop.f32.mrb[0].mxu0
  %3269 = vmatprep.mubr.bf16.mxu0 0
  %3270 = vmatmul.mubr.bf16.gmra.mrb[0].mxu0 %v2034
  %v3271 = vpop.f32.mrb[0].mxu0
  %v3272 = vadd.f32 %v2752, %v3271
  %v3273 = vpop.f32.mrb[0].mxu0
  %v3274 = vpop.f32.mrb[0].mxu0
  %v3275 = vadd.f32 %v2755, %v3274
  %v3276 = vpop.f32.mrb[0].mxu0
  %3277 = vmatprep.mubr.bf16.mxu0 0
  %3278 = vmatmul.mubr.bf16.gmra.mrb[0].mxu0 %v2037
  %v3279 = vpop.f32.mrb[0].mxu0
  %v3280 = vadd.f32 %v2760, %v3279
  %v3281 = vpop.f32.mrb[0].mxu0
  %v3282 = vpop.f32.mrb[0].mxu0
  %v3283 = vadd.f32 %v2763, %v3282
  %v3284 = vpop.f32.mrb[0].mxu0
  %3285 = vmatprep.mubr.bf16.mxu0 0
  %3286 = vmatmul.mubr.bf16.gmra.mrb[0].mxu0 %v2040
  %v3287 = vpop.f32.mrb[0].mxu0
  %v3288 = vadd.f32 %v2768, %v3287
  %v3289 = vpop.f32.mrb[0].mxu0
  %v3290 = vpop.f32.mrb[0].mxu0
  %v3291 = vadd.f32 %v2771, %v3290
  %v3292 = vpop.f32.mrb[0].mxu0
  %3293 = vmatprep.mubr.bf16.mxu0 0
  %3294 = vmatmul.mubr.bf16.gmra.mrb[0].mxu0 %v2043
  %v3295 = vpop.f32.mrb[0].mxu0
  %v3296 = vadd.f32 %v2776, %v3295
  %v3297 = vpop.f32.mrb[0].mxu0
  %v3298 = vpop.f32.mrb[0].mxu0
  %v3299 = vadd.f32 %v2779, %v3298
  %v3300 = vpop.f32.mrb[0].mxu0
  %3301 = vmatprep.mubr.bf16.mxu0 0
  %3302 = vmatmul.mubr.bf16.gmra.mrb[0].mxu0 %v2046
  %v3303 = vpop.f32.mrb[0].mxu0
  %v3304 = vadd.f32 %v2784, %v3303
  %v3305 = vpop.f32.mrb[0].mxu0
  %v3306 = vpop.f32.mrb[0].mxu0
  %v3307 = vadd.f32 %v2787, %v3306
  %v3308 = vpop.f32.mrb[0].mxu0
  %3309 = vmatprep.mubr.bf16.mxu0 0
  %3310 = vmatmul.mubr.bf16.gmra.mrb[0].mxu0 %v2049
  %v3311 = vpop.f32.mrb[0].mxu0
  %v3312 = vadd.f32 %v2792, %v3311
  %v3313 = vpop.f32.mrb[0].mxu0
  %v3314 = vpop.f32.mrb[0].mxu0
  %v3315 = vadd.f32 %v2795, %v3314
  %v3316 = vpop.f32.mrb[0].mxu0
  %3317 = vmatprep.mubr.bf16.mxu0 0
  %3318 = vmatmul.mubr.bf16.gmra.mrb[0].mxu0 %v2052
  %v3319 = vpop.f32.mrb[0].mxu0
  %v3320 = vadd.f32 %v2800, %v3319
  %v3321 = vpop.f32.mrb[0].mxu0
  %v3322 = vpop.f32.mrb[0].mxu0
  %v3323 = vadd.f32 %v2803, %v3322
  %v3324 = vpop.f32.mrb[0].mxu0
  %3325 = vmatprep.mubr.bf16.mxu0 0
  %3326 = vmatmul.mubr.bf16.gmra.mrb[0].mxu0 %v2055
  %v3327 = vpop.f32.mrb[0].mxu0
  %v3328 = vadd.f32 %v2808, %v3327
  %v3329 = vpop.f32.mrb[0].mxu0
  %v3330 = vpop.f32.mrb[0].mxu0
  %v3331 = vadd.f32 %v2811, %v3330
  %v3332 = vpop.f32.mrb[0].mxu0
  %3333 = vmatprep.mubr.bf16.mxu0 0
  %3334 = vmatmul.mubr.bf16.gmra.mrb[0].mxu0 %v2058
  %v3335 = vpop.f32.mrb[0].mxu0
  %v3336 = vadd.f32 %v2816, %v3335
  %v3337 = vpop.f32.mrb[0].mxu0
  %v3338 = vpop.f32.mrb[0].mxu0
  %v3339 = vadd.f32 %v2819, %v3338
  %v3340 = vpop.f32.mrb[0].mxu0
  %3341 = vmatprep.mubr.bf16.mxu0 0
  %3342 = vmatmul.mubr.bf16.gmra.mrb[0].mxu0 %v2061
  %v3343 = vpop.f32.mrb[0].mxu0
  %v3344 = vadd.f32 %v2824, %v3343
  %v3345 = vpop.f32.mrb[0].mxu0
  %v3346 = vpop.f32.mrb[0].mxu0
  %v3347 = vadd.f32 %v2827, %v3346
  %v3348 = vpop.f32.mrb[0].mxu0
  %3349 = vmatprep.mubr.bf16.mxu0 0
  %3350 = vmatmul.mubr.bf16.gmra.mrb[0].mxu0 %v2064
  %v3351 = vpop.f32.mrb[0].mxu0
  %v3352 = vadd.f32 %v2832, %v3351
  %v3353 = vpop.f32.mrb[0].mxu0
  %v3354 = vpop.f32.mrb[0].mxu0
  %v3355 = vadd.f32 %v2835, %v3354
  %v3356 = vpop.f32.mrb[0].mxu0
  %3357 = vmatprep.mubr.bf16.mxu0 0
  %3358 = vmatmul.mubr.bf16.gmra.mrb[0].mxu0 %v2067
  %v3359 = vpop.f32.mrb[0].mxu0
  %v3360 = vadd.f32 %v2840, %v3359
  %v3361 = vpop.f32.mrb[0].mxu0
  %v3362 = vpop.f32.mrb[0].mxu0
  %v3363 = vadd.f32 %v2843, %v3362
  %v3364 = vpop.f32.mrb[0].mxu0
  %3365 = vmatprep.mubr.bf16.mxu0 0
  %3366 = vmatmul.mubr.bf16.gmra.mrb[0].mxu0 %v2070
  %v3367 = vpop.f32.mrb[0].mxu0
  %v3368 = vadd.f32 %v2848, %v3367
  %v3369 = vpop.f32.mrb[0].mxu0
  %v3370 = vpop.f32.mrb[0].mxu0
  %v3371 = vadd.f32 %v2851, %v3370
  %v3372 = vpop.f32.mrb[0].mxu0
  %3373 = vmatprep.mubr.bf16.mxu0 0
  %3374 = vmatmul.mubr.bf16.gmra.mrb[0].mxu0 %v2073
  %v3375 = vpop.f32.mrb[0].mxu0
  %v3376 = vadd.f32 %v2856, %v3375
  %v3377 = vpop.f32.mrb[0].mxu0
  %v3378 = vpop.f32.mrb[0].mxu0
  %v3379 = vadd.f32 %v2859, %v3378
  %v3380 = vpop.f32.mrb[0].mxu0
  %3381 = vmatprep.mubr.bf16.mxu0 0
  %3382 = vmatmul.mubr.bf16.gmra.mrb[0].mxu0 %v2076
  %v3383 = vpop.f32.mrb[0].mxu0
  %v3384 = vadd.f32 %v2864, %v3383
  %v3385 = vpop.f32.mrb[0].mxu0
  %v3386 = vpop.f32.mrb[0].mxu0
  %v3387 = vadd.f32 %v2867, %v3386
  %v3388 = vpop.f32.mrb[0].mxu0
  %3389 = vmatprep.mubr.bf16.mxu0 0
  %3390 = vmatmul.mubr.bf16.gmra.mrb[0].mxu0 %v2079
  %v3391 = vpop.f32.mrb[0].mxu0
  %v3392 = vadd.f32 %v2872, %v3391
  %v3393 = vpop.f32.mrb[0].mxu0
  %v3394 = vpop.f32.mrb[0].mxu0
  %v3395 = vadd.f32 %v2875, %v3394
  %v3396 = vpop.f32.mrb[0].mxu0
  %3397 = vmatprep.mubr.bf16.mxu0 0
  %3398 = vmatmul.mubr.bf16.gmra.mrb[0].mxu0 %v2082
  %v3399 = vpop.f32.mrb[0].mxu0
  %v3400 = vadd.f32 %v2880, %v3399
  %v3401 = vpop.f32.mrb[0].mxu0
  %v3402 = vpop.f32.mrb[0].mxu0
  %v3403 = vadd.f32 %v2883, %v3402
  %v3404 = vpop.f32.mrb[0].mxu0
  %3405 = vmatprep.mubr.bf16.mxu0 0
  %3406 = vmatmul.mubr.bf16.gmra.mrb[0].mxu0 %v2085
  %v3407 = vpop.f32.mrb[0].mxu0
  %v3408 = vadd.f32 %v2888, %v3407
  %v3409 = vpop.f32.mrb[0].mxu0
  %v3410 = vpop.f32.mrb[0].mxu0
  %v3411 = vadd.f32 %v2891, %v3410
  %v3412 = vpop.f32.mrb[0].mxu0
  %3413 = vmatprep.mubr.bf16.mxu0 0
  %3414 = vmatmul.mubr.bf16.gmra.mrb[0].mxu0 %v2088
  %v3415 = vpop.f32.mrb[0].mxu0
  %v3416 = vadd.f32 %v2896, %v3415
  %v3417 = vpop.f32.mrb[0].mxu0
  %v3418 = vpop.f32.mrb[0].mxu0
  %v3419 = vadd.f32 %v2899, %v3418
  %v3420 = vpop.f32.mrb[0].mxu0
  %3421 = vmatprep.mubr.bf16.mxu0 0
  %3422 = vmatmul.mubr.bf16.gmra.mrb[0].mxu0 %v2091
  %v3423 = vpop.f32.mrb[0].mxu0
  %v3424 = vadd.f32 %v2904, %v3423
  %v3425 = vpop.f32.mrb[0].mxu0
  %v3426 = vpop.f32.mrb[0].mxu0
  %v3427 = vadd.f32 %v2907, %v3426
  %v3428 = vpop.f32.mrb[0].mxu0
  %3429 = vmatprep.mubr.bf16.mxu0 0
  %3430 = vmatmul.mubr.bf16.gmra.mrb[0].mxu0 %v2094
  %v3431 = vpop.f32.mrb[0].mxu0
  %v3432 = vadd.f32 %v2912, %v3431
  %v3433 = vpop.f32.mrb[0].mxu0
  %v3434 = vpop.f32.mrb[0].mxu0
  %v3435 = vadd.f32 %v2915, %v3434
  %v3436 = vpop.f32.mrb[0].mxu0
  %3437 = vmatprep.mubr.bf16.mxu0 0
  %3438 = vmatmul.mubr.bf16.gmra.mrb[0].mxu0 %v2097
  %v3439 = vpop.f32.mrb[0].mxu0
  %v3440 = vadd.f32 %v2920, %v3439
  %v3441 = vpop.f32.mrb[0].mxu0
  %v3442 = vpop.f32.mrb[0].mxu0
  %v3443 = vadd.f32 %v2923, %v3442
  %v3444 = vpop.f32.mrb[0].mxu0
  %3445 = vmatprep.mubr.bf16.mxu0 0
  %3446 = vmatmul.mubr.bf16.gmra.mrb[0].mxu0 %v2100
  %v3447 = vpop.f32.mrb[0].mxu0
  %v3448 = vadd.f32 %v2928, %v3447
  %v3449 = vpop.f32.mrb[0].mxu0
  %v3450 = vpop.f32.mrb[0].mxu0
  %v3451 = vadd.f32 %v2931, %v3450
  %v3452 = vpop.f32.mrb[0].mxu0
  %3453 = vmatprep.mubr.bf16.mxu0 0
  %3454 = vmatmul.mubr.bf16.gmra.mrb[0].mxu0 %v2103
  %v3455 = vpop.f32.mrb[0].mxu0
  %v3456 = vadd.f32 %v2936, %v3455
  %v3457 = vpop.f32.mrb[0].mxu0
  %v3458 = vpop.f32.mrb[0].mxu0
  %v3459 = vadd.f32 %v2939, %v3458
  %v3460 = vpop.f32.mrb[0].mxu0
  %3461 = vmatprep.mubr.bf16.mxu0 0
  %3462 = vmatmul.mubr.bf16.gmra.mrb[0].mxu0 %v2106
  %v3463 = vpop.f32.mrb[0].mxu0
  %v3464 = vadd.f32 %v2944, %v3463
  %v3465 = vpop.f32.mrb[0].mxu0
  %v3466 = vpop.f32.mrb[0].mxu0
  %v3467 = vadd.f32 %v2947, %v3466
  %v3468 = vpop.f32.mrb[0].mxu0
  %3469 = vmatprep.mubr.bf16.mxu0 0
  %3470 = vmatmul.mubr.bf16.gmra.mrb[0].mxu0 %v2109
  %v3471 = vpop.f32.mrb[0].mxu0
  %v3472 = vadd.f32 %v2952, %v3471
  %v3473 = vpop.f32.mrb[0].mxu0
  %v3474 = vpop.f32.mrb[0].mxu0
  %v3475 = vpop.f32.mrb[0].mxu0
  %3476 = vdwg.mxu0
  %vm3477 = vcmask 523264
  %3478 = vst.msk [vmem:[#allocation2] sm:$0xff] %vm3477, %v2992
  %3479 = vst.msk [vmem:[#allocation2 + $0x8] sm:$0xff] %vm3477, %v2995
  %3480 = vst.msk [vmem:[#allocation2 + $0x10] sm:$0xff] %vm3477, %v3000
  %3481 = vst.msk [vmem:[#allocation2 + $0x18] sm:$0xff] %vm3477, %v3003
  %3482 = vst.msk [vmem:[#allocation2 + $0x20] sm:$0xff] %vm3477, %v3008
  %3483 = vst.msk [vmem:[#allocation2 + $0x28] sm:$0xff] %vm3477, %v3011
  %3484 = vst.msk [vmem:[#allocation2 + $0x30] sm:$0xff] %vm3477, %v3016
  %3485 = vst.msk [vmem:[#allocation2 + $0x38] sm:$0xff] %vm3477, %v3019
  %3486 = vst.msk [vmem:[#allocation2 + $0x40] sm:$0xff] %vm3477, %v3024
  %3487 = vst.msk [vmem:[#allocation2 + $0x48] sm:$0xff] %vm3477, %v3027
  %3488 = vst.msk [vmem:[#allocation2 + $0x50] sm:$0xff] %vm3477, %v3032
  %3489 = vst.msk [vmem:[#allocation2 + $0x58] sm:$0xff] %vm3477, %v3035
  %3490 = vst.msk [vmem:[#allocation2 + $0x60] sm:$0xff] %vm3477, %v3040
  %3491 = vst.msk [vmem:[#allocation2 + $0x68] sm:$0xff] %vm3477, %v3043
  %3492 = vst.msk [vmem:[#allocation2 + $0x70] sm:$0xff] %vm3477, %v3048
  %3493 = vst.msk [vmem:[#allocation2 + $0x78] sm:$0xff] %vm3477, %v3051
  %3494 = vst.msk [vmem:[#allocation2 + $0x80] sm:$0xff] %vm3477, %v3056
  %3495 = vst.msk [vmem:[#allocation2 + $0x88] sm:$0xff] %vm3477, %v3059
  %3496 = vst.msk [vmem:[#allocation2 + $0x90] sm:$0xff] %vm3477, %v3064
  %3497 = vst.msk [vmem:[#allocation2 + $0x98] sm:$0xff] %vm3477, %v3067
  %3498 = vst.msk [vmem:[#allocation2 + $0xa0] sm:$0xff] %vm3477, %v3072
  %3499 = vst.msk [vmem:[#allocation2 + $0xa8] sm:$0xff] %vm3477, %v3075
  %3500 = vst.msk [vmem:[#allocation2 + $0xb0] sm:$0xff] %vm3477, %v3080
  %3501 = vst.msk [vmem:[#allocation2 + $0xb8] sm:$0xff] %vm3477, %v3083
  %3502 = vst.msk [vmem:[#allocation2 + $0xc0] sm:$0xff] %vm3477, %v3088
  %3503 = vst.msk [vmem:[#allocation2 + $0xc8] sm:$0xff] %vm3477, %v3091
  %3504 = vst.msk [vmem:[#allocation2 + $0xd0] sm:$0xff] %vm3477, %v3096
  %3505 = vst.msk [vmem:[#allocation2 + $0xd8] sm:$0xff] %vm3477, %v3099
  %3506 = vst.msk [vmem:[#allocation2 + $0xe0] sm:$0xff] %vm3477, %v3104
  %3507 = vst.msk [vmem:[#allocation2 + $0xe8] sm:$0xff] %vm3477, %v3107
  %3508 = vst.msk [vmem:[#allocation2 + $0xf0] sm:$0xff] %vm3477, %v3112
  %3509 = vst.msk [vmem:[#allocation2 + $0xf8] sm:$0xff] %vm3477, %v3115
  %3510 = vst.msk [vmem:[#allocation2 + $0x100] sm:$0xff] %vm3477, %v3120
  %3511 = vst.msk [vmem:[#allocation2 + $0x108] sm:$0xff] %vm3477, %v3123
  %3512 = vst.msk [vmem:[#allocation2 + $0x110] sm:$0xff] %vm3477, %v3128
  %3513 = vst.msk [vmem:[#allocation2 + $0x118] sm:$0xff] %vm3477, %v3131
  %3514 = vst.msk [vmem:[#allocation2 + $0x120] sm:$0xff] %vm3477, %v3136
  %3515 = vst.msk [vmem:[#allocation2 + $0x128] sm:$0xff] %vm3477, %v3139
  %3516 = vst.msk [vmem:[#allocation2 + $0x130] sm:$0xff] %vm3477, %v3144
  %3517 = vst.msk [vmem:[#allocation2 + $0x138] sm:$0xff] %vm3477, %v3147
  %3518 = vst.msk [vmem:[#allocation2 + $0x140] sm:$0xff] %vm3477, %v3152
  %3519 = vst.msk [vmem:[#allocation2 + $0x148] sm:$0xff] %vm3477, %v3155
  %3520 = vst.msk [vmem:[#allocation2 + $0x150] sm:$0xff] %vm3477, %v3160
  %3521 = vst.msk [vmem:[#allocation2 + $0x158] sm:$0xff] %vm3477, %v3163
  %3522 = vst.msk [vmem:[#allocation2 + $0x160] sm:$0xff] %vm3477, %v3168
  %3523 = vst.msk [vmem:[#allocation2 + $0x168] sm:$0xff] %vm3477, %v3171
  %3524 = vst.msk [vmem:[#allocation2 + $0x170] sm:$0xff] %vm3477, %v3176
  %3525 = vst.msk [vmem:[#allocation2 + $0x178] sm:$0xff] %vm3477, %v3179
  %3526 = vst.msk [vmem:[#allocation2 + $0x180] sm:$0xff] %vm3477, %v3184
  %3527 = vst.msk [vmem:[#allocation2 + $0x188] sm:$0xff] %vm3477, %v3187
  %3528 = vst.msk [vmem:[#allocation2 + $0x190] sm:$0xff] %vm3477, %v3192
  %3529 = vst.msk [vmem:[#allocation2 + $0x198] sm:$0xff] %vm3477, %v3195
  %3530 = vst.msk [vmem:[#allocation2 + $0x1a0] sm:$0xff] %vm3477, %v3200
  %3531 = vst.msk [vmem:[#allocation2 + $0x1a8] sm:$0xff] %vm3477, %v3203
  %3532 = vst.msk [vmem:[#allocation2 + $0x1b0] sm:$0xff] %vm3477, %v3208
  %3533 = vst.msk [vmem:[#allocation2 + $0x1b8] sm:$0xff] %vm3477, %v3211
  %3534 = vst.msk [vmem:[#allocation2 + $0x1c0] sm:$0xff] %vm3477, %v3216
  %3535 = vst.msk [vmem:[#allocation2 + $0x1c8] sm:$0xff] %vm3477, %v3219
  %3536 = vst.msk [vmem:[#allocation2 + $0x1d0] sm:$0xff] %vm3477, %v3224
  %3537 = vst.msk [vmem:[#allocation2 + $0x1d8] sm:$0xff] %vm3477, %v3227
  %3538 = vst.msk [vmem:[#allocation2 + $0x1e0] sm:$0xff] %vm3477, %v3232
  %3539 = vst.msk [vmem:[#allocation2 + $0x1e8] sm:$0xff] %vm3477, %v3235
  %3540 = vst.msk [vmem:[#allocation2 + $0x1f0] sm:$0xff] %vm3477, %v3240
  %3541 = vst.msk [vmem:[#allocation2 + $0x1f8] sm:$0xff] %vm3477, %v3243
  %3542 = vst.msk [vmem:[#allocation2 + $0x200] sm:$0xff] %vm3477, %v3248
  %3543 = vst.msk [vmem:[#allocation2 + $0x208] sm:$0xff] %vm3477, %v3251
  %3544 = vst.msk [vmem:[#allocation2 + $0x210] sm:$0xff] %vm3477, %v3256
  %3545 = vst.msk [vmem:[#allocation2 + $0x218] sm:$0xff] %vm3477, %v3259
  %3546 = vst.msk [vmem:[#allocation2 + $0x220] sm:$0xff] %vm3477, %v3264
  %3547 = vst.msk [vmem:[#allocation2 + $0x228] sm:$0xff] %vm3477, %v3267
  %3548 = vst.msk [vmem:[#allocation2 + $0x230] sm:$0xff] %vm3477, %v3272
  %3549 = vst.msk [vmem:[#allocation2 + $0x238] sm:$0xff] %vm3477, %v3275
  %3550 = vst.msk [vmem:[#allocation2 + $0x240] sm:$0xff] %vm3477, %v3280
  %3551 = vst.msk [vmem:[#allocation2 + $0x248] sm:$0xff] %vm3477, %v3283
  %3552 = vst.msk [vmem:[#allocation2 + $0x250] sm:$0xff] %vm3477, %v3288
  %3553 = vst.msk [vmem:[#allocation2 + $0x258] sm:$0xff] %vm3477, %v3291
  %3554 = vst.msk [vmem:[#allocation2 + $0x260] sm:$0xff] %vm3477, %v3296
  %3555 = vst.msk [vmem:[#allocation2 + $0x268] sm:$0xff] %vm3477, %v3299
  %3556 = vst.msk [vmem:[#allocation2 + $0x270] sm:$0xff] %vm3477, %v3304
  %3557 = vst.msk [vmem:[#allocation2 + $0x278] sm:$0xff] %vm3477, %v3307
  %3558 = vst.msk [vmem:[#allocation2 + $0x280] sm:$0xff] %vm3477, %v3312
  %3559 = vst.msk [vmem:[#allocation2 + $0x288] sm:$0xff] %vm3477, %v3315
  %3560 = vst.msk [vmem:[#allocation2 + $0x290] sm:$0xff] %vm3477, %v3320
  %3561 = vst.msk [vmem:[#allocation2 + $0x298] sm:$0xff] %vm3477, %v3323
  %3562 = vst.msk [vmem:[#allocation2 + $0x2a0] sm:$0xff] %vm3477, %v3328
  %3563 = vst.msk [vmem:[#allocation2 + $0x2a8] sm:$0xff] %vm3477, %v3331
  %3564 = vst.msk [vmem:[#allocation2 + $0x2b0] sm:$0xff] %vm3477, %v3336
  %3565 = vst.msk [vmem:[#allocation2 + $0x2b8] sm:$0xff] %vm3477, %v3339
  %3566 = vst.msk [vmem:[#allocation2 + $0x2c0] sm:$0xff] %vm3477, %v3344
  %3567 = vst.msk [vmem:[#allocation2 + $0x2c8] sm:$0xff] %vm3477, %v3347
  %3568 = vst.msk [vmem:[#allocation2 + $0x2d0] sm:$0xff] %vm3477, %v3352
  %3569 = vst.msk [vmem:[#allocation2 + $0x2d8] sm:$0xff] %vm3477, %v3355
  %3570 = vst.msk [vmem:[#allocation2 + $0x2e0] sm:$0xff] %vm3477, %v3360
  %3571 = vst.msk [vmem:[#allocation2 + $0x2e8] sm:$0xff] %vm3477, %v3363
  %3572 = vst.msk [vmem:[#allocation2 + $0x2f0] sm:$0xff] %vm3477, %v3368
  %3573 = vst.msk [vmem:[#allocation2 + $0x2f8] sm:$0xff] %vm3477, %v3371
  %3574 = vst.msk [vmem:[#allocation2 + $0x300] sm:$0xff] %vm3477, %v3376
  %3575 = vst.msk [vmem:[#allocation2 + $0x308] sm:$0xff] %vm3477, %v3379
  %3576 = vst.msk [vmem:[#allocation2 + $0x310] sm:$0xff] %vm3477, %v3384
  %3577 = vst.msk [vmem:[#allocation2 + $0x318] sm:$0xff] %vm3477, %v3387
  %3578 = vst.msk [vmem:[#allocation2 + $0x320] sm:$0xff] %vm3477, %v3392
  %3579 = vst.msk [vmem:[#allocation2 + $0x328] sm:$0xff] %vm3477, %v3395
  %3580 = vst.msk [vmem:[#allocation2 + $0x330] sm:$0xff] %vm3477, %v3400
  %3581 = vst.msk [vmem:[#allocation2 + $0x338] sm:$0xff] %vm3477, %v3403
  %3582 = vst.msk [vmem:[#allocation2 + $0x340] sm:$0xff] %vm3477, %v3408
  %3583 = vst.msk [vmem:[#allocation2 + $0x348] sm:$0xff] %vm3477, %v3411
  %3584 = vst.msk [vmem:[#allocation2 + $0x350] sm:$0xff] %vm3477, %v3416
  %3585 = vst.msk [vmem:[#allocation2 + $0x358] sm:$0xff] %vm3477, %v3419
  %3586 = vst.msk [vmem:[#allocation2 + $0x360] sm:$0xff] %vm3477, %v3424
  %3587 = vst.msk [vmem:[#allocation2 + $0x368] sm:$0xff] %vm3477, %v3427
  %3588 = vst.msk [vmem:[#allocation2 + $0x370] sm:$0xff] %vm3477, %v3432
  %3589 = vst.msk [vmem:[#allocation2 + $0x378] sm:$0xff] %vm3477, %v3435
  %3590 = vst.msk [vmem:[#allocation2 + $0x380] sm:$0xff] %vm3477, %v3440
  %3591 = vst.msk [vmem:[#allocation2 + $0x388] sm:$0xff] %vm3477, %v3443
  %3592 = vst.msk [vmem:[#allocation2 + $0x390] sm:$0xff] %vm3477, %v3448
  %3593 = vst.msk [vmem:[#allocation2 + $0x398] sm:$0xff] %vm3477, %v3451
  %3594 = vst.msk [vmem:[#allocation2 + $0x3a0] sm:$0xff] %vm3477, %v3456
  %3595 = vst.msk [vmem:[#allocation2 + $0x3a8] sm:$0xff] %vm3477, %v3459
  %3596 = vst.msk [vmem:[#allocation2 + $0x3b0] sm:$0xff] %vm3477, %v3464
  %3597 = vst.msk [vmem:[#allocation2 + $0x3b8] sm:$0xff] %vm3477, %v3467
  %3598 = vst.msk [vmem:[#allocation2 + $0x3c0] sm:$0xff] %vm3477, %v3472
  %v3599 = vld [vmem:[#allocation2] sm:$0xff]
  %v3600 = vadd.f32 %v3599, 0.0
  %v3601 = vmul.f32 %v3599, %v3599
  %v3602 = vadd.f32 %v3601, 0.0
  %v3603 = vld [vmem:[#allocation2 + $0x8] sm:$0xff]
  %v3604 = vadd.f32 %v3600, %v3603
  %v3605 = vmul.f32 %v3603, %v3603
  %v3606 = vadd.f32 %v3602, %v3605
  %v3607 = vld [vmem:[#allocation2 + $0x10] sm:$0xff]
  %v3608 = vadd.f32 %v3604, %v3607
  %v3609 = vmul.f32 %v3607, %v3607
  %v3610 = vadd.f32 %v3606, %v3609
  %v3611 = vld [vmem:[#allocation2 + $0x18] sm:$0xff]
  %v3612 = vadd.f32 %v3608, %v3611
  %v3613 = vmul.f32 %v3611, %v3611
  %v3614 = vadd.f32 %v3610, %v3613
  %v3615 = vld [vmem:[#allocation2 + $0x20] sm:$0xff]
  %v3616 = vadd.f32 %v3612, %v3615
  %v3617 = vmul.f32 %v3615, %v3615
  %v3618 = vadd.f32 %v3614, %v3617
  %v3619 = vld [vmem:[#allocation2 + $0x28] sm:$0xff]
  %v3620 = vadd.f32 %v3616, %v3619
  %v3621 = vmul.f32 %v3619, %v3619
  %v3622 = vadd.f32 %v3618, %v3621
  %v3623 = vld [vmem:[#allocation2 + $0x30] sm:$0xff]
  %v3624 = vadd.f32 %v3620, %v3623
  %v3625 = vmul.f32 %v3623, %v3623
  %v3626 = vadd.f32 %v3622, %v3625
  %v3627 = vld [vmem:[#allocation2 + $0x38] sm:$0xff]
  %v3628 = vadd.f32 %v3624, %v3627
  %v3629 = vmul.f32 %v3627, %v3627
  %v3630 = vadd.f32 %v3626, %v3629
  %v3631 = vld [vmem:[#allocation2 + $0x40] sm:$0xff]
  %v3632 = vadd.f32 %v3628, %v3631
  %v3633 = vmul.f32 %v3631, %v3631
  %v3634 = vadd.f32 %v3630, %v3633
  %v3635 = vld [vmem:[#allocation2 + $0x48] sm:$0xff]
  %v3636 = vadd.f32 %v3632, %v3635
  %v3637 = vmul.f32 %v3635, %v3635
  %v3638 = vadd.f32 %v3634, %v3637
  %v3639 = vld [vmem:[#allocation2 + $0x50] sm:$0xff]
  %v3640 = vadd.f32 %v3636, %v3639
  %v3641 = vmul.f32 %v3639, %v3639
  %v3642 = vadd.f32 %v3638, %v3641
  %v3643 = vld [vmem:[#allocation2 + $0x58] sm:$0xff]
  %v3644 = vadd.f32 %v3640, %v3643
  %v3645 = vmul.f32 %v3643, %v3643
  %v3646 = vadd.f32 %v3642, %v3645
  %v3647 = vld [vmem:[#allocation2 + $0x60] sm:$0xff]
  %v3648 = vadd.f32 %v3644, %v3647
  %v3649 = vmul.f32 %v3647, %v3647
  %v3650 = vadd.f32 %v3646, %v3649
  %v3651 = vld [vmem:[#allocation2 + $0x68] sm:$0xff]
  %v3652 = vadd.f32 %v3648, %v3651
  %v3653 = vmul.f32 %v3651, %v3651
  %v3654 = vadd.f32 %v3650, %v3653
  %v3655 = vld [vmem:[#allocation2 + $0x70] sm:$0xff]
  %v3656 = vadd.f32 %v3652, %v3655
  %v3657 = vmul.f32 %v3655, %v3655
  %v3658 = vadd.f32 %v3654, %v3657
  %v3659 = vld [vmem:[#allocation2 + $0x78] sm:$0xff]
  %v3660 = vadd.f32 %v3656, %v3659
  %v3661 = vmul.f32 %v3659, %v3659
  %v3662 = vadd.f32 %v3658, %v3661
  %v3663 = vld [vmem:[#allocation2 + $0x80] sm:$0xff]
  %v3664 = vadd.f32 %v3660, %v3663
  %v3665 = vmul.f32 %v3663, %v3663
  %v3666 = vadd.f32 %v3662, %v3665
  %v3667 = vld [vmem:[#allocation2 + $0x88] sm:$0xff]
  %v3668 = vadd.f32 %v3664, %v3667
  %v3669 = vmul.f32 %v3667, %v3667
  %v3670 = vadd.f32 %v3666, %v3669
  %v3671 = vld [vmem:[#allocation2 + $0x90] sm:$0xff]
  %v3672 = vadd.f32 %v3668, %v3671
  %v3673 = vmul.f32 %v3671, %v3671
  %v3674 = vadd.f32 %v3670, %v3673
  %v3675 = vld [vmem:[#allocation2 + $0x98] sm:$0xff]
  %v3676 = vadd.f32 %v3672, %v3675
  %v3677 = vmul.f32 %v3675, %v3675
  %v3678 = vadd.f32 %v3674, %v3677
  %v3679 = vld [vmem:[#allocation2 + $0xa0] sm:$0xff]
  %v3680 = vadd.f32 %v3676, %v3679
  %v3681 = vmul.f32 %v3679, %v3679
  %v3682 = vadd.f32 %v3678, %v3681
  %v3683 = vld [vmem:[#allocation2 + $0xa8] sm:$0xff]
  %v3684 = vadd.f32 %v3680, %v3683
  %v3685 = vmul.f32 %v3683, %v3683
  %v3686 = vadd.f32 %v3682, %v3685
  %v3687 = vld [vmem:[#allocation2 + $0xb0] sm:$0xff]
  %v3688 = vadd.f32 %v3684, %v3687
  %v3689 = vmul.f32 %v3687, %v3687
  %v3690 = vadd.f32 %v3686, %v3689
  %v3691 = vld [vmem:[#allocation2 + $0xb8] sm:$0xff]
  %v3692 = vadd.f32 %v3688, %v3691
  %v3693 = vmul.f32 %v3691, %v3691
  %v3694 = vadd.f32 %v3690, %v3693
  %v3695 = vld [vmem:[#allocation2 + $0xc0] sm:$0xff]
  %v3696 = vadd.f32 %v3692, %v3695
  %v3697 = vmul.f32 %v3695, %v3695
  %v3698 = vadd.f32 %v3694, %v3697
  %v3699 = vld [vmem:[#allocation2 + $0xc8] sm:$0xff]
  %v3700 = vadd.f32 %v3696, %v3699
  %v3701 = vmul.f32 %v3699, %v3699
  %v3702 = vadd.f32 %v3698, %v3701
  %v3703 = vld [vmem:[#allocation2 + $0xd0] sm:$0xff]
  %v3704 = vadd.f32 %v3700, %v3703
  %v3705 = vmul.f32 %v3703, %v3703
  %v3706 = vadd.f32 %v3702, %v3705
  %v3707 = vld [vmem:[#allocation2 + $0xd8] sm:$0xff]
  %v3708 = vadd.f32 %v3704, %v3707
  %v3709 = vmul.f32 %v3707, %v3707
  %v3710 = vadd.f32 %v3706, %v3709
  %v3711 = vld [vmem:[#allocation2 + $0xe0] sm:$0xff]
  %v3712 = vadd.f32 %v3708, %v3711
  %v3713 = vmul.f32 %v3711, %v3711
  %v3714 = vadd.f32 %v3710, %v3713
  %v3715 = vld [vmem:[#allocation2 + $0xe8] sm:$0xff]
  %v3716 = vadd.f32 %v3712, %v3715
  %v3717 = vmul.f32 %v3715, %v3715
  %v3718 = vadd.f32 %v3714, %v3717
  %v3719 = vld [vmem:[#allocation2 + $0xf0] sm:$0xff]
  %v3720 = vadd.f32 %v3716, %v3719
  %v3721 = vmul.f32 %v3719, %v3719
  %v3722 = vadd.f32 %v3718, %v3721
  %v3723 = vld [vmem:[#allocation2 + $0xf8] sm:$0xff]
  %v3724 = vadd.f32 %v3720, %v3723
  %v3725 = vmul.f32 %v3723, %v3723
  %v3726 = vadd.f32 %v3722, %v3725
  %v3727 = vld [vmem:[#allocation2 + $0x100] sm:$0xff]
  %v3728 = vadd.f32 %v3724, %v3727
  %v3729 = vmul.f32 %v3727, %v3727
  %v3730 = vadd.f32 %v3726, %v3729
  %v3731 = vld [vmem:[#allocation2 + $0x108] sm:$0xff]
  %v3732 = vadd.f32 %v3728, %v3731
  %v3733 = vmul.f32 %v3731, %v3731
  %v3734 = vadd.f32 %v3730, %v3733
  %v3735 = vld [vmem:[#allocation2 + $0x110] sm:$0xff]
  %v3736 = vadd.f32 %v3732, %v3735
  %v3737 = vmul.f32 %v3735, %v3735
  %v3738 = vadd.f32 %v3734, %v3737
  %v3739 = vld [vmem:[#allocation2 + $0x118] sm:$0xff]
  %v3740 = vadd.f32 %v3736, %v3739
  %v3741 = vmul.f32 %v3739, %v3739
  %v3742 = vadd.f32 %v3738, %v3741
  %v3743 = vld [vmem:[#allocation2 + $0x120] sm:$0xff]
  %v3744 = vadd.f32 %v3740, %v3743
  %v3745 = vmul.f32 %v3743, %v3743
  %v3746 = vadd.f32 %v3742, %v3745
  %v3747 = vld [vmem:[#allocation2 + $0x128] sm:$0xff]
  %v3748 = vadd.f32 %v3744, %v3747
  %v3749 = vmul.f32 %v3747, %v3747
  %v3750 = vadd.f32 %v3746, %v3749
  %v3751 = vld [vmem:[#allocation2 + $0x130] sm:$0xff]
  %v3752 = vadd.f32 %v3748, %v3751
  %v3753 = vmul.f32 %v3751, %v3751
  %v3754 = vadd.f32 %v3750, %v3753
  %v3755 = vld [vmem:[#allocation2 + $0x138] sm:$0xff]
  %v3756 = vadd.f32 %v3752, %v3755
  %v3757 = vmul.f32 %v3755, %v3755
  %v3758 = vadd.f32 %v3754, %v3757
  %v3759 = vld [vmem:[#allocation2 + $0x140] sm:$0xff]
  %v3760 = vadd.f32 %v3756, %v3759
  %v3761 = vmul.f32 %v3759, %v3759
  %v3762 = vadd.f32 %v3758, %v3761
  %v3763 = vld [vmem:[#allocation2 + $0x148] sm:$0xff]
  %v3764 = vadd.f32 %v3760, %v3763
  %v3765 = vmul.f32 %v3763, %v3763
  %v3766 = vadd.f32 %v3762, %v3765
  %v3767 = vld [vmem:[#allocation2 + $0x150] sm:$0xff]
  %v3768 = vadd.f32 %v3764, %v3767
  %v3769 = vmul.f32 %v3767, %v3767
  %v3770 = vadd.f32 %v3766, %v3769
  %v3771 = vld [vmem:[#allocation2 + $0x158] sm:$0xff]
  %v3772 = vadd.f32 %v3768, %v3771
  %v3773 = vmul.f32 %v3771, %v3771
  %v3774 = vadd.f32 %v3770, %v3773
  %v3775 = vld [vmem:[#allocation2 + $0x160] sm:$0xff]
  %v3776 = vadd.f32 %v3772, %v3775
  %v3777 = vmul.f32 %v3775, %v3775
  %v3778 = vadd.f32 %v3774, %v3777
  %v3779 = vld [vmem:[#allocation2 + $0x168] sm:$0xff]
  %v3780 = vadd.f32 %v3776, %v3779
  %v3781 = vmul.f32 %v3779, %v3779
  %v3782 = vadd.f32 %v3778, %v3781
  %v3783 = vld [vmem:[#allocation2 + $0x170] sm:$0xff]
  %v3784 = vadd.f32 %v3780, %v3783
  %v3785 = vmul.f32 %v3783, %v3783
  %v3786 = vadd.f32 %v3782, %v3785
  %v3787 = vld [vmem:[#allocation2 + $0x178] sm:$0xff]
  %v3788 = vadd.f32 %v3784, %v3787
  %v3789 = vmul.f32 %v3787, %v3787
  %v3790 = vadd.f32 %v3786, %v3789
  %v3791 = vld [vmem:[#allocation2 + $0x180] sm:$0xff]
  %v3792 = vadd.f32 %v3788, %v3791
  %v3793 = vmul.f32 %v3791, %v3791
  %v3794 = vadd.f32 %v3790, %v3793
  %v3795 = vld [vmem:[#allocation2 + $0x188] sm:$0xff]
  %v3796 = vadd.f32 %v3792, %v3795
  %v3797 = vmul.f32 %v3795, %v3795
  %v3798 = vadd.f32 %v3794, %v3797
  %v3799 = vld [vmem:[#allocation2 + $0x190] sm:$0xff]
  %v3800 = vadd.f32 %v3796, %v3799
  %v3801 = vmul.f32 %v3799, %v3799
  %v3802 = vadd.f32 %v3798, %v3801
  %v3803 = vld [vmem:[#allocation2 + $0x198] sm:$0xff]
  %v3804 = vadd.f32 %v3800, %v3803
  %v3805 = vmul.f32 %v3803, %v3803
  %v3806 = vadd.f32 %v3802, %v3805
  %v3807 = vld [vmem:[#allocation2 + $0x1a0] sm:$0xff]
  %v3808 = vadd.f32 %v3804, %v3807
  %v3809 = vmul.f32 %v3807, %v3807
  %v3810 = vadd.f32 %v3806, %v3809
  %v3811 = vld [vmem:[#allocation2 + $0x1a8] sm:$0xff]
  %v3812 = vadd.f32 %v3808, %v3811
  %v3813 = vmul.f32 %v3811, %v3811
  %v3814 = vadd.f32 %v3810, %v3813
  %v3815 = vld [vmem:[#allocation2 + $0x1b0] sm:$0xff]
  %v3816 = vadd.f32 %v3812, %v3815
  %v3817 = vmul.f32 %v3815, %v3815
  %v3818 = vadd.f32 %v3814, %v3817
  %v3819 = vld [vmem:[#allocation2 + $0x1b8] sm:$0xff]
  %v3820 = vadd.f32 %v3816, %v3819
  %v3821 = vmul.f32 %v3819, %v3819
  %v3822 = vadd.f32 %v3818, %v3821
  %v3823 = vld [vmem:[#allocation2 + $0x1c0] sm:$0xff]
  %v3824 = vadd.f32 %v3820, %v3823
  %v3825 = vmul.f32 %v3823, %v3823
  %v3826 = vadd.f32 %v3822, %v3825
  %v3827 = vld [vmem:[#allocation2 + $0x1c8] sm:$0xff]
  %v3828 = vadd.f32 %v3824, %v3827
  %v3829 = vmul.f32 %v3827, %v3827
  %v3830 = vadd.f32 %v3826, %v3829
  %v3831 = vld [vmem:[#allocation2 + $0x1d0] sm:$0xff]
  %v3832 = vadd.f32 %v3828, %v3831
  %v3833 = vmul.f32 %v3831, %v3831
  %v3834 = vadd.f32 %v3830, %v3833
  %v3835 = vld [vmem:[#allocation2 + $0x1d8] sm:$0xff]
  %v3836 = vadd.f32 %v3832, %v3835
  %v3837 = vmul.f32 %v3835, %v3835
  %v3838 = vadd.f32 %v3834, %v3837
  %v3839 = vld [vmem:[#allocation2 + $0x1e0] sm:$0xff]
  %v3840 = vadd.f32 %v3836, %v3839
  %v3841 = vmul.f32 %v3839, %v3839
  %v3842 = vadd.f32 %v3838, %v3841
  %v3843 = vld [vmem:[#allocation2 + $0x1e8] sm:$0xff]
  %v3844 = vadd.f32 %v3840, %v3843
  %v3845 = vmul.f32 %v3843, %v3843
  %v3846 = vadd.f32 %v3842, %v3845
  %v3847 = vld [vmem:[#allocation2 + $0x1f0] sm:$0xff]
  %v3848 = vadd.f32 %v3844, %v3847
  %v3849 = vmul.f32 %v3847, %v3847
  %v3850 = vadd.f32 %v3846, %v3849
  %v3851 = vld [vmem:[#allocation2 + $0x1f8] sm:$0xff]
  %v3852 = vadd.f32 %v3848, %v3851
  %v3853 = vmul.f32 %v3851, %v3851
  %v3854 = vadd.f32 %v3850, %v3853
  %v3855 = vld [vmem:[#allocation2 + $0x200] sm:$0xff]
  %v3856 = vadd.f32 %v3852, %v3855
  %v3857 = vmul.f32 %v3855, %v3855
  %v3858 = vadd.f32 %v3854, %v3857
  %v3859 = vld [vmem:[#allocation2 + $0x208] sm:$0xff]
  %v3860 = vadd.f32 %v3856, %v3859
  %v3861 = vmul.f32 %v3859, %v3859
  %v3862 = vadd.f32 %v3858, %v3861
  %v3863 = vld [vmem:[#allocation2 + $0x210] sm:$0xff]
  %v3864 = vadd.f32 %v3860, %v3863
  %v3865 = vmul.f32 %v3863, %v3863
  %v3866 = vadd.f32 %v3862, %v3865
  %v3867 = vld [vmem:[#allocation2 + $0x218] sm:$0xff]
  %v3868 = vadd.f32 %v3864, %v3867
  %v3869 = vmul.f32 %v3867, %v3867
  %v3870 = vadd.f32 %v3866, %v3869
  %v3871 = vld [vmem:[#allocation2 + $0x220] sm:$0xff]
  %v3872 = vadd.f32 %v3868, %v3871
  %v3873 = vmul.f32 %v3871, %v3871
  %v3874 = vadd.f32 %v3870, %v3873
  %v3875 = vld [vmem:[#allocation2 + $0x228] sm:$0xff]
  %v3876 = vadd.f32 %v3872, %v3875
  %v3877 = vmul.f32 %v3875, %v3875
  %v3878 = vadd.f32 %v3874, %v3877
  %v3879 = vld [vmem:[#allocation2 + $0x230] sm:$0xff]
  %v3880 = vadd.f32 %v3876, %v3879
  %v3881 = vmul.f32 %v3879, %v3879
  %v3882 = vadd.f32 %v3878, %v3881
  %v3883 = vld [vmem:[#allocation2 + $0x238] sm:$0xff]
  %v3884 = vadd.f32 %v3880, %v3883
  %v3885 = vmul.f32 %v3883, %v3883
  %v3886 = vadd.f32 %v3882, %v3885
  %v3887 = vld [vmem:[#allocation2 + $0x240] sm:$0xff]
  %v3888 = vadd.f32 %v3884, %v3887
  %v3889 = vmul.f32 %v3887, %v3887
  %v3890 = vadd.f32 %v3886, %v3889
  %v3891 = vld [vmem:[#allocation2 + $0x248] sm:$0xff]
  %v3892 = vadd.f32 %v3888, %v3891
  %v3893 = vmul.f32 %v3891, %v3891
  %v3894 = vadd.f32 %v3890, %v3893
  %v3895 = vld [vmem:[#allocation2 + $0x250] sm:$0xff]
  %v3896 = vadd.f32 %v3892, %v3895
  %v3897 = vmul.f32 %v3895, %v3895
  %v3898 = vadd.f32 %v3894, %v3897
  %v3899 = vld [vmem:[#allocation2 + $0x258] sm:$0xff]
  %v3900 = vadd.f32 %v3896, %v3899
  %v3901 = vmul.f32 %v3899, %v3899
  %v3902 = vadd.f32 %v3898, %v3901
  %v3903 = vld [vmem:[#allocation2 + $0x260] sm:$0xff]
  %v3904 = vadd.f32 %v3900, %v3903
  %v3905 = vmul.f32 %v3903, %v3903
  %v3906 = vadd.f32 %v3902, %v3905
  %v3907 = vld [vmem:[#allocation2 + $0x268] sm:$0xff]
  %v3908 = vadd.f32 %v3904, %v3907
  %v3909 = vmul.f32 %v3907, %v3907
  %v3910 = vadd.f32 %v3906, %v3909
  %v3911 = vld [vmem:[#allocation2 + $0x270] sm:$0xff]
  %v3912 = vadd.f32 %v3908, %v3911
  %v3913 = vmul.f32 %v3911, %v3911
  %v3914 = vadd.f32 %v3910, %v3913
  %v3915 = vld [vmem:[#allocation2 + $0x278] sm:$0xff]
  %v3916 = vadd.f32 %v3912, %v3915
  %v3917 = vmul.f32 %v3915, %v3915
  %v3918 = vadd.f32 %v3914, %v3917
  %v3919 = vld [vmem:[#allocation2 + $0x280] sm:$0xff]
  %v3920 = vadd.f32 %v3916, %v3919
  %v3921 = vmul.f32 %v3919, %v3919
  %v3922 = vadd.f32 %v3918, %v3921
  %v3923 = vld [vmem:[#allocation2 + $0x288] sm:$0xff]
  %v3924 = vadd.f32 %v3920, %v3923
  %v3925 = vmul.f32 %v3923, %v3923
  %v3926 = vadd.f32 %v3922, %v3925
  %v3927 = vld [vmem:[#allocation2 + $0x290] sm:$0xff]
  %v3928 = vadd.f32 %v3924, %v3927
  %v3929 = vmul.f32 %v3927, %v3927
  %v3930 = vadd.f32 %v3926, %v3929
  %v3931 = vld [vmem:[#allocation2 + $0x298] sm:$0xff]
  %v3932 = vadd.f32 %v3928, %v3931
  %v3933 = vmul.f32 %v3931, %v3931
  %v3934 = vadd.f32 %v3930, %v3933
  %v3935 = vld [vmem:[#allocation2 + $0x2a0] sm:$0xff]
  %v3936 = vadd.f32 %v3932, %v3935
  %v3937 = vmul.f32 %v3935, %v3935
  %v3938 = vadd.f32 %v3934, %v3937
  %v3939 = vld [vmem:[#allocation2 + $0x2a8] sm:$0xff]
  %v3940 = vadd.f32 %v3936, %v3939
  %v3941 = vmul.f32 %v3939, %v3939
  %v3942 = vadd.f32 %v3938, %v3941
  %v3943 = vld [vmem:[#allocation2 + $0x2b0] sm:$0xff]
  %v3944 = vadd.f32 %v3940, %v3943
  %v3945 = vmul.f32 %v3943, %v3943
  %v3946 = vadd.f32 %v3942, %v3945
  %v3947 = vld [vmem:[#allocation2 + $0x2b8] sm:$0xff]
  %v3948 = vadd.f32 %v3944, %v3947
  %v3949 = vmul.f32 %v3947, %v3947
  %v3950 = vadd.f32 %v3946, %v3949
  %v3951 = vld [vmem:[#allocation2 + $0x2c0] sm:$0xff]
  %v3952 = vadd.f32 %v3948, %v3951
  %v3953 = vmul.f32 %v3951, %v3951
  %v3954 = vadd.f32 %v3950, %v3953
  %v3955 = vld [vmem:[#allocation2 + $0x2c8] sm:$0xff]
  %v3956 = vadd.f32 %v3952, %v3955
  %v3957 = vmul.f32 %v3955, %v3955
  %v3958 = vadd.f32 %v3954, %v3957
  %v3959 = vld [vmem:[#allocation2 + $0x2d0] sm:$0xff]
  %v3960 = vadd.f32 %v3956, %v3959
  %v3961 = vmul.f32 %v3959, %v3959
  %v3962 = vadd.f32 %v3958, %v3961
  %v3963 = vld [vmem:[#allocation2 + $0x2d8] sm:$0xff]
  %v3964 = vadd.f32 %v3960, %v3963
  %v3965 = vmul.f32 %v3963, %v3963
  %v3966 = vadd.f32 %v3962, %v3965
  %v3967 = vld [vmem:[#allocation2 + $0x2e0] sm:$0xff]
  %v3968 = vadd.f32 %v3964, %v3967
  %v3969 = vmul.f32 %v3967, %v3967
  %v3970 = vadd.f32 %v3966, %v3969
  %v3971 = vld [vmem:[#allocation2 + $0x2e8] sm:$0xff]
  %v3972 = vadd.f32 %v3968, %v3971
  %v3973 = vmul.f32 %v3971, %v3971
  %v3974 = vadd.f32 %v3970, %v3973
  %v3975 = vld [vmem:[#allocation2 + $0x2f0] sm:$0xff]
  %v3976 = vadd.f32 %v3972, %v3975
  %v3977 = vmul.f32 %v3975, %v3975
  %v3978 = vadd.f32 %v3974, %v3977
  %v3979 = vld [vmem:[#allocation2 + $0x2f8] sm:$0xff]
  %v3980 = vadd.f32 %v3976, %v3979
  %v3981 = vmul.f32 %v3979, %v3979
  %v3982 = vadd.f32 %v3978, %v3981
  %v3983 = vld [vmem:[#allocation2 + $0x300] sm:$0xff]
  %v3984 = vadd.f32 %v3980, %v3983
  %v3985 = vmul.f32 %v3983, %v3983
  %v3986 = vadd.f32 %v3982, %v3985
  %v3987 = vld [vmem:[#allocation2 + $0x308] sm:$0xff]
  %v3988 = vadd.f32 %v3984, %v3987
  %v3989 = vmul.f32 %v3987, %v3987
  %v3990 = vadd.f32 %v3986, %v3989
  %v3991 = vld [vmem:[#allocation2 + $0x310] sm:$0xff]
  %v3992 = vadd.f32 %v3988, %v3991
  %v3993 = vmul.f32 %v3991, %v3991
  %v3994 = vadd.f32 %v3990, %v3993
  %v3995 = vld [vmem:[#allocation2 + $0x318] sm:$0xff]
  %v3996 = vadd.f32 %v3992, %v3995
  %v3997 = vmul.f32 %v3995, %v3995
  %v3998 = vadd.f32 %v3994, %v3997
  %v3999 = vld [vmem:[#allocation2 + $0x320] sm:$0xff]
  %v4000 = vadd.f32 %v3996, %v3999
  %v4001 = vmul.f32 %v3999, %v3999
  %v4002 = vadd.f32 %v3998, %v4001
  %v4003 = vld [vmem:[#allocation2 + $0x328] sm:$0xff]
  %v4004 = vadd.f32 %v4000, %v4003
  %v4005 = vmul.f32 %v4003, %v4003
  %v4006 = vadd.f32 %v4002, %v4005
  %v4007 = vld [vmem:[#allocation2 + $0x330] sm:$0xff]
  %v4008 = vadd.f32 %v4004, %v4007
  %v4009 = vmul.f32 %v4007, %v4007
  %v4010 = vadd.f32 %v4006, %v4009
  %v4011 = vld [vmem:[#allocation2 + $0x338] sm:$0xff]
  %v4012 = vadd.f32 %v4008, %v4011
  %v4013 = vmul.f32 %v4011, %v4011
  %v4014 = vadd.f32 %v4010, %v4013
  %v4015 = vld [vmem:[#allocation2 + $0x340] sm:$0xff]
  %v4016 = vadd.f32 %v4012, %v4015
  %v4017 = vmul.f32 %v4015, %v4015
  %v4018 = vadd.f32 %v4014, %v4017
  %v4019 = vld [vmem:[#allocation2 + $0x348] sm:$0xff]
  %v4020 = vadd.f32 %v4016, %v4019
  %v4021 = vmul.f32 %v4019, %v4019
  %v4022 = vadd.f32 %v4018, %v4021
  %v4023 = vld [vmem:[#allocation2 + $0x350] sm:$0xff]
  %v4024 = vadd.f32 %v4020, %v4023
  %v4025 = vmul.f32 %v4023, %v4023
  %v4026 = vadd.f32 %v4022, %v4025
  %v4027 = vld [vmem:[#allocation2 + $0x358] sm:$0xff]
  %v4028 = vadd.f32 %v4024, %v4027
  %v4029 = vmul.f32 %v4027, %v4027
  %v4030 = vadd.f32 %v4026, %v4029
  %v4031 = vld [vmem:[#allocation2 + $0x360] sm:$0xff]
  %v4032 = vadd.f32 %v4028, %v4031
  %v4033 = vmul.f32 %v4031, %v4031
  %v4034 = vadd.f32 %v4030, %v4033
  %v4035 = vld [vmem:[#allocation2 + $0x368] sm:$0xff]
  %v4036 = vadd.f32 %v4032, %v4035
  %v4037 = vmul.f32 %v4035, %v4035
  %v4038 = vadd.f32 %v4034, %v4037
  %v4039 = vld [vmem:[#allocation2 + $0x370] sm:$0xff]
  %v4040 = vadd.f32 %v4036, %v4039
  %v4041 = vmul.f32 %v4039, %v4039
  %v4042 = vadd.f32 %v4038, %v4041
  %v4043 = vld [vmem:[#allocation2 + $0x378] sm:$0xff]
  %v4044 = vadd.f32 %v4040, %v4043
  %v4045 = vmul.f32 %v4043, %v4043
  %v4046 = vadd.f32 %v4042, %v4045
  %v4047 = vld [vmem:[#allocation2 + $0x380] sm:$0xff]
  %v4048 = vadd.f32 %v4044, %v4047
  %v4049 = vmul.f32 %v4047, %v4047
  %v4050 = vadd.f32 %v4046, %v4049
  %v4051 = vld [vmem:[#allocation2 + $0x388] sm:$0xff]
  %v4052 = vadd.f32 %v4048, %v4051
  %v4053 = vmul.f32 %v4051, %v4051
  %v4054 = vadd.f32 %v4050, %v4053
  %v4055 = vld [vmem:[#allocation2 + $0x390] sm:$0xff]
  %v4056 = vadd.f32 %v4052, %v4055
  %v4057 = vmul.f32 %v4055, %v4055
  %v4058 = vadd.f32 %v4054, %v4057
  %v4059 = vld [vmem:[#allocation2 + $0x398] sm:$0xff]
  %v4060 = vadd.f32 %v4056, %v4059
  %v4061 = vmul.f32 %v4059, %v4059
  %v4062 = vadd.f32 %v4058, %v4061
  %v4063 = vld [vmem:[#allocation2 + $0x3a0] sm:$0xff]
  %v4064 = vadd.f32 %v4060, %v4063
  %v4065 = vmul.f32 %v4063, %v4063
  %v4066 = vadd.f32 %v4062, %v4065
  %v4067 = vld [vmem:[#allocation2 + $0x3a8] sm:$0xff]
  %v4068 = vadd.f32 %v4064, %v4067
  %v4069 = vmul.f32 %v4067, %v4067
  %v4070 = vadd.f32 %v4066, %v4069
  %v4071 = vld [vmem:[#allocation2 + $0x3b0] sm:$0xff]
  %v4072 = vadd.f32 %v4068, %v4071
  %v4073 = vmul.f32 %v4071, %v4071
  %v4074 = vadd.f32 %v4070, %v4073
  %v4075 = vld [vmem:[#allocation2 + $0x3b8] sm:$0xff]
  %v4076 = vadd.f32 %v4072, %v4075
  %v4077 = vmul.f32 %v4075, %v4075
  %v4078 = vadd.f32 %v4074, %v4077
  %v4079 = vld [vmem:[#allocation2 + $0x3c0] sm:$0xff]
  %v4080 = vadd.f32 %v4076, %v4079
  %v4081 = vmul.f32 %v4079, %v4079
  %v4082 = vadd.f32 %v4078, %v4081
  %v4083 = vsel %vm3477, %v4080, 0.0
  %v4084 = vrot.slane %v4083, 4
  %v4085 = vadd.f32 %v4083, %v4084
  %v4086 = vrot.slane %v4085, 2
  %v4087 = vadd.f32 %v4085, %v4086
  %v4088 = vrot.slane %v4087, 1
  %v4089 = vadd.f32 %v4087, %v4088
  %v4090 = vmul.f32 %v4089, 0.0010330578
  %v4091 = vsel %vm3477, %v4082, 0.0
  %v4092 = vrot.slane %v4091, 4
  %v4093 = vadd.f32 %v4091, %v4092
  %v4094 = vrot.slane %v4093, 2
  %v4095 = vadd.f32 %v4093, %v4094
  %v4096 = vrot.slane %v4095, 1
  %v4097 = vadd.f32 %v4095, %v4096
  %v4098 = vmul.f32 %v4097, 0.0010330578
  %v4099 = vmul.f32 %v4090, %v4090
  %v4100 = vsub.f32 %v4098, %v4099
  %v4101 = vld [vmem:[%s2] sm:$0x1]
  %v4102 = vadd.f32 %v4100, 1e-05
  %v4103 = vrsqrt.pop %v4102
  %v4104 = vmul.f32 %v4101, %v4103
  %v4105 = vmul.f32 %v4090, %v4104
  %v4108 = vunpack.c.l.s4 1966171168
  %v4109 = vunpack.c.0.s8 %v4108
  %v4110 = vlaneseq
  %v4111 = vshrl.u32 %v4110, 7
  %v4112 = vsub.s32 %v4109, %v4111
  %v4113 = vrot.slane %v4105, %v4112
  %v4115 = vunpack.c.l.s4 1966171168
  %v4116 = vunpack.c.0.s8 %v4115
  %v4117 = vlaneseq
  %v4118 = vshrl.u32 %v4117, 7
  %v4119 = vsub.s32 %v4116, %v4118
  %v4120 = vrot.slane %v4113, %v4119
  %4121 = vrot.lane.b32.xlu0 %v4120, 64
  %v4122 = vpop.permute.xlu0 %4121
  %v4124 = vsub.f32 %v4101, %v4122
  %v4126 = vlaneseq
  %v4127 = vshrl.u32 %v4126, 7
  %v4128 = vsub.s32 0, %v4127
  %v4129 = vrot.slane %v4104, %v4128
  %v4132 = vlaneseq
  %v4133 = vshrl.u32 %v4132, 7
  %v4134 = vsub.s32 0, %v4133
  %v4135 = vrot.slane %v4124, %v4134
  %vm4136 = vcmask 1043968
  %4137 = vst.msk [vmem:[#allocation3 + $0xf0] sm:$0xf] %vm4136, 0
  %v4138 = vld [vmem:[#allocation2] sm:$0xff]
  %v4139 = vmul.f32 %v4138, %v4129
  %4140 = vrot.lane.b32.xlu0 %v4135, 64
  %v4141 = vpop.permute.xlu0 %4140
  %v4143 = vadd.f32 %v4139, %v4141
  %vm4144 = vcmp.gt.f32.partialorder %v4143, 0.0
  %v4145 = vmul.f32 %v4143, 0.2
  %v4146 = vsel %vm4144, %v4143, %v4145
  %v4147 = vpack.c.bf16 %v4146, %v4146
  %vm4148 = vcmask 519168
  %4149 = vst.msk [vmem:[#allocation3] sm:$0xf] %vm4148, %v4147
  %v4150 = vld [vmem:[#allocation2 + $0x8] sm:$0xff]
  %v4151 = vmul.f32 %v4150, %v4129
  %v4152 = vadd.f32 %v4151, %v4141
  %vm4153 = vcmp.gt.f32.partialorder %v4152, 0.0
  %v4154 = vmul.f32 %v4152, 0.2
  %v4155 = vsel %vm4153, %v4152, %v4154
  %v4156 = vpack.c.bf16 %v4155, %v4155
  %v4158 = vunpack.c.l.b16 %v4156
  %v4159 = vpack.c.b16 %v4158, %v4158
  %4160 = vrot.lane.b32.xlu0 %v4159, 64
  %v4161 = vpop.permute.xlu0 %4160
  %4163 = vst.msk [vmem:[#allocation3] sm:$0xf] %vm4136, %v4161
  %v4164 = vld [vmem:[#allocation2 + $0x10] sm:$0xff]
  %v4165 = vmul.f32 %v4164, %v4129
  %v4166 = vadd.f32 %v4165, %v4141
  %vm4167 = vcmp.gt.f32.partialorder %v4166, 0.0
  %v4168 = vmul.f32 %v4166, 0.2
  %v4169 = vsel %vm4167, %v4166, %v4168
  %v4170 = vpack.c.bf16 %v4169, %v4169
  %4171 = vst.msk [vmem:[#allocation3 + $0x4] sm:$0xf] %vm4148, %v4170
  %v4172 = vld [vmem:[#allocation2 + $0x18] sm:$0xff]
  %v4173 = vmul.f32 %v4172, %v4129
  %v4174 = vadd.f32 %v4173, %v4141
  %vm4175 = vcmp.gt.f32.partialorder %v4174, 0.0
  %v4176 = vmul.f32 %v4174, 0.2
  %v4177 = vsel %vm4175, %v4174, %v4176
  %v4178 = vpack.c.bf16 %v4177, %v4177
  %v4180 = vunpack.c.l.b16 %v4178
  %v4181 = vpack.c.b16 %v4180, %v4180
  %4182 = vrot.lane.b32.xlu0 %v4181, 64
  %v4183 = vpop.permute.xlu0 %4182
  %4185 = vst.msk [vmem:[#allocation3 + $0x4] sm:$0xf] %vm4136, %v4183
  %v4186 = vld [vmem:[#allocation2 + $0x20] sm:$0xff]
  %v4187 = vmul.f32 %v4186, %v4129
  %v4188 = vadd.f32 %v4187, %v4141
  %vm4189 = vcmp.gt.f32.partialorder %v4188, 0.0
  %v4190 = vmul.f32 %v4188, 0.2
  %v4191 = vsel %vm4189, %v4188, %v4190
  %v4192 = vpack.c.bf16 %v4191, %v4191
  %4193 = vst.msk [vmem:[#allocation3 + $0x8] sm:$0xf] %vm4148, %v4192
  %v4194 = vld [vmem:[#allocation2 + $0x28] sm:$0xff]
  %v4195 = vmul.f32 %v4194, %v4129
  %v4196 = vadd.f32 %v4195, %v4141
  %vm4197 = vcmp.gt.f32.partialorder %v4196, 0.0
  %v4198 = vmul.f32 %v4196, 0.2
  %v4199 = vsel %vm4197, %v4196, %v4198
  %v4200 = vpack.c.bf16 %v4199, %v4199
  %v4202 = vunpack.c.l.b16 %v4200
  %v4203 = vpack.c.b16 %v4202, %v4202
  %4204 = vrot.lane.b32.xlu0 %v4203, 64
  %v4205 = vpop.permute.xlu0 %4204
  %4207 = vst.msk [vmem:[#allocation3 + $0x8] sm:$0xf] %vm4136, %v4205
  %v4208 = vld [vmem:[#allocation2 + $0x30] sm:$0xff]
  %v4209 = vmul.f32 %v4208, %v4129
  %v4210 = vadd.f32 %v4209, %v4141
  %vm4211 = vcmp.gt.f32.partialorder %v4210, 0.0
  %v4212 = vmul.f32 %v4210, 0.2
  %v4213 = vsel %vm4211, %v4210, %v4212
  %v4214 = vpack.c.bf16 %v4213, %v4213
  %4215 = vst.msk [vmem:[#allocation3 + $0xc] sm:$0xf] %vm4148, %v4214
  %v4216 = vld [vmem:[#allocation2 + $0x38] sm:$0xff]
  %v4217 = vmul.f32 %v4216, %v4129
  %v4218 = vadd.f32 %v4217, %v4141
  %vm4219 = vcmp.gt.f32.partialorder %v4218, 0.0
  %v4220 = vmul.f32 %v4218, 0.2
  %v4221 = vsel %vm4219, %v4218, %v4220
  %v4222 = vpack.c.bf16 %v4221, %v4221
  %v4224 = vunpack.c.l.b16 %v4222
  %v4225 = vpack.c.b16 %v4224, %v4224
  %4226 = vrot.lane.b32.xlu0 %v4225, 64
  %v4227 = vpop.permute.xlu0 %4226
  %4229 = vst.msk [vmem:[#allocation3 + $0xc] sm:$0xf] %vm4136, %v4227
  %v4230 = vld [vmem:[#allocation2 + $0x40] sm:$0xff]
  %v4231 = vmul.f32 %v4230, %v4129
  %v4232 = vadd.f32 %v4231, %v4141
  %vm4233 = vcmp.gt.f32.partialorder %v4232, 0.0
  %v4234 = vmul.f32 %v4232, 0.2
  %v4235 = vsel %vm4233, %v4232, %v4234
  %v4236 = vpack.c.bf16 %v4235, %v4235
  %4237 = vst.msk [vmem:[#allocation3 + $0x10] sm:$0xf] %vm4148, %v4236
  %v4238 = vld [vmem:[#allocation2 + $0x48] sm:$0xff]
  %v4239 = vmul.f32 %v4238, %v4129
  %v4240 = vadd.f32 %v4239, %v4141
  %vm4241 = vcmp.gt.f32.partialorder %v4240, 0.0
  %v4242 = vmul.f32 %v4240, 0.2
  %v4243 = vsel %vm4241, %v4240, %v4242
  %v4244 = vpack.c.bf16 %v4243, %v4243
  %v4246 = vunpack.c.l.b16 %v4244
  %v4247 = vpack.c.b16 %v4246, %v4246
  %4248 = vrot.lane.b32.xlu0 %v4247, 64
  %v4249 = vpop.permute.xlu0 %4248
  %4251 = vst.msk [vmem:[#allocation3 + $0x10] sm:$0xf] %vm4136, %v4249
  %v4252 = vld [vmem:[#allocation2 + $0x50] sm:$0xff]
  %v4253 = vmul.f32 %v4252, %v4129
  %v4254 = vadd.f32 %v4253, %v4141
  %vm4255 = vcmp.gt.f32.partialorder %v4254, 0.0
  %v4256 = vmul.f32 %v4254, 0.2
  %v4257 = vsel %vm4255, %v4254, %v4256
  %v4258 = vpack.c.bf16 %v4257, %v4257
  %4259 = vst.msk [vmem:[#allocation3 + $0x14] sm:$0xf] %vm4148, %v4258
  %v4260 = vld [vmem:[#allocation2 + $0x58] sm:$0xff]
  %v4261 = vmul.f32 %v4260, %v4129
  %v4262 = vadd.f32 %v4261, %v4141
  %vm4263 = vcmp.gt.f32.partialorder %v4262, 0.0
  %v4264 = vmul.f32 %v4262, 0.2
  %v4265 = vsel %vm4263, %v4262, %v4264
  %v4266 = vpack.c.bf16 %v4265, %v4265
  %v4268 = vunpack.c.l.b16 %v4266
  %v4269 = vpack.c.b16 %v4268, %v4268
  %4270 = vrot.lane.b32.xlu0 %v4269, 64
  %v4271 = vpop.permute.xlu0 %4270
  %4273 = vst.msk [vmem:[#allocation3 + $0x14] sm:$0xf] %vm4136, %v4271
  %v4274 = vld [vmem:[#allocation2 + $0x60] sm:$0xff]
  %v4275 = vmul.f32 %v4274, %v4129
  %v4276 = vadd.f32 %v4275, %v4141
  %vm4277 = vcmp.gt.f32.partialorder %v4276, 0.0
  %v4278 = vmul.f32 %v4276, 0.2
  %v4279 = vsel %vm4277, %v4276, %v4278
  %v4280 = vpack.c.bf16 %v4279, %v4279
  %4281 = vst.msk [vmem:[#allocation3 + $0x18] sm:$0xf] %vm4148, %v4280
  %v4282 = vld [vmem:[#allocation2 + $0x68] sm:$0xff]
  %v4283 = vmul.f32 %v4282, %v4129
  %v4284 = vadd.f32 %v4283, %v4141
  %vm4285 = vcmp.gt.f32.partialorder %v4284, 0.0
  %v4286 = vmul.f32 %v4284, 0.2
  %v4287 = vsel %vm4285, %v4284, %v4286
  %v4288 = vpack.c.bf16 %v4287, %v4287
  %v4290 = vunpack.c.l.b16 %v4288
  %v4291 = vpack.c.b16 %v4290, %v4290
  %4292 = vrot.lane.b32.xlu0 %v4291, 64
  %v4293 = vpop.permute.xlu0 %4292
  %4295 = vst.msk [vmem:[#allocation3 + $0x18] sm:$0xf] %vm4136, %v4293
  %v4296 = vld [vmem:[#allocation2 + $0x70] sm:$0xff]
  %v4297 = vmul.f32 %v4296, %v4129
  %v4298 = vadd.f32 %v4297, %v4141
  %vm4299 = vcmp.gt.f32.partialorder %v4298, 0.0
  %v4300 = vmul.f32 %v4298, 0.2
  %v4301 = vsel %vm4299, %v4298, %v4300
  %v4302 = vpack.c.bf16 %v4301, %v4301
  %4303 = vst.msk [vmem:[#allocation3 + $0x1c] sm:$0xf] %vm4148, %v4302
  %v4304 = vld [vmem:[#allocation2 + $0x78] sm:$0xff]
  %v4305 = vmul.f32 %v4304, %v4129
  %v4306 = vadd.f32 %v4305, %v4141
  %vm4307 = vcmp.gt.f32.partialorder %v4306, 0.0
  %v4308 = vmul.f32 %v4306, 0.2
  %v4309 = vsel %vm4307, %v4306, %v4308
  %v4310 = vpack.c.bf16 %v4309, %v4309
  %v4312 = vunpack.c.l.b16 %v4310
  %v4313 = vpack.c.b16 %v4312, %v4312
  %4314 = vrot.lane.b32.xlu0 %v4313, 64
  %v4315 = vpop.permute.xlu0 %4314
  %4317 = vst.msk [vmem:[#allocation3 + $0x1c] sm:$0xf] %vm4136, %v4315
  %v4318 = vld [vmem:[#allocation2 + $0x80] sm:$0xff]
  %v4319 = vmul.f32 %v4318, %v4129
  %v4320 = vadd.f32 %v4319, %v4141
  %vm4321 = vcmp.gt.f32.partialorder %v4320, 0.0
  %v4322 = vmul.f32 %v4320, 0.2
  %v4323 = vsel %vm4321, %v4320, %v4322
  %v4324 = vpack.c.bf16 %v4323, %v4323
  %4325 = vst.msk [vmem:[#allocation3 + $0x20] sm:$0xf] %vm4148, %v4324
  %v4326 = vld [vmem:[#allocation2 + $0x88] sm:$0xff]
  %v4327 = vmul.f32 %v4326, %v4129
  %v4328 = vadd.f32 %v4327, %v4141
  %vm4329 = vcmp.gt.f32.partialorder %v4328, 0.0
  %v4330 = vmul.f32 %v4328, 0.2
  %v4331 = vsel %vm4329, %v4328, %v4330
  %v4332 = vpack.c.bf16 %v4331, %v4331
  %v4334 = vunpack.c.l.b16 %v4332
  %v4335 = vpack.c.b16 %v4334, %v4334
  %4336 = vrot.lane.b32.xlu0 %v4335, 64
  %v4337 = vpop.permute.xlu0 %4336
  %4339 = vst.msk [vmem:[#allocation3 + $0x20] sm:$0xf] %vm4136, %v4337
  %v4340 = vld [vmem:[#allocation2 + $0x90] sm:$0xff]
  %v4341 = vmul.f32 %v4340, %v4129
  %v4342 = vadd.f32 %v4341, %v4141
  %vm4343 = vcmp.gt.f32.partialorder %v4342, 0.0
  %v4344 = vmul.f32 %v4342, 0.2
  %v4345 = vsel %vm4343, %v4342, %v4344
  %v4346 = vpack.c.bf16 %v4345, %v4345
  %4347 = vst.msk [vmem:[#allocation3 + $0x24] sm:$0xf] %vm4148, %v4346
  %v4348 = vld [vmem:[#allocation2 + $0x98] sm:$0xff]
  %v4349 = vmul.f32 %v4348, %v4129
  %v4350 = vadd.f32 %v4349, %v4141
  %vm4351 = vcmp.gt.f32.partialorder %v4350, 0.0
  %v4352 = vmul.f32 %v4350, 0.2
  %v4353 = vsel %vm4351, %v4350, %v4352
  %v4354 = vpack.c.bf16 %v4353, %v4353
  %v4356 = vunpack.c.l.b16 %v4354
  %v4357 = vpack.c.b16 %v4356, %v4356
  %4358 = vrot.lane.b32.xlu0 %v4357, 64
  %v4359 = vpop.permute.xlu0 %4358
  %4361 = vst.msk [vmem:[#allocation3 + $0x24] sm:$0xf] %vm4136, %v4359
  %v4362 = vld [vmem:[#allocation2 + $0xa0] sm:$0xff]
  %v4363 = vmul.f32 %v4362, %v4129
  %v4364 = vadd.f32 %v4363, %v4141
  %vm4365 = vcmp.gt.f32.partialorder %v4364, 0.0
  %v4366 = vmul.f32 %v4364, 0.2
  %v4367 = vsel %vm4365, %v4364, %v4366
  %v4368 = vpack.c.bf16 %v4367, %v4367
  %4369 = vst.msk [vmem:[#allocation3 + $0x28] sm:$0xf] %vm4148, %v4368
  %v4370 = vld [vmem:[#allocation2 + $0xa8] sm:$0xff]
  %v4371 = vmul.f32 %v4370, %v4129
  %v4372 = vadd.f32 %v4371, %v4141
  %vm4373 = vcmp.gt.f32.partialorder %v4372, 0.0
  %v4374 = vmul.f32 %v4372, 0.2
  %v4375 = vsel %vm4373, %v4372, %v4374
  %v4376 = vpack.c.bf16 %v4375, %v4375
  %v4378 = vunpack.c.l.b16 %v4376
  %v4379 = vpack.c.b16 %v4378, %v4378
  %4380 = vrot.lane.b32.xlu0 %v4379, 64
  %v4381 = vpop.permute.xlu0 %4380
  %4383 = vst.msk [vmem:[#allocation3 + $0x28] sm:$0xf] %vm4136, %v4381
  %v4384 = vld [vmem:[#allocation2 + $0xb0] sm:$0xff]
  %v4385 = vmul.f32 %v4384, %v4129
  %v4386 = vadd.f32 %v4385, %v4141
  %vm4387 = vcmp.gt.f32.partialorder %v4386, 0.0
  %v4388 = vmul.f32 %v4386, 0.2
  %v4389 = vsel %vm4387, %v4386, %v4388
  %v4390 = vpack.c.bf16 %v4389, %v4389
  %4391 = vst.msk [vmem:[#allocation3 + $0x2c] sm:$0xf] %vm4148, %v4390
  %v4392 = vld [vmem:[#allocation2 + $0xb8] sm:$0xff]
  %v4393 = vmul.f32 %v4392, %v4129
  %v4394 = vadd.f32 %v4393, %v4141
  %vm4395 = vcmp.gt.f32.partialorder %v4394, 0.0
  %v4396 = vmul.f32 %v4394, 0.2
  %v4397 = vsel %vm4395, %v4394, %v4396
  %v4398 = vpack.c.bf16 %v4397, %v4397
  %v4400 = vunpack.c.l.b16 %v4398
  %v4401 = vpack.c.b16 %v4400, %v4400
  %4402 = vrot.lane.b32.xlu0 %v4401, 64
  %v4403 = vpop.permute.xlu0 %4402
  %4405 = vst.msk [vmem:[#allocation3 + $0x2c] sm:$0xf] %vm4136, %v4403
  %v4406 = vld [vmem:[#allocation2 + $0xc0] sm:$0xff]
  %v4407 = vmul.f32 %v4406, %v4129
  %v4408 = vadd.f32 %v4407, %v4141
  %vm4409 = vcmp.gt.f32.partialorder %v4408, 0.0
  %v4410 = vmul.f32 %v4408, 0.2
  %v4411 = vsel %vm4409, %v4408, %v4410
  %v4412 = vpack.c.bf16 %v4411, %v4411
  %4413 = vst.msk [vmem:[#allocation3 + $0x30] sm:$0xf] %vm4148, %v4412
  %v4414 = vld [vmem:[#allocation2 + $0xc8] sm:$0xff]
  %v4415 = vmul.f32 %v4414, %v4129
  %v4416 = vadd.f32 %v4415, %v4141
  %vm4417 = vcmp.gt.f32.partialorder %v4416, 0.0
  %v4418 = vmul.f32 %v4416, 0.2
  %v4419 = vsel %vm4417, %v4416, %v4418
  %v4420 = vpack.c.bf16 %v4419, %v4419
  %v4422 = vunpack.c.l.b16 %v4420
  %v4423 = vpack.c.b16 %v4422, %v4422
  %4424 = vrot.lane.b32.xlu0 %v4423, 64
  %v4425 = vpop.permute.xlu0 %4424
  %4427 = vst.msk [vmem:[#allocation3 + $0x30] sm:$0xf] %vm4136, %v4425
  %v4428 = vld [vmem:[#allocation2 + $0xd0] sm:$0xff]
  %v4429 = vmul.f32 %v4428, %v4129
  %v4430 = vadd.f32 %v4429, %v4141
  %vm4431 = vcmp.gt.f32.partialorder %v4430, 0.0
  %v4432 = vmul.f32 %v4430, 0.2
  %v4433 = vsel %vm4431, %v4430, %v4432
  %v4434 = vpack.c.bf16 %v4433, %v4433
  %4435 = vst.msk [vmem:[#allocation3 + $0x34] sm:$0xf] %vm4148, %v4434
  %v4436 = vld [vmem:[#allocation2 + $0xd8] sm:$0xff]
  %v4437 = vmul.f32 %v4436, %v4129
  %v4438 = vadd.f32 %v4437, %v4141
  %vm4439 = vcmp.gt.f32.partialorder %v4438, 0.0
  %v4440 = vmul.f32 %v4438, 0.2
  %v4441 = vsel %vm4439, %v4438, %v4440
  %v4442 = vpack.c.bf16 %v4441, %v4441
  %v4444 = vunpack.c.l.b16 %v4442
  %v4445 = vpack.c.b16 %v4444, %v4444
  %4446 = vrot.lane.b32.xlu0 %v4445, 64
  %v4447 = vpop.permute.xlu0 %4446
  %4449 = vst.msk [vmem:[#allocation3 + $0x34] sm:$0xf] %vm4136, %v4447
  %v4450 = vld [vmem:[#allocation2 + $0xe0] sm:$0xff]
  %v4451 = vmul.f32 %v4450, %v4129
  %v4452 = vadd.f32 %v4451, %v4141
  %vm4453 = vcmp.gt.f32.partialorder %v4452, 0.0
  %v4454 = vmul.f32 %v4452, 0.2
  %v4455 = vsel %vm4453, %v4452, %v4454
  %v4456 = vpack.c.bf16 %v4455, %v4455
  %4457 = vst.msk [vmem:[#allocation3 + $0x38] sm:$0xf] %vm4148, %v4456
  %v4458 = vld [vmem:[#allocation2 + $0xe8] sm:$0xff]
  %v4459 = vmul.f32 %v4458, %v4129
  %v4460 = vadd.f32 %v4459, %v4141
  %vm4461 = vcmp.gt.f32.partialorder %v4460, 0.0
  %v4462 = vmul.f32 %v4460, 0.2
  %v4463 = vsel %vm4461, %v4460, %v4462
  %v4464 = vpack.c.bf16 %v4463, %v4463
  %v4466 = vunpack.c.l.b16 %v4464
  %v4467 = vpack.c.b16 %v4466, %v4466
  %4468 = vrot.lane.b32.xlu0 %v4467, 64
  %v4469 = vpop.permute.xlu0 %4468
  %4471 = vst.msk [vmem:[#allocation3 + $0x38] sm:$0xf] %vm4136, %v4469
  %v4472 = vld [vmem:[#allocation2 + $0xf0] sm:$0xff]
  %v4473 = vmul.f32 %v4472, %v4129
  %v4474 = vadd.f32 %v4473, %v4141
  %vm4475 = vcmp.gt.f32.partialorder %v4474, 0.0
  %v4476 = vmul.f32 %v4474, 0.2
  %v4477 = vsel %vm4475, %v4474, %v4476
  %v4478 = vpack.c.bf16 %v4477, %v4477
  %4479 = vst.msk [vmem:[#allocation3 + $0x3c] sm:$0xf] %vm4148, %v4478
  %v4480 = vld [vmem:[#allocation2 + $0xf8] sm:$0xff]
  %v4481 = vmul.f32 %v4480, %v4129
  %v4482 = vadd.f32 %v4481, %v4141
  %vm4483 = vcmp.gt.f32.partialorder %v4482, 0.0
  %v4484 = vmul.f32 %v4482, 0.2
  %v4485 = vsel %vm4483, %v4482, %v4484
  %v4486 = vpack.c.bf16 %v4485, %v4485
  %v4488 = vunpack.c.l.b16 %v4486
  %v4489 = vpack.c.b16 %v4488, %v4488
  %4490 = vrot.lane.b32.xlu0 %v4489, 64
  %v4491 = vpop.permute.xlu0 %4490
  %4493 = vst.msk [vmem:[#allocation3 + $0x3c] sm:$0xf] %vm4136, %v4491
  %v4494 = vld [vmem:[#allocation2 + $0x100] sm:$0xff]
  %v4495 = vmul.f32 %v4494, %v4129
  %v4496 = vadd.f32 %v4495, %v4141
  %vm4497 = vcmp.gt.f32.partialorder %v4496, 0.0
  %v4498 = vmul.f32 %v4496, 0.2
  %v4499 = vsel %vm4497, %v4496, %v4498
  %v4500 = vpack.c.bf16 %v4499, %v4499
  %4501 = vst.msk [vmem:[#allocation3 + $0x40] sm:$0xf] %vm4148, %v4500
  %v4502 = vld [vmem:[#allocation2 + $0x108] sm:$0xff]
  %v4503 = vmul.f32 %v4502, %v4129
  %v4504 = vadd.f32 %v4503, %v4141
  %vm4505 = vcmp.gt.f32.partialorder %v4504, 0.0
  %v4506 = vmul.f32 %v4504, 0.2
  %v4507 = vsel %vm4505, %v4504, %v4506
  %v4508 = vpack.c.bf16 %v4507, %v4507
  %v4510 = vunpack.c.l.b16 %v4508
  %v4511 = vpack.c.b16 %v4510, %v4510
  %4512 = vrot.lane.b32.xlu0 %v4511, 64
  %v4513 = vpop.permute.xlu0 %4512
  %4515 = vst.msk [vmem:[#allocation3 + $0x40] sm:$0xf] %vm4136, %v4513
  %v4516 = vld [vmem:[#allocation2 + $0x110] sm:$0xff]
  %v4517 = vmul.f32 %v4516, %v4129
  %v4518 = vadd.f32 %v4517, %v4141
  %vm4519 = vcmp.gt.f32.partialorder %v4518, 0.0
  %v4520 = vmul.f32 %v4518, 0.2
  %v4521 = vsel %vm4519, %v4518, %v4520
  %v4522 = vpack.c.bf16 %v4521, %v4521
  %4523 = vst.msk [vmem:[#allocation3 + $0x44] sm:$0xf] %vm4148, %v4522
  %v4524 = vld [vmem:[#allocation2 + $0x118] sm:$0xff]
  %v4525 = vmul.f32 %v4524, %v4129
  %v4526 = vadd.f32 %v4525, %v4141
  %vm4527 = vcmp.gt.f32.partialorder %v4526, 0.0
  %v4528 = vmul.f32 %v4526, 0.2
  %v4529 = vsel %vm4527, %v4526, %v4528
  %v4530 = vpack.c.bf16 %v4529, %v4529
  %v4532 = vunpack.c.l.b16 %v4530
  %v4533 = vpack.c.b16 %v4532, %v4532
  %4534 = vrot.lane.b32.xlu0 %v4533, 64
  %v4535 = vpop.permute.xlu0 %4534
  %4537 = vst.msk [vmem:[#allocation3 + $0x44] sm:$0xf] %vm4136, %v4535
  %v4538 = vld [vmem:[#allocation2 + $0x120] sm:$0xff]
  %v4539 = vmul.f32 %v4538, %v4129
  %v4540 = vadd.f32 %v4539, %v4141
  %vm4541 = vcmp.gt.f32.partialorder %v4540, 0.0
  %v4542 = vmul.f32 %v4540, 0.2
  %v4543 = vsel %vm4541, %v4540, %v4542
  %v4544 = vpack.c.bf16 %v4543, %v4543
  %4545 = vst.msk [vmem:[#allocation3 + $0x48] sm:$0xf] %vm4148, %v4544
  %v4546 = vld [vmem:[#allocation2 + $0x128] sm:$0xff]
  %v4547 = vmul.f32 %v4546, %v4129
  %v4548 = vadd.f32 %v4547, %v4141
  %vm4549 = vcmp.gt.f32.partialorder %v4548, 0.0
  %v4550 = vmul.f32 %v4548, 0.2
  %v4551 = vsel %vm4549, %v4548, %v4550
  %v4552 = vpack.c.bf16 %v4551, %v4551
  %v4554 = vunpack.c.l.b16 %v4552
  %v4555 = vpack.c.b16 %v4554, %v4554
  %4556 = vrot.lane.b32.xlu0 %v4555, 64
  %v4557 = vpop.permute.xlu0 %4556
  %4559 = vst.msk [vmem:[#allocation3 + $0x48] sm:$0xf] %vm4136, %v4557
  %v4560 = vld [vmem:[#allocation2 + $0x130] sm:$0xff]
  %v4561 = vmul.f32 %v4560, %v4129
  %v4562 = vadd.f32 %v4561, %v4141
  %vm4563 = vcmp.gt.f32.partialorder %v4562, 0.0
  %v4564 = vmul.f32 %v4562, 0.2
  %v4565 = vsel %vm4563, %v4562, %v4564
  %v4566 = vpack.c.bf16 %v4565, %v4565
  %4567 = vst.msk [vmem:[#allocation3 + $0x4c] sm:$0xf] %vm4148, %v4566
  %v4568 = vld [vmem:[#allocation2 + $0x138] sm:$0xff]
  %v4569 = vmul.f32 %v4568, %v4129
  %v4570 = vadd.f32 %v4569, %v4141
  %vm4571 = vcmp.gt.f32.partialorder %v4570, 0.0
  %v4572 = vmul.f32 %v4570, 0.2
  %v4573 = vsel %vm4571, %v4570, %v4572
  %v4574 = vpack.c.bf16 %v4573, %v4573
  %v4576 = vunpack.c.l.b16 %v4574
  %v4577 = vpack.c.b16 %v4576, %v4576
  %4578 = vrot.lane.b32.xlu0 %v4577, 64
  %v4579 = vpop.permute.xlu0 %4578
  %4581 = vst.msk [vmem:[#allocation3 + $0x4c] sm:$0xf] %vm4136, %v4579
  %v4582 = vld [vmem:[#allocation2 + $0x140] sm:$0xff]
  %v4583 = vmul.f32 %v4582, %v4129
  %v4584 = vadd.f32 %v4583, %v4141
  %vm4585 = vcmp.gt.f32.partialorder %v4584, 0.0
  %v4586 = vmul.f32 %v4584, 0.2
  %v4587 = vsel %vm4585, %v4584, %v4586
  %v4588 = vpack.c.bf16 %v4587, %v4587
  %4589 = vst.msk [vmem:[#allocation3 + $0x50] sm:$0xf] %vm4148, %v4588
  %v4590 = vld [vmem:[#allocation2 + $0x148] sm:$0xff]
  %v4591 = vmul.f32 %v4590, %v4129
  %v4592 = vadd.f32 %v4591, %v4141
  %vm4593 = vcmp.gt.f32.partialorder %v4592, 0.0
  %v4594 = vmul.f32 %v4592, 0.2
  %v4595 = vsel %vm4593, %v4592, %v4594
  %v4596 = vpack.c.bf16 %v4595, %v4595
  %v4598 = vunpack.c.l.b16 %v4596
  %v4599 = vpack.c.b16 %v4598, %v4598
  %4600 = vrot.lane.b32.xlu0 %v4599, 64
  %v4601 = vpop.permute.xlu0 %4600
  %4603 = vst.msk [vmem:[#allocation3 + $0x50] sm:$0xf] %vm4136, %v4601
  %v4604 = vld [vmem:[#allocation2 + $0x150] sm:$0xff]
  %v4605 = vmul.f32 %v4604, %v4129
  %v4606 = vadd.f32 %v4605, %v4141
  %vm4607 = vcmp.gt.f32.partialorder %v4606, 0.0
  %v4608 = vmul.f32 %v4606, 0.2
  %v4609 = vsel %vm4607, %v4606, %v4608
  %v4610 = vpack.c.bf16 %v4609, %v4609
  %4611 = vst.msk [vmem:[#allocation3 + $0x54] sm:$0xf] %vm4148, %v4610
  %v4612 = vld [vmem:[#allocation2 + $0x158] sm:$0xff]
  %v4613 = vmul.f32 %v4612, %v4129
  %v4614 = vadd.f32 %v4613, %v4141
  %vm4615 = vcmp.gt.f32.partialorder %v4614, 0.0
  %v4616 = vmul.f32 %v4614, 0.2
  %v4617 = vsel %vm4615, %v4614, %v4616
  %v4618 = vpack.c.bf16 %v4617, %v4617
  %v4620 = vunpack.c.l.b16 %v4618
  %v4621 = vpack.c.b16 %v4620, %v4620
  %4622 = vrot.lane.b32.xlu0 %v4621, 64
  %v4623 = vpop.permute.xlu0 %4622
  %4625 = vst.msk [vmem:[#allocation3 + $0x54] sm:$0xf] %vm4136, %v4623
  %v4626 = vld [vmem:[#allocation2 + $0x160] sm:$0xff]
  %v4627 = vmul.f32 %v4626, %v4129
  %v4628 = vadd.f32 %v4627, %v4141
  %vm4629 = vcmp.gt.f32.partialorder %v4628, 0.0
  %v4630 = vmul.f32 %v4628, 0.2
  %v4631 = vsel %vm4629, %v4628, %v4630
  %v4632 = vpack.c.bf16 %v4631, %v4631
  %4633 = vst.msk [vmem:[#allocation3 + $0x58] sm:$0xf] %vm4148, %v4632
  %v4634 = vld [vmem:[#allocation2 + $0x168] sm:$0xff]
  %v4635 = vmul.f32 %v4634, %v4129
  %v4636 = vadd.f32 %v4635, %v4141
  %vm4637 = vcmp.gt.f32.partialorder %v4636, 0.0
  %v4638 = vmul.f32 %v4636, 0.2
  %v4639 = vsel %vm4637, %v4636, %v4638
  %v4640 = vpack.c.bf16 %v4639, %v4639
  %v4642 = vunpack.c.l.b16 %v4640
  %v4643 = vpack.c.b16 %v4642, %v4642
  %4644 = vrot.lane.b32.xlu0 %v4643, 64
  %v4645 = vpop.permute.xlu0 %4644
  %4647 = vst.msk [vmem:[#allocation3 + $0x58] sm:$0xf] %vm4136, %v4645
  %v4648 = vld [vmem:[#allocation2 + $0x170] sm:$0xff]
  %v4649 = vmul.f32 %v4648, %v4129
  %v4650 = vadd.f32 %v4649, %v4141
  %vm4651 = vcmp.gt.f32.partialorder %v4650, 0.0
  %v4652 = vmul.f32 %v4650, 0.2
  %v4653 = vsel %vm4651, %v4650, %v4652
  %v4654 = vpack.c.bf16 %v4653, %v4653
  %4655 = vst.msk [vmem:[#allocation3 + $0x5c] sm:$0xf] %vm4148, %v4654
  %v4656 = vld [vmem:[#allocation2 + $0x178] sm:$0xff]
  %v4657 = vmul.f32 %v4656, %v4129
  %v4658 = vadd.f32 %v4657, %v4141
  %vm4659 = vcmp.gt.f32.partialorder %v4658, 0.0
  %v4660 = vmul.f32 %v4658, 0.2
  %v4661 = vsel %vm4659, %v4658, %v4660
  %v4662 = vpack.c.bf16 %v4661, %v4661
  %v4664 = vunpack.c.l.b16 %v4662
  %v4665 = vpack.c.b16 %v4664, %v4664
  %4666 = vrot.lane.b32.xlu0 %v4665, 64
  %v4667 = vpop.permute.xlu0 %4666
  %4669 = vst.msk [vmem:[#allocation3 + $0x5c] sm:$0xf] %vm4136, %v4667
  %v4670 = vld [vmem:[#allocation2 + $0x180] sm:$0xff]
  %v4671 = vmul.f32 %v4670, %v4129
  %v4672 = vadd.f32 %v4671, %v4141
  %vm4673 = vcmp.gt.f32.partialorder %v4672, 0.0
  %v4674 = vmul.f32 %v4672, 0.2
  %v4675 = vsel %vm4673, %v4672, %v4674
  %v4676 = vpack.c.bf16 %v4675, %v4675
  %4677 = vst.msk [vmem:[#allocation3 + $0x60] sm:$0xf] %vm4148, %v4676
  %v4678 = vld [vmem:[#allocation2 + $0x188] sm:$0xff]
  %v4679 = vmul.f32 %v4678, %v4129
  %v4680 = vadd.f32 %v4679, %v4141
  %vm4681 = vcmp.gt.f32.partialorder %v4680, 0.0
  %v4682 = vmul.f32 %v4680, 0.2
  %v4683 = vsel %vm4681, %v4680, %v4682
  %v4684 = vpack.c.bf16 %v4683, %v4683
  %v4686 = vunpack.c.l.b16 %v4684
  %v4687 = vpack.c.b16 %v4686, %v4686
  %4688 = vrot.lane.b32.xlu0 %v4687, 64
  %v4689 = vpop.permute.xlu0 %4688
  %4691 = vst.msk [vmem:[#allocation3 + $0x60] sm:$0xf] %vm4136, %v4689
  %v4692 = vld [vmem:[#allocation2 + $0x190] sm:$0xff]
  %v4693 = vmul.f32 %v4692, %v4129
  %v4694 = vadd.f32 %v4693, %v4141
  %vm4695 = vcmp.gt.f32.partialorder %v4694, 0.0
  %v4696 = vmul.f32 %v4694, 0.2
  %v4697 = vsel %vm4695, %v4694, %v4696
  %v4698 = vpack.c.bf16 %v4697, %v4697
  %4699 = vst.msk [vmem:[#allocation3 + $0x64] sm:$0xf] %vm4148, %v4698
  %v4700 = vld [vmem:[#allocation2 + $0x198] sm:$0xff]
  %v4701 = vmul.f32 %v4700, %v4129
  %v4702 = vadd.f32 %v4701, %v4141
  %vm4703 = vcmp.gt.f32.partialorder %v4702, 0.0
  %v4704 = vmul.f32 %v4702, 0.2
  %v4705 = vsel %vm4703, %v4702, %v4704
  %v4706 = vpack.c.bf16 %v4705, %v4705
  %v4708 = vunpack.c.l.b16 %v4706
  %v4709 = vpack.c.b16 %v4708, %v4708
  %4710 = vrot.lane.b32.xlu0 %v4709, 64
  %v4711 = vpop.permute.xlu0 %4710
  %4713 = vst.msk [vmem:[#allocation3 + $0x64] sm:$0xf] %vm4136, %v4711
  %v4714 = vld [vmem:[#allocation2 + $0x1a0] sm:$0xff]
  %v4715 = vmul.f32 %v4714, %v4129
  %v4716 = vadd.f32 %v4715, %v4141
  %vm4717 = vcmp.gt.f32.partialorder %v4716, 0.0
  %v4718 = vmul.f32 %v4716, 0.2
  %v4719 = vsel %vm4717, %v4716, %v4718
  %v4720 = vpack.c.bf16 %v4719, %v4719
  %4721 = vst.msk [vmem:[#allocation3 + $0x68] sm:$0xf] %vm4148, %v4720
  %v4722 = vld [vmem:[#allocation2 + $0x1a8] sm:$0xff]
  %v4723 = vmul.f32 %v4722, %v4129
  %v4724 = vadd.f32 %v4723, %v4141
  %vm4725 = vcmp.gt.f32.partialorder %v4724, 0.0
  %v4726 = vmul.f32 %v4724, 0.2
  %v4727 = vsel %vm4725, %v4724, %v4726
  %v4728 = vpack.c.bf16 %v4727, %v4727
  %v4730 = vunpack.c.l.b16 %v4728
  %v4731 = vpack.c.b16 %v4730, %v4730
  %4732 = vrot.lane.b32.xlu0 %v4731, 64
  %v4733 = vpop.permute.xlu0 %4732
  %4735 = vst.msk [vmem:[#allocation3 + $0x68] sm:$0xf] %vm4136, %v4733
  %v4736 = vld [vmem:[#allocation2 + $0x1b0] sm:$0xff]
  %v4737 = vmul.f32 %v4736, %v4129
  %v4738 = vadd.f32 %v4737, %v4141
  %vm4739 = vcmp.gt.f32.partialorder %v4738, 0.0
  %v4740 = vmul.f32 %v4738, 0.2
  %v4741 = vsel %vm4739, %v4738, %v4740
  %v4742 = vpack.c.bf16 %v4741, %v4741
  %4743 = vst.msk [vmem:[#allocation3 + $0x6c] sm:$0xf] %vm4148, %v4742
  %v4744 = vld [vmem:[#allocation2 + $0x1b8] sm:$0xff]
  %v4745 = vmul.f32 %v4744, %v4129
  %v4746 = vadd.f32 %v4745, %v4141
  %vm4747 = vcmp.gt.f32.partialorder %v4746, 0.0
  %v4748 = vmul.f32 %v4746, 0.2
  %v4749 = vsel %vm4747, %v4746, %v4748
  %v4750 = vpack.c.bf16 %v4749, %v4749
  %v4752 = vunpack.c.l.b16 %v4750
  %v4753 = vpack.c.b16 %v4752, %v4752
  %4754 = vrot.lane.b32.xlu0 %v4753, 64
  %v4755 = vpop.permute.xlu0 %4754
  %4757 = vst.msk [vmem:[#allocation3 + $0x6c] sm:$0xf] %vm4136, %v4755
  %v4758 = vld [vmem:[#allocation2 + $0x1c0] sm:$0xff]
  %v4759 = vmul.f32 %v4758, %v4129
  %v4760 = vadd.f32 %v4759, %v4141
  %vm4761 = vcmp.gt.f32.partialorder %v4760, 0.0
  %v4762 = vmul.f32 %v4760, 0.2
  %v4763 = vsel %vm4761, %v4760, %v4762
  %v4764 = vpack.c.bf16 %v4763, %v4763
  %4765 = vst.msk [vmem:[#allocation3 + $0x70] sm:$0xf] %vm4148, %v4764
  %v4766 = vld [vmem:[#allocation2 + $0x1c8] sm:$0xff]
  %v4767 = vmul.f32 %v4766, %v4129
  %v4768 = vadd.f32 %v4767, %v4141
  %vm4769 = vcmp.gt.f32.partialorder %v4768, 0.0
  %v4770 = vmul.f32 %v4768, 0.2
  %v4771 = vsel %vm4769, %v4768, %v4770
  %v4772 = vpack.c.bf16 %v4771, %v4771
  %v4774 = vunpack.c.l.b16 %v4772
  %v4775 = vpack.c.b16 %v4774, %v4774
  %4776 = vrot.lane.b32.xlu0 %v4775, 64
  %v4777 = vpop.permute.xlu0 %4776
  %4779 = vst.msk [vmem:[#allocation3 + $0x70] sm:$0xf] %vm4136, %v4777
  %v4780 = vld [vmem:[#allocation2 + $0x1d0] sm:$0xff]
  %v4781 = vmul.f32 %v4780, %v4129
  %v4782 = vadd.f32 %v4781, %v4141
  %vm4783 = vcmp.gt.f32.partialorder %v4782, 0.0
  %v4784 = vmul.f32 %v4782, 0.2
  %v4785 = vsel %vm4783, %v4782, %v4784
  %v4786 = vpack.c.bf16 %v4785, %v4785
  %4787 = vst.msk [vmem:[#allocation3 + $0x74] sm:$0xf] %vm4148, %v4786
  %v4788 = vld [vmem:[#allocation2 + $0x1d8] sm:$0xff]
  %v4789 = vmul.f32 %v4788, %v4129
  %v4790 = vadd.f32 %v4789, %v4141
  %vm4791 = vcmp.gt.f32.partialorder %v4790, 0.0
  %v4792 = vmul.f32 %v4790, 0.2
  %v4793 = vsel %vm4791, %v4790, %v4792
  %v4794 = vpack.c.bf16 %v4793, %v4793
  %v4796 = vunpack.c.l.b16 %v4794
  %v4797 = vpack.c.b16 %v4796, %v4796
  %4798 = vrot.lane.b32.xlu0 %v4797, 64
  %v4799 = vpop.permute.xlu0 %4798
  %4801 = vst.msk [vmem:[#allocation3 + $0x74] sm:$0xf] %vm4136, %v4799
  %v4802 = vld [vmem:[#allocation2 + $0x1e0] sm:$0xff]
  %v4803 = vmul.f32 %v4802, %v4129
  %v4804 = vadd.f32 %v4803, %v4141
  %vm4805 = vcmp.gt.f32.partialorder %v4804, 0.0
  %v4806 = vmul.f32 %v4804, 0.2
  %v4807 = vsel %vm4805, %v4804, %v4806
  %v4808 = vpack.c.bf16 %v4807, %v4807
  %4809 = vst.msk [vmem:[#allocation3 + $0x78] sm:$0xf] %vm4148, %v4808
  %v4810 = vld [vmem:[#allocation2 + $0x1e8] sm:$0xff]
  %v4811 = vmul.f32 %v4810, %v4129
  %v4812 = vadd.f32 %v4811, %v4141
  %vm4813 = vcmp.gt.f32.partialorder %v4812, 0.0
  %v4814 = vmul.f32 %v4812, 0.2
  %v4815 = vsel %vm4813, %v4812, %v4814
  %v4816 = vpack.c.bf16 %v4815, %v4815
  %v4818 = vunpack.c.l.b16 %v4816
  %v4819 = vpack.c.b16 %v4818, %v4818
  %4820 = vrot.lane.b32.xlu0 %v4819, 64
  %v4821 = vpop.permute.xlu0 %4820
  %4823 = vst.msk [vmem:[#allocation3 + $0x78] sm:$0xf] %vm4136, %v4821
  %v4824 = vld [vmem:[#allocation2 + $0x1f0] sm:$0xff]
  %v4825 = vmul.f32 %v4824, %v4129
  %v4826 = vadd.f32 %v4825, %v4141
  %vm4827 = vcmp.gt.f32.partialorder %v4826, 0.0
  %v4828 = vmul.f32 %v4826, 0.2
  %v4829 = vsel %vm4827, %v4826, %v4828
  %v4830 = vpack.c.bf16 %v4829, %v4829
  %4831 = vst.msk [vmem:[#allocation3 + $0x7c] sm:$0xf] %vm4148, %v4830
  %v4832 = vld [vmem:[#allocation2 + $0x1f8] sm:$0xff]
  %v4833 = vmul.f32 %v4832, %v4129
  %v4834 = vadd.f32 %v4833, %v4141
  %vm4835 = vcmp.gt.f32.partialorder %v4834, 0.0
  %v4836 = vmul.f32 %v4834, 0.2
  %v4837 = vsel %vm4835, %v4834, %v4836
  %v4838 = vpack.c.bf16 %v4837, %v4837
  %v4840 = vunpack.c.l.b16 %v4838
  %v4841 = vpack.c.b16 %v4840, %v4840
  %4842 = vrot.lane.b32.xlu0 %v4841, 64
  %v4843 = vpop.permute.xlu0 %4842
  %4845 = vst.msk [vmem:[#allocation3 + $0x7c] sm:$0xf] %vm4136, %v4843
  %v4846 = vld [vmem:[#allocation2 + $0x200] sm:$0xff]
  %v4847 = vmul.f32 %v4846, %v4129
  %v4848 = vadd.f32 %v4847, %v4141
  %vm4849 = vcmp.gt.f32.partialorder %v4848, 0.0
  %v4850 = vmul.f32 %v4848, 0.2
  %v4851 = vsel %vm4849, %v4848, %v4850
  %v4852 = vpack.c.bf16 %v4851, %v4851
  %4853 = vst.msk [vmem:[#allocation3 + $0x80] sm:$0xf] %vm4148, %v4852
  %v4854 = vld [vmem:[#allocation2 + $0x208] sm:$0xff]
  %v4855 = vmul.f32 %v4854, %v4129
  %v4856 = vadd.f32 %v4855, %v4141
  %vm4857 = vcmp.gt.f32.partialorder %v4856, 0.0
  %v4858 = vmul.f32 %v4856, 0.2
  %v4859 = vsel %vm4857, %v4856, %v4858
  %v4860 = vpack.c.bf16 %v4859, %v4859
  %v4862 = vunpack.c.l.b16 %v4860
  %v4863 = vpack.c.b16 %v4862, %v4862
  %4864 = vrot.lane.b32.xlu0 %v4863, 64
  %v4865 = vpop.permute.xlu0 %4864
  %4867 = vst.msk [vmem:[#allocation3 + $0x80] sm:$0xf] %vm4136, %v4865
  %v4868 = vld [vmem:[#allocation2 + $0x210] sm:$0xff]
  %v4869 = vmul.f32 %v4868, %v4129
  %v4870 = vadd.f32 %v4869, %v4141
  %vm4871 = vcmp.gt.f32.partialorder %v4870, 0.0
  %v4872 = vmul.f32 %v4870, 0.2
  %v4873 = vsel %vm4871, %v4870, %v4872
  %v4874 = vpack.c.bf16 %v4873, %v4873
  %4875 = vst.msk [vmem:[#allocation3 + $0x84] sm:$0xf] %vm4148, %v4874
  %v4876 = vld [vmem:[#allocation2 + $0x218] sm:$0xff]
  %v4877 = vmul.f32 %v4876, %v4129
  %v4878 = vadd.f32 %v4877, %v4141
  %vm4879 = vcmp.gt.f32.partialorder %v4878, 0.0
  %v4880 = vmul.f32 %v4878, 0.2
  %v4881 = vsel %vm4879, %v4878, %v4880
  %v4882 = vpack.c.bf16 %v4881, %v4881
  %v4884 = vunpack.c.l.b16 %v4882
  %v4885 = vpack.c.b16 %v4884, %v4884
  %4886 = vrot.lane.b32.xlu0 %v4885, 64
  %v4887 = vpop.permute.xlu0 %4886
  %4889 = vst.msk [vmem:[#allocation3 + $0x84] sm:$0xf] %vm4136, %v4887
  %v4890 = vld [vmem:[#allocation2 + $0x220] sm:$0xff]
  %v4891 = vmul.f32 %v4890, %v4129
  %v4892 = vadd.f32 %v4891, %v4141
  %vm4893 = vcmp.gt.f32.partialorder %v4892, 0.0
  %v4894 = vmul.f32 %v4892, 0.2
  %v4895 = vsel %vm4893, %v4892, %v4894
  %v4896 = vpack.c.bf16 %v4895, %v4895
  %4897 = vst.msk [vmem:[#allocation3 + $0x88] sm:$0xf] %vm4148, %v4896
  %v4898 = vld [vmem:[#allocation2 + $0x228] sm:$0xff]
  %v4899 = vmul.f32 %v4898, %v4129
  %v4900 = vadd.f32 %v4899, %v4141
  %vm4901 = vcmp.gt.f32.partialorder %v4900, 0.0
  %v4902 = vmul.f32 %v4900, 0.2
  %v4903 = vsel %vm4901, %v4900, %v4902
  %v4904 = vpack.c.bf16 %v4903, %v4903
  %v4906 = vunpack.c.l.b16 %v4904
  %v4907 = vpack.c.b16 %v4906, %v4906
  %4908 = vrot.lane.b32.xlu0 %v4907, 64
  %v4909 = vpop.permute.xlu0 %4908
  %4911 = vst.msk [vmem:[#allocation3 + $0x88] sm:$0xf] %vm4136, %v4909
  %v4912 = vld [vmem:[#allocation2 + $0x230] sm:$0xff]
  %v4913 = vmul.f32 %v4912, %v4129
  %v4914 = vadd.f32 %v4913, %v4141
  %vm4915 = vcmp.gt.f32.partialorder %v4914, 0.0
  %v4916 = vmul.f32 %v4914, 0.2
  %v4917 = vsel %vm4915, %v4914, %v4916
  %v4918 = vpack.c.bf16 %v4917, %v4917
  %4919 = vst.msk [vmem:[#allocation3 + $0x8c] sm:$0xf] %vm4148, %v4918
  %v4920 = vld [vmem:[#allocation2 + $0x238] sm:$0xff]
  %v4921 = vmul.f32 %v4920, %v4129
  %v4922 = vadd.f32 %v4921, %v4141
  %vm4923 = vcmp.gt.f32.partialorder %v4922, 0.0
  %v4924 = vmul.f32 %v4922, 0.2
  %v4925 = vsel %vm4923, %v4922, %v4924
  %v4926 = vpack.c.bf16 %v4925, %v4925
  %v4928 = vunpack.c.l.b16 %v4926
  %v4929 = vpack.c.b16 %v4928, %v4928
  %4930 = vrot.lane.b32.xlu0 %v4929, 64
  %v4931 = vpop.permute.xlu0 %4930
  %4933 = vst.msk [vmem:[#allocation3 + $0x8c] sm:$0xf] %vm4136, %v4931
  %v4934 = vld [vmem:[#allocation2 + $0x240] sm:$0xff]
  %v4935 = vmul.f32 %v4934, %v4129
  %v4936 = vadd.f32 %v4935, %v4141
  %vm4937 = vcmp.gt.f32.partialorder %v4936, 0.0
  %v4938 = vmul.f32 %v4936, 0.2
  %v4939 = vsel %vm4937, %v4936, %v4938
  %v4940 = vpack.c.bf16 %v4939, %v4939
  %4941 = vst.msk [vmem:[#allocation3 + $0x90] sm:$0xf] %vm4148, %v4940
  %v4942 = vld [vmem:[#allocation2 + $0x248] sm:$0xff]
  %v4943 = vmul.f32 %v4942, %v4129
  %v4944 = vadd.f32 %v4943, %v4141
  %vm4945 = vcmp.gt.f32.partialorder %v4944, 0.0
  %v4946 = vmul.f32 %v4944, 0.2
  %v4947 = vsel %vm4945, %v4944, %v4946
  %v4948 = vpack.c.bf16 %v4947, %v4947
  %v4950 = vunpack.c.l.b16 %v4948
  %v4951 = vpack.c.b16 %v4950, %v4950
  %4952 = vrot.lane.b32.xlu0 %v4951, 64
  %v4953 = vpop.permute.xlu0 %4952
  %4955 = vst.msk [vmem:[#allocation3 + $0x90] sm:$0xf] %vm4136, %v4953
  %v4956 = vld [vmem:[#allocation2 + $0x250] sm:$0xff]
  %v4957 = vmul.f32 %v4956, %v4129
  %v4958 = vadd.f32 %v4957, %v4141
  %vm4959 = vcmp.gt.f32.partialorder %v4958, 0.0
  %v4960 = vmul.f32 %v4958, 0.2
  %v4961 = vsel %vm4959, %v4958, %v4960
  %v4962 = vpack.c.bf16 %v4961, %v4961
  %4963 = vst.msk [vmem:[#allocation3 + $0x94] sm:$0xf] %vm4148, %v4962
  %v4964 = vld [vmem:[#allocation2 + $0x258] sm:$0xff]
  %v4965 = vmul.f32 %v4964, %v4129
  %v4966 = vadd.f32 %v4965, %v4141
  %vm4967 = vcmp.gt.f32.partialorder %v4966, 0.0
  %v4968 = vmul.f32 %v4966, 0.2
  %v4969 = vsel %vm4967, %v4966, %v4968
  %v4970 = vpack.c.bf16 %v4969, %v4969
  %v4972 = vunpack.c.l.b16 %v4970
  %v4973 = vpack.c.b16 %v4972, %v4972
  %4974 = vrot.lane.b32.xlu0 %v4973, 64
  %v4975 = vpop.permute.xlu0 %4974
  %4977 = vst.msk [vmem:[#allocation3 + $0x94] sm:$0xf] %vm4136, %v4975
  %v4978 = vld [vmem:[#allocation2 + $0x260] sm:$0xff]
  %v4979 = vmul.f32 %v4978, %v4129
  %v4980 = vadd.f32 %v4979, %v4141
  %vm4981 = vcmp.gt.f32.partialorder %v4980, 0.0
  %v4982 = vmul.f32 %v4980, 0.2
  %v4983 = vsel %vm4981, %v4980, %v4982
  %v4984 = vpack.c.bf16 %v4983, %v4983
  %4985 = vst.msk [vmem:[#allocation3 + $0x98] sm:$0xf] %vm4148, %v4984
  %v4986 = vld [vmem:[#allocation2 + $0x268] sm:$0xff]
  %v4987 = vmul.f32 %v4986, %v4129
  %v4988 = vadd.f32 %v4987, %v4141
  %vm4989 = vcmp.gt.f32.partialorder %v4988, 0.0
  %v4990 = vmul.f32 %v4988, 0.2
  %v4991 = vsel %vm4989, %v4988, %v4990
  %v4992 = vpack.c.bf16 %v4991, %v4991
  %v4994 = vunpack.c.l.b16 %v4992
  %v4995 = vpack.c.b16 %v4994, %v4994
  %4996 = vrot.lane.b32.xlu0 %v4995, 64
  %v4997 = vpop.permute.xlu0 %4996
  %4999 = vst.msk [vmem:[#allocation3 + $0x98] sm:$0xf] %vm4136, %v4997
  %v5000 = vld [vmem:[#allocation2 + $0x270] sm:$0xff]
  %v5001 = vmul.f32 %v5000, %v4129
  %v5002 = vadd.f32 %v5001, %v4141
  %vm5003 = vcmp.gt.f32.partialorder %v5002, 0.0
  %v5004 = vmul.f32 %v5002, 0.2
  %v5005 = vsel %vm5003, %v5002, %v5004
  %v5006 = vpack.c.bf16 %v5005, %v5005
  %5007 = vst.msk [vmem:[#allocation3 + $0x9c] sm:$0xf] %vm4148, %v5006
  %v5008 = vld [vmem:[#allocation2 + $0x278] sm:$0xff]
  %v5009 = vmul.f32 %v5008, %v4129
  %v5010 = vadd.f32 %v5009, %v4141
  %vm5011 = vcmp.gt.f32.partialorder %v5010, 0.0
  %v5012 = vmul.f32 %v5010, 0.2
  %v5013 = vsel %vm5011, %v5010, %v5012
  %v5014 = vpack.c.bf16 %v5013, %v5013
  %v5016 = vunpack.c.l.b16 %v5014
  %v5017 = vpack.c.b16 %v5016, %v5016
  %5018 = vrot.lane.b32.xlu0 %v5017, 64
  %v5019 = vpop.permute.xlu0 %5018
  %5021 = vst.msk [vmem:[#allocation3 + $0x9c] sm:$0xf] %vm4136, %v5019
  %v5022 = vld [vmem:[#allocation2 + $0x280] sm:$0xff]
  %v5023 = vmul.f32 %v5022, %v4129
  %v5024 = vadd.f32 %v5023, %v4141
  %vm5025 = vcmp.gt.f32.partialorder %v5024, 0.0
  %v5026 = vmul.f32 %v5024, 0.2
  %v5027 = vsel %vm5025, %v5024, %v5026
  %v5028 = vpack.c.bf16 %v5027, %v5027
  %5029 = vst.msk [vmem:[#allocation3 + $0xa0] sm:$0xf] %vm4148, %v5028
  %v5030 = vld [vmem:[#allocation2 + $0x288] sm:$0xff]
  %v5031 = vmul.f32 %v5030, %v4129
  %v5032 = vadd.f32 %v5031, %v4141
  %vm5033 = vcmp.gt.f32.partialorder %v5032, 0.0
  %v5034 = vmul.f32 %v5032, 0.2
  %v5035 = vsel %vm5033, %v5032, %v5034
  %v5036 = vpack.c.bf16 %v5035, %v5035
  %v5038 = vunpack.c.l.b16 %v5036
  %v5039 = vpack.c.b16 %v5038, %v5038
  %5040 = vrot.lane.b32.xlu0 %v5039, 64
  %v5041 = vpop.permute.xlu0 %5040
  %5043 = vst.msk [vmem:[#allocation3 + $0xa0] sm:$0xf] %vm4136, %v5041
  %v5044 = vld [vmem:[#allocation2 + $0x290] sm:$0xff]
  %v5045 = vmul.f32 %v5044, %v4129
  %v5046 = vadd.f32 %v5045, %v4141
  %vm5047 = vcmp.gt.f32.partialorder %v5046, 0.0
  %v5048 = vmul.f32 %v5046, 0.2
  %v5049 = vsel %vm5047, %v5046, %v5048
  %v5050 = vpack.c.bf16 %v5049, %v5049
  %5051 = vst.msk [vmem:[#allocation3 + $0xa4] sm:$0xf] %vm4148, %v5050
  %v5052 = vld [vmem:[#allocation2 + $0x298] sm:$0xff]
  %v5053 = vmul.f32 %v5052, %v4129
  %v5054 = vadd.f32 %v5053, %v4141
  %vm5055 = vcmp.gt.f32.partialorder %v5054, 0.0
  %v5056 = vmul.f32 %v5054, 0.2
  %v5057 = vsel %vm5055, %v5054, %v5056
  %v5058 = vpack.c.bf16 %v5057, %v5057
  %v5060 = vunpack.c.l.b16 %v5058
  %v5061 = vpack.c.b16 %v5060, %v5060
  %5062 = vrot.lane.b32.xlu0 %v5061, 64
  %v5063 = vpop.permute.xlu0 %5062
  %5065 = vst.msk [vmem:[#allocation3 + $0xa4] sm:$0xf] %vm4136, %v5063
  %v5066 = vld [vmem:[#allocation2 + $0x2a0] sm:$0xff]
  %v5067 = vmul.f32 %v5066, %v4129
  %v5068 = vadd.f32 %v5067, %v4141
  %vm5069 = vcmp.gt.f32.partialorder %v5068, 0.0
  %v5070 = vmul.f32 %v5068, 0.2
  %v5071 = vsel %vm5069, %v5068, %v5070
  %v5072 = vpack.c.bf16 %v5071, %v5071
  %5073 = vst.msk [vmem:[#allocation3 + $0xa8] sm:$0xf] %vm4148, %v5072
  %v5074 = vld [vmem:[#allocation2 + $0x2a8] sm:$0xff]
  %v5075 = vmul.f32 %v5074, %v4129
  %v5076 = vadd.f32 %v5075, %v4141
  %vm5077 = vcmp.gt.f32.partialorder %v5076, 0.0
  %v5078 = vmul.f32 %v5076, 0.2
  %v5079 = vsel %vm5077, %v5076, %v5078
  %v5080 = vpack.c.bf16 %v5079, %v5079
  %v5082 = vunpack.c.l.b16 %v5080
  %v5083 = vpack.c.b16 %v5082, %v5082
  %5084 = vrot.lane.b32.xlu0 %v5083, 64
  %v5085 = vpop.permute.xlu0 %5084
  %5087 = vst.msk [vmem:[#allocation3 + $0xa8] sm:$0xf] %vm4136, %v5085
  %v5088 = vld [vmem:[#allocation2 + $0x2b0] sm:$0xff]
  %v5089 = vmul.f32 %v5088, %v4129
  %v5090 = vadd.f32 %v5089, %v4141
  %vm5091 = vcmp.gt.f32.partialorder %v5090, 0.0
  %v5092 = vmul.f32 %v5090, 0.2
  %v5093 = vsel %vm5091, %v5090, %v5092
  %v5094 = vpack.c.bf16 %v5093, %v5093
  %5095 = vst.msk [vmem:[#allocation3 + $0xac] sm:$0xf] %vm4148, %v5094
  %v5096 = vld [vmem:[#allocation2 + $0x2b8] sm:$0xff]
  %v5097 = vmul.f32 %v5096, %v4129
  %v5098 = vadd.f32 %v5097, %v4141
  %vm5099 = vcmp.gt.f32.partialorder %v5098, 0.0
  %v5100 = vmul.f32 %v5098, 0.2
  %v5101 = vsel %vm5099, %v5098, %v5100
  %v5102 = vpack.c.bf16 %v5101, %v5101
  %v5104 = vunpack.c.l.b16 %v5102
  %v5105 = vpack.c.b16 %v5104, %v5104
  %5106 = vrot.lane.b32.xlu0 %v5105, 64
  %v5107 = vpop.permute.xlu0 %5106
  %5109 = vst.msk [vmem:[#allocation3 + $0xac] sm:$0xf] %vm4136, %v5107
  %v5110 = vld [vmem:[#allocation2 + $0x2c0] sm:$0xff]
  %v5111 = vmul.f32 %v5110, %v4129
  %v5112 = vadd.f32 %v5111, %v4141
  %vm5113 = vcmp.gt.f32.partialorder %v5112, 0.0
  %v5114 = vmul.f32 %v5112, 0.2
  %v5115 = vsel %vm5113, %v5112, %v5114
  %v5116 = vpack.c.bf16 %v5115, %v5115
  %5117 = vst.msk [vmem:[#allocation3 + $0xb0] sm:$0xf] %vm4148, %v5116
  %v5118 = vld [vmem:[#allocation2 + $0x2c8] sm:$0xff]
  %v5119 = vmul.f32 %v5118, %v4129
  %v5120 = vadd.f32 %v5119, %v4141
  %vm5121 = vcmp.gt.f32.partialorder %v5120, 0.0
  %v5122 = vmul.f32 %v5120, 0.2
  %v5123 = vsel %vm5121, %v5120, %v5122
  %v5124 = vpack.c.bf16 %v5123, %v5123
  %v5126 = vunpack.c.l.b16 %v5124
  %v5127 = vpack.c.b16 %v5126, %v5126
  %5128 = vrot.lane.b32.xlu0 %v5127, 64
  %v5129 = vpop.permute.xlu0 %5128
  %5131 = vst.msk [vmem:[#allocation3 + $0xb0] sm:$0xf] %vm4136, %v5129
  %v5132 = vld [vmem:[#allocation2 + $0x2d0] sm:$0xff]
  %v5133 = vmul.f32 %v5132, %v4129
  %v5134 = vadd.f32 %v5133, %v4141
  %vm5135 = vcmp.gt.f32.partialorder %v5134, 0.0
  %v5136 = vmul.f32 %v5134, 0.2
  %v5137 = vsel %vm5135, %v5134, %v5136
  %v5138 = vpack.c.bf16 %v5137, %v5137
  %5139 = vst.msk [vmem:[#allocation3 + $0xb4] sm:$0xf] %vm4148, %v5138
  %v5140 = vld [vmem:[#allocation2 + $0x2d8] sm:$0xff]
  %v5141 = vmul.f32 %v5140, %v4129
  %v5142 = vadd.f32 %v5141, %v4141
  %vm5143 = vcmp.gt.f32.partialorder %v5142, 0.0
  %v5144 = vmul.f32 %v5142, 0.2
  %v5145 = vsel %vm5143, %v5142, %v5144
  %v5146 = vpack.c.bf16 %v5145, %v5145
  %v5148 = vunpack.c.l.b16 %v5146
  %v5149 = vpack.c.b16 %v5148, %v5148
  %5150 = vrot.lane.b32.xlu0 %v5149, 64
  %v5151 = vpop.permute.xlu0 %5150
  %5153 = vst.msk [vmem:[#allocation3 + $0xb4] sm:$0xf] %vm4136, %v5151
  %v5154 = vld [vmem:[#allocation2 + $0x2e0] sm:$0xff]
  %v5155 = vmul.f32 %v5154, %v4129
  %v5156 = vadd.f32 %v5155, %v4141
  %vm5157 = vcmp.gt.f32.partialorder %v5156, 0.0
  %v5158 = vmul.f32 %v5156, 0.2
  %v5159 = vsel %vm5157, %v5156, %v5158
  %v5160 = vpack.c.bf16 %v5159, %v5159
  %5161 = vst.msk [vmem:[#allocation3 + $0xb8] sm:$0xf] %vm4148, %v5160
  %v5162 = vld [vmem:[#allocation2 + $0x2e8] sm:$0xff]
  %v5163 = vmul.f32 %v5162, %v4129
  %v5164 = vadd.f32 %v5163, %v4141
  %vm5165 = vcmp.gt.f32.partialorder %v5164, 0.0
  %v5166 = vmul.f32 %v5164, 0.2
  %v5167 = vsel %vm5165, %v5164, %v5166
  %v5168 = vpack.c.bf16 %v5167, %v5167
  %v5170 = vunpack.c.l.b16 %v5168
  %v5171 = vpack.c.b16 %v5170, %v5170
  %5172 = vrot.lane.b32.xlu0 %v5171, 64
  %v5173 = vpop.permute.xlu0 %5172
  %5175 = vst.msk [vmem:[#allocation3 + $0xb8] sm:$0xf] %vm4136, %v5173
  %v5176 = vld [vmem:[#allocation2 + $0x2f0] sm:$0xff]
  %v5177 = vmul.f32 %v5176, %v4129
  %v5178 = vadd.f32 %v5177, %v4141
  %vm5179 = vcmp.gt.f32.partialorder %v5178, 0.0
  %v5180 = vmul.f32 %v5178, 0.2
  %v5181 = vsel %vm5179, %v5178, %v5180
  %v5182 = vpack.c.bf16 %v5181, %v5181
  %5183 = vst.msk [vmem:[#allocation3 + $0xbc] sm:$0xf] %vm4148, %v5182
  %v5184 = vld [vmem:[#allocation2 + $0x2f8] sm:$0xff]
  %v5185 = vmul.f32 %v5184, %v4129
  %v5186 = vadd.f32 %v5185, %v4141
  %vm5187 = vcmp.gt.f32.partialorder %v5186, 0.0
  %v5188 = vmul.f32 %v5186, 0.2
  %v5189 = vsel %vm5187, %v5186, %v5188
  %v5190 = vpack.c.bf16 %v5189, %v5189
  %v5192 = vunpack.c.l.b16 %v5190
  %v5193 = vpack.c.b16 %v5192, %v5192
  %5194 = vrot.lane.b32.xlu0 %v5193, 64
  %v5195 = vpop.permute.xlu0 %5194
  %5197 = vst.msk [vmem:[#allocation3 + $0xbc] sm:$0xf] %vm4136, %v5195
  %v5198 = vld [vmem:[#allocation2 + $0x300] sm:$0xff]
  %v5199 = vmul.f32 %v5198, %v4129
  %v5200 = vadd.f32 %v5199, %v4141
  %vm5201 = vcmp.gt.f32.partialorder %v5200, 0.0
  %v5202 = vmul.f32 %v5200, 0.2
  %v5203 = vsel %vm5201, %v5200, %v5202
  %v5204 = vpack.c.bf16 %v5203, %v5203
  %5205 = vst.msk [vmem:[#allocation3 + $0xc0] sm:$0xf] %vm4148, %v5204
  %v5206 = vld [vmem:[#allocation2 + $0x308] sm:$0xff]
  %v5207 = vmul.f32 %v5206, %v4129
  %v5208 = vadd.f32 %v5207, %v4141
  %vm5209 = vcmp.gt.f32.partialorder %v5208, 0.0
  %v5210 = vmul.f32 %v5208, 0.2
  %v5211 = vsel %vm5209, %v5208, %v5210
  %v5212 = vpack.c.bf16 %v5211, %v5211
  %v5214 = vunpack.c.l.b16 %v5212
  %v5215 = vpack.c.b16 %v5214, %v5214
  %5216 = vrot.lane.b32.xlu0 %v5215, 64
  %v5217 = vpop.permute.xlu0 %5216
  %5219 = vst.msk [vmem:[#allocation3 + $0xc0] sm:$0xf] %vm4136, %v5217
  %v5220 = vld [vmem:[#allocation2 + $0x310] sm:$0xff]
  %v5221 = vmul.f32 %v5220, %v4129
  %v5222 = vadd.f32 %v5221, %v4141
  %vm5223 = vcmp.gt.f32.partialorder %v5222, 0.0
  %v5224 = vmul.f32 %v5222, 0.2
  %v5225 = vsel %vm5223, %v5222, %v5224
  %v5226 = vpack.c.bf16 %v5225, %v5225
  %5227 = vst.msk [vmem:[#allocation3 + $0xc4] sm:$0xf] %vm4148, %v5226
  %v5228 = vld [vmem:[#allocation2 + $0x318] sm:$0xff]
  %v5229 = vmul.f32 %v5228, %v4129
  %v5230 = vadd.f32 %v5229, %v4141
  %vm5231 = vcmp.gt.f32.partialorder %v5230, 0.0
  %v5232 = vmul.f32 %v5230, 0.2
  %v5233 = vsel %vm5231, %v5230, %v5232
  %v5234 = vpack.c.bf16 %v5233, %v5233
  %v5236 = vunpack.c.l.b16 %v5234
  %v5237 = vpack.c.b16 %v5236, %v5236
  %5238 = vrot.lane.b32.xlu0 %v5237, 64
  %v5239 = vpop.permute.xlu0 %5238
  %5241 = vst.msk [vmem:[#allocation3 + $0xc4] sm:$0xf] %vm4136, %v5239
  %v5242 = vld [vmem:[#allocation2 + $0x320] sm:$0xff]
  %v5243 = vmul.f32 %v5242, %v4129
  %v5244 = vadd.f32 %v5243, %v4141
  %vm5245 = vcmp.gt.f32.partialorder %v5244, 0.0
  %v5246 = vmul.f32 %v5244, 0.2
  %v5247 = vsel %vm5245, %v5244, %v5246
  %v5248 = vpack.c.bf16 %v5247, %v5247
  %5249 = vst.msk [vmem:[#allocation3 + $0xc8] sm:$0xf] %vm4148, %v5248
  %v5250 = vld [vmem:[#allocation2 + $0x328] sm:$0xff]
  %v5251 = vmul.f32 %v5250, %v4129
  %v5252 = vadd.f32 %v5251, %v4141
  %vm5253 = vcmp.gt.f32.partialorder %v5252, 0.0
  %v5254 = vmul.f32 %v5252, 0.2
  %v5255 = vsel %vm5253, %v5252, %v5254
  %v5256 = vpack.c.bf16 %v5255, %v5255
  %v5258 = vunpack.c.l.b16 %v5256
  %v5259 = vpack.c.b16 %v5258, %v5258
  %5260 = vrot.lane.b32.xlu0 %v5259, 64
  %v5261 = vpop.permute.xlu0 %5260
  %5263 = vst.msk [vmem:[#allocation3 + $0xc8] sm:$0xf] %vm4136, %v5261
  %v5264 = vld [vmem:[#allocation2 + $0x330] sm:$0xff]
  %v5265 = vmul.f32 %v5264, %v4129
  %v5266 = vadd.f32 %v5265, %v4141
  %vm5267 = vcmp.gt.f32.partialorder %v5266, 0.0
  %v5268 = vmul.f32 %v5266, 0.2
  %v5269 = vsel %vm5267, %v5266, %v5268
  %v5270 = vpack.c.bf16 %v5269, %v5269
  %5271 = vst.msk [vmem:[#allocation3 + $0xcc] sm:$0xf] %vm4148, %v5270
  %v5272 = vld [vmem:[#allocation2 + $0x338] sm:$0xff]
  %v5273 = vmul.f32 %v5272, %v4129
  %v5274 = vadd.f32 %v5273, %v4141
  %vm5275 = vcmp.gt.f32.partialorder %v5274, 0.0
  %v5276 = vmul.f32 %v5274, 0.2
  %v5277 = vsel %vm5275, %v5274, %v5276
  %v5278 = vpack.c.bf16 %v5277, %v5277
  %v5280 = vunpack.c.l.b16 %v5278
  %v5281 = vpack.c.b16 %v5280, %v5280
  %5282 = vrot.lane.b32.xlu0 %v5281, 64
  %v5283 = vpop.permute.xlu0 %5282
  %5285 = vst.msk [vmem:[#allocation3 + $0xcc] sm:$0xf] %vm4136, %v5283
  %v5286 = vld [vmem:[#allocation2 + $0x340] sm:$0xff]
  %v5287 = vmul.f32 %v5286, %v4129
  %v5288 = vadd.f32 %v5287, %v4141
  %vm5289 = vcmp.gt.f32.partialorder %v5288, 0.0
  %v5290 = vmul.f32 %v5288, 0.2
  %v5291 = vsel %vm5289, %v5288, %v5290
  %v5292 = vpack.c.bf16 %v5291, %v5291
  %5293 = vst.msk [vmem:[#allocation3 + $0xd0] sm:$0xf] %vm4148, %v5292
  %v5294 = vld [vmem:[#allocation2 + $0x348] sm:$0xff]
  %v5295 = vmul.f32 %v5294, %v4129
  %v5296 = vadd.f32 %v5295, %v4141
  %vm5297 = vcmp.gt.f32.partialorder %v5296, 0.0
  %v5298 = vmul.f32 %v5296, 0.2
  %v5299 = vsel %vm5297, %v5296, %v5298
  %v5300 = vpack.c.bf16 %v5299, %v5299
  %v5302 = vunpack.c.l.b16 %v5300
  %v5303 = vpack.c.b16 %v5302, %v5302
  %5304 = vrot.lane.b32.xlu0 %v5303, 64
  %v5305 = vpop.permute.xlu0 %5304
  %5307 = vst.msk [vmem:[#allocation3 + $0xd0] sm:$0xf] %vm4136, %v5305
  %v5308 = vld [vmem:[#allocation2 + $0x350] sm:$0xff]
  %v5309 = vmul.f32 %v5308, %v4129
  %v5310 = vadd.f32 %v5309, %v4141
  %vm5311 = vcmp.gt.f32.partialorder %v5310, 0.0
  %v5312 = vmul.f32 %v5310, 0.2
  %v5313 = vsel %vm5311, %v5310, %v5312
  %v5314 = vpack.c.bf16 %v5313, %v5313
  %5315 = vst.msk [vmem:[#allocation3 + $0xd4] sm:$0xf] %vm4148, %v5314
  %v5316 = vld [vmem:[#allocation2 + $0x358] sm:$0xff]
  %v5317 = vmul.f32 %v5316, %v4129
  %v5318 = vadd.f32 %v5317, %v4141
  %vm5319 = vcmp.gt.f32.partialorder %v5318, 0.0
  %v5320 = vmul.f32 %v5318, 0.2
  %v5321 = vsel %vm5319, %v5318, %v5320
  %v5322 = vpack.c.bf16 %v5321, %v5321
  %v5324 = vunpack.c.l.b16 %v5322
  %v5325 = vpack.c.b16 %v5324, %v5324
  %5326 = vrot.lane.b32.xlu0 %v5325, 64
  %v5327 = vpop.permute.xlu0 %5326
  %5329 = vst.msk [vmem:[#allocation3 + $0xd4] sm:$0xf] %vm4136, %v5327
  %v5330 = vld [vmem:[#allocation2 + $0x360] sm:$0xff]
  %v5331 = vmul.f32 %v5330, %v4129
  %v5332 = vadd.f32 %v5331, %v4141
  %vm5333 = vcmp.gt.f32.partialorder %v5332, 0.0
  %v5334 = vmul.f32 %v5332, 0.2
  %v5335 = vsel %vm5333, %v5332, %v5334
  %v5336 = vpack.c.bf16 %v5335, %v5335
  %5337 = vst.msk [vmem:[#allocation3 + $0xd8] sm:$0xf] %vm4148, %v5336
  %v5338 = vld [vmem:[#allocation2 + $0x368] sm:$0xff]
  %v5339 = vmul.f32 %v5338, %v4129
  %v5340 = vadd.f32 %v5339, %v4141
  %vm5341 = vcmp.gt.f32.partialorder %v5340, 0.0
  %v5342 = vmul.f32 %v5340, 0.2
  %v5343 = vsel %vm5341, %v5340, %v5342
  %v5344 = vpack.c.bf16 %v5343, %v5343
  %v5346 = vunpack.c.l.b16 %v5344
  %v5347 = vpack.c.b16 %v5346, %v5346
  %5348 = vrot.lane.b32.xlu0 %v5347, 64
  %v5349 = vpop.permute.xlu0 %5348
  %5351 = vst.msk [vmem:[#allocation3 + $0xd8] sm:$0xf] %vm4136, %v5349
  %v5352 = vld [vmem:[#allocation2 + $0x370] sm:$0xff]
  %v5353 = vmul.f32 %v5352, %v4129
  %v5354 = vadd.f32 %v5353, %v4141
  %vm5355 = vcmp.gt.f32.partialorder %v5354, 0.0
  %v5356 = vmul.f32 %v5354, 0.2
  %v5357 = vsel %vm5355, %v5354, %v5356
  %v5358 = vpack.c.bf16 %v5357, %v5357
  %5359 = vst.msk [vmem:[#allocation3 + $0xdc] sm:$0xf] %vm4148, %v5358
  %v5360 = vld [vmem:[#allocation2 + $0x378] sm:$0xff]
  %v5361 = vmul.f32 %v5360, %v4129
  %v5362 = vadd.f32 %v5361, %v4141
  %vm5363 = vcmp.gt.f32.partialorder %v5362, 0.0
  %v5364 = vmul.f32 %v5362, 0.2
  %v5365 = vsel %vm5363, %v5362, %v5364
  %v5366 = vpack.c.bf16 %v5365, %v5365
  %v5368 = vunpack.c.l.b16 %v5366
  %v5369 = vpack.c.b16 %v5368, %v5368
  %5370 = vrot.lane.b32.xlu0 %v5369, 64
  %v5371 = vpop.permute.xlu0 %5370
  %5373 = vst.msk [vmem:[#allocation3 + $0xdc] sm:$0xf] %vm4136, %v5371
  %v5374 = vld [vmem:[#allocation2 + $0x380] sm:$0xff]
  %v5375 = vmul.f32 %v5374, %v4129
  %v5376 = vadd.f32 %v5375, %v4141
  %vm5377 = vcmp.gt.f32.partialorder %v5376, 0.0
  %v5378 = vmul.f32 %v5376, 0.2
  %v5379 = vsel %vm5377, %v5376, %v5378
  %v5380 = vpack.c.bf16 %v5379, %v5379
  %5381 = vst.msk [vmem:[#allocation3 + $0xe0] sm:$0xf] %vm4148, %v5380
  %v5382 = vld [vmem:[#allocation2 + $0x388] sm:$0xff]
  %v5383 = vmul.f32 %v5382, %v4129
  %v5384 = vadd.f32 %v5383, %v4141
  %vm5385 = vcmp.gt.f32.partialorder %v5384, 0.0
  %v5386 = vmul.f32 %v5384, 0.2
  %v5387 = vsel %vm5385, %v5384, %v5386
  %v5388 = vpack.c.bf16 %v5387, %v5387
  %v5390 = vunpack.c.l.b16 %v5388
  %v5391 = vpack.c.b16 %v5390, %v5390
  %5392 = vrot.lane.b32.xlu0 %v5391, 64
  %v5393 = vpop.permute.xlu0 %5392
  %5395 = vst.msk [vmem:[#allocation3 + $0xe0] sm:$0xf] %vm4136, %v5393
  %v5396 = vld [vmem:[#allocation2 + $0x390] sm:$0xff]
  %v5397 = vmul.f32 %v5396, %v4129
  %v5398 = vadd.f32 %v5397, %v4141
  %vm5399 = vcmp.gt.f32.partialorder %v5398, 0.0
  %v5400 = vmul.f32 %v5398, 0.2
  %v5401 = vsel %vm5399, %v5398, %v5400
  %v5402 = vpack.c.bf16 %v5401, %v5401
  %5403 = vst.msk [vmem:[#allocation3 + $0xe4] sm:$0xf] %vm4148, %v5402
  %v5404 = vld [vmem:[#allocation2 + $0x398] sm:$0xff]
  %v5405 = vmul.f32 %v5404, %v4129
  %v5406 = vadd.f32 %v5405, %v4141
  %vm5407 = vcmp.gt.f32.partialorder %v5406, 0.0
  %v5408 = vmul.f32 %v5406, 0.2
  %v5409 = vsel %vm5407, %v5406, %v5408
  %v5410 = vpack.c.bf16 %v5409, %v5409
  %v5412 = vunpack.c.l.b16 %v5410
  %v5413 = vpack.c.b16 %v5412, %v5412
  %5414 = vrot.lane.b32.xlu0 %v5413, 64
  %v5415 = vpop.permute.xlu0 %5414
  %5417 = vst.msk [vmem:[#allocation3 + $0xe4] sm:$0xf] %vm4136, %v5415
  %v5418 = vld [vmem:[#allocation2 + $0x3a0] sm:$0xff]
  %v5419 = vmul.f32 %v5418, %v4129
  %v5420 = vadd.f32 %v5419, %v4141
  %vm5421 = vcmp.gt.f32.partialorder %v5420, 0.0
  %v5422 = vmul.f32 %v5420, 0.2
  %v5423 = vsel %vm5421, %v5420, %v5422
  %v5424 = vpack.c.bf16 %v5423, %v5423
  %5425 = vst.msk [vmem:[#allocation3 + $0xe8] sm:$0xf] %vm4148, %v5424
  %v5426 = vld [vmem:[#allocation2 + $0x3a8] sm:$0xff]
  %v5427 = vmul.f32 %v5426, %v4129
  %v5428 = vadd.f32 %v5427, %v4141
  %vm5429 = vcmp.gt.f32.partialorder %v5428, 0.0
  %v5430 = vmul.f32 %v5428, 0.2
  %v5431 = vsel %vm5429, %v5428, %v5430
  %v5432 = vpack.c.bf16 %v5431, %v5431
  %v5434 = vunpack.c.l.b16 %v5432
  %v5435 = vpack.c.b16 %v5434, %v5434
  %5436 = vrot.lane.b32.xlu0 %v5435, 64
  %v5437 = vpop.permute.xlu0 %5436
  %5439 = vst.msk [vmem:[#allocation3 + $0xe8] sm:$0xf] %vm4136, %v5437
  %v5440 = vld [vmem:[#allocation2 + $0x3b0] sm:$0xff]
  %v5441 = vmul.f32 %v5440, %v4129
  %v5442 = vadd.f32 %v5441, %v4141
  %vm5443 = vcmp.gt.f32.partialorder %v5442, 0.0
  %v5444 = vmul.f32 %v5442, 0.2
  %v5445 = vsel %vm5443, %v5442, %v5444
  %v5446 = vpack.c.bf16 %v5445, %v5445
  %5447 = vst.msk [vmem:[#allocation3 + $0xec] sm:$0xf] %vm4148, %v5446
  %v5448 = vld [vmem:[#allocation2 + $0x3b8] sm:$0xff]
  %v5449 = vmul.f32 %v5448, %v4129
  %v5450 = vadd.f32 %v5449, %v4141
  %vm5451 = vcmp.gt.f32.partialorder %v5450, 0.0
  %v5452 = vmul.f32 %v5450, 0.2
  %v5453 = vsel %vm5451, %v5450, %v5452
  %v5454 = vpack.c.bf16 %v5453, %v5453
  %v5456 = vunpack.c.l.b16 %v5454
  %v5457 = vpack.c.b16 %v5456, %v5456
  %5458 = vrot.lane.b32.xlu0 %v5457, 64
  %v5459 = vpop.permute.xlu0 %5458
  %5461 = vst.msk [vmem:[#allocation3 + $0xec] sm:$0xf] %vm4136, %v5459
  %v5462 = vld [vmem:[#allocation2 + $0x3c0] sm:$0xff]
  %v5463 = vmul.f32 %v5462, %v4129
  %v5464 = vadd.f32 %v5463, %v4141
  %vm5465 = vcmp.gt.f32.partialorder %v5464, 0.0
  %v5466 = vmul.f32 %v5464, 0.2
  %v5467 = vsel %vm5465, %v5464, %v5466
  %v5468 = vpack.c.bf16 %v5467, %v5467
  %5469 = vst.msk [vmem:[#allocation3 + $0xf0] sm:$0xf] %vm4148, %v5468
  %s5470 = smul.u32 4, 976
  %s5471 = smul.u32 %s5470, 1
  %s5472 = sshll.u32 %s5471, 4
  %5473 = dma.done [#allocation5], %s5472
  %v5474 = vld [vmem:[#allocation3] sm:$0xff]
  %v5475 = vld [vmem:[#allocation3 + $0x8] sm:$0xff]
  %v5476 = vld [vmem:[#allocation3 + $0x10] sm:$0xff]
  %v5477 = vld [vmem:[#allocation3 + $0x18] sm:$0xff]
  %v5478 = vld [vmem:[#allocation3 + $0x20] sm:$0xff]
  %v5479 = vld [vmem:[#allocation3 + $0x28] sm:$0xff]
  %v5480 = vld [vmem:[#allocation3 + $0x30] sm:$0xff]
  %v5481 = vld [vmem:[#allocation3 + $0x38] sm:$0xff]
  %v5482 = vld [vmem:[#allocation3 + $0x40] sm:$0xff]
  %v5483 = vld [vmem:[#allocation3 + $0x48] sm:$0xff]
  %v5484 = vld [vmem:[#allocation3 + $0x50] sm:$0xff]
  %v5485 = vld [vmem:[#allocation3 + $0x58] sm:$0xff]
  %v5486 = vld [vmem:[#allocation3 + $0x60] sm:$0xff]
  %v5487 = vld [vmem:[#allocation3 + $0x68] sm:$0xff]
  %v5488 = vld [vmem:[#allocation3 + $0x70] sm:$0xff]
  %v5489 = vld [vmem:[#allocation3 + $0x78] sm:$0xff]
  %v5490 = vld [vmem:[#allocation3 + $0x80] sm:$0xff]
  %v5491 = vld [vmem:[#allocation3 + $0x88] sm:$0xff]
  %v5492 = vld [vmem:[#allocation3 + $0x90] sm:$0xff]
  %v5493 = vld [vmem:[#allocation3 + $0x98] sm:$0xff]
  %v5494 = vld [vmem:[#allocation3 + $0xa0] sm:$0xff]
  %v5495 = vld [vmem:[#allocation3 + $0xa8] sm:$0xff]
  %v5496 = vld [vmem:[#allocation3 + $0xb0] sm:$0xff]
  %v5497 = vld [vmem:[#allocation3 + $0xb8] sm:$0xff]
  %v5498 = vld [vmem:[#allocation3 + $0xc0] sm:$0xff]
  %v5499 = vld [vmem:[#allocation3 + $0xc8] sm:$0xff]
  %v5500 = vld [vmem:[#allocation3 + $0xd0] sm:$0xff]
  %v5501 = vld [vmem:[#allocation3 + $0xd8] sm:$0xff]
  %v5502 = vld [vmem:[#allocation3 + $0xe0] sm:$0xff]
  %v5503 = vld [vmem:[#allocation3 + $0xe8] sm:$0xff]
  %v5504 = vld [vmem:[#allocation3 + $0xf0] sm:$0xf]
  %v5505 = vld [vmem:[#allocation4] sm:$0xff]
  %v5506 = vld [vmem:[#allocation4 + $0x8] sm:$0xff]
  %v5507 = vld [vmem:[#allocation4 + $0x10] sm:$0xff]
  %v5508 = vld [vmem:[#allocation4 + $0x18] sm:$0xff]
  %v5509 = vld [vmem:[#allocation4 + $0x20] sm:$0xff]
  %v5510 = vld [vmem:[#allocation4 + $0x28] sm:$0xff]
  %v5511 = vld [vmem:[#allocation4 + $0x30] sm:$0xff]
  %v5512 = vld [vmem:[#allocation4 + $0x38] sm:$0xff]
  %v5513 = vld [vmem:[#allocation4 + $0x40] sm:$0xff]
  %v5514 = vld [vmem:[#allocation4 + $0x48] sm:$0xff]
  %v5515 = vld [vmem:[#allocation4 + $0x50] sm:$0xff]
  %v5516 = vld [vmem:[#allocation4 + $0x58] sm:$0xff]
  %v5517 = vld [vmem:[#allocation4 + $0x60] sm:$0xff]
  %v5518 = vld [vmem:[#allocation4 + $0x68] sm:$0xff]
  %v5519 = vld [vmem:[#allocation4 + $0x70] sm:$0xff]
  %v5520 = vld [vmem:[#allocation4 + $0x78] sm:$0xff]
  %v5521 = vld [vmem:[#allocation4 + $0x80] sm:$0xff]
  %v5522 = vld [vmem:[#allocation4 + $0x88] sm:$0xff]
  %v5523 = vld [vmem:[#allocation4 + $0x90] sm:$0xff]
  %v5524 = vld [vmem:[#allocation4 + $0x98] sm:$0xff]
  %v5525 = vld [vmem:[#allocation4 + $0xa0] sm:$0xff]
  %v5526 = vld [vmem:[#allocation4 + $0xa8] sm:$0xff]
  %v5527 = vld [vmem:[#allocation4 + $0xb0] sm:$0xff]
  %v5528 = vld [vmem:[#allocation4 + $0xb8] sm:$0xff]
  %v5529 = vld [vmem:[#allocation4 + $0xc0] sm:$0xff]
  %v5530 = vld [vmem:[#allocation4 + $0xc8] sm:$0xff]
  %v5531 = vld [vmem:[#allocation4 + $0xd0] sm:$0xff]
  %v5532 = vld [vmem:[#allocation4 + $0xd8] sm:$0xff]
  %v5533 = vld [vmem:[#allocation4 + $0xe0] sm:$0xff]
  %v5534 = vld [vmem:[#allocation4 + $0xe8] sm:$0xff]
  %v5535 = vld [vmem:[#allocation4 + $0xf0] sm:$0xff]
  %v5536 = vld [vmem:[#allocation4 + $0xf8] sm:$0xff]
  %v5537 = vld [vmem:[#allocation4 + $0x100] sm:$0xff]
  %v5538 = vld [vmem:[#allocation4 + $0x108] sm:$0xff]
  %v5539 = vld [vmem:[#allocation4 + $0x110] sm:$0xff]
  %v5540 = vld [vmem:[#allocation4 + $0x118] sm:$0xff]
  %v5541 = vld [vmem:[#allocation4 + $0x120] sm:$0xff]
  %v5542 = vld [vmem:[#allocation4 + $0x128] sm:$0xff]
  %v5543 = vld [vmem:[#allocation4 + $0x130] sm:$0xff]
  %v5544 = vld [vmem:[#allocation4 + $0x138] sm:$0xff]
  %v5545 = vld [vmem:[#allocation4 + $0x140] sm:$0xff]
  %v5546 = vld [vmem:[#allocation4 + $0x148] sm:$0xff]
  %v5547 = vld [vmem:[#allocation4 + $0x150] sm:$0xff]
  %v5548 = vld [vmem:[#allocation4 + $0x158] sm:$0xff]
  %v5549 = vld [vmem:[#allocation4 + $0x160] sm:$0xff]
  %v5550 = vld [vmem:[#allocation4 + $0x168] sm:$0xff]
  %v5551 = vld [vmem:[#allocation4 + $0x170] sm:$0xff]
  %v5552 = vld [vmem:[#allocation4 + $0x178] sm:$0xff]
  %v5553 = vld [vmem:[#allocation4 + $0x180] sm:$0xff]
  %v5554 = vld [vmem:[#allocation4 + $0x188] sm:$0xff]
  %v5555 = vld [vmem:[#allocation4 + $0x190] sm:$0xff]
  %v5556 = vld [vmem:[#allocation4 + $0x198] sm:$0xff]
  %v5557 = vld [vmem:[#allocation4 + $0x1a0] sm:$0xff]
  %v5558 = vld [vmem:[#allocation4 + $0x1a8] sm:$0xff]
  %v5559 = vld [vmem:[#allocation4 + $0x1b0] sm:$0xff]
  %v5560 = vld [vmem:[#allocation4 + $0x1b8] sm:$0xff]
  %v5561 = vld [vmem:[#allocation4 + $0x1c0] sm:$0xff]
  %v5562 = vld [vmem:[#allocation4 + $0x1c8] sm:$0xff]
  %v5563 = vld [vmem:[#allocation4 + $0x1d0] sm:$0xff]
  %v5564 = vld [vmem:[#allocation4 + $0x1d8] sm:$0xff]
  %v5565 = vld [vmem:[#allocation4 + $0x1e0] sm:$0xff]
  %v5566 = vld [vmem:[#allocation4 + $0x1e8] sm:$0xff]
  %v5567 = vld [vmem:[#allocation4 + $0x1f0] sm:$0xff]
  %v5568 = vld [vmem:[#allocation4 + $0x1f8] sm:$0xff]
  %v5569 = vld [vmem:[#allocation4 + $0x200] sm:$0xff]
  %v5570 = vld [vmem:[#allocation4 + $0x208] sm:$0xff]
  %v5571 = vld [vmem:[#allocation4 + $0x210] sm:$0xff]
  %v5572 = vld [vmem:[#allocation4 + $0x218] sm:$0xff]
  %v5573 = vld [vmem:[#allocation4 + $0x220] sm:$0xff]
  %v5574 = vld [vmem:[#allocation4 + $0x228] sm:$0xff]
  %v5575 = vld [vmem:[#allocation4 + $0x230] sm:$0xff]
  %v5576 = vld [vmem:[#allocation4 + $0x238] sm:$0xff]
  %v5577 = vld [vmem:[#allocation4 + $0x240] sm:$0xff]
  %v5578 = vld [vmem:[#allocation4 + $0x248] sm:$0xff]
  %v5579 = vld [vmem:[#allocation4 + $0x250] sm:$0xff]
  %v5580 = vld [vmem:[#allocation4 + $0x258] sm:$0xff]
  %v5581 = vld [vmem:[#allocation4 + $0x260] sm:$0xff]
  %v5582 = vld [vmem:[#allocation4 + $0x268] sm:$0xff]
  %v5583 = vld [vmem:[#allocation4 + $0x270] sm:$0xff]
  %v5584 = vld [vmem:[#allocation4 + $0x278] sm:$0xff]
  %v5585 = vld [vmem:[#allocation4 + $0x280] sm:$0xff]
  %v5586 = vld [vmem:[#allocation4 + $0x288] sm:$0xff]
  %v5587 = vld [vmem:[#allocation4 + $0x290] sm:$0xff]
  %v5588 = vld [vmem:[#allocation4 + $0x298] sm:$0xff]
  %v5589 = vld [vmem:[#allocation4 + $0x2a0] sm:$0xff]
  %v5590 = vld [vmem:[#allocation4 + $0x2a8] sm:$0xff]
  %v5591 = vld [vmem:[#allocation4 + $0x2b0] sm:$0xff]
  %v5592 = vld [vmem:[#allocation4 + $0x2b8] sm:$0xff]
  %v5593 = vld [vmem:[#allocation4 + $0x2c0] sm:$0xff]
  %v5594 = vld [vmem:[#allocation4 + $0x2c8] sm:$0xff]
  %v5595 = vld [vmem:[#allocation4 + $0x2d0] sm:$0xff]
  %v5596 = vld [vmem:[#allocation4 + $0x2d8] sm:$0xff]
  %v5597 = vld [vmem:[#allocation4 + $0x2e0] sm:$0xff]
  %v5598 = vld [vmem:[#allocation4 + $0x2e8] sm:$0xff]
  %v5599 = vld [vmem:[#allocation4 + $0x2f0] sm:$0xff]
  %v5600 = vld [vmem:[#allocation4 + $0x2f8] sm:$0xff]
  %v5601 = vld [vmem:[#allocation4 + $0x300] sm:$0xff]
  %v5602 = vld [vmem:[#allocation4 + $0x308] sm:$0xff]
  %v5603 = vld [vmem:[#allocation4 + $0x310] sm:$0xff]
  %v5604 = vld [vmem:[#allocation4 + $0x318] sm:$0xff]
  %v5605 = vld [vmem:[#allocation4 + $0x320] sm:$0xff]
  %v5606 = vld [vmem:[#allocation4 + $0x328] sm:$0xff]
  %v5607 = vld [vmem:[#allocation4 + $0x330] sm:$0xff]
  %v5608 = vld [vmem:[#allocation4 + $0x338] sm:$0xff]
  %v5609 = vld [vmem:[#allocation4 + $0x340] sm:$0xff]
  %v5610 = vld [vmem:[#allocation4 + $0x348] sm:$0xff]
  %v5611 = vld [vmem:[#allocation4 + $0x350] sm:$0xff]
  %v5612 = vld [vmem:[#allocation4 + $0x358] sm:$0xff]
  %v5613 = vld [vmem:[#allocation4 + $0x360] sm:$0xff]
  %v5614 = vld [vmem:[#allocation4 + $0x368] sm:$0xff]
  %v5615 = vld [vmem:[#allocation4 + $0x370] sm:$0xff]
  %v5616 = vld [vmem:[#allocation4 + $0x378] sm:$0xff]
  %v5617 = vld [vmem:[#allocation4 + $0x380] sm:$0xff]
  %v5618 = vld [vmem:[#allocation4 + $0x388] sm:$0xff]
  %v5619 = vld [vmem:[#allocation4 + $0x390] sm:$0xff]
  %v5620 = vld [vmem:[#allocation4 + $0x398] sm:$0xff]
  %v5621 = vld [vmem:[#allocation4 + $0x3a0] sm:$0xff]
  %v5622 = vld [vmem:[#allocation4 + $0x3a8] sm:$0xff]
  %v5623 = vld [vmem:[#allocation4 + $0x3b0] sm:$0xff]
  %v5624 = vld [vmem:[#allocation4 + $0x3b8] sm:$0xff]
  %v5625 = vld [vmem:[#allocation4 + $0x3c0] sm:$0xff]
  %v5626 = vld [vmem:[#allocation4 + $0x3c8] sm:$0xff]
  %v5627 = vld [vmem:[#allocation4 + $0x3d0] sm:$0xff]
  %v5628 = vld [vmem:[#allocation4 + $0x3d8] sm:$0xff]
  %v5629 = vld [vmem:[#allocation4 + $0x3e0] sm:$0xff]
  %v5630 = vld [vmem:[#allocation4 + $0x3e8] sm:$0xff]
  %v5631 = vld [vmem:[#allocation4 + $0x3f0] sm:$0xff]
  %v5632 = vld [vmem:[#allocation4 + $0x3f8] sm:$0xff]
  %v5633 = vld [vmem:[#allocation4 + $0x400] sm:$0xff]
  %v5634 = vld [vmem:[#allocation4 + $0x408] sm:$0xff]
  %v5635 = vld [vmem:[#allocation4 + $0x410] sm:$0xff]
  %v5636 = vld [vmem:[#allocation4 + $0x418] sm:$0xff]
  %v5637 = vld [vmem:[#allocation4 + $0x420] sm:$0xff]
  %v5638 = vld [vmem:[#allocation4 + $0x428] sm:$0xff]
  %v5639 = vld [vmem:[#allocation4 + $0x430] sm:$0xff]
  %v5640 = vld [vmem:[#allocation4 + $0x438] sm:$0xff]
  %v5641 = vld [vmem:[#allocation4 + $0x440] sm:$0xff]
  %v5642 = vld [vmem:[#allocation4 + $0x448] sm:$0xff]
  %v5643 = vld [vmem:[#allocation4 + $0x450] sm:$0xff]
  %v5644 = vld [vmem:[#allocation4 + $0x458] sm:$0xff]
  %v5645 = vld [vmem:[#allocation4 + $0x460] sm:$0xff]
  %v5646 = vld [vmem:[#allocation4 + $0x468] sm:$0xff]
  %v5647 = vld [vmem:[#allocation4 + $0x470] sm:$0xff]
  %v5648 = vld [vmem:[#allocation4 + $0x478] sm:$0xff]
  %v5649 = vld [vmem:[#allocation4 + $0x480] sm:$0xff]
  %v5650 = vld [vmem:[#allocation4 + $0x488] sm:$0xff]
  %v5651 = vld [vmem:[#allocation4 + $0x490] sm:$0xff]
  %v5652 = vld [vmem:[#allocation4 + $0x498] sm:$0xff]
  %v5653 = vld [vmem:[#allocation4 + $0x4a0] sm:$0xff]
  %v5654 = vld [vmem:[#allocation4 + $0x4a8] sm:$0xff]
  %v5655 = vld [vmem:[#allocation4 + $0x4b0] sm:$0xff]
  %v5656 = vld [vmem:[#allocation4 + $0x4b8] sm:$0xff]
  %v5657 = vld [vmem:[#allocation4 + $0x4c0] sm:$0xff]
  %v5658 = vld [vmem:[#allocation4 + $0x4c8] sm:$0xff]
  %v5659 = vld [vmem:[#allocation4 + $0x4d0] sm:$0xff]
  %v5660 = vld [vmem:[#allocation4 + $0x4d8] sm:$0xff]
  %v5661 = vld [vmem:[#allocation4 + $0x4e0] sm:$0xff]
  %v5662 = vld [vmem:[#allocation4 + $0x4e8] sm:$0xff]
  %v5663 = vld [vmem:[#allocation4 + $0x4f0] sm:$0xff]
  %v5664 = vld [vmem:[#allocation4 + $0x4f8] sm:$0xff]
  %v5665 = vld [vmem:[#allocation4 + $0x500] sm:$0xff]
  %v5666 = vld [vmem:[#allocation4 + $0x508] sm:$0xff]
  %v5667 = vld [vmem:[#allocation4 + $0x510] sm:$0xff]
  %v5668 = vld [vmem:[#allocation4 + $0x518] sm:$0xff]
  %v5669 = vld [vmem:[#allocation4 + $0x520] sm:$0xff]
  %v5670 = vld [vmem:[#allocation4 + $0x528] sm:$0xff]
  %v5671 = vld [vmem:[#allocation4 + $0x530] sm:$0xff]
  %v5672 = vld [vmem:[#allocation4 + $0x538] sm:$0xff]
  %v5673 = vld [vmem:[#allocation4 + $0x540] sm:$0xff]
  %v5674 = vld [vmem:[#allocation4 + $0x548] sm:$0xff]
  %v5675 = vld [vmem:[#allocation4 + $0x550] sm:$0xff]
  %v5676 = vld [vmem:[#allocation4 + $0x558] sm:$0xff]
  %v5677 = vld [vmem:[#allocation4 + $0x560] sm:$0xff]
  %v5678 = vld [vmem:[#allocation4 + $0x568] sm:$0xff]
  %v5679 = vld [vmem:[#allocation4 + $0x570] sm:$0xff]
  %v5680 = vld [vmem:[#allocation4 + $0x578] sm:$0xff]
  %v5681 = vld [vmem:[#allocation4 + $0x580] sm:$0xff]
  %v5682 = vld [vmem:[#allocation4 + $0x588] sm:$0xff]
  %v5683 = vld [vmem:[#allocation4 + $0x590] sm:$0xff]
  %v5684 = vld [vmem:[#allocation4 + $0x598] sm:$0xff]
  %v5685 = vld [vmem:[#allocation4 + $0x5a0] sm:$0xff]
  %v5686 = vld [vmem:[#allocation4 + $0x5a8] sm:$0xff]
  %v5687 = vld [vmem:[#allocation4 + $0x5b0] sm:$0xff]
  %v5688 = vld [vmem:[#allocation4 + $0x5b8] sm:$0xff]
  %v5689 = vld [vmem:[#allocation4 + $0x5c0] sm:$0xff]
  %v5690 = vld [vmem:[#allocation4 + $0x5c8] sm:$0xff]
  %v5691 = vld [vmem:[#allocation4 + $0x5d0] sm:$0xff]
  %v5692 = vld [vmem:[#allocation4 + $0x5d8] sm:$0xff]
  %v5693 = vld [vmem:[#allocation4 + $0x5e0] sm:$0xff]
  %v5694 = vld [vmem:[#allocation4 + $0x5e8] sm:$0xff]
  %v5695 = vld [vmem:[#allocation4 + $0x5f0] sm:$0xff]
  %v5696 = vld [vmem:[#allocation4 + $0x5f8] sm:$0xff]
  %v5697 = vld [vmem:[#allocation4 + $0x600] sm:$0xff]
  %v5698 = vld [vmem:[#allocation4 + $0x608] sm:$0xff]
  %v5699 = vld [vmem:[#allocation4 + $0x610] sm:$0xff]
  %v5700 = vld [vmem:[#allocation4 + $0x618] sm:$0xff]
  %v5701 = vld [vmem:[#allocation4 + $0x620] sm:$0xff]
  %v5702 = vld [vmem:[#allocation4 + $0x628] sm:$0xff]
  %v5703 = vld [vmem:[#allocation4 + $0x630] sm:$0xff]
  %v5704 = vld [vmem:[#allocation4 + $0x638] sm:$0xff]
  %v5705 = vld [vmem:[#allocation4 + $0x640] sm:$0xff]
  %v5706 = vld [vmem:[#allocation4 + $0x648] sm:$0xff]
  %v5707 = vld [vmem:[#allocation4 + $0x650] sm:$0xff]
  %v5708 = vld [vmem:[#allocation4 + $0x658] sm:$0xff]
  %v5709 = vld [vmem:[#allocation4 + $0x660] sm:$0xff]
  %v5710 = vld [vmem:[#allocation4 + $0x668] sm:$0xff]
  %v5711 = vld [vmem:[#allocation4 + $0x670] sm:$0xff]
  %v5712 = vld [vmem:[#allocation4 + $0x678] sm:$0xff]
  %v5713 = vld [vmem:[#allocation4 + $0x680] sm:$0xff]
  %v5714 = vld [vmem:[#allocation4 + $0x688] sm:$0xff]
  %v5715 = vld [vmem:[#allocation4 + $0x690] sm:$0xff]
  %v5716 = vld [vmem:[#allocation4 + $0x698] sm:$0xff]
  %v5717 = vld [vmem:[#allocation4 + $0x6a0] sm:$0xff]
  %v5718 = vld [vmem:[#allocation4 + $0x6a8] sm:$0xff]
  %v5719 = vld [vmem:[#allocation4 + $0x6b0] sm:$0xff]
  %v5720 = vld [vmem:[#allocation4 + $0x6b8] sm:$0xff]
  %v5721 = vld [vmem:[#allocation4 + $0x6c0] sm:$0xff]
  %v5722 = vld [vmem:[#allocation4 + $0x6c8] sm:$0xff]
  %v5723 = vld [vmem:[#allocation4 + $0x6d0] sm:$0xff]
  %v5724 = vld [vmem:[#allocation4 + $0x6d8] sm:$0xff]
  %v5725 = vld [vmem:[#allocation4 + $0x6e0] sm:$0xff]
  %v5726 = vld [vmem:[#allocation4 + $0x6e8] sm:$0xff]
  %v5727 = vld [vmem:[#allocation4 + $0x6f0] sm:$0xff]
  %v5728 = vld [vmem:[#allocation4 + $0x6f8] sm:$0xff]
  %v5729 = vld [vmem:[#allocation4 + $0x700] sm:$0xff]
  %v5730 = vld [vmem:[#allocation4 + $0x708] sm:$0xff]
  %v5731 = vld [vmem:[#allocation4 + $0x710] sm:$0xff]
  %v5732 = vld [vmem:[#allocation4 + $0x718] sm:$0xff]
  %v5733 = vld [vmem:[#allocation4 + $0x720] sm:$0xff]
  %v5734 = vld [vmem:[#allocation4 + $0x728] sm:$0xff]
  %v5735 = vld [vmem:[#allocation4 + $0x730] sm:$0xff]
  %v5736 = vld [vmem:[#allocation4 + $0x738] sm:$0xff]
  %v5737 = vld [vmem:[#allocation4 + $0x740] sm:$0xff]
  %v5738 = vld [vmem:[#allocation4 + $0x748] sm:$0xff]
  %v5739 = vld [vmem:[#allocation4 + $0x750] sm:$0xff]
  %v5740 = vld [vmem:[#allocation4 + $0x758] sm:$0xff]
  %v5741 = vld [vmem:[#allocation4 + $0x760] sm:$0xff]
  %v5742 = vld [vmem:[#allocation4 + $0x768] sm:$0xff]
  %v5743 = vld [vmem:[#allocation4 + $0x770] sm:$0xff]
  %v5744 = vld [vmem:[#allocation4 + $0x778] sm:$0xff]
  %v5745 = vld [vmem:[#allocation4 + $0x780] sm:$0xff]
  %v5746 = vld [vmem:[#allocation4 + $0x788] sm:$0xff]
  %v5747 = vld [vmem:[#allocation4 + $0x790] sm:$0xff]
  %v5748 = vld [vmem:[#allocation4 + $0x798] sm:$0xff]
  %v5749 = vld [vmem:[#allocation4 + $0x7a0] sm:$0xff]
  %v5750 = vld [vmem:[#allocation4 + $0x7a8] sm:$0xff]
  %v5751 = vld [vmem:[#allocation4 + $0x7b0] sm:$0xff]
  %v5752 = vld [vmem:[#allocation4 + $0x7b8] sm:$0xff]
  %v5753 = vld [vmem:[#allocation4 + $0x7c0] sm:$0xff]
  %v5754 = vld [vmem:[#allocation4 + $0x7c8] sm:$0xff]
  %v5755 = vld [vmem:[#allocation4 + $0x7d0] sm:$0xff]
  %v5756 = vld [vmem:[#allocation4 + $0x7d8] sm:$0xff]
  %v5757 = vld [vmem:[#allocation4 + $0x7e0] sm:$0xff]
  %v5758 = vld [vmem:[#allocation4 + $0x7e8] sm:$0xff]
  %v5759 = vld [vmem:[#allocation4 + $0x7f0] sm:$0xff]
  %v5760 = vld [vmem:[#allocation4 + $0x7f8] sm:$0xff]
  %v5761 = vld [vmem:[#allocation4 + $0x800] sm:$0xff]
  %v5762 = vld [vmem:[#allocation4 + $0x808] sm:$0xff]
  %v5763 = vld [vmem:[#allocation4 + $0x810] sm:$0xff]
  %v5764 = vld [vmem:[#allocation4 + $0x818] sm:$0xff]
  %v5765 = vld [vmem:[#allocation4 + $0x820] sm:$0xff]
  %v5766 = vld [vmem:[#allocation4 + $0x828] sm:$0xff]
  %v5767 = vld [vmem:[#allocation4 + $0x830] sm:$0xff]
  %v5768 = vld [vmem:[#allocation4 + $0x838] sm:$0xff]
  %v5769 = vld [vmem:[#allocation4 + $0x840] sm:$0xff]
  %v5770 = vld [vmem:[#allocation4 + $0x848] sm:$0xff]
  %v5771 = vld [vmem:[#allocation4 + $0x850] sm:$0xff]
  %v5772 = vld [vmem:[#allocation4 + $0x858] sm:$0xff]
  %v5773 = vld [vmem:[#allocation4 + $0x860] sm:$0xff]
  %v5774 = vld [vmem:[#allocation4 + $0x868] sm:$0xff]
  %v5775 = vld [vmem:[#allocation4 + $0x870] sm:$0xff]
  %v5776 = vld [vmem:[#allocation4 + $0x878] sm:$0xff]
  %v5777 = vld [vmem:[#allocation4 + $0x880] sm:$0xff]
  %v5778 = vld [vmem:[#allocation4 + $0x888] sm:$0xff]
  %v5779 = vld [vmem:[#allocation4 + $0x890] sm:$0xff]
  %v5780 = vld [vmem:[#allocation4 + $0x898] sm:$0xff]
  %v5781 = vld [vmem:[#allocation4 + $0x8a0] sm:$0xff]
  %v5782 = vld [vmem:[#allocation4 + $0x8a8] sm:$0xff]
  %v5783 = vld [vmem:[#allocation4 + $0x8b0] sm:$0xff]
  %v5784 = vld [vmem:[#allocation4 + $0x8b8] sm:$0xff]
  %v5785 = vld [vmem:[#allocation4 + $0x8c0] sm:$0xff]
  %v5786 = vld [vmem:[#allocation4 + $0x8c8] sm:$0xff]
  %v5787 = vld [vmem:[#allocation4 + $0x8d0] sm:$0xff]
  %v5788 = vld [vmem:[#allocation4 + $0x8d8] sm:$0xff]
  %v5789 = vld [vmem:[#allocation4 + $0x8e0] sm:$0xff]
  %v5790 = vld [vmem:[#allocation4 + $0x8e8] sm:$0xff]
  %v5791 = vld [vmem:[#allocation4 + $0x8f0] sm:$0xff]
  %v5792 = vld [vmem:[#allocation4 + $0x8f8] sm:$0xff]
  %v5793 = vld [vmem:[#allocation4 + $0x900] sm:$0xff]
  %v5794 = vld [vmem:[#allocation4 + $0x908] sm:$0xff]
  %v5795 = vld [vmem:[#allocation4 + $0x910] sm:$0xff]
  %v5796 = vld [vmem:[#allocation4 + $0x918] sm:$0xff]
  %v5797 = vld [vmem:[#allocation4 + $0x920] sm:$0xff]
  %v5798 = vld [vmem:[#allocation4 + $0x928] sm:$0xff]
  %v5799 = vld [vmem:[#allocation4 + $0x930] sm:$0xff]
  %v5800 = vld [vmem:[#allocation4 + $0x938] sm:$0xff]
  %v5801 = vld [vmem:[#allocation4 + $0x940] sm:$0xff]
  %v5802 = vld [vmem:[#allocation4 + $0x948] sm:$0xff]
  %v5803 = vld [vmem:[#allocation4 + $0x950] sm:$0xff]
  %v5804 = vld [vmem:[#allocation4 + $0x958] sm:$0xff]
  %v5805 = vld [vmem:[#allocation4 + $0x960] sm:$0xff]
  %v5806 = vld [vmem:[#allocation4 + $0x968] sm:$0xff]
  %v5807 = vld [vmem:[#allocation4 + $0x970] sm:$0xff]
  %v5808 = vld [vmem:[#allocation4 + $0x978] sm:$0xff]
  %v5809 = vld [vmem:[#allocation4 + $0x980] sm:$0xff]
  %v5810 = vld [vmem:[#allocation4 + $0x988] sm:$0xff]
  %v5811 = vld [vmem:[#allocation4 + $0x990] sm:$0xff]
  %v5812 = vld [vmem:[#allocation4 + $0x998] sm:$0xff]
  %v5813 = vld [vmem:[#allocation4 + $0x9a0] sm:$0xff]
  %v5814 = vld [vmem:[#allocation4 + $0x9a8] sm:$0xff]
  %v5815 = vld [vmem:[#allocation4 + $0x9b0] sm:$0xff]
  %v5816 = vld [vmem:[#allocation4 + $0x9b8] sm:$0xff]
  %v5817 = vld [vmem:[#allocation4 + $0x9c0] sm:$0xff]
  %v5818 = vld [vmem:[#allocation4 + $0x9c8] sm:$0xff]
  %v5819 = vld [vmem:[#allocation4 + $0x9d0] sm:$0xff]
  %v5820 = vld [vmem:[#allocation4 + $0x9d8] sm:$0xff]
  %v5821 = vld [vmem:[#allocation4 + $0x9e0] sm:$0xff]
  %v5822 = vld [vmem:[#allocation4 + $0x9e8] sm:$0xff]
  %v5823 = vld [vmem:[#allocation4 + $0x9f0] sm:$0xff]
  %v5824 = vld [vmem:[#allocation4 + $0x9f8] sm:$0xff]
  %v5825 = vld [vmem:[#allocation4 + $0xa00] sm:$0xff]
  %v5826 = vld [vmem:[#allocation4 + $0xa08] sm:$0xff]
  %v5827 = vld [vmem:[#allocation4 + $0xa10] sm:$0xff]
  %v5828 = vld [vmem:[#allocation4 + $0xa18] sm:$0xff]
  %v5829 = vld [vmem:[#allocation4 + $0xa20] sm:$0xff]
  %v5830 = vld [vmem:[#allocation4 + $0xa28] sm:$0xff]
  %v5831 = vld [vmem:[#allocation4 + $0xa30] sm:$0xff]
  %v5832 = vld [vmem:[#allocation4 + $0xa38] sm:$0xff]
  %v5833 = vld [vmem:[#allocation4 + $0xa40] sm:$0xff]
  %v5834 = vld [vmem:[#allocation4 + $0xa48] sm:$0xff]
  %v5835 = vld [vmem:[#allocation4 + $0xa50] sm:$0xff]
  %v5836 = vld [vmem:[#allocation4 + $0xa58] sm:$0xff]
  %v5837 = vld [vmem:[#allocation4 + $0xa60] sm:$0xff]
  %v5838 = vld [vmem:[#allocation4 + $0xa68] sm:$0xff]
  %v5839 = vld [vmem:[#allocation4 + $0xa70] sm:$0xff]
  %v5840 = vld [vmem:[#allocation4 + $0xa78] sm:$0xff]
  %v5841 = vld [vmem:[#allocation4 + $0xa80] sm:$0xff]
  %v5842 = vld [vmem:[#allocation4 + $0xa88] sm:$0xff]
  %v5843 = vld [vmem:[#allocation4 + $0xa90] sm:$0xff]
  %v5844 = vld [vmem:[#allocation4 + $0xa98] sm:$0xff]
  %v5845 = vld [vmem:[#allocation4 + $0xaa0] sm:$0xff]
  %v5846 = vld [vmem:[#allocation4 + $0xaa8] sm:$0xff]
  %v5847 = vld [vmem:[#allocation4 + $0xab0] sm:$0xff]
  %v5848 = vld [vmem:[#allocation4 + $0xab8] sm:$0xff]
  %v5849 = vld [vmem:[#allocation4 + $0xac0] sm:$0xff]
  %v5850 = vld [vmem:[#allocation4 + $0xac8] sm:$0xff]
  %v5851 = vld [vmem:[#allocation4 + $0xad0] sm:$0xff]
  %v5852 = vld [vmem:[#allocation4 + $0xad8] sm:$0xff]
  %v5853 = vld [vmem:[#allocation4 + $0xae0] sm:$0xff]
  %v5854 = vld [vmem:[#allocation4 + $0xae8] sm:$0xff]
  %v5855 = vld [vmem:[#allocation4 + $0xaf0] sm:$0xff]
  %v5856 = vld [vmem:[#allocation4 + $0xaf8] sm:$0xff]
  %v5857 = vld [vmem:[#allocation4 + $0xb00] sm:$0xff]
  %v5858 = vld [vmem:[#allocation4 + $0xb08] sm:$0xff]
  %v5859 = vld [vmem:[#allocation4 + $0xb10] sm:$0xff]
  %v5860 = vld [vmem:[#allocation4 + $0xb18] sm:$0xff]
  %v5861 = vld [vmem:[#allocation4 + $0xb20] sm:$0xff]
  %v5862 = vld [vmem:[#allocation4 + $0xb28] sm:$0xff]
  %v5863 = vld [vmem:[#allocation4 + $0xb30] sm:$0xff]
  %v5864 = vld [vmem:[#allocation4 + $0xb38] sm:$0xff]
  %v5865 = vld [vmem:[#allocation4 + $0xb40] sm:$0xff]
  %v5866 = vld [vmem:[#allocation4 + $0xb48] sm:$0xff]
  %v5867 = vld [vmem:[#allocation4 + $0xb50] sm:$0xff]
  %v5868 = vld [vmem:[#allocation4 + $0xb58] sm:$0xff]
  %v5869 = vld [vmem:[#allocation4 + $0xb60] sm:$0xff]
  %v5870 = vld [vmem:[#allocation4 + $0xb68] sm:$0xff]
  %v5871 = vld [vmem:[#allocation4 + $0xb70] sm:$0xff]
  %v5872 = vld [vmem:[#allocation4 + $0xb78] sm:$0xff]
  %v5873 = vld [vmem:[#allocation4 + $0xb80] sm:$0xff]
  %v5874 = vld [vmem:[#allocation4 + $0xb88] sm:$0xff]
  %v5875 = vld [vmem:[#allocation4 + $0xb90] sm:$0xff]
  %v5876 = vld [vmem:[#allocation4 + $0xb98] sm:$0xff]
  %v5877 = vld [vmem:[#allocation4 + $0xba0] sm:$0xff]
  %v5878 = vld [vmem:[#allocation4 + $0xba8] sm:$0xff]
  %v5879 = vld [vmem:[#allocation4 + $0xbb0] sm:$0xff]
  %v5880 = vld [vmem:[#allocation4 + $0xbb8] sm:$0xff]
  %v5881 = vld [vmem:[#allocation4 + $0xbc0] sm:$0xff]
  %v5882 = vld [vmem:[#allocation4 + $0xbc8] sm:$0xff]
  %v5883 = vld [vmem:[#allocation4 + $0xbd0] sm:$0xff]
  %v5884 = vld [vmem:[#allocation4 + $0xbd8] sm:$0xff]
  %v5885 = vld [vmem:[#allocation4 + $0xbe0] sm:$0xff]
  %v5886 = vld [vmem:[#allocation4 + $0xbe8] sm:$0xff]
  %v5887 = vld [vmem:[#allocation4 + $0xbf0] sm:$0xff]
  %v5888 = vld [vmem:[#allocation4 + $0xbf8] sm:$0xff]
  %v5889 = vld [vmem:[#allocation4 + $0xc00] sm:$0xff]
  %v5890 = vld [vmem:[#allocation4 + $0xc08] sm:$0xff]
  %v5891 = vld [vmem:[#allocation4 + $0xc10] sm:$0xff]
  %v5892 = vld [vmem:[#allocation4 + $0xc18] sm:$0xff]
  %v5893 = vld [vmem:[#allocation4 + $0xc20] sm:$0xff]
  %v5894 = vld [vmem:[#allocation4 + $0xc28] sm:$0xff]
  %v5895 = vld [vmem:[#allocation4 + $0xc30] sm:$0xff]
  %v5896 = vld [vmem:[#allocation4 + $0xc38] sm:$0xff]
  %v5897 = vld [vmem:[#allocation4 + $0xc40] sm:$0xff]
  %v5898 = vld [vmem:[#allocation4 + $0xc48] sm:$0xff]
  %v5899 = vld [vmem:[#allocation4 + $0xc50] sm:$0xff]
  %v5900 = vld [vmem:[#allocation4 + $0xc58] sm:$0xff]
  %v5901 = vld [vmem:[#allocation4 + $0xc60] sm:$0xff]
  %v5902 = vld [vmem:[#allocation4 + $0xc68] sm:$0xff]
  %v5903 = vld [vmem:[#allocation4 + $0xc70] sm:$0xff]
  %v5904 = vld [vmem:[#allocation4 + $0xc78] sm:$0xff]
  %v5905 = vld [vmem:[#allocation4 + $0xc80] sm:$0xff]
  %v5906 = vld [vmem:[#allocation4 + $0xc88] sm:$0xff]
  %v5907 = vld [vmem:[#allocation4 + $0xc90] sm:$0xff]
  %v5908 = vld [vmem:[#allocation4 + $0xc98] sm:$0xff]
  %v5909 = vld [vmem:[#allocation4 + $0xca0] sm:$0xff]
  %v5910 = vld [vmem:[#allocation4 + $0xca8] sm:$0xff]
  %v5911 = vld [vmem:[#allocation4 + $0xcb0] sm:$0xff]
  %v5912 = vld [vmem:[#allocation4 + $0xcb8] sm:$0xff]
  %v5913 = vld [vmem:[#allocation4 + $0xcc0] sm:$0xff]
  %v5914 = vld [vmem:[#allocation4 + $0xcc8] sm:$0xff]
  %v5915 = vld [vmem:[#allocation4 + $0xcd0] sm:$0xff]
  %v5916 = vld [vmem:[#allocation4 + $0xcd8] sm:$0xff]
  %v5917 = vld [vmem:[#allocation4 + $0xce0] sm:$0xff]
  %v5918 = vld [vmem:[#allocation4 + $0xce8] sm:$0xff]
  %v5919 = vld [vmem:[#allocation4 + $0xcf0] sm:$0xff]
  %v5920 = vld [vmem:[#allocation4 + $0xcf8] sm:$0xff]
  %v5921 = vld [vmem:[#allocation4 + $0xd00] sm:$0xff]
  %v5922 = vld [vmem:[#allocation4 + $0xd08] sm:$0xff]
  %v5923 = vld [vmem:[#allocation4 + $0xd10] sm:$0xff]
  %v5924 = vld [vmem:[#allocation4 + $0xd18] sm:$0xff]
  %v5925 = vld [vmem:[#allocation4 + $0xd20] sm:$0xff]
  %v5926 = vld [vmem:[#allocation4 + $0xd28] sm:$0xff]
  %v5927 = vld [vmem:[#allocation4 + $0xd30] sm:$0xff]
  %v5928 = vld [vmem:[#allocation4 + $0xd38] sm:$0xff]
  %v5929 = vld [vmem:[#allocation4 + $0xd40] sm:$0xff]
  %v5930 = vld [vmem:[#allocation4 + $0xd48] sm:$0xff]
  %v5931 = vld [vmem:[#allocation4 + $0xd50] sm:$0xff]
  %v5932 = vld [vmem:[#allocation4 + $0xd58] sm:$0xff]
  %v5933 = vld [vmem:[#allocation4 + $0xd60] sm:$0xff]
  %v5934 = vld [vmem:[#allocation4 + $0xd68] sm:$0xff]
  %v5935 = vld [vmem:[#allocation4 + $0xd70] sm:$0xff]
  %v5936 = vld [vmem:[#allocation4 + $0xd78] sm:$0xff]
  %v5937 = vld [vmem:[#allocation4 + $0xd80] sm:$0xff]
  %v5938 = vld [vmem:[#allocation4 + $0xd88] sm:$0xff]
  %v5939 = vld [vmem:[#allocation4 + $0xd90] sm:$0xff]
  %v5940 = vld [vmem:[#allocation4 + $0xd98] sm:$0xff]
  %v5941 = vld [vmem:[#allocation4 + $0xda0] sm:$0xff]
  %v5942 = vld [vmem:[#allocation4 + $0xda8] sm:$0xff]
  %v5943 = vld [vmem:[#allocation4 + $0xdb0] sm:$0xff]
  %v5944 = vld [vmem:[#allocation4 + $0xdb8] sm:$0xff]
  %v5945 = vld [vmem:[#allocation4 + $0xdc0] sm:$0xff]
  %v5946 = vld [vmem:[#allocation4 + $0xdc8] sm:$0xff]
  %v5947 = vld [vmem:[#allocation4 + $0xdd0] sm:$0xff]
  %v5948 = vld [vmem:[#allocation4 + $0xdd8] sm:$0xff]
  %v5949 = vld [vmem:[#allocation4 + $0xde0] sm:$0xff]
  %v5950 = vld [vmem:[#allocation4 + $0xde8] sm:$0xff]
  %v5951 = vld [vmem:[#allocation4 + $0xdf0] sm:$0xff]
  %v5952 = vld [vmem:[#allocation4 + $0xdf8] sm:$0xff]
  %v5953 = vld [vmem:[#allocation4 + $0xe00] sm:$0xff]
  %v5954 = vld [vmem:[#allocation4 + $0xe08] sm:$0xff]
  %v5955 = vld [vmem:[#allocation4 + $0xe10] sm:$0xff]
  %v5956 = vld [vmem:[#allocation4 + $0xe18] sm:$0xff]
  %v5957 = vld [vmem:[#allocation4 + $0xe20] sm:$0xff]
  %v5958 = vld [vmem:[#allocation4 + $0xe28] sm:$0xff]
  %v5959 = vld [vmem:[#allocation4 + $0xe30] sm:$0xff]
  %v5960 = vld [vmem:[#allocation4 + $0xe38] sm:$0xff]
  %v5961 = vld [vmem:[#allocation4 + $0xe40] sm:$0xff]
  %v5962 = vld [vmem:[#allocation4 + $0xe48] sm:$0xff]
  %v5963 = vld [vmem:[#allocation4 + $0xe50] sm:$0xff]
  %v5964 = vld [vmem:[#allocation4 + $0xe58] sm:$0xff]
  %v5965 = vld [vmem:[#allocation4 + $0xe60] sm:$0xff]
  %v5966 = vld [vmem:[#allocation4 + $0xe68] sm:$0xff]
  %v5967 = vld [vmem:[#allocation4 + $0xe70] sm:$0xff]
  %v5968 = vld [vmem:[#allocation4 + $0xe78] sm:$0xff]
  %v5969 = vld [vmem:[#allocation4 + $0xe80] sm:$0xff]
  %v5970 = vld [vmem:[#allocation4 + $0xe88] sm:$0xff]
  %v5971 = vld [vmem:[#allocation4 + $0xe90] sm:$0xff]
  %v5972 = vld [vmem:[#allocation4 + $0xe98] sm:$0xff]
  %v5973 = vld [vmem:[#allocation4 + $0xea0] sm:$0xff]
  %v5974 = vld [vmem:[#allocation4 + $0xea8] sm:$0xff]
  %v5975 = vld [vmem:[#allocation4 + $0xeb0] sm:$0xff]
  %v5976 = vld [vmem:[#allocation4 + $0xeb8] sm:$0xff]
  %v5977 = vld [vmem:[#allocation4 + $0xec0] sm:$0xff]
  %v5978 = vld [vmem:[#allocation4 + $0xec8] sm:$0xff]
  %v5979 = vld [vmem:[#allocation4 + $0xed0] sm:$0xff]
  %v5980 = vld [vmem:[#allocation4 + $0xed8] sm:$0xff]
  %v5981 = vld [vmem:[#allocation4 + $0xee0] sm:$0xff]
  %v5982 = vld [vmem:[#allocation4 + $0xee8] sm:$0xff]
  %v5983 = vld [vmem:[#allocation4 + $0xef0] sm:$0xff]
  %v5984 = vld [vmem:[#allocation4 + $0xef8] sm:$0xff]
  %v5985 = vld [vmem:[#allocation4 + $0xf00] sm:$0xff]
  %v5986 = vld [vmem:[#allocation4 + $0xf08] sm:$0xff]
  %v5987 = vld [vmem:[#allocation4 + $0xf10] sm:$0xff]
  %v5988 = vld [vmem:[#allocation4 + $0xf18] sm:$0xff]
  %v5989 = vld [vmem:[#allocation4 + $0xf20] sm:$0xff]
  %v5990 = vld [vmem:[#allocation4 + $0xf28] sm:$0xff]
  %v5991 = vld [vmem:[#allocation4 + $0xf30] sm:$0xff]
  %v5992 = vld [vmem:[#allocation4 + $0xf38] sm:$0xff]
  %v6024 = vunpack.c.l.b16 %v5474
  %v6025 = vunpack.c.h.b16 %v5474
  %v6026 = vunpack.c.l.b16 %v5475
  %v6027 = vunpack.c.h.b16 %v5475
  %v6028 = vunpack.c.l.b16 %v5476
  %v6029 = vunpack.c.h.b16 %v5476
  %v6030 = vunpack.c.l.b16 %v5477
  %v6031 = vunpack.c.h.b16 %v5477
  %v6032 = vunpack.c.l.b16 %v5478
  %v6033 = vunpack.c.h.b16 %v5478
  %v6034 = vunpack.c.l.b16 %v5479
  %v6035 = vunpack.c.h.b16 %v5479
  %v6036 = vunpack.c.l.b16 %v5480
  %v6037 = vunpack.c.h.b16 %v5480
  %v6038 = vunpack.c.l.b16 %v5481
  %v6039 = vunpack.c.h.b16 %v5481
  %v6040 = vunpack.c.l.b16 %v5482
  %v6041 = vunpack.c.h.b16 %v5482
  %v6042 = vunpack.c.l.b16 %v5483
  %v6043 = vunpack.c.h.b16 %v5483
  %v6044 = vunpack.c.l.b16 %v5484
  %v6045 = vunpack.c.h.b16 %v5484
  %v6046 = vunpack.c.l.b16 %v5485
  %v6047 = vunpack.c.h.b16 %v5485
  %v6048 = vunpack.c.l.b16 %v5486
  %v6049 = vunpack.c.h.b16 %v5486
  %v6050 = vunpack.c.l.b16 %v5487
  %v6051 = vunpack.c.h.b16 %v5487
  %v6052 = vunpack.c.l.b16 %v5488
  %v6053 = vunpack.c.h.b16 %v5488
  %v6054 = vunpack.c.l.b16 %v5489
  %v6055 = vunpack.c.h.b16 %v5489
  %v6056 = vunpack.c.l.b16 %v5490
  %v6057 = vunpack.c.h.b16 %v5490
  %v6058 = vunpack.c.l.b16 %v5491
  %v6059 = vunpack.c.h.b16 %v5491
  %v6060 = vunpack.c.l.b16 %v5492
  %v6061 = vunpack.c.h.b16 %v5492
  %v6062 = vunpack.c.l.b16 %v5493
  %v6063 = vunpack.c.h.b16 %v5493
  %v6064 = vunpack.c.l.b16 %v5494
  %v6065 = vunpack.c.h.b16 %v5494
  %v6066 = vunpack.c.l.b16 %v5495
  %v6067 = vunpack.c.h.b16 %v5495
  %v6068 = vunpack.c.l.b16 %v5496
  %v6069 = vunpack.c.h.b16 %v5496
  %v6070 = vunpack.c.l.b16 %v5497
  %v6071 = vunpack.c.h.b16 %v5497
  %v6072 = vunpack.c.l.b16 %v5498
  %v6073 = vunpack.c.h.b16 %v5498
  %v6074 = vunpack.c.l.b16 %v5499
  %v6075 = vunpack.c.h.b16 %v5499
  %v6076 = vunpack.c.l.b16 %v5500
  %v6077 = vunpack.c.h.b16 %v5500
  %v6078 = vunpack.c.l.b16 %v5501
  %v6079 = vunpack.c.h.b16 %v5501
  %v6080 = vunpack.c.l.b16 %v5502
  %v6081 = vunpack.c.h.b16 %v5502
  %v6082 = vunpack.c.l.b16 %v5503
  %v6083 = vunpack.c.h.b16 %v5503
  %v6084 = vunpack.c.l.b16 %v5504
  %v6085 = vpack.c.b16 %v6024, %v6024
  %v6086 = vpack.c.b16 %v6025, %v6025
  %v6087 = vpack.c.b16 %v6026, %v6026
  %v6088 = vpack.c.b16 %v6027, %v6027
  %v6089 = vpack.c.b16 %v6028, %v6028
  %v6090 = vpack.c.b16 %v6029, %v6029
  %v6091 = vpack.c.b16 %v6030, %v6030
  %v6092 = vpack.c.b16 %v6031, %v6031
  %v6093 = vpack.c.b16 %v6032, %v6032
  %v6094 = vpack.c.b16 %v6033, %v6033
  %v6095 = vpack.c.b16 %v6034, %v6034
  %v6096 = vpack.c.b16 %v6035, %v6035
  %v6097 = vpack.c.b16 %v6036, %v6036
  %v6098 = vpack.c.b16 %v6037, %v6037
  %v6099 = vpack.c.b16 %v6038, %v6038
  %v6100 = vpack.c.b16 %v6039, %v6039
  %v6101 = vpack.c.b16 %v6040, %v6040
  %v6102 = vpack.c.b16 %v6041, %v6041
  %v6103 = vpack.c.b16 %v6042, %v6042
  %v6104 = vpack.c.b16 %v6043, %v6043
  %v6105 = vpack.c.b16 %v6044, %v6044
  %v6106 = vpack.c.b16 %v6045, %v6045
  %v6107 = vpack.c.b16 %v6046, %v6046
  %v6108 = vpack.c.b16 %v6047, %v6047
  %v6109 = vpack.c.b16 %v6048, %v6048
  %v6110 = vpack.c.b16 %v6049, %v6049
  %v6111 = vpack.c.b16 %v6050, %v6050
  %v6112 = vpack.c.b16 %v6051, %v6051
  %v6113 = vpack.c.b16 %v6052, %v6052
  %v6114 = vpack.c.b16 %v6053, %v6053
  %v6115 = vpack.c.b16 %v6054, %v6054
  %v6116 = vpack.c.b16 %v6055, %v6055
  %v6117 = vpack.c.b16 %v6056, %v6056
  %v6118 = vpack.c.b16 %v6057, %v6057
  %v6119 = vpack.c.b16 %v6058, %v6058
  %v6120 = vpack.c.b16 %v6059, %v6059
  %v6121 = vpack.c.b16 %v6060, %v6060
  %v6122 = vpack.c.b16 %v6061, %v6061
  %v6123 = vpack.c.b16 %v6062, %v6062
  %v6124 = vpack.c.b16 %v6063, %v6063
  %v6125 = vpack.c.b16 %v6064, %v6064
  %v6126 = vpack.c.b16 %v6065, %v6065
  %v6127 = vpack.c.b16 %v6066, %v6066
  %v6128 = vpack.c.b16 %v6067, %v6067
  %v6129 = vpack.c.b16 %v6068, %v6068
  %v6130 = vpack.c.b16 %v6069, %v6069
  %v6131 = vpack.c.b16 %v6070, %v6070
  %v6132 = vpack.c.b16 %v6071, %v6071
  %v6133 = vpack.c.b16 %v6072, %v6072
  %v6134 = vpack.c.b16 %v6073, %v6073
  %v6135 = vpack.c.b16 %v6074, %v6074
  %v6136 = vpack.c.b16 %v6075, %v6075
  %v6137 = vpack.c.b16 %v6076, %v6076
  %v6138 = vpack.c.b16 %v6077, %v6077
  %v6139 = vpack.c.b16 %v6078, %v6078
  %v6140 = vpack.c.b16 %v6079, %v6079
  %v6141 = vpack.c.b16 %v6080, %v6080
  %v6142 = vpack.c.b16 %v6081, %v6081
  %v6143 = vpack.c.b16 %v6082, %v6082
  %v6144 = vpack.c.b16 %v6083, %v6083
  %v6145 = vpack.c.b16 %v6084, %v6084
  %6207 = vmatprep.subr.bf16.mxu0 0
  %6208 = vmatpush1.bf16.msra.mxu0 %v5505
  %6209 = vmatprep.subr.bf16.mxu0 0
  %6210 = vmatpush1.bf16.msra.mxu0 %v5506
  %6211 = vmatprep.subr.bf16.mxu0 0
  %6212 = vmatpush1.bf16.msra.mxu0 %v5507
  %6213 = vmatprep.subr.bf16.mxu0 0
  %6214 = vmatpush1.bf16.msra.mxu0 %v5508
  %6215 = vmatprep.subr.bf16.mxu0 0
  %6216 = vmatpush1.bf16.msra.mxu0 %v5509
  %6217 = vmatprep.subr.bf16.mxu0 0
  %6218 = vmatpush1.bf16.msra.mxu0 %v5510
  %6219 = vmatprep.subr.bf16.mxu0 0
  %6220 = vmatpush1.bf16.msra.mxu0 %v5511
  %6221 = vmatprep.subr.bf16.mxu0 0
  %6222 = vmatpush1.bf16.msra.mxu0 %v5512
  %6223 = vmatprep.subr.bf16.mxu0 0
  %6224 = vmatpush1.bf16.msra.mxu0 %v5513
  %6225 = vmatprep.subr.bf16.mxu0 0
  %6226 = vmatpush1.bf16.msra.mxu0 %v5514
  %6227 = vmatprep.subr.bf16.mxu0 0
  %6228 = vmatpush1.bf16.msra.mxu0 %v5515
  %6229 = vmatprep.subr.bf16.mxu0 0
  %6230 = vmatpush1.bf16.msra.mxu0 %v5516
  %6231 = vmatprep.subr.bf16.mxu0 0
  %6232 = vmatpush1.bf16.msra.mxu0 %v5517
  %6233 = vmatprep.subr.bf16.mxu0 0
  %6234 = vmatpush1.bf16.msra.mxu0 %v5518
  %6235 = vmatprep.subr.bf16.mxu0 0
  %6236 = vmatpush1.bf16.msra.mxu0 %v5519
  %6237 = vmatprep.subr.bf16.mxu0 0
  %6238 = vmatpush1.bf16.msra.mxu0 %v5520
  %6239 = vmatprep.mubr.bf16.mxu0 %v6086
  %6240 = vmatmul.mubr.bf16.gmra.mrb[0].mxu0 %v6085
  %v6241 = vpop.f32.mrb[0].mxu0
  %v6242 = vadd.f32 0.0, %v6241
  %v6243 = vpop.f32.mrb[0].mxu0
  %v6244 = vpop.f32.mrb[0].mxu0
  %v6245 = vpop.f32.mrb[0].mxu0
  %6246 = vdwg.mxu0
  %6247 = vmatprep.subr.bf16.mxu0 0
  %6248 = vmatpush1.bf16.msra.mxu0 %v5521
  %6249 = vmatprep.subr.bf16.mxu0 0
  %6250 = vmatpush1.bf16.msra.mxu0 %v5522
  %6251 = vmatprep.subr.bf16.mxu0 0
  %6252 = vmatpush1.bf16.msra.mxu0 %v5523
  %6253 = vmatprep.subr.bf16.mxu0 0
  %6254 = vmatpush1.bf16.msra.mxu0 %v5524
  %6255 = vmatprep.subr.bf16.mxu0 0
  %6256 = vmatpush1.bf16.msra.mxu0 %v5525
  %6257 = vmatprep.subr.bf16.mxu0 0
  %6258 = vmatpush1.bf16.msra.mxu0 %v5526
  %6259 = vmatprep.subr.bf16.mxu0 0
  %6260 = vmatpush1.bf16.msra.mxu0 %v5527
  %6261 = vmatprep.subr.bf16.mxu0 0
  %6262 = vmatpush1.bf16.msra.mxu0 %v5528
  %6263 = vmatprep.subr.bf16.mxu0 0
  %6264 = vmatpush1.bf16.msra.mxu0 %v5529
  %6265 = vmatprep.subr.bf16.mxu0 0
  %6266 = vmatpush1.bf16.msra.mxu0 %v5530
  %6267 = vmatprep.subr.bf16.mxu0 0
  %6268 = vmatpush1.bf16.msra.mxu0 %v5531
  %6269 = vmatprep.subr.bf16.mxu0 0
  %6270 = vmatpush1.bf16.msra.mxu0 %v5532
  %6271 = vmatprep.subr.bf16.mxu0 0
  %6272 = vmatpush1.bf16.msra.mxu0 %v5533
  %6273 = vmatprep.subr.bf16.mxu0 0
  %6274 = vmatpush1.bf16.msra.mxu0 %v5534
  %6275 = vmatprep.subr.bf16.mxu0 0
  %6276 = vmatpush1.bf16.msra.mxu0 %v5535
  %6277 = vmatprep.subr.bf16.mxu0 0
  %6278 = vmatpush1.bf16.msra.mxu0 %v5536
  %6279 = vmatprep.mubr.bf16.mxu0 %v6088
  %6280 = vmatmul.mubr.bf16.gmra.mrb[0].mxu0 %v6087
  %v6281 = vpop.f32.mrb[0].mxu0
  %v6282 = vadd.f32 %v6242, %v6281
  %v6283 = vpop.f32.mrb[0].mxu0
  %v6284 = vpop.f32.mrb[0].mxu0
  %v6285 = vpop.f32.mrb[0].mxu0
  %6286 = vdwg.mxu0
  %6287 = vmatprep.subr.bf16.mxu0 0
  %6288 = vmatpush1.bf16.msra.mxu0 %v5537
  %6289 = vmatprep.subr.bf16.mxu0 0
  %6290 = vmatpush1.bf16.msra.mxu0 %v5538
  %6291 = vmatprep.subr.bf16.mxu0 0
  %6292 = vmatpush1.bf16.msra.mxu0 %v5539
  %6293 = vmatprep.subr.bf16.mxu0 0
  %6294 = vmatpush1.bf16.msra.mxu0 %v5540
  %6295 = vmatprep.subr.bf16.mxu0 0
  %6296 = vmatpush1.bf16.msra.mxu0 %v5541
  %6297 = vmatprep.subr.bf16.mxu0 0
  %6298 = vmatpush1.bf16.msra.mxu0 %v5542
  %6299 = vmatprep.subr.bf16.mxu0 0
  %6300 = vmatpush1.bf16.msra.mxu0 %v5543
  %6301 = vmatprep.subr.bf16.mxu0 0
  %6302 = vmatpush1.bf16.msra.mxu0 %v5544
  %6303 = vmatprep.subr.bf16.mxu0 0
  %6304 = vmatpush1.bf16.msra.mxu0 %v5545
  %6305 = vmatprep.subr.bf16.mxu0 0
  %6306 = vmatpush1.bf16.msra.mxu0 %v5546
  %6307 = vmatprep.subr.bf16.mxu0 0
  %6308 = vmatpush1.bf16.msra.mxu0 %v5547
  %6309 = vmatprep.subr.bf16.mxu0 0
  %6310 = vmatpush1.bf16.msra.mxu0 %v5548
  %6311 = vmatprep.subr.bf16.mxu0 0
  %6312 = vmatpush1.bf16.msra.mxu0 %v5549
  %6313 = vmatprep.subr.bf16.mxu0 0
  %6314 = vmatpush1.bf16.msra.mxu0 %v5550
  %6315 = vmatprep.subr.bf16.mxu0 0
  %6316 = vmatpush1.bf16.msra.mxu0 %v5551
  %6317 = vmatprep.subr.bf16.mxu0 0
  %6318 = vmatpush1.bf16.msra.mxu0 %v5552
  %6319 = vmatprep.mubr.bf16.mxu0 %v6090
  %6320 = vmatmul.mubr.bf16.gmra.mrb[0].mxu0 %v6089
  %v6321 = vpop.f32.mrb[0].mxu0
  %v6322 = vadd.f32 %v6282, %v6321
  %v6323 = vpop.f32.mrb[0].mxu0
  %v6324 = vpop.f32.mrb[0].mxu0
  %v6325 = vpop.f32.mrb[0].mxu0
  %6326 = vdwg.mxu0
  %6327 = vmatprep.subr.bf16.mxu0 0
  %6328 = vmatpush1.bf16.msra.mxu0 %v5553
  %6329 = vmatprep.subr.bf16.mxu0 0
  %6330 = vmatpush1.bf16.msra.mxu0 %v5554
  %6331 = vmatprep.subr.bf16.mxu0 0
  %6332 = vmatpush1.bf16.msra.mxu0 %v5555
  %6333 = vmatprep.subr.bf16.mxu0 0
  %6334 = vmatpush1.bf16.msra.mxu0 %v5556
  %6335 = vmatprep.subr.bf16.mxu0 0
  %6336 = vmatpush1.bf16.msra.mxu0 %v5557
  %6337 = vmatprep.subr.bf16.mxu0 0
  %6338 = vmatpush1.bf16.msra.mxu0 %v5558
  %6339 = vmatprep.subr.bf16.mxu0 0
  %6340 = vmatpush1.bf16.msra.mxu0 %v5559
  %6341 = vmatprep.subr.bf16.mxu0 0
  %6342 = vmatpush1.bf16.msra.mxu0 %v5560
  %6343 = vmatprep.subr.bf16.mxu0 0
  %6344 = vmatpush1.bf16.msra.mxu0 %v5561
  %6345 = vmatprep.subr.bf16.mxu0 0
  %6346 = vmatpush1.bf16.msra.mxu0 %v5562
  %6347 = vmatprep.subr.bf16.mxu0 0
  %6348 = vmatpush1.bf16.msra.mxu0 %v5563
  %6349 = vmatprep.subr.bf16.mxu0 0
  %6350 = vmatpush1.bf16.msra.mxu0 %v5564
  %6351 = vmatprep.subr.bf16.mxu0 0
  %6352 = vmatpush1.bf16.msra.mxu0 %v5565
  %6353 = vmatprep.subr.bf16.mxu0 0
  %6354 = vmatpush1.bf16.msra.mxu0 %v5566
  %6355 = vmatprep.subr.bf16.mxu0 0
  %6356 = vmatpush1.bf16.msra.mxu0 %v5567
  %6357 = vmatprep.subr.bf16.mxu0 0
  %6358 = vmatpush1.bf16.msra.mxu0 %v5568
  %6359 = vmatprep.mubr.bf16.mxu0 %v6092
  %6360 = vmatmul.mubr.bf16.gmra.mrb[0].mxu0 %v6091
  %v6361 = vpop.f32.mrb[0].mxu0
  %v6362 = vadd.f32 %v6322, %v6361
  %v6363 = vpop.f32.mrb[0].mxu0
  %v6364 = vpop.f32.mrb[0].mxu0
  %v6365 = vpop.f32.mrb[0].mxu0
  %6366 = vdwg.mxu0
  %6367 = vmatprep.subr.bf16.mxu0 0
  %6368 = vmatpush1.bf16.msra.mxu0 %v5569
  %6369 = vmatprep.subr.bf16.mxu0 0
  %6370 = vmatpush1.bf16.msra.mxu0 %v5570
  %6371 = vmatprep.subr.bf16.mxu0 0
  %6372 = vmatpush1.bf16.msra.mxu0 %v5571
  %6373 = vmatprep.subr.bf16.mxu0 0
  %6374 = vmatpush1.bf16.msra.mxu0 %v5572
  %6375 = vmatprep.subr.bf16.mxu0 0
  %6376 = vmatpush1.bf16.msra.mxu0 %v5573
  %6377 = vmatprep.subr.bf16.mxu0 0
  %6378 = vmatpush1.bf16.msra.mxu0 %v5574
  %6379 = vmatprep.subr.bf16.mxu0 0
  %6380 = vmatpush1.bf16.msra.mxu0 %v5575
  %6381 = vmatprep.subr.bf16.mxu0 0
  %6382 = vmatpush1.bf16.msra.mxu0 %v5576
  %6383 = vmatprep.subr.bf16.mxu0 0
  %6384 = vmatpush1.bf16.msra.mxu0 %v5577
  %6385 = vmatprep.subr.bf16.mxu0 0
  %6386 = vmatpush1.bf16.msra.mxu0 %v5578
  %6387 = vmatprep.subr.bf16.mxu0 0
  %6388 = vmatpush1.bf16.msra.mxu0 %v5579
  %6389 = vmatprep.subr.bf16.mxu0 0
  %6390 = vmatpush1.bf16.msra.mxu0 %v5580
  %6391 = vmatprep.subr.bf16.mxu0 0
  %6392 = vmatpush1.bf16.msra.mxu0 %v5581
  %6393 = vmatprep.subr.bf16.mxu0 0
  %6394 = vmatpush1.bf16.msra.mxu0 %v5582
  %6395 = vmatprep.subr.bf16.mxu0 0
  %6396 = vmatpush1.bf16.msra.mxu0 %v5583
  %6397 = vmatprep.subr.bf16.mxu0 0
  %6398 = vmatpush1.bf16.msra.mxu0 %v5584
  %6399 = vmatprep.mubr.bf16.mxu0 %v6094
  %6400 = vmatmul.mubr.bf16.gmra.mrb[0].mxu0 %v6093
  %v6401 = vpop.f32.mrb[0].mxu0
  %v6402 = vadd.f32 %v6362, %v6401
  %v6403 = vpop.f32.mrb[0].mxu0
  %v6404 = vpop.f32.mrb[0].mxu0
  %v6405 = vpop.f32.mrb[0].mxu0
  %6406 = vdwg.mxu0
  %6407 = vmatprep.subr.bf16.mxu0 0
  %6408 = vmatpush1.bf16.msra.mxu0 %v5585
  %6409 = vmatprep.subr.bf16.mxu0 0
  %6410 = vmatpush1.bf16.msra.mxu0 %v5586
  %6411 = vmatprep.subr.bf16.mxu0 0
  %6412 = vmatpush1.bf16.msra.mxu0 %v5587
  %6413 = vmatprep.subr.bf16.mxu0 0
  %6414 = vmatpush1.bf16.msra.mxu0 %v5588
  %6415 = vmatprep.subr.bf16.mxu0 0
  %6416 = vmatpush1.bf16.msra.mxu0 %v5589
  %6417 = vmatprep.subr.bf16.mxu0 0
  %6418 = vmatpush1.bf16.msra.mxu0 %v5590
  %6419 = vmatprep.subr.bf16.mxu0 0
  %6420 = vmatpush1.bf16.msra.mxu0 %v5591
  %6421 = vmatprep.subr.bf16.mxu0 0
  %6422 = vmatpush1.bf16.msra.mxu0 %v5592
  %6423 = vmatprep.subr.bf16.mxu0 0
  %6424 = vmatpush1.bf16.msra.mxu0 %v5593
  %6425 = vmatprep.subr.bf16.mxu0 0
  %6426 = vmatpush1.bf16.msra.mxu0 %v5594
  %6427 = vmatprep.subr.bf16.mxu0 0
  %6428 = vmatpush1.bf16.msra.mxu0 %v5595
  %6429 = vmatprep.subr.bf16.mxu0 0
  %6430 = vmatpush1.bf16.msra.mxu0 %v5596
  %6431 = vmatprep.subr.bf16.mxu0 0
  %6432 = vmatpush1.bf16.msra.mxu0 %v5597
  %6433 = vmatprep.subr.bf16.mxu0 0
  %6434 = vmatpush1.bf16.msra.mxu0 %v5598
  %6435 = vmatprep.subr.bf16.mxu0 0
  %6436 = vmatpush1.bf16.msra.mxu0 %v5599
  %6437 = vmatprep.subr.bf16.mxu0 0
  %6438 = vmatpush1.bf16.msra.mxu0 %v5600
  %6439 = vmatprep.mubr.bf16.mxu0 %v6096
  %6440 = vmatmul.mubr.bf16.gmra.mrb[0].mxu0 %v6095
  %v6441 = vpop.f32.mrb[0].mxu0
  %v6442 = vadd.f32 %v6402, %v6441
  %v6443 = vpop.f32.mrb[0].mxu0
  %v6444 = vpop.f32.mrb[0].mxu0
  %v6445 = vpop.f32.mrb[0].mxu0
  %6446 = vdwg.mxu0
  %6447 = vmatprep.subr.bf16.mxu0 0
  %6448 = vmatpush1.bf16.msra.mxu0 %v5601
  %6449 = vmatprep.subr.bf16.mxu0 0
  %6450 = vmatpush1.bf16.msra.mxu0 %v5602
  %6451 = vmatprep.subr.bf16.mxu0 0
  %6452 = vmatpush1.bf16.msra.mxu0 %v5603
  %6453 = vmatprep.subr.bf16.mxu0 0
  %6454 = vmatpush1.bf16.msra.mxu0 %v5604
  %6455 = vmatprep.subr.bf16.mxu0 0
  %6456 = vmatpush1.bf16.msra.mxu0 %v5605
  %6457 = vmatprep.subr.bf16.mxu0 0
  %6458 = vmatpush1.bf16.msra.mxu0 %v5606
  %6459 = vmatprep.subr.bf16.mxu0 0
  %6460 = vmatpush1.bf16.msra.mxu0 %v5607
  %6461 = vmatprep.subr.bf16.mxu0 0
  %6462 = vmatpush1.bf16.msra.mxu0 %v5608
  %6463 = vmatprep.subr.bf16.mxu0 0
  %6464 = vmatpush1.bf16.msra.mxu0 %v5609
  %6465 = vmatprep.subr.bf16.mxu0 0
  %6466 = vmatpush1.bf16.msra.mxu0 %v5610
  %6467 = vmatprep.subr.bf16.mxu0 0
  %6468 = vmatpush1.bf16.msra.mxu0 %v5611
  %6469 = vmatprep.subr.bf16.mxu0 0
  %6470 = vmatpush1.bf16.msra.mxu0 %v5612
  %6471 = vmatprep.subr.bf16.mxu0 0
  %6472 = vmatpush1.bf16.msra.mxu0 %v5613
  %6473 = vmatprep.subr.bf16.mxu0 0
  %6474 = vmatpush1.bf16.msra.mxu0 %v5614
  %6475 = vmatprep.subr.bf16.mxu0 0
  %6476 = vmatpush1.bf16.msra.mxu0 %v5615
  %6477 = vmatprep.subr.bf16.mxu0 0
  %6478 = vmatpush1.bf16.msra.mxu0 %v5616
  %6479 = vmatprep.mubr.bf16.mxu0 %v6098
  %6480 = vmatmul.mubr.bf16.gmra.mrb[0].mxu0 %v6097
  %v6481 = vpop.f32.mrb[0].mxu0
  %v6482 = vadd.f32 %v6442, %v6481
  %v6483 = vpop.f32.mrb[0].mxu0
  %v6484 = vpop.f32.mrb[0].mxu0
  %v6485 = vpop.f32.mrb[0].mxu0
  %6486 = vdwg.mxu0
  %6487 = vmatprep.subr.bf16.mxu0 0
  %6488 = vmatpush1.bf16.msra.mxu0 %v5617
  %6489 = vmatprep.subr.bf16.mxu0 0
  %6490 = vmatpush1.bf16.msra.mxu0 %v5618
  %6491 = vmatprep.subr.bf16.mxu0 0
  %6492 = vmatpush1.bf16.msra.mxu0 %v5619
  %6493 = vmatprep.subr.bf16.mxu0 0
  %6494 = vmatpush1.bf16.msra.mxu0 %v5620
  %6495 = vmatprep.subr.bf16.mxu0 0
  %6496 = vmatpush1.bf16.msra.mxu0 %v5621
  %6497 = vmatprep.subr.bf16.mxu0 0
  %6498 = vmatpush1.bf16.msra.mxu0 %v5622
  %6499 = vmatprep.subr.bf16.mxu0 0
  %6500 = vmatpush1.bf16.msra.mxu0 %v5623
  %6501 = vmatprep.subr.bf16.mxu0 0
  %6502 = vmatpush1.bf16.msra.mxu0 %v5624
  %6503 = vmatprep.subr.bf16.mxu0 0
  %6504 = vmatpush1.bf16.msra.mxu0 %v5625
  %6505 = vmatprep.subr.bf16.mxu0 0
  %6506 = vmatpush1.bf16.msra.mxu0 %v5626
  %6507 = vmatprep.subr.bf16.mxu0 0
  %6508 = vmatpush1.bf16.msra.mxu0 %v5627
  %6509 = vmatprep.subr.bf16.mxu0 0
  %6510 = vmatpush1.bf16.msra.mxu0 %v5628
  %6511 = vmatprep.subr.bf16.mxu0 0
  %6512 = vmatpush1.bf16.msra.mxu0 %v5629
  %6513 = vmatprep.subr.bf16.mxu0 0
  %6514 = vmatpush1.bf16.msra.mxu0 %v5630
  %6515 = vmatprep.subr.bf16.mxu0 0
  %6516 = vmatpush1.bf16.msra.mxu0 %v5631
  %6517 = vmatprep.subr.bf16.mxu0 0
  %6518 = vmatpush1.bf16.msra.mxu0 %v5632
  %6519 = vmatprep.mubr.bf16.mxu0 %v6100
  %6520 = vmatmul.mubr.bf16.gmra.mrb[0].mxu0 %v6099
  %v6521 = vpop.f32.mrb[0].mxu0
  %v6522 = vadd.f32 %v6482, %v6521
  %v6523 = vpop.f32.mrb[0].mxu0
  %v6524 = vpop.f32.mrb[0].mxu0
  %v6525 = vpop.f32.mrb[0].mxu0
  %6526 = vdwg.mxu0
  %6527 = vmatprep.subr.bf16.mxu0 0
  %6528 = vmatpush1.bf16.msra.mxu0 %v5633
  %6529 = vmatprep.subr.bf16.mxu0 0
  %6530 = vmatpush1.bf16.msra.mxu0 %v5634
  %6531 = vmatprep.subr.bf16.mxu0 0
  %6532 = vmatpush1.bf16.msra.mxu0 %v5635
  %6533 = vmatprep.subr.bf16.mxu0 0
  %6534 = vmatpush1.bf16.msra.mxu0 %v5636
  %6535 = vmatprep.subr.bf16.mxu0 0
  %6536 = vmatpush1.bf16.msra.mxu0 %v5637
  %6537 = vmatprep.subr.bf16.mxu0 0
  %6538 = vmatpush1.bf16.msra.mxu0 %v5638
  %6539 = vmatprep.subr.bf16.mxu0 0
  %6540 = vmatpush1.bf16.msra.mxu0 %v5639
  %6541 = vmatprep.subr.bf16.mxu0 0
  %6542 = vmatpush1.bf16.msra.mxu0 %v5640
  %6543 = vmatprep.subr.bf16.mxu0 0
  %6544 = vmatpush1.bf16.msra.mxu0 %v5641
  %6545 = vmatprep.subr.bf16.mxu0 0
  %6546 = vmatpush1.bf16.msra.mxu0 %v5642
  %6547 = vmatprep.subr.bf16.mxu0 0
  %6548 = vmatpush1.bf16.msra.mxu0 %v5643
  %6549 = vmatprep.subr.bf16.mxu0 0
  %6550 = vmatpush1.bf16.msra.mxu0 %v5644
  %6551 = vmatprep.subr.bf16.mxu0 0
  %6552 = vmatpush1.bf16.msra.mxu0 %v5645
  %6553 = vmatprep.subr.bf16.mxu0 0
  %6554 = vmatpush1.bf16.msra.mxu0 %v5646
  %6555 = vmatprep.subr.bf16.mxu0 0
  %6556 = vmatpush1.bf16.msra.mxu0 %v5647
  %6557 = vmatprep.subr.bf16.mxu0 0
  %6558 = vmatpush1.bf16.msra.mxu0 %v5648
  %6559 = vmatprep.mubr.bf16.mxu0 %v6102
  %6560 = vmatmul.mubr.bf16.gmra.mrb[0].mxu0 %v6101
  %v6561 = vpop.f32.mrb[0].mxu0
  %v6562 = vadd.f32 %v6522, %v6561
  %v6563 = vpop.f32.mrb[0].mxu0
  %v6564 = vpop.f32.mrb[0].mxu0
  %v6565 = vpop.f32.mrb[0].mxu0
  %6566 = vdwg.mxu0
  %6567 = vmatprep.subr.bf16.mxu0 0
  %6568 = vmatpush1.bf16.msra.mxu0 %v5649
  %6569 = vmatprep.subr.bf16.mxu0 0
  %6570 = vmatpush1.bf16.msra.mxu0 %v5650
  %6571 = vmatprep.subr.bf16.mxu0 0
  %6572 = vmatpush1.bf16.msra.mxu0 %v5651
  %6573 = vmatprep.subr.bf16.mxu0 0
  %6574 = vmatpush1.bf16.msra.mxu0 %v5652
  %6575 = vmatprep.subr.bf16.mxu0 0
  %6576 = vmatpush1.bf16.msra.mxu0 %v5653
  %6577 = vmatprep.subr.bf16.mxu0 0
  %6578 = vmatpush1.bf16.msra.mxu0 %v5654
  %6579 = vmatprep.subr.bf16.mxu0 0
  %6580 = vmatpush1.bf16.msra.mxu0 %v5655
  %6581 = vmatprep.subr.bf16.mxu0 0
  %6582 = vmatpush1.bf16.msra.mxu0 %v5656
  %6583 = vmatprep.subr.bf16.mxu0 0
  %6584 = vmatpush1.bf16.msra.mxu0 %v5657
  %6585 = vmatprep.subr.bf16.mxu0 0
  %6586 = vmatpush1.bf16.msra.mxu0 %v5658
  %6587 = vmatprep.subr.bf16.mxu0 0
  %6588 = vmatpush1.bf16.msra.mxu0 %v5659
  %6589 = vmatprep.subr.bf16.mxu0 0
  %6590 = vmatpush1.bf16.msra.mxu0 %v5660
  %6591 = vmatprep.subr.bf16.mxu0 0
  %6592 = vmatpush1.bf16.msra.mxu0 %v5661
  %6593 = vmatprep.subr.bf16.mxu0 0
  %6594 = vmatpush1.bf16.msra.mxu0 %v5662
  %6595 = vmatprep.subr.bf16.mxu0 0
  %6596 = vmatpush1.bf16.msra.mxu0 %v5663
  %6597 = vmatprep.subr.bf16.mxu0 0
  %6598 = vmatpush1.bf16.msra.mxu0 %v5664
  %6599 = vmatprep.mubr.bf16.mxu0 %v6104
  %6600 = vmatmul.mubr.bf16.gmra.mrb[0].mxu0 %v6103
  %v6601 = vpop.f32.mrb[0].mxu0
  %v6602 = vadd.f32 %v6562, %v6601
  %v6603 = vpop.f32.mrb[0].mxu0
  %v6604 = vpop.f32.mrb[0].mxu0
  %v6605 = vpop.f32.mrb[0].mxu0
  %6606 = vdwg.mxu0
  %6607 = vmatprep.subr.bf16.mxu0 0
  %6608 = vmatpush1.bf16.msra.mxu0 %v5665
  %6609 = vmatprep.subr.bf16.mxu0 0
  %6610 = vmatpush1.bf16.msra.mxu0 %v5666
  %6611 = vmatprep.subr.bf16.mxu0 0
  %6612 = vmatpush1.bf16.msra.mxu0 %v5667
  %6613 = vmatprep.subr.bf16.mxu0 0
  %6614 = vmatpush1.bf16.msra.mxu0 %v5668
  %6615 = vmatprep.subr.bf16.mxu0 0
  %6616 = vmatpush1.bf16.msra.mxu0 %v5669
  %6617 = vmatprep.subr.bf16.mxu0 0
  %6618 = vmatpush1.bf16.msra.mxu0 %v5670
  %6619 = vmatprep.subr.bf16.mxu0 0
  %6620 = vmatpush1.bf16.msra.mxu0 %v5671
  %6621 = vmatprep.subr.bf16.mxu0 0
  %6622 = vmatpush1.bf16.msra.mxu0 %v5672
  %6623 = vmatprep.subr.bf16.mxu0 0
  %6624 = vmatpush1.bf16.msra.mxu0 %v5673
  %6625 = vmatprep.subr.bf16.mxu0 0
  %6626 = vmatpush1.bf16.msra.mxu0 %v5674
  %6627 = vmatprep.subr.bf16.mxu0 0
  %6628 = vmatpush1.bf16.msra.mxu0 %v5675
  %6629 = vmatprep.subr.bf16.mxu0 0
  %6630 = vmatpush1.bf16.msra.mxu0 %v5676
  %6631 = vmatprep.subr.bf16.mxu0 0
  %6632 = vmatpush1.bf16.msra.mxu0 %v5677
  %6633 = vmatprep.subr.bf16.mxu0 0
  %6634 = vmatpush1.bf16.msra.mxu0 %v5678
  %6635 = vmatprep.subr.bf16.mxu0 0
  %6636 = vmatpush1.bf16.msra.mxu0 %v5679
  %6637 = vmatprep.subr.bf16.mxu0 0
  %6638 = vmatpush1.bf16.msra.mxu0 %v5680
  %6639 = vmatprep.mubr.bf16.mxu0 %v6106
  %6640 = vmatmul.mubr.bf16.gmra.mrb[0].mxu0 %v6105
  %v6641 = vpop.f32.mrb[0].mxu0
  %v6642 = vadd.f32 %v6602, %v6641
  %v6643 = vpop.f32.mrb[0].mxu0
  %v6644 = vpop.f32.mrb[0].mxu0
  %v6645 = vpop.f32.mrb[0].mxu0
  %6646 = vdwg.mxu0
  %6647 = vmatprep.subr.bf16.mxu0 0
  %6648 = vmatpush1.bf16.msra.mxu0 %v5681
  %6649 = vmatprep.subr.bf16.mxu0 0
  %6650 = vmatpush1.bf16.msra.mxu0 %v5682
  %6651 = vmatprep.subr.bf16.mxu0 0
  %6652 = vmatpush1.bf16.msra.mxu0 %v5683
  %6653 = vmatprep.subr.bf16.mxu0 0
  %6654 = vmatpush1.bf16.msra.mxu0 %v5684
  %6655 = vmatprep.subr.bf16.mxu0 0
  %6656 = vmatpush1.bf16.msra.mxu0 %v5685
  %6657 = vmatprep.subr.bf16.mxu0 0
  %6658 = vmatpush1.bf16.msra.mxu0 %v5686
  %6659 = vmatprep.subr.bf16.mxu0 0
  %6660 = vmatpush1.bf16.msra.mxu0 %v5687
  %6661 = vmatprep.subr.bf16.mxu0 0
  %6662 = vmatpush1.bf16.msra.mxu0 %v5688
  %6663 = vmatprep.subr.bf16.mxu0 0
  %6664 = vmatpush1.bf16.msra.mxu0 %v5689
  %6665 = vmatprep.subr.bf16.mxu0 0
  %6666 = vmatpush1.bf16.msra.mxu0 %v5690
  %6667 = vmatprep.subr.bf16.mxu0 0
  %6668 = vmatpush1.bf16.msra.mxu0 %v5691
  %6669 = vmatprep.subr.bf16.mxu0 0
  %6670 = vmatpush1.bf16.msra.mxu0 %v5692
  %6671 = vmatprep.subr.bf16.mxu0 0
  %6672 = vmatpush1.bf16.msra.mxu0 %v5693
  %6673 = vmatprep.subr.bf16.mxu0 0
  %6674 = vmatpush1.bf16.msra.mxu0 %v5694
  %6675 = vmatprep.subr.bf16.mxu0 0
  %6676 = vmatpush1.bf16.msra.mxu0 %v5695
  %6677 = vmatprep.subr.bf16.mxu0 0
  %6678 = vmatpush1.bf16.msra.mxu0 %v5696
  %6679 = vmatprep.mubr.bf16.mxu0 %v6108
  %6680 = vmatmul.mubr.bf16.gmra.mrb[0].mxu0 %v6107
  %v6681 = vpop.f32.mrb[0].mxu0
  %v6682 = vadd.f32 %v6642, %v6681
  %v6683 = vpop.f32.mrb[0].mxu0
  %v6684 = vpop.f32.mrb[0].mxu0
  %v6685 = vpop.f32.mrb[0].mxu0
  %6686 = vdwg.mxu0
  %6687 = vmatprep.subr.bf16.mxu0 0
  %6688 = vmatpush1.bf16.msra.mxu0 %v5697
  %6689 = vmatprep.subr.bf16.mxu0 0
  %6690 = vmatpush1.bf16.msra.mxu0 %v5698
  %6691 = vmatprep.subr.bf16.mxu0 0
  %6692 = vmatpush1.bf16.msra.mxu0 %v5699
  %6693 = vmatprep.subr.bf16.mxu0 0
  %6694 = vmatpush1.bf16.msra.mxu0 %v5700
  %6695 = vmatprep.subr.bf16.mxu0 0
  %6696 = vmatpush1.bf16.msra.mxu0 %v5701
  %6697 = vmatprep.subr.bf16.mxu0 0
  %6698 = vmatpush1.bf16.msra.mxu0 %v5702
  %6699 = vmatprep.subr.bf16.mxu0 0
  %6700 = vmatpush1.bf16.msra.mxu0 %v5703
  %6701 = vmatprep.subr.bf16.mxu0 0
  %6702 = vmatpush1.bf16.msra.mxu0 %v5704
  %6703 = vmatprep.subr.bf16.mxu0 0
  %6704 = vmatpush1.bf16.msra.mxu0 %v5705
  %6705 = vmatprep.subr.bf16.mxu0 0
  %6706 = vmatpush1.bf16.msra.mxu0 %v5706
  %6707 = vmatprep.subr.bf16.mxu0 0
  %6708 = vmatpush1.bf16.msra.mxu0 %v5707
  %6709 = vmatprep.subr.bf16.mxu0 0
  %6710 = vmatpush1.bf16.msra.mxu0 %v5708
  %6711 = vmatprep.subr.bf16.mxu0 0
  %6712 = vmatpush1.bf16.msra.mxu0 %v5709
  %6713 = vmatprep.subr.bf16.mxu0 0
  %6714 = vmatpush1.bf16.msra.mxu0 %v5710
  %6715 = vmatprep.subr.bf16.mxu0 0
  %6716 = vmatpush1.bf16.msra.mxu0 %v5711
  %6717 = vmatprep.subr.bf16.mxu0 0
  %6718 = vmatpush1.bf16.msra.mxu0 %v5712
  %6719 = vmatprep.mubr.bf16.mxu0 %v6110
  %6720 = vmatmul.mubr.bf16.gmra.mrb[0].mxu0 %v6109
  %v6721 = vpop.f32.mrb[0].mxu0
  %v6722 = vadd.f32 %v6682, %v6721
  %v6723 = vpop.f32.mrb[0].mxu0
  %v6724 = vpop.f32.mrb[0].mxu0
  %v6725 = vpop.f32.mrb[0].mxu0
  %6726 = vdwg.mxu0
  %6727 = vmatprep.subr.bf16.mxu0 0
  %6728 = vmatpush1.bf16.msra.mxu0 %v5713
  %6729 = vmatprep.subr.bf16.mxu0 0
  %6730 = vmatpush1.bf16.msra.mxu0 %v5714
  %6731 = vmatprep.subr.bf16.mxu0 0
  %6732 = vmatpush1.bf16.msra.mxu0 %v5715
  %6733 = vmatprep.subr.bf16.mxu0 0
  %6734 = vmatpush1.bf16.msra.mxu0 %v5716
  %6735 = vmatprep.subr.bf16.mxu0 0
  %6736 = vmatpush1.bf16.msra.mxu0 %v5717
  %6737 = vmatprep.subr.bf16.mxu0 0
  %6738 = vmatpush1.bf16.msra.mxu0 %v5718
  %6739 = vmatprep.subr.bf16.mxu0 0
  %6740 = vmatpush1.bf16.msra.mxu0 %v5719
  %6741 = vmatprep.subr.bf16.mxu0 0
  %6742 = vmatpush1.bf16.msra.mxu0 %v5720
  %6743 = vmatprep.subr.bf16.mxu0 0
  %6744 = vmatpush1.bf16.msra.mxu0 %v5721
  %6745 = vmatprep.subr.bf16.mxu0 0
  %6746 = vmatpush1.bf16.msra.mxu0 %v5722
  %6747 = vmatprep.subr.bf16.mxu0 0
  %6748 = vmatpush1.bf16.msra.mxu0 %v5723
  %6749 = vmatprep.subr.bf16.mxu0 0
  %6750 = vmatpush1.bf16.msra.mxu0 %v5724
  %6751 = vmatprep.subr.bf16.mxu0 0
  %6752 = vmatpush1.bf16.msra.mxu0 %v5725
  %6753 = vmatprep.subr.bf16.mxu0 0
  %6754 = vmatpush1.bf16.msra.mxu0 %v5726
  %6755 = vmatprep.subr.bf16.mxu0 0
  %6756 = vmatpush1.bf16.msra.mxu0 %v5727
  %6757 = vmatprep.subr.bf16.mxu0 0
  %6758 = vmatpush1.bf16.msra.mxu0 %v5728
  %6759 = vmatprep.mubr.bf16.mxu0 %v6112
  %6760 = vmatmul.mubr.bf16.gmra.mrb[0].mxu0 %v6111
  %v6761 = vpop.f32.mrb[0].mxu0
  %v6762 = vadd.f32 %v6722, %v6761
  %v6763 = vpop.f32.mrb[0].mxu0
  %v6764 = vpop.f32.mrb[0].mxu0
  %v6765 = vpop.f32.mrb[0].mxu0
  %6766 = vdwg.mxu0
  %6767 = vmatprep.subr.bf16.mxu0 0
  %6768 = vmatpush1.bf16.msra.mxu0 %v5729
  %6769 = vmatprep.subr.bf16.mxu0 0
  %6770 = vmatpush1.bf16.msra.mxu0 %v5730
  %6771 = vmatprep.subr.bf16.mxu0 0
  %6772 = vmatpush1.bf16.msra.mxu0 %v5731
  %6773 = vmatprep.subr.bf16.mxu0 0
  %6774 = vmatpush1.bf16.msra.mxu0 %v5732
  %6775 = vmatprep.subr.bf16.mxu0 0
  %6776 = vmatpush1.bf16.msra.mxu0 %v5733
  %6777 = vmatprep.subr.bf16.mxu0 0
  %6778 = vmatpush1.bf16.msra.mxu0 %v5734
  %6779 = vmatprep.subr.bf16.mxu0 0
  %6780 = vmatpush1.bf16.msra.mxu0 %v5735
  %6781 = vmatprep.subr.bf16.mxu0 0
  %6782 = vmatpush1.bf16.msra.mxu0 %v5736
  %6783 = vmatprep.subr.bf16.mxu0 0
  %6784 = vmatpush1.bf16.msra.mxu0 %v5737
  %6785 = vmatprep.subr.bf16.mxu0 0
  %6786 = vmatpush1.bf16.msra.mxu0 %v5738
  %6787 = vmatprep.subr.bf16.mxu0 0
  %6788 = vmatpush1.bf16.msra.mxu0 %v5739
  %6789 = vmatprep.subr.bf16.mxu0 0
  %6790 = vmatpush1.bf16.msra.mxu0 %v5740
  %6791 = vmatprep.subr.bf16.mxu0 0
  %6792 = vmatpush1.bf16.msra.mxu0 %v5741
  %6793 = vmatprep.subr.bf16.mxu0 0
  %6794 = vmatpush1.bf16.msra.mxu0 %v5742
  %6795 = vmatprep.subr.bf16.mxu0 0
  %6796 = vmatpush1.bf16.msra.mxu0 %v5743
  %6797 = vmatprep.subr.bf16.mxu0 0
  %6798 = vmatpush1.bf16.msra.mxu0 %v5744
  %6799 = vmatprep.mubr.bf16.mxu0 %v6114
  %6800 = vmatmul.mubr.bf16.gmra.mrb[0].mxu0 %v6113
  %v6801 = vpop.f32.mrb[0].mxu0
  %v6802 = vadd.f32 %v6762, %v6801
  %v6803 = vpop.f32.mrb[0].mxu0
  %v6804 = vpop.f32.mrb[0].mxu0
  %v6805 = vpop.f32.mrb[0].mxu0
  %6806 = vdwg.mxu0
  %6807 = vmatprep.subr.bf16.mxu0 0
  %6808 = vmatpush1.bf16.msra.mxu0 %v5745
  %6809 = vmatprep.subr.bf16.mxu0 0
  %6810 = vmatpush1.bf16.msra.mxu0 %v5746
  %6811 = vmatprep.subr.bf16.mxu0 0
  %6812 = vmatpush1.bf16.msra.mxu0 %v5747
  %6813 = vmatprep.subr.bf16.mxu0 0
  %6814 = vmatpush1.bf16.msra.mxu0 %v5748
  %6815 = vmatprep.subr.bf16.mxu0 0
  %6816 = vmatpush1.bf16.msra.mxu0 %v5749
  %6817 = vmatprep.subr.bf16.mxu0 0
  %6818 = vmatpush1.bf16.msra.mxu0 %v5750
  %6819 = vmatprep.subr.bf16.mxu0 0
  %6820 = vmatpush1.bf16.msra.mxu0 %v5751
  %6821 = vmatprep.subr.bf16.mxu0 0
  %6822 = vmatpush1.bf16.msra.mxu0 %v5752
  %6823 = vmatprep.subr.bf16.mxu0 0
  %6824 = vmatpush1.bf16.msra.mxu0 %v5753
  %6825 = vmatprep.subr.bf16.mxu0 0
  %6826 = vmatpush1.bf16.msra.mxu0 %v5754
  %6827 = vmatprep.subr.bf16.mxu0 0
  %6828 = vmatpush1.bf16.msra.mxu0 %v5755
  %6829 = vmatprep.subr.bf16.mxu0 0
  %6830 = vmatpush1.bf16.msra.mxu0 %v5756
  %6831 = vmatprep.subr.bf16.mxu0 0
  %6832 = vmatpush1.bf16.msra.mxu0 %v5757
  %6833 = vmatprep.subr.bf16.mxu0 0
  %6834 = vmatpush1.bf16.msra.mxu0 %v5758
  %6835 = vmatprep.subr.bf16.mxu0 0
  %6836 = vmatpush1.bf16.msra.mxu0 %v5759
  %6837 = vmatprep.subr.bf16.mxu0 0
  %6838 = vmatpush1.bf16.msra.mxu0 %v5760
  %6839 = vmatprep.mubr.bf16.mxu0 %v6116
  %6840 = vmatmul.mubr.bf16.gmra.mrb[0].mxu0 %v6115
  %v6841 = vpop.f32.mrb[0].mxu0
  %v6842 = vadd.f32 %v6802, %v6841
  %v6843 = vpop.f32.mrb[0].mxu0
  %v6844 = vpop.f32.mrb[0].mxu0
  %v6845 = vpop.f32.mrb[0].mxu0
  %6846 = vdwg.mxu0
  %6847 = vmatprep.subr.bf16.mxu0 0
  %6848 = vmatpush1.bf16.msra.mxu0 %v5761
  %6849 = vmatprep.subr.bf16.mxu0 0
  %6850 = vmatpush1.bf16.msra.mxu0 %v5762
  %6851 = vmatprep.subr.bf16.mxu0 0
  %6852 = vmatpush1.bf16.msra.mxu0 %v5763
  %6853 = vmatprep.subr.bf16.mxu0 0
  %6854 = vmatpush1.bf16.msra.mxu0 %v5764
  %6855 = vmatprep.subr.bf16.mxu0 0
  %6856 = vmatpush1.bf16.msra.mxu0 %v5765
  %6857 = vmatprep.subr.bf16.mxu0 0
  %6858 = vmatpush1.bf16.msra.mxu0 %v5766
  %6859 = vmatprep.subr.bf16.mxu0 0
  %6860 = vmatpush1.bf16.msra.mxu0 %v5767
  %6861 = vmatprep.subr.bf16.mxu0 0
  %6862 = vmatpush1.bf16.msra.mxu0 %v5768
  %6863 = vmatprep.subr.bf16.mxu0 0
  %6864 = vmatpush1.bf16.msra.mxu0 %v5769
  %6865 = vmatprep.subr.bf16.mxu0 0
  %6866 = vmatpush1.bf16.msra.mxu0 %v5770
  %6867 = vmatprep.subr.bf16.mxu0 0
  %6868 = vmatpush1.bf16.msra.mxu0 %v5771
  %6869 = vmatprep.subr.bf16.mxu0 0
  %6870 = vmatpush1.bf16.msra.mxu0 %v5772
  %6871 = vmatprep.subr.bf16.mxu0 0
  %6872 = vmatpush1.bf16.msra.mxu0 %v5773
  %6873 = vmatprep.subr.bf16.mxu0 0
  %6874 = vmatpush1.bf16.msra.mxu0 %v5774
  %6875 = vmatprep.subr.bf16.mxu0 0
  %6876 = vmatpush1.bf16.msra.mxu0 %v5775
  %6877 = vmatprep.subr.bf16.mxu0 0
  %6878 = vmatpush1.bf16.msra.mxu0 %v5776
  %6879 = vmatprep.mubr.bf16.mxu0 %v6118
  %6880 = vmatmul.mubr.bf16.gmra.mrb[0].mxu0 %v6117
  %v6881 = vpop.f32.mrb[0].mxu0
  %v6882 = vadd.f32 %v6842, %v6881
  %v6883 = vpop.f32.mrb[0].mxu0
  %v6884 = vpop.f32.mrb[0].mxu0
  %v6885 = vpop.f32.mrb[0].mxu0
  %6886 = vdwg.mxu0
  %6887 = vmatprep.subr.bf16.mxu0 0
  %6888 = vmatpush1.bf16.msra.mxu0 %v5777
  %6889 = vmatprep.subr.bf16.mxu0 0
  %6890 = vmatpush1.bf16.msra.mxu0 %v5778
  %6891 = vmatprep.subr.bf16.mxu0 0
  %6892 = vmatpush1.bf16.msra.mxu0 %v5779
  %6893 = vmatprep.subr.bf16.mxu0 0
  %6894 = vmatpush1.bf16.msra.mxu0 %v5780
  %6895 = vmatprep.subr.bf16.mxu0 0
  %6896 = vmatpush1.bf16.msra.mxu0 %v5781
  %6897 = vmatprep.subr.bf16.mxu0 0
  %6898 = vmatpush1.bf16.msra.mxu0 %v5782
  %6899 = vmatprep.subr.bf16.mxu0 0
  %6900 = vmatpush1.bf16.msra.mxu0 %v5783
  %6901 = vmatprep.subr.bf16.mxu0 0
  %6902 = vmatpush1.bf16.msra.mxu0 %v5784
  %6903 = vmatprep.subr.bf16.mxu0 0
  %6904 = vmatpush1.bf16.msra.mxu0 %v5785
  %6905 = vmatprep.subr.bf16.mxu0 0
  %6906 = vmatpush1.bf16.msra.mxu0 %v5786
  %6907 = vmatprep.subr.bf16.mxu0 0
  %6908 = vmatpush1.bf16.msra.mxu0 %v5787
  %6909 = vmatprep.subr.bf16.mxu0 0
  %6910 = vmatpush1.bf16.msra.mxu0 %v5788
  %6911 = vmatprep.subr.bf16.mxu0 0
  %6912 = vmatpush1.bf16.msra.mxu0 %v5789
  %6913 = vmatprep.subr.bf16.mxu0 0
  %6914 = vmatpush1.bf16.msra.mxu0 %v5790
  %6915 = vmatprep.subr.bf16.mxu0 0
  %6916 = vmatpush1.bf16.msra.mxu0 %v5791
  %6917 = vmatprep.subr.bf16.mxu0 0
  %6918 = vmatpush1.bf16.msra.mxu0 %v5792
  %6919 = vmatprep.mubr.bf16.mxu0 %v6120
  %6920 = vmatmul.mubr.bf16.gmra.mrb[0].mxu0 %v6119
  %v6921 = vpop.f32.mrb[0].mxu0
  %v6922 = vadd.f32 %v6882, %v6921
  %v6923 = vpop.f32.mrb[0].mxu0
  %v6924 = vpop.f32.mrb[0].mxu0
  %v6925 = vpop.f32.mrb[0].mxu0
  %6926 = vdwg.mxu0
  %6927 = vmatprep.subr.bf16.mxu0 0
  %6928 = vmatpush1.bf16.msra.mxu0 %v5793
  %6929 = vmatprep.subr.bf16.mxu0 0
  %6930 = vmatpush1.bf16.msra.mxu0 %v5794
  %6931 = vmatprep.subr.bf16.mxu0 0
  %6932 = vmatpush1.bf16.msra.mxu0 %v5795
  %6933 = vmatprep.subr.bf16.mxu0 0
  %6934 = vmatpush1.bf16.msra.mxu0 %v5796
  %6935 = vmatprep.subr.bf16.mxu0 0
  %6936 = vmatpush1.bf16.msra.mxu0 %v5797
  %6937 = vmatprep.subr.bf16.mxu0 0
  %6938 = vmatpush1.bf16.msra.mxu0 %v5798
  %6939 = vmatprep.subr.bf16.mxu0 0
  %6940 = vmatpush1.bf16.msra.mxu0 %v5799
  %6941 = vmatprep.subr.bf16.mxu0 0
  %6942 = vmatpush1.bf16.msra.mxu0 %v5800
  %6943 = vmatprep.subr.bf16.mxu0 0
  %6944 = vmatpush1.bf16.msra.mxu0 %v5801
  %6945 = vmatprep.subr.bf16.mxu0 0
  %6946 = vmatpush1.bf16.msra.mxu0 %v5802
  %6947 = vmatprep.subr.bf16.mxu0 0
  %6948 = vmatpush1.bf16.msra.mxu0 %v5803
  %6949 = vmatprep.subr.bf16.mxu0 0
  %6950 = vmatpush1.bf16.msra.mxu0 %v5804
  %6951 = vmatprep.subr.bf16.mxu0 0
  %6952 = vmatpush1.bf16.msra.mxu0 %v5805
  %6953 = vmatprep.subr.bf16.mxu0 0
  %6954 = vmatpush1.bf16.msra.mxu0 %v5806
  %6955 = vmatprep.subr.bf16.mxu0 0
  %6956 = vmatpush1.bf16.msra.mxu0 %v5807
  %6957 = vmatprep.subr.bf16.mxu0 0
  %6958 = vmatpush1.bf16.msra.mxu0 %v5808
  %6959 = vmatprep.mubr.bf16.mxu0 %v6122
  %6960 = vmatmul.mubr.bf16.gmra.mrb[0].mxu0 %v6121
  %v6961 = vpop.f32.mrb[0].mxu0
  %v6962 = vadd.f32 %v6922, %v6961
  %v6963 = vpop.f32.mrb[0].mxu0
  %v6964 = vpop.f32.mrb[0].mxu0
  %v6965 = vpop.f32.mrb[0].mxu0
  %6966 = vdwg.mxu0
  %6967 = vmatprep.subr.bf16.mxu0 0
  %6968 = vmatpush1.bf16.msra.mxu0 %v5809
  %6969 = vmatprep.subr.bf16.mxu0 0
  %6970 = vmatpush1.bf16.msra.mxu0 %v5810
  %6971 = vmatprep.subr.bf16.mxu0 0
  %6972 = vmatpush1.bf16.msra.mxu0 %v5811
  %6973 = vmatprep.subr.bf16.mxu0 0
  %6974 = vmatpush1.bf16.msra.mxu0 %v5812
  %6975 = vmatprep.subr.bf16.mxu0 0
  %6976 = vmatpush1.bf16.msra.mxu0 %v5813
  %6977 = vmatprep.subr.bf16.mxu0 0
  %6978 = vmatpush1.bf16.msra.mxu0 %v5814
  %6979 = vmatprep.subr.bf16.mxu0 0
  %6980 = vmatpush1.bf16.msra.mxu0 %v5815
  %6981 = vmatprep.subr.bf16.mxu0 0
  %6982 = vmatpush1.bf16.msra.mxu0 %v5816
  %6983 = vmatprep.subr.bf16.mxu0 0
  %6984 = vmatpush1.bf16.msra.mxu0 %v5817
  %6985 = vmatprep.subr.bf16.mxu0 0
  %6986 = vmatpush1.bf16.msra.mxu0 %v5818
  %6987 = vmatprep.subr.bf16.mxu0 0
  %6988 = vmatpush1.bf16.msra.mxu0 %v5819
  %6989 = vmatprep.subr.bf16.mxu0 0
  %6990 = vmatpush1.bf16.msra.mxu0 %v5820
  %6991 = vmatprep.subr.bf16.mxu0 0
  %6992 = vmatpush1.bf16.msra.mxu0 %v5821
  %6993 = vmatprep.subr.bf16.mxu0 0
  %6994 = vmatpush1.bf16.msra.mxu0 %v5822
  %6995 = vmatprep.subr.bf16.mxu0 0
  %6996 = vmatpush1.bf16.msra.mxu0 %v5823
  %6997 = vmatprep.subr.bf16.mxu0 0
  %6998 = vmatpush1.bf16.msra.mxu0 %v5824
  %6999 = vmatprep.mubr.bf16.mxu0 %v6124
  %7000 = vmatmul.mubr.bf16.gmra.mrb[0].mxu0 %v6123
  %v7001 = vpop.f32.mrb[0].mxu0
  %v7002 = vadd.f32 %v6962, %v7001
  %v7003 = vpop.f32.mrb[0].mxu0
  %v7004 = vpop.f32.mrb[0].mxu0
  %v7005 = vpop.f32.mrb[0].mxu0
  %7006 = vdwg.mxu0
  %7007 = vmatprep.subr.bf16.mxu0 0
  %7008 = vmatpush1.bf16.msra.mxu0 %v5825
  %7009 = vmatprep.subr.bf16.mxu0 0
  %7010 = vmatpush1.bf16.msra.mxu0 %v5826
  %7011 = vmatprep.subr.bf16.mxu0 0
  %7012 = vmatpush1.bf16.msra.mxu0 %v5827
  %7013 = vmatprep.subr.bf16.mxu0 0
  %7014 = vmatpush1.bf16.msra.mxu0 %v5828
  %7015 = vmatprep.subr.bf16.mxu0 0
  %7016 = vmatpush1.bf16.msra.mxu0 %v5829
  %7017 = vmatprep.subr.bf16.mxu0 0
  %7018 = vmatpush1.bf16.msra.mxu0 %v5830
  %7019 = vmatprep.subr.bf16.mxu0 0
  %7020 = vmatpush1.bf16.msra.mxu0 %v5831
  %7021 = vmatprep.subr.bf16.mxu0 0
  %7022 = vmatpush1.bf16.msra.mxu0 %v5832
  %7023 = vmatprep.subr.bf16.mxu0 0
  %7024 = vmatpush1.bf16.msra.mxu0 %v5833
  %7025 = vmatprep.subr.bf16.mxu0 0
  %7026 = vmatpush1.bf16.msra.mxu0 %v5834
  %7027 = vmatprep.subr.bf16.mxu0 0
  %7028 = vmatpush1.bf16.msra.mxu0 %v5835
  %7029 = vmatprep.subr.bf16.mxu0 0
  %7030 = vmatpush1.bf16.msra.mxu0 %v5836
  %7031 = vmatprep.subr.bf16.mxu0 0
  %7032 = vmatpush1.bf16.msra.mxu0 %v5837
  %7033 = vmatprep.subr.bf16.mxu0 0
  %7034 = vmatpush1.bf16.msra.mxu0 %v5838
  %7035 = vmatprep.subr.bf16.mxu0 0
  %7036 = vmatpush1.bf16.msra.mxu0 %v5839
  %7037 = vmatprep.subr.bf16.mxu0 0
  %7038 = vmatpush1.bf16.msra.mxu0 %v5840
  %7039 = vmatprep.mubr.bf16.mxu0 %v6126
  %7040 = vmatmul.mubr.bf16.gmra.mrb[0].mxu0 %v6125
  %v7041 = vpop.f32.mrb[0].mxu0
  %v7042 = vadd.f32 %v7002, %v7041
  %v7043 = vpop.f32.mrb[0].mxu0
  %v7044 = vpop.f32.mrb[0].mxu0
  %v7045 = vpop.f32.mrb[0].mxu0
  %7046 = vdwg.mxu0
  %7047 = vmatprep.subr.bf16.mxu0 0
  %7048 = vmatpush1.bf16.msra.mxu0 %v5841
  %7049 = vmatprep.subr.bf16.mxu0 0
  %7050 = vmatpush1.bf16.msra.mxu0 %v5842
  %7051 = vmatprep.subr.bf16.mxu0 0
  %7052 = vmatpush1.bf16.msra.mxu0 %v5843
  %7053 = vmatprep.subr.bf16.mxu0 0
  %7054 = vmatpush1.bf16.msra.mxu0 %v5844
  %7055 = vmatprep.subr.bf16.mxu0 0
  %7056 = vmatpush1.bf16.msra.mxu0 %v5845
  %7057 = vmatprep.subr.bf16.mxu0 0
  %7058 = vmatpush1.bf16.msra.mxu0 %v5846
  %7059 = vmatprep.subr.bf16.mxu0 0
  %7060 = vmatpush1.bf16.msra.mxu0 %v5847
  %7061 = vmatprep.subr.bf16.mxu0 0
  %7062 = vmatpush1.bf16.msra.mxu0 %v5848
  %7063 = vmatprep.subr.bf16.mxu0 0
  %7064 = vmatpush1.bf16.msra.mxu0 %v5849
  %7065 = vmatprep.subr.bf16.mxu0 0
  %7066 = vmatpush1.bf16.msra.mxu0 %v5850
  %7067 = vmatprep.subr.bf16.mxu0 0
  %7068 = vmatpush1.bf16.msra.mxu0 %v5851
  %7069 = vmatprep.subr.bf16.mxu0 0
  %7070 = vmatpush1.bf16.msra.mxu0 %v5852
  %7071 = vmatprep.subr.bf16.mxu0 0
  %7072 = vmatpush1.bf16.msra.mxu0 %v5853
  %7073 = vmatprep.subr.bf16.mxu0 0
  %7074 = vmatpush1.bf16.msra.mxu0 %v5854
  %7075 = vmatprep.subr.bf16.mxu0 0
  %7076 = vmatpush1.bf16.msra.mxu0 %v5855
  %7077 = vmatprep.subr.bf16.mxu0 0
  %7078 = vmatpush1.bf16.msra.mxu0 %v5856
  %7079 = vmatprep.mubr.bf16.mxu0 %v6128
  %7080 = vmatmul.mubr.bf16.gmra.mrb[0].mxu0 %v6127
  %v7081 = vpop.f32.mrb[0].mxu0
  %v7082 = vadd.f32 %v7042, %v7081
  %v7083 = vpop.f32.mrb[0].mxu0
  %v7084 = vpop.f32.mrb[0].mxu0
  %v7085 = vpop.f32.mrb[0].mxu0
  %7086 = vdwg.mxu0
  %7087 = vmatprep.subr.bf16.mxu0 0
  %7088 = vmatpush1.bf16.msra.mxu0 %v5857
  %7089 = vmatprep.subr.bf16.mxu0 0
  %7090 = vmatpush1.bf16.msra.mxu0 %v5858
  %7091 = vmatprep.subr.bf16.mxu0 0
  %7092 = vmatpush1.bf16.msra.mxu0 %v5859
  %7093 = vmatprep.subr.bf16.mxu0 0
  %7094 = vmatpush1.bf16.msra.mxu0 %v5860
  %7095 = vmatprep.subr.bf16.mxu0 0
  %7096 = vmatpush1.bf16.msra.mxu0 %v5861
  %7097 = vmatprep.subr.bf16.mxu0 0
  %7098 = vmatpush1.bf16.msra.mxu0 %v5862
  %7099 = vmatprep.subr.bf16.mxu0 0
  %7100 = vmatpush1.bf16.msra.mxu0 %v5863
  %7101 = vmatprep.subr.bf16.mxu0 0
  %7102 = vmatpush1.bf16.msra.mxu0 %v5864
  %7103 = vmatprep.subr.bf16.mxu0 0
  %7104 = vmatpush1.bf16.msra.mxu0 %v5865
  %7105 = vmatprep.subr.bf16.mxu0 0
  %7106 = vmatpush1.bf16.msra.mxu0 %v5866
  %7107 = vmatprep.subr.bf16.mxu0 0
  %7108 = vmatpush1.bf16.msra.mxu0 %v5867
  %7109 = vmatprep.subr.bf16.mxu0 0
  %7110 = vmatpush1.bf16.msra.mxu0 %v5868
  %7111 = vmatprep.subr.bf16.mxu0 0
  %7112 = vmatpush1.bf16.msra.mxu0 %v5869
  %7113 = vmatprep.subr.bf16.mxu0 0
  %7114 = vmatpush1.bf16.msra.mxu0 %v5870
  %7115 = vmatprep.subr.bf16.mxu0 0
  %7116 = vmatpush1.bf16.msra.mxu0 %v5871
  %7117 = vmatprep.subr.bf16.mxu0 0
  %7118 = vmatpush1.bf16.msra.mxu0 %v5872
  %7119 = vmatprep.mubr.bf16.mxu0 %v6130
  %7120 = vmatmul.mubr.bf16.gmra.mrb[0].mxu0 %v6129
  %v7121 = vpop.f32.mrb[0].mxu0
  %v7122 = vadd.f32 %v7082, %v7121
  %v7123 = vpop.f32.mrb[0].mxu0
  %v7124 = vpop.f32.mrb[0].mxu0
  %v7125 = vpop.f32.mrb[0].mxu0
  %7126 = vdwg.mxu0
  %7127 = vmatprep.subr.bf16.mxu0 0
  %7128 = vmatpush1.bf16.msra.mxu0 %v5873
  %7129 = vmatprep.subr.bf16.mxu0 0
  %7130 = vmatpush1.bf16.msra.mxu0 %v5874
  %7131 = vmatprep.subr.bf16.mxu0 0
  %7132 = vmatpush1.bf16.msra.mxu0 %v5875
  %7133 = vmatprep.subr.bf16.mxu0 0
  %7134 = vmatpush1.bf16.msra.mxu0 %v5876
  %7135 = vmatprep.subr.bf16.mxu0 0
  %7136 = vmatpush1.bf16.msra.mxu0 %v5877
  %7137 = vmatprep.subr.bf16.mxu0 0
  %7138 = vmatpush1.bf16.msra.mxu0 %v5878
  %7139 = vmatprep.subr.bf16.mxu0 0
  %7140 = vmatpush1.bf16.msra.mxu0 %v5879
  %7141 = vmatprep.subr.bf16.mxu0 0
  %7142 = vmatpush1.bf16.msra.mxu0 %v5880
  %7143 = vmatprep.subr.bf16.mxu0 0
  %7144 = vmatpush1.bf16.msra.mxu0 %v5881
  %7145 = vmatprep.subr.bf16.mxu0 0
  %7146 = vmatpush1.bf16.msra.mxu0 %v5882
  %7147 = vmatprep.subr.bf16.mxu0 0
  %7148 = vmatpush1.bf16.msra.mxu0 %v5883
  %7149 = vmatprep.subr.bf16.mxu0 0
  %7150 = vmatpush1.bf16.msra.mxu0 %v5884
  %7151 = vmatprep.subr.bf16.mxu0 0
  %7152 = vmatpush1.bf16.msra.mxu0 %v5885
  %7153 = vmatprep.subr.bf16.mxu0 0
  %7154 = vmatpush1.bf16.msra.mxu0 %v5886
  %7155 = vmatprep.subr.bf16.mxu0 0
  %7156 = vmatpush1.bf16.msra.mxu0 %v5887
  %7157 = vmatprep.subr.bf16.mxu0 0
  %7158 = vmatpush1.bf16.msra.mxu0 %v5888
  %7159 = vmatprep.mubr.bf16.mxu0 %v6132
  %7160 = vmatmul.mubr.bf16.gmra.mrb[0].mxu0 %v6131
  %v7161 = vpop.f32.mrb[0].mxu0
  %v7162 = vadd.f32 %v7122, %v7161
  %v7163 = vpop.f32.mrb[0].mxu0
  %v7164 = vpop.f32.mrb[0].mxu0
  %v7165 = vpop.f32.mrb[0].mxu0
  %7166 = vdwg.mxu0
  %7167 = vmatprep.subr.bf16.mxu0 0
  %7168 = vmatpush1.bf16.msra.mxu0 %v5889
  %7169 = vmatprep.subr.bf16.mxu0 0
  %7170 = vmatpush1.bf16.msra.mxu0 %v5890
  %7171 = vmatprep.subr.bf16.mxu0 0
  %7172 = vmatpush1.bf16.msra.mxu0 %v5891
  %7173 = vmatprep.subr.bf16.mxu0 0
  %7174 = vmatpush1.bf16.msra.mxu0 %v5892
  %7175 = vmatprep.subr.bf16.mxu0 0
  %7176 = vmatpush1.bf16.msra.mxu0 %v5893
  %7177 = vmatprep.subr.bf16.mxu0 0
  %7178 = vmatpush1.bf16.msra.mxu0 %v5894
  %7179 = vmatprep.subr.bf16.mxu0 0
  %7180 = vmatpush1.bf16.msra.mxu0 %v5895
  %7181 = vmatprep.subr.bf16.mxu0 0
  %7182 = vmatpush1.bf16.msra.mxu0 %v5896
  %7183 = vmatprep.subr.bf16.mxu0 0
  %7184 = vmatpush1.bf16.msra.mxu0 %v5897
  %7185 = vmatprep.subr.bf16.mxu0 0
  %7186 = vmatpush1.bf16.msra.mxu0 %v5898
  %7187 = vmatprep.subr.bf16.mxu0 0
  %7188 = vmatpush1.bf16.msra.mxu0 %v5899
  %7189 = vmatprep.subr.bf16.mxu0 0
  %7190 = vmatpush1.bf16.msra.mxu0 %v5900
  %7191 = vmatprep.subr.bf16.mxu0 0
  %7192 = vmatpush1.bf16.msra.mxu0 %v5901
  %7193 = vmatprep.subr.bf16.mxu0 0
  %7194 = vmatpush1.bf16.msra.mxu0 %v5902
  %7195 = vmatprep.subr.bf16.mxu0 0
  %7196 = vmatpush1.bf16.msra.mxu0 %v5903
  %7197 = vmatprep.subr.bf16.mxu0 0
  %7198 = vmatpush1.bf16.msra.mxu0 %v5904
  %7199 = vmatprep.mubr.bf16.mxu0 %v6134
  %7200 = vmatmul.mubr.bf16.gmra.mrb[0].mxu0 %v6133
  %v7201 = vpop.f32.mrb[0].mxu0
  %v7202 = vadd.f32 %v7162, %v7201
  %v7203 = vpop.f32.mrb[0].mxu0
  %v7204 = vpop.f32.mrb[0].mxu0
  %v7205 = vpop.f32.mrb[0].mxu0
  %7206 = vdwg.mxu0
  %7207 = vmatprep.subr.bf16.mxu0 0
  %7208 = vmatpush1.bf16.msra.mxu0 %v5905
  %7209 = vmatprep.subr.bf16.mxu0 0
  %7210 = vmatpush1.bf16.msra.mxu0 %v5906
  %7211 = vmatprep.subr.bf16.mxu0 0
  %7212 = vmatpush1.bf16.msra.mxu0 %v5907
  %7213 = vmatprep.subr.bf16.mxu0 0
  %7214 = vmatpush1.bf16.msra.mxu0 %v5908
  %7215 = vmatprep.subr.bf16.mxu0 0
  %7216 = vmatpush1.bf16.msra.mxu0 %v5909
  %7217 = vmatprep.subr.bf16.mxu0 0
  %7218 = vmatpush1.bf16.msra.mxu0 %v5910
  %7219 = vmatprep.subr.bf16.mxu0 0
  %7220 = vmatpush1.bf16.msra.mxu0 %v5911
  %7221 = vmatprep.subr.bf16.mxu0 0
  %7222 = vmatpush1.bf16.msra.mxu0 %v5912
  %7223 = vmatprep.subr.bf16.mxu0 0
  %7224 = vmatpush1.bf16.msra.mxu0 %v5913
  %7225 = vmatprep.subr.bf16.mxu0 0
  %7226 = vmatpush1.bf16.msra.mxu0 %v5914
  %7227 = vmatprep.subr.bf16.mxu0 0
  %7228 = vmatpush1.bf16.msra.mxu0 %v5915
  %7229 = vmatprep.subr.bf16.mxu0 0
  %7230 = vmatpush1.bf16.msra.mxu0 %v5916
  %7231 = vmatprep.subr.bf16.mxu0 0
  %7232 = vmatpush1.bf16.msra.mxu0 %v5917
  %7233 = vmatprep.subr.bf16.mxu0 0
  %7234 = vmatpush1.bf16.msra.mxu0 %v5918
  %7235 = vmatprep.subr.bf16.mxu0 0
  %7236 = vmatpush1.bf16.msra.mxu0 %v5919
  %7237 = vmatprep.subr.bf16.mxu0 0
  %7238 = vmatpush1.bf16.msra.mxu0 %v5920
  %7239 = vmatprep.mubr.bf16.mxu0 %v6136
  %7240 = vmatmul.mubr.bf16.gmra.mrb[0].mxu0 %v6135
  %v7241 = vpop.f32.mrb[0].mxu0
  %v7242 = vadd.f32 %v7202, %v7241
  %v7243 = vpop.f32.mrb[0].mxu0
  %v7244 = vpop.f32.mrb[0].mxu0
  %v7245 = vpop.f32.mrb[0].mxu0
  %7246 = vdwg.mxu0
  %7247 = vmatprep.subr.bf16.mxu0 0
  %7248 = vmatpush1.bf16.msra.mxu0 %v5921
  %7249 = vmatprep.subr.bf16.mxu0 0
  %7250 = vmatpush1.bf16.msra.mxu0 %v5922
  %7251 = vmatprep.subr.bf16.mxu0 0
  %7252 = vmatpush1.bf16.msra.mxu0 %v5923
  %7253 = vmatprep.subr.bf16.mxu0 0
  %7254 = vmatpush1.bf16.msra.mxu0 %v5924
  %7255 = vmatprep.subr.bf16.mxu0 0
  %7256 = vmatpush1.bf16.msra.mxu0 %v5925
  %7257 = vmatprep.subr.bf16.mxu0 0
  %7258 = vmatpush1.bf16.msra.mxu0 %v5926
  %7259 = vmatprep.subr.bf16.mxu0 0
  %7260 = vmatpush1.bf16.msra.mxu0 %v5927
  %7261 = vmatprep.subr.bf16.mxu0 0
  %7262 = vmatpush1.bf16.msra.mxu0 %v5928
  %7263 = vmatprep.subr.bf16.mxu0 0
  %7264 = vmatpush1.bf16.msra.mxu0 %v5929
  %7265 = vmatprep.subr.bf16.mxu0 0
  %7266 = vmatpush1.bf16.msra.mxu0 %v5930
  %7267 = vmatprep.subr.bf16.mxu0 0
  %7268 = vmatpush1.bf16.msra.mxu0 %v5931
  %7269 = vmatprep.subr.bf16.mxu0 0
  %7270 = vmatpush1.bf16.msra.mxu0 %v5932
  %7271 = vmatprep.subr.bf16.mxu0 0
  %7272 = vmatpush1.bf16.msra.mxu0 %v5933
  %7273 = vmatprep.subr.bf16.mxu0 0
  %7274 = vmatpush1.bf16.msra.mxu0 %v5934
  %7275 = vmatprep.subr.bf16.mxu0 0
  %7276 = vmatpush1.bf16.msra.mxu0 %v5935
  %7277 = vmatprep.subr.bf16.mxu0 0
  %7278 = vmatpush1.bf16.msra.mxu0 %v5936
  %7279 = vmatprep.mubr.bf16.mxu0 %v6138
  %7280 = vmatmul.mubr.bf16.gmra.mrb[0].mxu0 %v6137
  %v7281 = vpop.f32.mrb[0].mxu0
  %v7282 = vadd.f32 %v7242, %v7281
  %v7283 = vpop.f32.mrb[0].mxu0
  %v7284 = vpop.f32.mrb[0].mxu0
  %v7285 = vpop.f32.mrb[0].mxu0
  %7286 = vdwg.mxu0
  %7287 = vmatprep.subr.bf16.mxu0 0
  %7288 = vmatpush1.bf16.msra.mxu0 %v5937
  %7289 = vmatprep.subr.bf16.mxu0 0
  %7290 = vmatpush1.bf16.msra.mxu0 %v5938
  %7291 = vmatprep.subr.bf16.mxu0 0
  %7292 = vmatpush1.bf16.msra.mxu0 %v5939
  %7293 = vmatprep.subr.bf16.mxu0 0
  %7294 = vmatpush1.bf16.msra.mxu0 %v5940
  %7295 = vmatprep.subr.bf16.mxu0 0
  %7296 = vmatpush1.bf16.msra.mxu0 %v5941
  %7297 = vmatprep.subr.bf16.mxu0 0
  %7298 = vmatpush1.bf16.msra.mxu0 %v5942
  %7299 = vmatprep.subr.bf16.mxu0 0
  %7300 = vmatpush1.bf16.msra.mxu0 %v5943
  %7301 = vmatprep.subr.bf16.mxu0 0
  %7302 = vmatpush1.bf16.msra.mxu0 %v5944
  %7303 = vmatprep.subr.bf16.mxu0 0
  %7304 = vmatpush1.bf16.msra.mxu0 %v5945
  %7305 = vmatprep.subr.bf16.mxu0 0
  %7306 = vmatpush1.bf16.msra.mxu0 %v5946
  %7307 = vmatprep.subr.bf16.mxu0 0
  %7308 = vmatpush1.bf16.msra.mxu0 %v5947
  %7309 = vmatprep.subr.bf16.mxu0 0
  %7310 = vmatpush1.bf16.msra.mxu0 %v5948
  %7311 = vmatprep.subr.bf16.mxu0 0
  %7312 = vmatpush1.bf16.msra.mxu0 %v5949
  %7313 = vmatprep.subr.bf16.mxu0 0
  %7314 = vmatpush1.bf16.msra.mxu0 %v5950
  %7315 = vmatprep.subr.bf16.mxu0 0
  %7316 = vmatpush1.bf16.msra.mxu0 %v5951
  %7317 = vmatprep.subr.bf16.mxu0 0
  %7318 = vmatpush1.bf16.msra.mxu0 %v5952
  %7319 = vmatprep.mubr.bf16.mxu0 %v6140
  %7320 = vmatmul.mubr.bf16.gmra.mrb[0].mxu0 %v6139
  %v7321 = vpop.f32.mrb[0].mxu0
  %v7322 = vadd.f32 %v7282, %v7321
  %v7323 = vpop.f32.mrb[0].mxu0
  %v7324 = vpop.f32.mrb[0].mxu0
  %v7325 = vpop.f32.mrb[0].mxu0
  %7326 = vdwg.mxu0
  %7327 = vmatprep.subr.bf16.mxu0 0
  %7328 = vmatpush1.bf16.msra.mxu0 %v5953
  %7329 = vmatprep.subr.bf16.mxu0 0
  %7330 = vmatpush1.bf16.msra.mxu0 %v5954
  %7331 = vmatprep.subr.bf16.mxu0 0
  %7332 = vmatpush1.bf16.msra.mxu0 %v5955
  %7333 = vmatprep.subr.bf16.mxu0 0
  %7334 = vmatpush1.bf16.msra.mxu0 %v5956
  %7335 = vmatprep.subr.bf16.mxu0 0
  %7336 = vmatpush1.bf16.msra.mxu0 %v5957
  %7337 = vmatprep.subr.bf16.mxu0 0
  %7338 = vmatpush1.bf16.msra.mxu0 %v5958
  %7339 = vmatprep.subr.bf16.mxu0 0
  %7340 = vmatpush1.bf16.msra.mxu0 %v5959
  %7341 = vmatprep.subr.bf16.mxu0 0
  %7342 = vmatpush1.bf16.msra.mxu0 %v5960
  %7343 = vmatprep.subr.bf16.mxu0 0
  %7344 = vmatpush1.bf16.msra.mxu0 %v5961
  %7345 = vmatprep.subr.bf16.mxu0 0
  %7346 = vmatpush1.bf16.msra.mxu0 %v5962
  %7347 = vmatprep.subr.bf16.mxu0 0
  %7348 = vmatpush1.bf16.msra.mxu0 %v5963
  %7349 = vmatprep.subr.bf16.mxu0 0
  %7350 = vmatpush1.bf16.msra.mxu0 %v5964
  %7351 = vmatprep.subr.bf16.mxu0 0
  %7352 = vmatpush1.bf16.msra.mxu0 %v5965
  %7353 = vmatprep.subr.bf16.mxu0 0
  %7354 = vmatpush1.bf16.msra.mxu0 %v5966
  %7355 = vmatprep.subr.bf16.mxu0 0
  %7356 = vmatpush1.bf16.msra.mxu0 %v5967
  %7357 = vmatprep.subr.bf16.mxu0 0
  %7358 = vmatpush1.bf16.msra.mxu0 %v5968
  %7359 = vmatprep.mubr.bf16.mxu0 %v6142
  %7360 = vmatmul.mubr.bf16.gmra.mrb[0].mxu0 %v6141
  %v7361 = vpop.f32.mrb[0].mxu0
  %v7362 = vadd.f32 %v7322, %v7361
  %v7363 = vpop.f32.mrb[0].mxu0
  %v7364 = vpop.f32.mrb[0].mxu0
  %v7365 = vpop.f32.mrb[0].mxu0
  %7366 = vdwg.mxu0
  %7367 = vmatprep.subr.bf16.mxu0 0
  %7368 = vmatpush1.bf16.msra.mxu0 %v5969
  %7369 = vmatprep.subr.bf16.mxu0 0
  %7370 = vmatpush1.bf16.msra.mxu0 %v5970
  %7371 = vmatprep.subr.bf16.mxu0 0
  %7372 = vmatpush1.bf16.msra.mxu0 %v5971
  %7373 = vmatprep.subr.bf16.mxu0 0
  %7374 = vmatpush1.bf16.msra.mxu0 %v5972
  %7375 = vmatprep.subr.bf16.mxu0 0
  %7376 = vmatpush1.bf16.msra.mxu0 %v5973
  %7377 = vmatprep.subr.bf16.mxu0 0
  %7378 = vmatpush1.bf16.msra.mxu0 %v5974
  %7379 = vmatprep.subr.bf16.mxu0 0
  %7380 = vmatpush1.bf16.msra.mxu0 %v5975
  %7381 = vmatprep.subr.bf16.mxu0 0
  %7382 = vmatpush1.bf16.msra.mxu0 %v5976
  %7383 = vmatprep.subr.bf16.mxu0 0
  %7384 = vmatpush1.bf16.msra.mxu0 %v5977
  %7385 = vmatprep.subr.bf16.mxu0 0
  %7386 = vmatpush1.bf16.msra.mxu0 %v5978
  %7387 = vmatprep.subr.bf16.mxu0 0
  %7388 = vmatpush1.bf16.msra.mxu0 %v5979
  %7389 = vmatprep.subr.bf16.mxu0 0
  %7390 = vmatpush1.bf16.msra.mxu0 %v5980
  %7391 = vmatprep.subr.bf16.mxu0 0
  %7392 = vmatpush1.bf16.msra.mxu0 %v5981
  %7393 = vmatprep.subr.bf16.mxu0 0
  %7394 = vmatpush1.bf16.msra.mxu0 %v5982
  %7395 = vmatprep.subr.bf16.mxu0 0
  %7396 = vmatpush1.bf16.msra.mxu0 %v5983
  %7397 = vmatprep.subr.bf16.mxu0 0
  %7398 = vmatpush1.bf16.msra.mxu0 %v5984
  %7399 = vmatprep.mubr.bf16.mxu0 %v6144
  %7400 = vmatmul.mubr.bf16.gmra.mrb[0].mxu0 %v6143
  %v7401 = vpop.f32.mrb[0].mxu0
  %v7402 = vadd.f32 %v7362, %v7401
  %v7403 = vpop.f32.mrb[0].mxu0
  %v7404 = vpop.f32.mrb[0].mxu0
  %v7405 = vpop.f32.mrb[0].mxu0
  %7406 = vdwg.mxu0
  %7407 = vmatprep.subr.bf16.mxu0 0
  %7408 = vmatpush1.bf16.msra.mxu0 %v5985
  %7409 = vmatprep.subr.bf16.mxu0 0
  %7410 = vmatpush1.bf16.msra.mxu0 %v5986
  %7411 = vmatprep.subr.bf16.mxu0 0
  %7412 = vmatpush1.bf16.msra.mxu0 %v5987
  %7413 = vmatprep.subr.bf16.mxu0 0
  %7414 = vmatpush1.bf16.msra.mxu0 %v5988
  %7415 = vmatprep.subr.bf16.mxu0 0
  %7416 = vmatpush1.bf16.msra.mxu0 %v5989
  %7417 = vmatprep.subr.bf16.mxu0 0
  %7418 = vmatpush1.bf16.msra.mxu0 %v5990
  %7419 = vmatprep.subr.bf16.mxu0 0
  %7420 = vmatpush1.bf16.msra.mxu0 %v5991
  %7421 = vmatprep.subr.bf16.mxu0 0
  %7422 = vmatpush1.bf16.msra.mxu0 %v5992
  %7423 = vmatprep.subr.bf16.mxu0 0
  %7424 = vmatpush1.bf16.msra.mxu0 0
  %7425 = vmatprep.subr.bf16.mxu0 0
  %7426 = vmatpush1.bf16.msra.mxu0 0
  %7427 = vmatprep.subr.bf16.mxu0 0
  %7428 = vmatpush1.bf16.msra.mxu0 0
  %7429 = vmatprep.subr.bf16.mxu0 0
  %7430 = vmatpush1.bf16.msra.mxu0 0
  %7431 = vmatprep.subr.bf16.mxu0 0
  %7432 = vmatpush1.bf16.msra.mxu0 0
  %7433 = vmatprep.subr.bf16.mxu0 0
  %7434 = vmatpush1.bf16.msra.mxu0 0
  %7435 = vmatprep.subr.bf16.mxu0 0
  %7436 = vmatpush1.bf16.msra.mxu0 0
  %7437 = vmatprep.subr.bf16.mxu0 0
  %7438 = vmatpush1.bf16.msra.mxu0 0
  %7439 = vmatprep.mubr.bf16.mxu0 0
  %7440 = vmatmul.mubr.bf16.gmra.mrb[0].mxu0 %v6145
  %v7441 = vpop.f32.mrb[0].mxu0
  %v7442 = vadd.f32 %v7402, %v7441
  %v7443 = vpop.f32.mrb[0].mxu0
  %v7444 = vpop.f32.mrb[0].mxu0
  %v7445 = vpop.f32.mrb[0].mxu0
  %7446 = vdwg.mxu0
  %v7447 = vld [vmem:[%s2 + $0x1] sm:$0x1]
  %v7448 = vld [vmem:[%s2 + $0x2] sm:$0x1]
  %v7449 = vrot.slane %v7442, 4
  %v7450 = vadd.f32 %v7442, %v7449
  %v7451 = vrot.slane %v7450, 2
  %v7452 = vadd.f32 %v7450, %v7451
  %v7453 = vrot.slane %v7452, 1
  %v7454 = vadd.f32 %v7452, %v7453
  %v7455 = vrcp.pop 8.0
  %v7456 = vmul.f32 %v7454, %v7455
  %v7457 = vmul.f32 %v7442, %v7442
  %v7458 = vrot.slane %v7457, 4
  %v7459 = vadd.f32 %v7457, %v7458
  %v7460 = vrot.slane %v7459, 2
  %v7461 = vadd.f32 %v7459, %v7460
  %v7462 = vrot.slane %v7461, 1
  %v7463 = vadd.f32 %v7461, %v7462
  %v7464 = vmul.f32 %v7463, %v7455
  %v7465 = vmul.f32 %v7456, %v7456
  %v7466 = vsub.f32 %v7464, %v7465
  %v7467 = vsub.f32 %v7442, %v7456
  %v7468 = vadd.f32 %v7466, 1e-05
  %v7469 = vrsqrt.pop %v7468
  %v7470 = vmul.f32 %v7467, %v7469
  %v7472 = vlaneseq
  %v7473 = vshrl.u32 %v7472, 7
  %v7474 = vsub.s32 0, %v7473
  %v7475 = vrot.slane %v7447, %v7474
  %v7477 = vmul.f32 %v7470, %v7475
  %v7479 = vlaneseq
  %v7480 = vshrl.u32 %v7479, 7
  %v7481 = vsub.s32 0, %v7480
  %v7482 = vrot.slane %v7448, %v7481
  %v7484 = vadd.f32 %v7477, %v7482
  %vm7485 = vcmp.gt.f32.partialorder %v7484, 0.0
  %v7486 = vmul.f32 %v7484, 0.2
  %v7487 = vsel %vm7485, %v7484, %v7486
  %v7488 = vld [vmem:[%s2 + $0x3] sm:$0x1]
  %v7489 = vld [vmem:[%s2 + $0x4] sm:$0x1]
  %v7491 = vlaneseq
  %v7492 = vshrl.u32 %v7491, 7
  %v7493 = vsub.s32 0, %v7492
  %v7494 = vrot.slane %v7488, %v7493
  %v7496 = vmul.f32 %v7487, %v7494
  %7497 = vadd.xlane.f32.xlu0 %v7496
  %v7498 = vpop.xlane.xlu0 %7497
  %v7500 = vlaneseq
  %v7501 = vshrl.u32 %v7500, 7
  %v7502 = vsub.s32 0, %v7501
  %v7503 = vrot.slane %v7489, %v7502
  %v7505 = vadd.f32 %v7498, %v7503
  %v7506 = vxor.u32 %v7505, 2147483648
  %v7507 = vmul.f32 %v7506, 1.442695
  %v7508 = vpow.pop %v7507
  %v7509 = vadd.f32 %v7508, 1.0
  %v7510 = vrcp.pop %v7509
  %v7511 = vmul.f32 1.0, %v7510
  %vm7512 = vcmask 7168
  %7513 = vst.msk [vmem:[%s4] sm:$0xff] %vm7512, %v7511
  // Predicated region
  $region48: #{discriminator_forward.1} parent=0 // pred_check
    _
  $region49: #{discriminator_forward.1} parent=0 // pred_check_branch
    %7515 = sbr.rel (0) target = $region51
  $region50: #{discriminator_forward.1} parent=0 // pred_region
    _
  $region51: #{discriminator_forward.1} parent=0 // pred_fallthru
    _
  // Predicated region
  $region52: #{discriminator_forward.1} parent=0 // pred_check
    _
  $region53: #{discriminator_forward.1} parent=0 // pred_check_branch
    %7517 = sbr.rel (0) target = $region55
  $region54: #{discriminator_forward.1} parent=0 // pred_region
    _
  $region55: #{discriminator_forward.1} parent=0 // pred_fallthru
    _
  %7518 = vsyncmov [#allocation5]
  %s7519 = vpop.sfrf %7518
  %p7520 = scmp.eq.s32.totalorder %s7519, 0
  %p7521 = pneg %p7520
  %7523 = shalt.err (%p7521)

</llo_original>
